<compile_context>
chip_gen: v7x
topology: tpu7x:2x2x1
jax: 0.10.0
libtpu: 0.0.40
codegen_flags: <defaults>
</compile_context>

<pallas_src>
import numpy as np
import jax
import jax.numpy as jnp
from jax.experimental import pallas as pl
from jax.experimental.pallas import tpu as pltpu

# ---------------------------------------------------------------------------
# Static network geometry (implied by fc1: 125 = 5ch * 5 * 5  ->  64x64x3 in)
# ---------------------------------------------------------------------------
H0 = W0 = 64
CIN = 3
C1, K1 = 5, 5
OH1, OW1 = H0 - K1 + 1, W0 - K1 + 1          # 60, 60
PH1, PW1 = OH1 // 3, OW1 // 3                # 20, 20
C2, K2 = 5, 5
OH2, OW2 = PH1 - K2 + 1, PW1 - K2 + 1        # 16, 16
PH2, PW2 = OH2 // 3, OW2 // 3                # 5, 5
NH, NOUT = 50, 16

L1 = C1 * OW1                                # 300  conv1 lane width (co*60 + w)
L2 = C2 * OW2                                # 80   conv2 lane width (co*16 + w)
WIN1 = L1 - 2                                # 298  sliding-max width (pool1)
WIN2 = L2 - 2                                # 78   sliding-max width (pool2)
R1 = OH1 - 2                                 # 58   rows after pool1 sliding max
R2 = 3 * (OH2 - 1) + 1                       # 46   conv2 output rows (valid @ 3*h)
R3 = R2 - 6                                  # 40   rows after pool2 sliding max


# ---------------------------------------------------------------------------
# One-time parameter preparation (host-side, outside the traced forward path)
# ---------------------------------------------------------------------------
def prepare_params(params):
    w1 = np.asarray(params["w1"], np.float32)   # (Cout, Cin, KH, KW)
    b1 = np.asarray(params["b1"], np.float32)
    w2 = np.asarray(params["w2"], np.float32)
    b2 = np.asarray(params["b2"], np.float32)
    fw1 = np.asarray(params["fw1"], np.float32)  # (50, 125)
    fb1 = np.asarray(params["fb1"], np.float32)
    fw2 = np.asarray(params["fw2"], np.float32)  # (16, 50)
    fb2 = np.asarray(params["fb2"], np.float32)

    # conv1 as sum_{i,c}  X[c*64+i : +60, :] @ m1[i*CIN+c]
    #   m1[i*CIN+c][w_in, co*OW1 + w_out] = w1[co, c, i, w_in - w_out]
    m1 = np.zeros((K1 * CIN, W0, L1), np.float32)
    for i in range(K1):
        for c in range(CIN):
            for co in range(C1):
                for w in range(OW1):
                    for kw in range(K1):
                        m1[i * CIN + c, w + kw, co * OW1 + w] = w1[co, c, i, kw]
    b1row = np.repeat(b1, OW1)[None, :]                     # (1, 300)

    # conv2 over the pooled (lane-sparse) layout; pool1's stride-3 lane
    # compaction is folded into m2's row indexing: input col = ci*60 + 3*pw
    m2 = np.zeros((K2, WIN1, L2), np.float32)
    for i in range(K2):
        for ci in range(C2):
            for co in range(C2):
                for w in range(OW2):
                    for kw in range(K2):
                        m2[i, ci * OW1 + 3 * (w + kw), co * OW2 + w] = w2[co, ci, i, kw]
    b2row = np.repeat(b2, OW2)[None, :]                     # (1, 80)

    # fc1 with the PyTorch NCHW flatten, pool2's lane compaction and the
    # weight transpose all folded in:  p2[9*ph, co*16+3*pw] <-> feat co*25+ph*5+pw
    t1 = np.zeros((PH2, WIN2, NH), np.float32)
    for ph in range(PH2):
        for co in range(C2):
            for pw in range(PW2):
                t1[ph, co * OW2 + 3 * pw, :] = fw1[:, co * (PH2 * PW2) + ph * PW2 + pw]

    return dict(
        m1=jnp.asarray(m1, jnp.bfloat16),
        b1row=jnp.asarray(b1row, jnp.float32),
        m2=jnp.asarray(m2, jnp.bfloat16),
        b2row=jnp.asarray(b2row, jnp.float32),
        t1=jnp.asarray(t1, jnp.float32),
        fb1=jnp.asarray(fb1[None, :], jnp.float32),
        fw2t=jnp.asarray(fw2.T, jnp.float32),               # (50, 16)
        fb2=jnp.asarray(fb2[None, :], jnp.float32),
    )


# ---------------------------------------------------------------------------
# Fused Pallas kernel (one image per grid step)
# ---------------------------------------------------------------------------
def net_fused_kernel(x_ref, m1_ref, b1r_ref, m2_ref, b2r_ref,
                     t1_ref, fb1_ref, fw2_ref, fb2_ref, o_ref):
    # ---- conv1 (+bias): (60, 300) f32, col = co*60 + w ----------------------
    acc1 = None
    for i in range(K1):
        for c in range(CIN):
            xs = x_ref[0, pl.ds(c * H0 + i, OH1), :].astype(jnp.bfloat16)    # (60, 64)
            p = jnp.dot(xs, m1_ref[i * CIN + c],
                        preferred_element_type=jnp.float32)                  # (60, 300)
            acc1 = p if acc1 is None else acc1 + p
    s1 = acc1 + b1r_ref[...]

    # ---- max_pool2d(3) + relu (sliding max; compaction folded into m2) ------
    hmax1 = jnp.maximum(jnp.maximum(s1[0:R1, :], s1[1:R1 + 1, :]), s1[2:R1 + 2, :])
    a1 = jnp.maximum(
        jnp.maximum(jnp.maximum(hmax1[:, 0:WIN1], hmax1[:, 1:WIN1 + 1]),
                    hmax1[:, 2:WIN1 + 2]),
        0.0)                                   # (58, 298); valid @ (3*ph, ci*60+3*pw)

    # ---- conv2 (+bias): (46, 80) f32, col = co*16 + w, valid rows 3*h -------
    # TODO(synk): nn.Dropout2d / F.dropout run in eval mode (identity);
    # training-mode RNG masking is not replicated.
    acc2 = None
    for i in range(K2):
        sl = a1[3 * i:3 * i + R2, :].astype(jnp.bfloat16)                    # (46, 298)
        p = jnp.dot(sl, m2_ref[i], preferred_element_type=jnp.float32)       # (46, 80)
        acc2 = p if acc2 is None else acc2 + p
    c2 = acc2 + b2r_ref[...]

    # ---- max_pool2d(3) + relu ------------------------------------------------
    hmax2 = jnp.maximum(jnp.maximum(c2[0:R3, :], c2[3:R3 + 3, :]), c2[6:R3 + 6, :])
    p2 = jnp.maximum(
        jnp.maximum(jnp.maximum(hmax2[:, 0:WIN2], hmax2[:, 1:WIN2 + 1]),
                    hmax2[:, 2:WIN2 + 2]),
        0.0)                                   # (40, 78); valid @ (9*ph, co*16+3*pw)

    # ---- fc1 + relu (NCHW flatten + compaction folded into t1) --------------
    acc3 = None
    for ph in range(PH2):
        p = jnp.dot(p2[9 * ph:9 * ph + 1, :], t1_ref[ph],
                    preferred_element_type=jnp.float32)                      # (1, 50)
        acc3 = p if acc3 is None else acc3 + p
    h = jnp.maximum(acc3 + fb1_ref[...], 0.0)

    # ---- (dropout: eval identity) fc2 + sigmoid ------------------------------
    z = jnp.dot(h, fw2_ref[...], preferred_element_type=jnp.float32) + fb2_ref[...]
    o_ref[0] = 1.0 / (1.0 + jnp.exp(-z))


# ---------------------------------------------------------------------------
# Wrapper: single pallas_call, grid over batch
# ---------------------------------------------------------------------------
def net_forward(prep, x_nchw):
    B = x_nchw.shape[0]
    x = x_nchw.reshape(B, CIN * H0, W0)          # free NCHW reshape: row = c*64 + h
    out = pl.pallas_call(
        net_fused_kernel,
        out_shape=jax.ShapeDtypeStruct((B, 1, NOUT), jnp.float32),
        grid=(B,),
        in_specs=[
            pl.BlockSpec((1, CIN * H0, W0), lambda b: (b, 0, 0)),   # image b
            pl.BlockSpec((K1 * CIN, W0, L1), lambda b: (0, 0, 0)),  # m1 (VMEM-resident)
            pl.BlockSpec((1, L1), lambda b: (0, 0)),                # conv1 bias row
            pl.BlockSpec((K2, WIN1, L2), lambda b: (0, 0, 0)),      # m2
            pl.BlockSpec((1, L2), lambda b: (0, 0)),                # conv2 bias row
            pl.BlockSpec((PH2, WIN2, NH), lambda b: (0, 0, 0)),     # t1 (fc1 folded)
            pl.BlockSpec((1, NH), lambda b: (0, 0)),                # fc1 bias
            pl.BlockSpec((NH, NOUT), lambda b: (0, 0)),             # fc2 weight^T
            pl.BlockSpec((1, NOUT), lambda b: (0, 0)),              # fc2 bias
        ],
        out_specs=pl.BlockSpec((1, 1, NOUT), lambda b: (b, 0, 0)),
        compiler_params=pltpu.CompilerParams(
            dimension_semantics=("parallel",),
            vmem_limit_bytes=32 * 1024 * 1024,
        ),
    )(x, prep["m1"], prep["b1row"], prep["m2"], prep["b2row"],
      prep["t1"], prep["fb1"], prep["fw2t"], prep["fb2"])
    return out.reshape(B, NOUT)


# ---------------------------------------------------------------------------
# Pure-JAX f32 reference (eval mode) for a correctness check
# ---------------------------------------------------------------------------
def reference_forward(params, x_nchw):
    def conv(x, w, b):
        y = jax.lax.conv_general_dilated(
            x, w, window_strides=(1, 1), padding="VALID",
            dimension_numbers=("NCHW", "OIHW", "NCHW"))
        return y + b[None, :, None, None]

    def pool3(x):
        return jax.lax.reduce_window(x, -jnp.inf, jax.lax.max,
                                     (1, 1, 3, 3), (1, 1, 3, 3), "VALID")

    y = jax.nn.relu(pool3(conv(x_nchw, params["w1"], params["b1"])))
    y = jax.nn.relu(pool3(conv(y, params["w2"], params["b2"])))
    feat = y.reshape(y.shape[0], -1)
    h = jax.nn.relu(feat @ params["fw1"].T + params["fb1"])
    z = h @ params["fw2"].T + params["fb2"]
    return jax.nn.sigmoid(z)


# ---------------------------------------------------------------------------
# Main
# ---------------------------------------------------------------------------
if __name__ == "__main__":
    key = jax.random.PRNGKey(0)
    ks = jax.random.split(key, 9)

    x = jax.random.normal(ks[0], (2, CIN, H0, W0), dtype=jnp.float32)
    params = {
        "w1": 0.1 * jax.random.normal(ks[1], (C1, CIN, K1, K1), dtype=jnp.float32),
        "b1": 0.1 * jax.random.normal(ks[2], (C1,), dtype=jnp.float32),
        "w2": 0.1 * jax.random.normal(ks[3], (C2, C1, K2, K2), dtype=jnp.float32),
        "b2": 0.1 * jax.random.normal(ks[4], (C2,), dtype=jnp.float32),
        "fw1": 0.1 * jax.random.normal(ks[5], (NH, C2 * PH2 * PW2), dtype=jnp.float32),
        "fb1": 0.1 * jax.random.normal(ks[6], (NH,), dtype=jnp.float32),
        "fw2": 0.1 * jax.random.normal(ks[7], (NOUT, NH), dtype=jnp.float32),
        "fb2": 0.1 * jax.random.normal(ks[8], (NOUT,), dtype=jnp.float32),
    }

    prep = prepare_params(params)               # one-time, outside the traced path
    fwd = jax.jit(net_forward)
    out = jax.block_until_ready(fwd(prep, x))

    assert out.shape == (2, NOUT) and out.dtype == jnp.float32
    assert bool(jnp.all(jnp.isfinite(out)))

    # numeric check vs. pure-JAX f32 reference (loose tol: bf16 conv operands)
    ref = reference_forward(params, x)
    assert float(jnp.max(jnp.abs(out - ref))) < 8e-2

    print("KERNEL_OK")
</pallas_src>

<mosaic_0001>
module attributes {stable_mosaic.version = 11 : i64} {
  func.func @net_fused_kernel(%arg0: i32, %arg1: memref<1x192x64xf32, #tpu.memory_space<vmem>>, %arg2: memref<15x64x300xbf16, #tpu.memory_space<vmem>>, %arg3: memref<1x300xf32, #tpu.memory_space<vmem>>, %arg4: memref<5x298x80xbf16, #tpu.memory_space<vmem>>, %arg5: memref<1x80xf32, #tpu.memory_space<vmem>>, %arg6: memref<5x78x50xf32, #tpu.memory_space<vmem>>, %arg7: memref<1x50xf32, #tpu.memory_space<vmem>>, %arg8: memref<50x16xf32, #tpu.memory_space<vmem>>, %arg9: memref<1x16xf32, #tpu.memory_space<vmem>>, %arg10: memref<1x1x16xf32, #tpu.memory_space<vmem>>) attributes {dimension_semantics = [#tpu.dimension_semantics<parallel>], iteration_bounds = array<i64: 2>, scalar_prefetch = 0 : i64, scratch_operands = 0 : i64, tpu.core_type = #tpu.core_type<tc>, window_params = [{transform_indices = @transform_0, window_bounds = array<i64: 1, 192, 64>}, {pipeline_mode = #tpu.pipeline_mode<synchronous>, transform_indices = @transform_1, window_bounds = array<i64: 15, 64, 300>}, {pipeline_mode = #tpu.pipeline_mode<synchronous>, transform_indices = @transform_2, window_bounds = array<i64: 1, 300>}, {pipeline_mode = #tpu.pipeline_mode<synchronous>, transform_indices = @transform_3, window_bounds = array<i64: 5, 298, 80>}, {pipeline_mode = #tpu.pipeline_mode<synchronous>, transform_indices = @transform_4, window_bounds = array<i64: 1, 80>}, {pipeline_mode = #tpu.pipeline_mode<synchronous>, transform_indices = @transform_5, window_bounds = array<i64: 5, 78, 50>}, {pipeline_mode = #tpu.pipeline_mode<synchronous>, transform_indices = @transform_6, window_bounds = array<i64: 1, 50>}, {pipeline_mode = #tpu.pipeline_mode<synchronous>, transform_indices = @transform_7, window_bounds = array<i64: 50, 16>}, {pipeline_mode = #tpu.pipeline_mode<synchronous>, transform_indices = @transform_8, window_bounds = array<i64: 1, 16>}, {transform_indices = @transform_9, window_bounds = array<i64: 1, 1, 16>}]} {
    %c0 = arith.constant 0 : index
    %c0_0 = arith.constant 0 : index
    %c0_1 = arith.constant 0 : index
    %0 = vector.load %arg1[%c0, %c0_0, %c0_1] : memref<1x192x64xf32, #tpu.memory_space<vmem>>, vector<1x60x64xf32>
    %1 = vector.shape_cast %0 : vector<1x60x64xf32> to vector<60x64xf32>
    %2 = arith.truncf %1 : vector<60x64xf32> to vector<60x64xbf16>
    %c0_2 = arith.constant 0 : index
    %c0_3 = arith.constant 0 : index
    %c0_4 = arith.constant 0 : index
    %3 = vector.load %arg2[%c0_2, %c0_3, %c0_4] : memref<15x64x300xbf16, #tpu.memory_space<vmem>>, vector<1x64x300xbf16>
    %4 = vector.shape_cast %3 : vector<1x64x300xbf16> to vector<64x300xbf16>
    %cst = arith.constant dense<0.000000e+00> : vector<60x300xf32>
    %5 = tpu.matmul %2, %4, %cst {dimension_numbers = #tpu.dot_dimension_numbers<[1], [0], [0], [1], [0, 0, 1, 1], [], []>} : vector<60x64xbf16>, vector<64x300xbf16>, vector<60x300xf32> -> vector<60x300xf32>
    %c0_5 = arith.constant 0 : index
    %c64 = arith.constant 64 : index
    %c0_6 = arith.constant 0 : index
    %6 = vector.load %arg1[%c0_5, %c64, %c0_6] : memref<1x192x64xf32, #tpu.memory_space<vmem>>, vector<1x60x64xf32>
    %7 = vector.shape_cast %6 : vector<1x60x64xf32> to vector<60x64xf32>
    %8 = arith.truncf %7 : vector<60x64xf32> to vector<60x64xbf16>
    %c1 = arith.constant 1 : index
    %c0_7 = arith.constant 0 : index
    %c0_8 = arith.constant 0 : index
    %9 = vector.load %arg2[%c1, %c0_7, %c0_8] : memref<15x64x300xbf16, #tpu.memory_space<vmem>>, vector<1x64x300xbf16>
    %10 = vector.shape_cast %9 : vector<1x64x300xbf16> to vector<64x300xbf16>
    %cst_9 = arith.constant dense<0.000000e+00> : vector<60x300xf32>
    %11 = tpu.matmul %8, %10, %cst_9 {dimension_numbers = #tpu.dot_dimension_numbers<[1], [0], [0], [1], [0, 0, 1, 1], [], []>} : vector<60x64xbf16>, vector<64x300xbf16>, vector<60x300xf32> -> vector<60x300xf32>
    %12 = arith.addf %5, %11 : vector<60x300xf32>
    %c0_10 = arith.constant 0 : index
    %c128 = arith.constant 128 : index
    %c0_11 = arith.constant 0 : index
    %13 = vector.load %arg1[%c0_10, %c128, %c0_11] : memref<1x192x64xf32, #tpu.memory_space<vmem>>, vector<1x60x64xf32>
    %14 = vector.shape_cast %13 : vector<1x60x64xf32> to vector<60x64xf32>
    %15 = arith.truncf %14 : vector<60x64xf32> to vector<60x64xbf16>
    %c2 = arith.constant 2 : index
    %c0_12 = arith.constant 0 : index
    %c0_13 = arith.constant 0 : index
    %16 = vector.load %arg2[%c2, %c0_12, %c0_13] : memref<15x64x300xbf16, #tpu.memory_space<vmem>>, vector<1x64x300xbf16>
    %17 = vector.shape_cast %16 : vector<1x64x300xbf16> to vector<64x300xbf16>
    %cst_14 = arith.constant dense<0.000000e+00> : vector<60x300xf32>
    %18 = tpu.matmul %15, %17, %cst_14 {dimension_numbers = #tpu.dot_dimension_numbers<[1], [0], [0], [1], [0, 0, 1, 1], [], []>} : vector<60x64xbf16>, vector<64x300xbf16>, vector<60x300xf32> -> vector<60x300xf32>
    %19 = arith.addf %12, %18 : vector<60x300xf32>
    %c0_15 = arith.constant 0 : index
    %c1_16 = arith.constant 1 : index
    %c0_17 = arith.constant 0 : index
    %20 = vector.load %arg1[%c0_15, %c1_16, %c0_17] : memref<1x192x64xf32, #tpu.memory_space<vmem>>, vector<1x60x64xf32>
    %21 = vector.shape_cast %20 : vector<1x60x64xf32> to vector<60x64xf32>
    %22 = arith.truncf %21 : vector<60x64xf32> to vector<60x64xbf16>
    %c3 = arith.constant 3 : index
    %c0_18 = arith.constant 0 : index
    %c0_19 = arith.constant 0 : index
    %23 = vector.load %arg2[%c3, %c0_18, %c0_19] : memref<15x64x300xbf16, #tpu.memory_space<vmem>>, vector<1x64x300xbf16>
    %24 = vector.shape_cast %23 : vector<1x64x300xbf16> to vector<64x300xbf16>
    %cst_20 = arith.constant dense<0.000000e+00> : vector<60x300xf32>
    %25 = tpu.matmul %22, %24, %cst_20 {dimension_numbers = #tpu.dot_dimension_numbers<[1], [0], [0], [1], [0, 0, 1, 1], [], []>} : vector<60x64xbf16>, vector<64x300xbf16>, vector<60x300xf32> -> vector<60x300xf32>
    %26 = arith.addf %19, %25 : vector<60x300xf32>
    %c0_21 = arith.constant 0 : index
    %c65 = arith.constant 65 : index
    %c0_22 = arith.constant 0 : index
    %27 = vector.load %arg1[%c0_21, %c65, %c0_22] : memref<1x192x64xf32, #tpu.memory_space<vmem>>, vector<1x60x64xf32>
    %28 = vector.shape_cast %27 : vector<1x60x64xf32> to vector<60x64xf32>
    %29 = arith.truncf %28 : vector<60x64xf32> to vector<60x64xbf16>
    %c4 = arith.constant 4 : index
    %c0_23 = arith.constant 0 : index
    %c0_24 = arith.constant 0 : index
    %30 = vector.load %arg2[%c4, %c0_23, %c0_24] : memref<15x64x300xbf16, #tpu.memory_space<vmem>>, vector<1x64x300xbf16>
    %31 = vector.shape_cast %30 : vector<1x64x300xbf16> to vector<64x300xbf16>
    %cst_25 = arith.constant dense<0.000000e+00> : vector<60x300xf32>
    %32 = tpu.matmul %29, %31, %cst_25 {dimension_numbers = #tpu.dot_dimension_numbers<[1], [0], [0], [1], [0, 0, 1, 1], [], []>} : vector<60x64xbf16>, vector<64x300xbf16>, vector<60x300xf32> -> vector<60x300xf32>
    %33 = arith.addf %26, %32 : vector<60x300xf32>
    %c0_26 = arith.constant 0 : index
    %c129 = arith.constant 129 : index
    %c0_27 = arith.constant 0 : index
    %34 = vector.load %arg1[%c0_26, %c129, %c0_27] : memref<1x192x64xf32, #tpu.memory_space<vmem>>, vector<1x60x64xf32>
    %35 = vector.shape_cast %34 : vector<1x60x64xf32> to vector<60x64xf32>
    %36 = arith.truncf %35 : vector<60x64xf32> to vector<60x64xbf16>
    %c5 = arith.constant 5 : index
    %c0_28 = arith.constant 0 : index
    %c0_29 = arith.constant 0 : index
    %37 = vector.load %arg2[%c5, %c0_28, %c0_29] : memref<15x64x300xbf16, #tpu.memory_space<vmem>>, vector<1x64x300xbf16>
    %38 = vector.shape_cast %37 : vector<1x64x300xbf16> to vector<64x300xbf16>
    %cst_30 = arith.constant dense<0.000000e+00> : vector<60x300xf32>
    %39 = tpu.matmul %36, %38, %cst_30 {dimension_numbers = #tpu.dot_dimension_numbers<[1], [0], [0], [1], [0, 0, 1, 1], [], []>} : vector<60x64xbf16>, vector<64x300xbf16>, vector<60x300xf32> -> vector<60x300xf32>
    %40 = arith.addf %33, %39 : vector<60x300xf32>
    %c0_31 = arith.constant 0 : index
    %c2_32 = arith.constant 2 : index
    %c0_33 = arith.constant 0 : index
    %41 = vector.load %arg1[%c0_31, %c2_32, %c0_33] : memref<1x192x64xf32, #tpu.memory_space<vmem>>, vector<1x60x64xf32>
    %42 = vector.shape_cast %41 : vector<1x60x64xf32> to vector<60x64xf32>
    %43 = arith.truncf %42 : vector<60x64xf32> to vector<60x64xbf16>
    %c6 = arith.constant 6 : index
    %c0_34 = arith.constant 0 : index
    %c0_35 = arith.constant 0 : index
    %44 = vector.load %arg2[%c6, %c0_34, %c0_35] : memref<15x64x300xbf16, #tpu.memory_space<vmem>>, vector<1x64x300xbf16>
    %45 = vector.shape_cast %44 : vector<1x64x300xbf16> to vector<64x300xbf16>
    %cst_36 = arith.constant dense<0.000000e+00> : vector<60x300xf32>
    %46 = tpu.matmul %43, %45, %cst_36 {dimension_numbers = #tpu.dot_dimension_numbers<[1], [0], [0], [1], [0, 0, 1, 1], [], []>} : vector<60x64xbf16>, vector<64x300xbf16>, vector<60x300xf32> -> vector<60x300xf32>
    %47 = arith.addf %40, %46 : vector<60x300xf32>
    %c0_37 = arith.constant 0 : index
    %c66 = arith.constant 66 : index
    %c0_38 = arith.constant 0 : index
    %48 = vector.load %arg1[%c0_37, %c66, %c0_38] : memref<1x192x64xf32, #tpu.memory_space<vmem>>, vector<1x60x64xf32>
    %49 = vector.shape_cast %48 : vector<1x60x64xf32> to vector<60x64xf32>
    %50 = arith.truncf %49 : vector<60x64xf32> to vector<60x64xbf16>
    %c7 = arith.constant 7 : index
    %c0_39 = arith.constant 0 : index
    %c0_40 = arith.constant 0 : index
    %51 = vector.load %arg2[%c7, %c0_39, %c0_40] : memref<15x64x300xbf16, #tpu.memory_space<vmem>>, vector<1x64x300xbf16>
    %52 = vector.shape_cast %51 : vector<1x64x300xbf16> to vector<64x300xbf16>
    %cst_41 = arith.constant dense<0.000000e+00> : vector<60x300xf32>
    %53 = tpu.matmul %50, %52, %cst_41 {dimension_numbers = #tpu.dot_dimension_numbers<[1], [0], [0], [1], [0, 0, 1, 1], [], []>} : vector<60x64xbf16>, vector<64x300xbf16>, vector<60x300xf32> -> vector<60x300xf32>
    %54 = arith.addf %47, %53 : vector<60x300xf32>
    %c0_42 = arith.constant 0 : index
    %c130 = arith.constant 130 : index
    %c0_43 = arith.constant 0 : index
    %55 = vector.load %arg1[%c0_42, %c130, %c0_43] : memref<1x192x64xf32, #tpu.memory_space<vmem>>, vector<1x60x64xf32>
    %56 = vector.shape_cast %55 : vector<1x60x64xf32> to vector<60x64xf32>
    %57 = arith.truncf %56 : vector<60x64xf32> to vector<60x64xbf16>
    %c8 = arith.constant 8 : index
    %c0_44 = arith.constant 0 : index
    %c0_45 = arith.constant 0 : index
    %58 = vector.load %arg2[%c8, %c0_44, %c0_45] : memref<15x64x300xbf16, #tpu.memory_space<vmem>>, vector<1x64x300xbf16>
    %59 = vector.shape_cast %58 : vector<1x64x300xbf16> to vector<64x300xbf16>
    %cst_46 = arith.constant dense<0.000000e+00> : vector<60x300xf32>
    %60 = tpu.matmul %57, %59, %cst_46 {dimension_numbers = #tpu.dot_dimension_numbers<[1], [0], [0], [1], [0, 0, 1, 1], [], []>} : vector<60x64xbf16>, vector<64x300xbf16>, vector<60x300xf32> -> vector<60x300xf32>
    %61 = arith.addf %54, %60 : vector<60x300xf32>
    %c0_47 = arith.constant 0 : index
    %c3_48 = arith.constant 3 : index
    %c0_49 = arith.constant 0 : index
    %62 = vector.load %arg1[%c0_47, %c3_48, %c0_49] : memref<1x192x64xf32, #tpu.memory_space<vmem>>, vector<1x60x64xf32>
    %63 = vector.shape_cast %62 : vector<1x60x64xf32> to vector<60x64xf32>
    %64 = arith.truncf %63 : vector<60x64xf32> to vector<60x64xbf16>
    %c9 = arith.constant 9 : index
    %c0_50 = arith.constant 0 : index
    %c0_51 = arith.constant 0 : index
    %65 = vector.load %arg2[%c9, %c0_50, %c0_51] : memref<15x64x300xbf16, #tpu.memory_space<vmem>>, vector<1x64x300xbf16>
    %66 = vector.shape_cast %65 : vector<1x64x300xbf16> to vector<64x300xbf16>
    %cst_52 = arith.constant dense<0.000000e+00> : vector<60x300xf32>
    %67 = tpu.matmul %64, %66, %cst_52 {dimension_numbers = #tpu.dot_dimension_numbers<[1], [0], [0], [1], [0, 0, 1, 1], [], []>} : vector<60x64xbf16>, vector<64x300xbf16>, vector<60x300xf32> -> vector<60x300xf32>
    %68 = arith.addf %61, %67 : vector<60x300xf32>
    %c0_53 = arith.constant 0 : index
    %c67 = arith.constant 67 : index
    %c0_54 = arith.constant 0 : index
    %69 = vector.load %arg1[%c0_53, %c67, %c0_54] : memref<1x192x64xf32, #tpu.memory_space<vmem>>, vector<1x60x64xf32>
    %70 = vector.shape_cast %69 : vector<1x60x64xf32> to vector<60x64xf32>
    %71 = arith.truncf %70 : vector<60x64xf32> to vector<60x64xbf16>
    %c10 = arith.constant 10 : index
    %c0_55 = arith.constant 0 : index
    %c0_56 = arith.constant 0 : index
    %72 = vector.load %arg2[%c10, %c0_55, %c0_56] : memref<15x64x300xbf16, #tpu.memory_space<vmem>>, vector<1x64x300xbf16>
    %73 = vector.shape_cast %72 : vector<1x64x300xbf16> to vector<64x300xbf16>
    %cst_57 = arith.constant dense<0.000000e+00> : vector<60x300xf32>
    %74 = tpu.matmul %71, %73, %cst_57 {dimension_numbers = #tpu.dot_dimension_numbers<[1], [0], [0], [1], [0, 0, 1, 1], [], []>} : vector<60x64xbf16>, vector<64x300xbf16>, vector<60x300xf32> -> vector<60x300xf32>
    %75 = arith.addf %68, %74 : vector<60x300xf32>
    %c0_58 = arith.constant 0 : index
    %c131 = arith.constant 131 : index
    %c0_59 = arith.constant 0 : index
    %76 = vector.load %arg1[%c0_58, %c131, %c0_59] : memref<1x192x64xf32, #tpu.memory_space<vmem>>, vector<1x60x64xf32>
    %77 = vector.shape_cast %76 : vector<1x60x64xf32> to vector<60x64xf32>
    %78 = arith.truncf %77 : vector<60x64xf32> to vector<60x64xbf16>
    %c11 = arith.constant 11 : index
    %c0_60 = arith.constant 0 : index
    %c0_61 = arith.constant 0 : index
    %79 = vector.load %arg2[%c11, %c0_60, %c0_61] : memref<15x64x300xbf16, #tpu.memory_space<vmem>>, vector<1x64x300xbf16>
    %80 = vector.shape_cast %79 : vector<1x64x300xbf16> to vector<64x300xbf16>
    %cst_62 = arith.constant dense<0.000000e+00> : vector<60x300xf32>
    %81 = tpu.matmul %78, %80, %cst_62 {dimension_numbers = #tpu.dot_dimension_numbers<[1], [0], [0], [1], [0, 0, 1, 1], [], []>} : vector<60x64xbf16>, vector<64x300xbf16>, vector<60x300xf32> -> vector<60x300xf32>
    %82 = arith.addf %75, %81 : vector<60x300xf32>
    %c0_63 = arith.constant 0 : index
    %c4_64 = arith.constant 4 : index
    %c0_65 = arith.constant 0 : index
    %83 = vector.load %arg1[%c0_63, %c4_64, %c0_65] : memref<1x192x64xf32, #tpu.memory_space<vmem>>, vector<1x60x64xf32>
    %84 = vector.shape_cast %83 : vector<1x60x64xf32> to vector<60x64xf32>
    %85 = arith.truncf %84 : vector<60x64xf32> to vector<60x64xbf16>
    %c12 = arith.constant 12 : index
    %c0_66 = arith.constant 0 : index
    %c0_67 = arith.constant 0 : index
    %86 = vector.load %arg2[%c12, %c0_66, %c0_67] : memref<15x64x300xbf16, #tpu.memory_space<vmem>>, vector<1x64x300xbf16>
    %87 = vector.shape_cast %86 : vector<1x64x300xbf16> to vector<64x300xbf16>
    %cst_68 = arith.constant dense<0.000000e+00> : vector<60x300xf32>
    %88 = tpu.matmul %85, %87, %cst_68 {dimension_numbers = #tpu.dot_dimension_numbers<[1], [0], [0], [1], [0, 0, 1, 1], [], []>} : vector<60x64xbf16>, vector<64x300xbf16>, vector<60x300xf32> -> vector<60x300xf32>
    %89 = arith.addf %82, %88 : vector<60x300xf32>
    %c0_69 = arith.constant 0 : index
    %c68 = arith.constant 68 : index
    %c0_70 = arith.constant 0 : index
    %90 = vector.load %arg1[%c0_69, %c68, %c0_70] : memref<1x192x64xf32, #tpu.memory_space<vmem>>, vector<1x60x64xf32>
    %91 = vector.shape_cast %90 : vector<1x60x64xf32> to vector<60x64xf32>
    %92 = arith.truncf %91 : vector<60x64xf32> to vector<60x64xbf16>
    %c13 = arith.constant 13 : index
    %c0_71 = arith.constant 0 : index
    %c0_72 = arith.constant 0 : index
    %93 = vector.load %arg2[%c13, %c0_71, %c0_72] : memref<15x64x300xbf16, #tpu.memory_space<vmem>>, vector<1x64x300xbf16>
    %94 = vector.shape_cast %93 : vector<1x64x300xbf16> to vector<64x300xbf16>
    %cst_73 = arith.constant dense<0.000000e+00> : vector<60x300xf32>
    %95 = tpu.matmul %92, %94, %cst_73 {dimension_numbers = #tpu.dot_dimension_numbers<[1], [0], [0], [1], [0, 0, 1, 1], [], []>} : vector<60x64xbf16>, vector<64x300xbf16>, vector<60x300xf32> -> vector<60x300xf32>
    %96 = arith.addf %89, %95 : vector<60x300xf32>
    %c0_74 = arith.constant 0 : index
    %c132 = arith.constant 132 : index
    %c0_75 = arith.constant 0 : index
    %97 = vector.load %arg1[%c0_74, %c132, %c0_75] : memref<1x192x64xf32, #tpu.memory_space<vmem>>, vector<1x60x64xf32>
    %98 = vector.shape_cast %97 : vector<1x60x64xf32> to vector<60x64xf32>
    %99 = arith.truncf %98 : vector<60x64xf32> to vector<60x64xbf16>
    %c14 = arith.constant 14 : index
    %c0_76 = arith.constant 0 : index
    %c0_77 = arith.constant 0 : index
    %100 = vector.load %arg2[%c14, %c0_76, %c0_77] : memref<15x64x300xbf16, #tpu.memory_space<vmem>>, vector<1x64x300xbf16>
    %101 = vector.shape_cast %100 : vector<1x64x300xbf16> to vector<64x300xbf16>
    %cst_78 = arith.constant dense<0.000000e+00> : vector<60x300xf32>
    %102 = tpu.matmul %99, %101, %cst_78 {dimension_numbers = #tpu.dot_dimension_numbers<[1], [0], [0], [1], [0, 0, 1, 1], [], []>} : vector<60x64xbf16>, vector<64x300xbf16>, vector<60x300xf32> -> vector<60x300xf32>
    %103 = arith.addf %96, %102 : vector<60x300xf32>
    %c0_79 = arith.constant 0 : index
    %c0_80 = arith.constant 0 : index
    %104 = vector.load %arg3[%c0_79, %c0_80] : memref<1x300xf32, #tpu.memory_space<vmem>>, vector<1x300xf32>
    %105 = vector.broadcast %104 : vector<1x300xf32> to vector<60x300xf32>
    %106 = arith.addf %103, %105 : vector<60x300xf32>
    %107 = vector.extract_strided_slice %106 {offsets = [0, 0], sizes = [58, 300], strides = [1, 1]} : vector<60x300xf32> to vector<58x300xf32>
    %108 = vector.extract_strided_slice %106 {offsets = [1, 0], sizes = [58, 300], strides = [1, 1]} : vector<60x300xf32> to vector<58x300xf32>
    %109 = arith.maximumf %107, %108 : vector<58x300xf32>
    %110 = vector.extract_strided_slice %106 {offsets = [2, 0], sizes = [58, 300], strides = [1, 1]} : vector<60x300xf32> to vector<58x300xf32>
    %111 = arith.maximumf %109, %110 : vector<58x300xf32>
    %112 = vector.extract_strided_slice %111 {offsets = [0, 0], sizes = [58, 298], strides = [1, 1]} : vector<58x300xf32> to vector<58x298xf32>
    %113 = vector.extract_strided_slice %111 {offsets = [0, 1], sizes = [58, 298], strides = [1, 1]} : vector<58x300xf32> to vector<58x298xf32>
    %114 = arith.maximumf %112, %113 : vector<58x298xf32>
    %115 = vector.extract_strided_slice %111 {offsets = [0, 2], sizes = [58, 298], strides = [1, 1]} : vector<58x300xf32> to vector<58x298xf32>
    %116 = arith.maximumf %114, %115 : vector<58x298xf32>
    %cst_81 = arith.constant 0.000000e+00 : f32
    %117 = vector.broadcast %cst_81 : f32 to vector<58x298xf32>
    %118 = arith.maximumf %116, %117 : vector<58x298xf32>
    %119 = vector.extract_strided_slice %118 {offsets = [0, 0], sizes = [46, 298], strides = [1, 1]} : vector<58x298xf32> to vector<46x298xf32>
    %120 = arith.truncf %119 : vector<46x298xf32> to vector<46x298xbf16>
    %c0_82 = arith.constant 0 : index
    %c0_83 = arith.constant 0 : index
    %c0_84 = arith.constant 0 : index
    %121 = vector.load %arg4[%c0_82, %c0_83, %c0_84] : memref<5x298x80xbf16, #tpu.memory_space<vmem>>, vector<1x298x80xbf16>
    %122 = vector.shape_cast %121 : vector<1x298x80xbf16> to vector<298x80xbf16>
    %cst_85 = arith.constant dense<0.000000e+00> : vector<46x80xf32>
    %123 = tpu.matmul %120, %122, %cst_85 {dimension_numbers = #tpu.dot_dimension_numbers<[1], [0], [0], [1], [0, 0, 1, 1], [], []>} : vector<46x298xbf16>, vector<298x80xbf16>, vector<46x80xf32> -> vector<46x80xf32>
    %124 = vector.extract_strided_slice %118 {offsets = [3, 0], sizes = [46, 298], strides = [1, 1]} : vector<58x298xf32> to vector<46x298xf32>
    %125 = arith.truncf %124 : vector<46x298xf32> to vector<46x298xbf16>
    %c1_86 = arith.constant 1 : index
    %c0_87 = arith.constant 0 : index
    %c0_88 = arith.constant 0 : index
    %126 = vector.load %arg4[%c1_86, %c0_87, %c0_88] : memref<5x298x80xbf16, #tpu.memory_space<vmem>>, vector<1x298x80xbf16>
    %127 = vector.shape_cast %126 : vector<1x298x80xbf16> to vector<298x80xbf16>
    %cst_89 = arith.constant dense<0.000000e+00> : vector<46x80xf32>
    %128 = tpu.matmul %125, %127, %cst_89 {dimension_numbers = #tpu.dot_dimension_numbers<[1], [0], [0], [1], [0, 0, 1, 1], [], []>} : vector<46x298xbf16>, vector<298x80xbf16>, vector<46x80xf32> -> vector<46x80xf32>
    %129 = arith.addf %123, %128 : vector<46x80xf32>
    %130 = vector.extract_strided_slice %118 {offsets = [6, 0], sizes = [46, 298], strides = [1, 1]} : vector<58x298xf32> to vector<46x298xf32>
    %131 = arith.truncf %130 : vector<46x298xf32> to vector<46x298xbf16>
    %c2_90 = arith.constant 2 : index
    %c0_91 = arith.constant 0 : index
    %c0_92 = arith.constant 0 : index
    %132 = vector.load %arg4[%c2_90, %c0_91, %c0_92] : memref<5x298x80xbf16, #tpu.memory_space<vmem>>, vector<1x298x80xbf16>
    %133 = vector.shape_cast %132 : vector<1x298x80xbf16> to vector<298x80xbf16>
    %cst_93 = arith.constant dense<0.000000e+00> : vector<46x80xf32>
    %134 = tpu.matmul %131, %133, %cst_93 {dimension_numbers = #tpu.dot_dimension_numbers<[1], [0], [0], [1], [0, 0, 1, 1], [], []>} : vector<46x298xbf16>, vector<298x80xbf16>, vector<46x80xf32> -> vector<46x80xf32>
    %135 = arith.addf %129, %134 : vector<46x80xf32>
    %136 = vector.extract_strided_slice %118 {offsets = [9, 0], sizes = [46, 298], strides = [1, 1]} : vector<58x298xf32> to vector<46x298xf32>
    %137 = arith.truncf %136 : vector<46x298xf32> to vector<46x298xbf16>
    %c3_94 = arith.constant 3 : index
    %c0_95 = arith.constant 0 : index
    %c0_96 = arith.constant 0 : index
    %138 = vector.load %arg4[%c3_94, %c0_95, %c0_96] : memref<5x298x80xbf16, #tpu.memory_space<vmem>>, vector<1x298x80xbf16>
    %139 = vector.shape_cast %138 : vector<1x298x80xbf16> to vector<298x80xbf16>
    %cst_97 = arith.constant dense<0.000000e+00> : vector<46x80xf32>
    %140 = tpu.matmul %137, %139, %cst_97 {dimension_numbers = #tpu.dot_dimension_numbers<[1], [0], [0], [1], [0, 0, 1, 1], [], []>} : vector<46x298xbf16>, vector<298x80xbf16>, vector<46x80xf32> -> vector<46x80xf32>
    %141 = arith.addf %135, %140 : vector<46x80xf32>
    %142 = vector.extract_strided_slice %118 {offsets = [12, 0], sizes = [46, 298], strides = [1, 1]} : vector<58x298xf32> to vector<46x298xf32>
    %143 = arith.truncf %142 : vector<46x298xf32> to vector<46x298xbf16>
    %c4_98 = arith.constant 4 : index
    %c0_99 = arith.constant 0 : index
    %c0_100 = arith.constant 0 : index
    %144 = vector.load %arg4[%c4_98, %c0_99, %c0_100] : memref<5x298x80xbf16, #tpu.memory_space<vmem>>, vector<1x298x80xbf16>
    %145 = vector.shape_cast %144 : vector<1x298x80xbf16> to vector<298x80xbf16>
    %cst_101 = arith.constant dense<0.000000e+00> : vector<46x80xf32>
    %146 = tpu.matmul %143, %145, %cst_101 {dimension_numbers = #tpu.dot_dimension_numbers<[1], [0], [0], [1], [0, 0, 1, 1], [], []>} : vector<46x298xbf16>, vector<298x80xbf16>, vector<46x80xf32> -> vector<46x80xf32>
    %147 = arith.addf %141, %146 : vector<46x80xf32>
    %c0_102 = arith.constant 0 : index
    %c0_103 = arith.constant 0 : index
    %148 = vector.load %arg5[%c0_102, %c0_103] : memref<1x80xf32, #tpu.memory_space<vmem>>, vector<1x80xf32>
    %149 = vector.broadcast %148 : vector<1x80xf32> to vector<46x80xf32>
    %150 = arith.addf %147, %149 : vector<46x80xf32>
    %151 = vector.extract_strided_slice %150 {offsets = [0, 0], sizes = [40, 80], strides = [1, 1]} : vector<46x80xf32> to vector<40x80xf32>
    %152 = vector.extract_strided_slice %150 {offsets = [3, 0], sizes = [40, 80], strides = [1, 1]} : vector<46x80xf32> to vector<40x80xf32>
    %153 = arith.maximumf %151, %152 : vector<40x80xf32>
    %154 = vector.extract_strided_slice %150 {offsets = [6, 0], sizes = [40, 80], strides = [1, 1]} : vector<46x80xf32> to vector<40x80xf32>
    %155 = arith.maximumf %153, %154 : vector<40x80xf32>
    %156 = vector.extract_strided_slice %155 {offsets = [0, 0], sizes = [40, 78], strides = [1, 1]} : vector<40x80xf32> to vector<40x78xf32>
    %157 = vector.extract_strided_slice %155 {offsets = [0, 1], sizes = [40, 78], strides = [1, 1]} : vector<40x80xf32> to vector<40x78xf32>
    %158 = arith.maximumf %156, %157 : vector<40x78xf32>
    %159 = vector.extract_strided_slice %155 {offsets = [0, 2], sizes = [40, 78], strides = [1, 1]} : vector<40x80xf32> to vector<40x78xf32>
    %160 = arith.maximumf %158, %159 : vector<40x78xf32>
    %cst_104 = arith.constant 0.000000e+00 : f32
    %161 = vector.broadcast %cst_104 : f32 to vector<40x78xf32>
    %162 = arith.maximumf %160, %161 : vector<40x78xf32>
    %163 = vector.extract_strided_slice %162 {offsets = [0, 0], sizes = [1, 78], strides = [1, 1]} : vector<40x78xf32> to vector<1x78xf32>
    %c0_105 = arith.constant 0 : index
    %c0_106 = arith.constant 0 : index
    %c0_107 = arith.constant 0 : index
    %164 = vector.load %arg6[%c0_105, %c0_106, %c0_107] : memref<5x78x50xf32, #tpu.memory_space<vmem>>, vector<1x78x50xf32>
    %165 = vector.shape_cast %164 : vector<1x78x50xf32> to vector<78x50xf32>
    %cst_108 = arith.constant dense<0.000000e+00> : vector<1x50xf32>
    %166 = tpu.matmul %163, %165, %cst_108 {dimension_numbers = #tpu.dot_dimension_numbers<[1], [0], [0], [1], [0, 0, 1, 1], [], []>} : vector<1x78xf32>, vector<78x50xf32>, vector<1x50xf32> -> vector<1x50xf32>
    %167 = vector.extract_strided_slice %162 {offsets = [9, 0], sizes = [1, 78], strides = [1, 1]} : vector<40x78xf32> to vector<1x78xf32>
    %c1_109 = arith.constant 1 : index
    %c0_110 = arith.constant 0 : index
    %c0_111 = arith.constant 0 : index
    %168 = vector.load %arg6[%c1_109, %c0_110, %c0_111] : memref<5x78x50xf32, #tpu.memory_space<vmem>>, vector<1x78x50xf32>
    %169 = vector.shape_cast %168 : vector<1x78x50xf32> to vector<78x50xf32>
    %cst_112 = arith.constant dense<0.000000e+00> : vector<1x50xf32>
    %170 = tpu.matmul %167, %169, %cst_112 {dimension_numbers = #tpu.dot_dimension_numbers<[1], [0], [0], [1], [0, 0, 1, 1], [], []>} : vector<1x78xf32>, vector<78x50xf32>, vector<1x50xf32> -> vector<1x50xf32>
    %171 = arith.addf %166, %170 : vector<1x50xf32>
    %172 = vector.extract_strided_slice %162 {offsets = [18, 0], sizes = [1, 78], strides = [1, 1]} : vector<40x78xf32> to vector<1x78xf32>
    %c2_113 = arith.constant 2 : index
    %c0_114 = arith.constant 0 : index
    %c0_115 = arith.constant 0 : index
    %173 = vector.load %arg6[%c2_113, %c0_114, %c0_115] : memref<5x78x50xf32, #tpu.memory_space<vmem>>, vector<1x78x50xf32>
    %174 = vector.shape_cast %173 : vector<1x78x50xf32> to vector<78x50xf32>
    %cst_116 = arith.constant dense<0.000000e+00> : vector<1x50xf32>
    %175 = tpu.matmul %172, %174, %cst_116 {dimension_numbers = #tpu.dot_dimension_numbers<[1], [0], [0], [1], [0, 0, 1, 1], [], []>} : vector<1x78xf32>, vector<78x50xf32>, vector<1x50xf32> -> vector<1x50xf32>
    %176 = arith.addf %171, %175 : vector<1x50xf32>
    %177 = vector.extract_strided_slice %162 {offsets = [27, 0], sizes = [1, 78], strides = [1, 1]} : vector<40x78xf32> to vector<1x78xf32>
    %c3_117 = arith.constant 3 : index
    %c0_118 = arith.constant 0 : index
    %c0_119 = arith.constant 0 : index
    %178 = vector.load %arg6[%c3_117, %c0_118, %c0_119] : memref<5x78x50xf32, #tpu.memory_space<vmem>>, vector<1x78x50xf32>
    %179 = vector.shape_cast %178 : vector<1x78x50xf32> to vector<78x50xf32>
    %cst_120 = arith.constant dense<0.000000e+00> : vector<1x50xf32>
    %180 = tpu.matmul %177, %179, %cst_120 {dimension_numbers = #tpu.dot_dimension_numbers<[1], [0], [0], [1], [0, 0, 1, 1], [], []>} : vector<1x78xf32>, vector<78x50xf32>, vector<1x50xf32> -> vector<1x50xf32>
    %181 = arith.addf %176, %180 : vector<1x50xf32>
    %182 = vector.extract_strided_slice %162 {offsets = [36, 0], sizes = [1, 78], strides = [1, 1]} : vector<40x78xf32> to vector<1x78xf32>
    %c4_121 = arith.constant 4 : index
    %c0_122 = arith.constant 0 : index
    %c0_123 = arith.constant 0 : index
    %183 = vector.load %arg6[%c4_121, %c0_122, %c0_123] : memref<5x78x50xf32, #tpu.memory_space<vmem>>, vector<1x78x50xf32>
    %184 = vector.shape_cast %183 : vector<1x78x50xf32> to vector<78x50xf32>
    %cst_124 = arith.constant dense<0.000000e+00> : vector<1x50xf32>
    %185 = tpu.matmul %182, %184, %cst_124 {dimension_numbers = #tpu.dot_dimension_numbers<[1], [0], [0], [1], [0, 0, 1, 1], [], []>} : vector<1x78xf32>, vector<78x50xf32>, vector<1x50xf32> -> vector<1x50xf32>
    %186 = arith.addf %181, %185 : vector<1x50xf32>
    %c0_125 = arith.constant 0 : index
    %c0_126 = arith.constant 0 : index
    %187 = vector.load %arg7[%c0_125, %c0_126] : memref<1x50xf32, #tpu.memory_space<vmem>>, vector<1x50xf32>
    %188 = arith.addf %186, %187 : vector<1x50xf32>
    %cst_127 = arith.constant 0.000000e+00 : f32
    %189 = vector.broadcast %cst_127 : f32 to vector<1x50xf32>
    %190 = arith.maximumf %188, %189 : vector<1x50xf32>
    %c0_128 = arith.constant 0 : index
    %c0_129 = arith.constant 0 : index
    %191 = vector.load %arg8[%c0_128, %c0_129] : memref<50x16xf32, #tpu.memory_space<vmem>>, vector<50x16xf32>
    %cst_130 = arith.constant dense<0.000000e+00> : vector<1x16xf32>
    %192 = tpu.matmul %190, %191, %cst_130 {dimension_numbers = #tpu.dot_dimension_numbers<[1], [0], [0], [1], [0, 0, 1, 1], [], []>} : vector<1x50xf32>, vector<50x16xf32>, vector<1x16xf32> -> vector<1x16xf32>
    %c0_131 = arith.constant 0 : index
    %c0_132 = arith.constant 0 : index
    %193 = vector.load %arg9[%c0_131, %c0_132] : memref<1x16xf32, #tpu.memory_space<vmem>>, vector<1x16xf32>
    %194 = arith.addf %192, %193 : vector<1x16xf32>
    %cst_133 = arith.constant 0.000000e+00 : f32
    %195 = vector.broadcast %cst_133 : f32 to vector<1x16xf32>
    %196 = arith.subf %195, %194 : vector<1x16xf32>
    %197 = math.exp %196 : vector<1x16xf32>
    %cst_134 = arith.constant 1.000000e+00 : f32
    %198 = vector.broadcast %cst_134 : f32 to vector<1x16xf32>
    %199 = arith.addf %198, %197 : vector<1x16xf32>
    %cst_135 = arith.constant 1.000000e+00 : f32
    %200 = vector.broadcast %cst_135 : f32 to vector<1x16xf32>
    %201 = arith.divf %200, %199 : vector<1x16xf32>
    %c0_136 = arith.constant 0 : index
    %c0_137 = arith.constant 0 : index
    %c0_138 = arith.constant 0 : index
    %202 = vector.load %arg10[%c0_136, %c0_137, %c0_138] : memref<1x1x16xf32, #tpu.memory_space<vmem>>, vector<1x1x16xf32>
    %203 = vector.shape_cast %202 : vector<1x1x16xf32> to vector<1x16xf32>
    %204 = vector.shape_cast %201 : vector<1x16xf32> to vector<1x1x16xf32>
    tpu.vector_store %arg10[%c0_136, %c0_137, %c0_138], %204 {strides = array<i32>} : memref<1x1x16xf32, #tpu.memory_space<vmem>>, vector<1x1x16xf32>,
    return
  }
  func.func @transform_0(%arg0: i32) -> (i32, i32, i32) {
    %c0_i32 = arith.constant 0 : i32
    %c0_i32_0 = arith.constant 0 : i32
    %c0_i32_1 = arith.constant 0 : i32
    return %arg0, %c0_i32, %c0_i32_0 : i32, i32, i32
  }
  func.func @transform_1(%arg0: i32) -> (i32, i32, i32) {
    %c0_i32 = arith.constant 0 : i32
    %c0_i32_0 = arith.constant 0 : i32
    %c0_i32_1 = arith.constant 0 : i32
    %c0_i32_2 = arith.constant 0 : i32
    return %c0_i32, %c0_i32_0, %c0_i32_1 : i32, i32, i32
  }
  func.func @transform_2(%arg0: i32) -> (i32, i32) {
    %c0_i32 = arith.constant 0 : i32
    %c0_i32_0 = arith.constant 0 : i32
    %c0_i32_1 = arith.constant 0 : i32
    return %c0_i32, %c0_i32_0 : i32, i32
  }
  func.func @transform_3(%arg0: i32) -> (i32, i32, i32) {
    %c0_i32 = arith.constant 0 : i32
    %c0_i32_0 = arith.constant 0 : i32
    %c0_i32_1 = arith.constant 0 : i32
    %c0_i32_2 = arith.constant 0 : i32
    return %c0_i32, %c0_i32_0, %c0_i32_1 : i32, i32, i32
  }
  func.func @transform_4(%arg0: i32) -> (i32, i32) {
    %c0_i32 = arith.constant 0 : i32
    %c0_i32_0 = arith.constant 0 : i32
    %c0_i32_1 = arith.constant 0 : i32
    return %c0_i32, %c0_i32_0 : i32, i32
  }
  func.func @transform_5(%arg0: i32) -> (i32, i32, i32) {
    %c0_i32 = arith.constant 0 : i32
    %c0_i32_0 = arith.constant 0 : i32
    %c0_i32_1 = arith.constant 0 : i32
    %c0_i32_2 = arith.constant 0 : i32
    return %c0_i32, %c0_i32_0, %c0_i32_1 : i32, i32, i32
  }
  func.func @transform_6(%arg0: i32) -> (i32, i32) {
    %c0_i32 = arith.constant 0 : i32
    %c0_i32_0 = arith.constant 0 : i32
    %c0_i32_1 = arith.constant 0 : i32
    return %c0_i32, %c0_i32_0 : i32, i32
  }
  func.func @transform_7(%arg0: i32) -> (i32, i32) {
    %c0_i32 = arith.constant 0 : i32
    %c0_i32_0 = arith.constant 0 : i32
    %c0_i32_1 = arith.constant 0 : i32
    return %c0_i32, %c0_i32_0 : i32, i32
  }
  func.func @transform_8(%arg0: i32) -> (i32, i32) {
    %c0_i32 = arith.constant 0 : i32
    %c0_i32_0 = arith.constant 0 : i32
    %c0_i32_1 = arith.constant 0 : i32
    return %c0_i32, %c0_i32_0 : i32, i32
  }
  func.func @transform_9(%arg0: i32) -> (i32, i32, i32) {
    %c0_i32 = arith.constant 0 : i32
    %c0_i32_0 = arith.constant 0 : i32
    %c0_i32_1 = arith.constant 0 : i32
    return %arg0, %c0_i32, %c0_i32_0 : i32, i32, i32
  }
}

</mosaic_0001>

<llo_original>
// kernel: net_forward.1
$region0: #{net_forward.1}
  #allocation0 [shape = 'u32[]', space=smem, size = 0x4, offset = 0x4, fixed_abs, tag = 'smem constant byte address 0x4 - core index']
  #allocation1 [shape = 'u32[144,128]{1,0:T(1,128)}', space=vmem, size = 0x12000, scoped, tag = 'internal scratch']
  %s0 = inlined_call_operand.hbm [shape: f32[2,192,64], index: 0, kind: input, shape index: {}]
  %s1 = inlined_call_operand.vmem [shape: bf16[15,64,300], index: 1, kind: input, shape index: {}]
  %s2 = inlined_call_operand.vmem [shape: f32[1,300], index: 2, kind: input, shape index: {}]
  %s3 = inlined_call_operand.vmem [shape: bf16[5,298,80], index: 3, kind: input, shape index: {}]
  %s4 = inlined_call_operand.vmem [shape: f32[1,80], index: 4, kind: input, shape index: {}]
  %s5 = inlined_call_operand.vmem [shape: f32[5,78,50], index: 5, kind: input, shape index: {}]
  %s6 = inlined_call_operand.vmem [shape: f32[1,50], index: 6, kind: input, shape index: {}]
  %s7 = inlined_call_operand.vmem [shape: f32[50,16], index: 7, kind: input, shape index: {}]
  %s8 = inlined_call_operand.vmem [shape: f32[1,16], index: 8, kind: input, shape index: {}]
  %s9 = inlined_call_operand.hbm [shape: f32[2,1,16], index: 9, kind: output, shape index: {}]
  %s10 = sld [smem:[#allocation0]]
  $region73: #{net_forward.1} parent=0
    _
  %s12 = ssub.s32 1, %s10
  %s13 = scalar_select 0, %s12, %s10
  $region1: #{net_forward.1} parent=0
    #allocation2 [shape = 'u8[196608]{0}', space=vmem, size = 0x30000, scoped, tag = 'input window, operand 0']
    #allocation3 [shape = 's32[2]{0}', space=sflag, size = 0x8, scoped, tag = 'scoped memory for net_forward.1']
    #allocation4 [shape = 's32[2]{0}', space=sflag, size = 0x8, scoped, tag = 'scoped memory for net_forward.1']
    #allocation5 [shape = 'u8[1024]{0}', space=vmem, size = 0x400, scoped, tag = 'output window, operand 0']
    %14 = vsyncpa [#allocation3], 0
    %s15 = scalar_lea.sflag [#allocation3], 1
    %16 = vsyncpa %s15, 0
    %17 = vsyncpa [#allocation4], 0
    %s18 = scalar_lea.sflag [#allocation4], 1
    %19 = vsyncpa %s18, 0
    loop: start=0, step=1, limit=4
    $region2: #{net_forward.1} parent=1 // loop_pre_header
      _
    $region3: #{net_forward.1} parent=1 // loop_header
      %s21 = sphi 0, %s25
      %p22 = scmp.ge.s32.totalorder %s21, 4
      %s31 = sphi 0, %s33
      %s34 = sphi 0, %s31
      %s35 = sphi 0, %s34
      %s51 = sphi 0, %s35
      %s55 = sphi 0, %s55
      %s57 = sphi 0, %s55
      %s58 = sphi 0, %s57
      %s72 = sphi 0, %s58
      %s76 = sphi 0, %s76
      %s78 = sphi 0, %s76
      %s79 = sphi 0, %s78
      %s93 = sphi 0, %s79
      %s97 = sphi 0, %s97
      %s99 = sphi 0, %s97
      %s100 = sphi 0, %s99
      %s114 = sphi 0, %s100
      %s118 = sphi 0, %s118
      %s120 = sphi 0, %s118
      %s121 = sphi 0, %s120
      %s135 = sphi 0, %s121
      %s139 = sphi 0, %s139
      %s141 = sphi 0, %s139
      %s142 = sphi 0, %s141
      %s156 = sphi 0, %s142
      %s160 = sphi 0, %s160
      %s162 = sphi 0, %s160
      %s163 = sphi 0, %s162
      %s177 = sphi 0, %s163
      %s181 = sphi 0, %s181
      %s183 = sphi 0, %s181
      %s184 = sphi 0, %s183
      %s198 = sphi 0, %s184
      %s202 = sphi 0, %s202
      %s204 = sphi 0, %s202
      %s205 = sphi 0, %s204
      %s219 = sphi 0, %s205
      %s225 = sphi 0, %s227
      %s228 = sphi 0, %s225
      %s229 = sphi 0, %s228
      %s245 = sphi 0, %s229
    $region4: #{net_forward.1} parent=1 // loop_header_branch
      %24 = sbr.rel (%p22) target = $region8
    $region5: #{net_forward.1} parent=1 // loop_body
      %s26 = ssub.s32 %s21, 1
      %s27 = ssub.s32 %s21, 2
      %s28 = sadd.s32 %s21, 1
      %s29 = ssub.s32 %s21, %s28
      %p30 = scmp.eq.s32.totalorder %s29, 0
      %s32 = sadd.s32 %s31, 1
      %s33 = scalar_select %p30, %s31, %s32
      %p36 = pneg %p30
      %p37 = scmp.eq.s32.totalorder %s21, 1
      %p38 = por %p36, %p37
      %p39 = scmp.ne.s32.totalorder %s31, %s34
      %p40 = scmp.eq.s32.totalorder %s21, 0
      %p41 = por %p39, %p40
      %p42 = scmp.ne.s32.totalorder %s31, %s34
      %p43 = scmp.eq.s32.totalorder %s26, 1
      %p44 = por %p42, %p43
      %p45 = scmp.ne.s32.totalorder %s34, %s35
      %p46 = scmp.eq.s32.totalorder %s26, 0
      %p47 = por %p45, %p46
      %p48 = scmp.ne.s32.totalorder %s34, %s35
      %p49 = scmp.eq.s32.totalorder %s27, 1
      %p50 = por %p48, %p49
      %p52 = scmp.ne.s32.totalorder %s35, %s51
      %p53 = scmp.eq.s32.totalorder %s27, 0
      %p54 = por %p52, %p53
      %s56 = sadd.s32 %s55, 1
      %p59 = scmp.eq.s32.totalorder %s21, 1
      %p60 = scmp.ne.s32.totalorder %s55, %s57
      %p61 = scmp.eq.s32.totalorder %s21, 0
      %p62 = por %p60, %p61
      %p63 = scmp.ne.s32.totalorder %s55, %s57
      %p64 = scmp.eq.s32.totalorder %s26, 1
      %p65 = por %p63, %p64
      %p66 = scmp.ne.s32.totalorder %s57, %s58
      %p67 = scmp.eq.s32.totalorder %s26, 0
      %p68 = por %p66, %p67
      %p69 = scmp.ne.s32.totalorder %s57, %s58
      %p70 = scmp.eq.s32.totalorder %s27, 1
      %p71 = por %p69, %p70
      %p73 = scmp.ne.s32.totalorder %s58, %s72
      %p74 = scmp.eq.s32.totalorder %s27, 0
      %p75 = por %p73, %p74
      %s77 = sadd.s32 %s76, 1
      %p80 = scmp.eq.s32.totalorder %s21, 1
      %p81 = scmp.ne.s32.totalorder %s76, %s78
      %p82 = scmp.eq.s32.totalorder %s21, 0
      %p83 = por %p81, %p82
      %p84 = scmp.ne.s32.totalorder %s76, %s78
      %p85 = scmp.eq.s32.totalorder %s26, 1
      %p86 = por %p84, %p85
      %p87 = scmp.ne.s32.totalorder %s78, %s79
      %p88 = scmp.eq.s32.totalorder %s26, 0
      %p89 = por %p87, %p88
      %p90 = scmp.ne.s32.totalorder %s78, %s79
      %p91 = scmp.eq.s32.totalorder %s27, 1
      %p92 = por %p90, %p91
      %p94 = scmp.ne.s32.totalorder %s79, %s93
      %p95 = scmp.eq.s32.totalorder %s27, 0
      %p96 = por %p94, %p95
      %s98 = sadd.s32 %s97, 1
      %p101 = scmp.eq.s32.totalorder %s21, 1
      %p102 = scmp.ne.s32.totalorder %s97, %s99
      %p103 = scmp.eq.s32.totalorder %s21, 0
      %p104 = por %p102, %p103
      %p105 = scmp.ne.s32.totalorder %s97, %s99
      %p106 = scmp.eq.s32.totalorder %s26, 1
      %p107 = por %p105, %p106
      %p108 = scmp.ne.s32.totalorder %s99, %s100
      %p109 = scmp.eq.s32.totalorder %s26, 0
      %p110 = por %p108, %p109
      %p111 = scmp.ne.s32.totalorder %s99, %s100
      %p112 = scmp.eq.s32.totalorder %s27, 1
      %p113 = por %p111, %p112
      %p115 = scmp.ne.s32.totalorder %s100, %s114
      %p116 = scmp.eq.s32.totalorder %s27, 0
      %p117 = por %p115, %p116
      %s119 = sadd.s32 %s118, 1
      %p122 = scmp.eq.s32.totalorder %s21, 1
      %p123 = scmp.ne.s32.totalorder %s118, %s120
      %p124 = scmp.eq.s32.totalorder %s21, 0
      %p125 = por %p123, %p124
      %p126 = scmp.ne.s32.totalorder %s118, %s120
      %p127 = scmp.eq.s32.totalorder %s26, 1
      %p128 = por %p126, %p127
      %p129 = scmp.ne.s32.totalorder %s120, %s121
      %p130 = scmp.eq.s32.totalorder %s26, 0
      %p131 = por %p129, %p130
      %p132 = scmp.ne.s32.totalorder %s120, %s121
      %p133 = scmp.eq.s32.totalorder %s27, 1
      %p134 = por %p132, %p133
      %p136 = scmp.ne.s32.totalorder %s121, %s135
      %p137 = scmp.eq.s32.totalorder %s27, 0
      %p138 = por %p136, %p137
      %s140 = sadd.s32 %s139, 1
      %p143 = scmp.eq.s32.totalorder %s21, 1
      %p144 = scmp.ne.s32.totalorder %s139, %s141
      %p145 = scmp.eq.s32.totalorder %s21, 0
      %p146 = por %p144, %p145
      %p147 = scmp.ne.s32.totalorder %s139, %s141
      %p148 = scmp.eq.s32.totalorder %s26, 1
      %p149 = por %p147, %p148
      %p150 = scmp.ne.s32.totalorder %s141, %s142
      %p151 = scmp.eq.s32.totalorder %s26, 0
      %p152 = por %p150, %p151
      %p153 = scmp.ne.s32.totalorder %s141, %s142
      %p154 = scmp.eq.s32.totalorder %s27, 1
      %p155 = por %p153, %p154
      %p157 = scmp.ne.s32.totalorder %s142, %s156
      %p158 = scmp.eq.s32.totalorder %s27, 0
      %p159 = por %p157, %p158
      %s161 = sadd.s32 %s160, 1
      %p164 = scmp.eq.s32.totalorder %s21, 1
      %p165 = scmp.ne.s32.totalorder %s160, %s162
      %p166 = scmp.eq.s32.totalorder %s21, 0
      %p167 = por %p165, %p166
      %p168 = scmp.ne.s32.totalorder %s160, %s162
      %p169 = scmp.eq.s32.totalorder %s26, 1
      %p170 = por %p168, %p169
      %p171 = scmp.ne.s32.totalorder %s162, %s163
      %p172 = scmp.eq.s32.totalorder %s26, 0
      %p173 = por %p171, %p172
      %p174 = scmp.ne.s32.totalorder %s162, %s163
      %p175 = scmp.eq.s32.totalorder %s27, 1
      %p176 = por %p174, %p175
      %p178 = scmp.ne.s32.totalorder %s163, %s177
      %p179 = scmp.eq.s32.totalorder %s27, 0
      %p180 = por %p178, %p179
      %s182 = sadd.s32 %s181, 1
      %p185 = scmp.eq.s32.totalorder %s21, 1
      %p186 = scmp.ne.s32.totalorder %s181, %s183
      %p187 = scmp.eq.s32.totalorder %s21, 0
      %p188 = por %p186, %p187
      %p189 = scmp.ne.s32.totalorder %s181, %s183
      %p190 = scmp.eq.s32.totalorder %s26, 1
      %p191 = por %p189, %p190
      %p192 = scmp.ne.s32.totalorder %s183, %s184
      %p193 = scmp.eq.s32.totalorder %s26, 0
      %p194 = por %p192, %p193
      %p195 = scmp.ne.s32.totalorder %s183, %s184
      %p196 = scmp.eq.s32.totalorder %s27, 1
      %p197 = por %p195, %p196
      %p199 = scmp.ne.s32.totalorder %s184, %s198
      %p200 = scmp.eq.s32.totalorder %s27, 0
      %p201 = por %p199, %p200
      %s203 = sadd.s32 %s202, 1
      %p206 = scmp.eq.s32.totalorder %s21, 1
      %p207 = scmp.ne.s32.totalorder %s202, %s204
      %p208 = scmp.eq.s32.totalorder %s21, 0
      %p209 = por %p207, %p208
      %p210 = scmp.ne.s32.totalorder %s202, %s204
      %p211 = scmp.eq.s32.totalorder %s26, 1
      %p212 = por %p210, %p211
      %p213 = scmp.ne.s32.totalorder %s204, %s205
      %p214 = scmp.eq.s32.totalorder %s26, 0
      %p215 = por %p213, %p214
      %p216 = scmp.ne.s32.totalorder %s204, %s205
      %p217 = scmp.eq.s32.totalorder %s27, 1
      %p218 = por %p216, %p217
      %p220 = scmp.ne.s32.totalorder %s205, %s219
      %p221 = scmp.eq.s32.totalorder %s27, 0
      %p222 = por %p220, %p221
      %s223 = ssub.s32 %s21, %s28
      %p224 = scmp.eq.s32.totalorder %s223, 0
      %s226 = sadd.s32 %s225, 1
      %s227 = scalar_select %p224, %s225, %s226
      %p230 = pneg %p224
      %p231 = scmp.eq.s32.totalorder %s21, 1
      %p232 = por %p230, %p231
      %p233 = scmp.ne.s32.totalorder %s225, %s228
      %p234 = scmp.eq.s32.totalorder %s21, 0
      %p235 = por %p233, %p234
      %p236 = scmp.ne.s32.totalorder %s225, %s228
      %p237 = scmp.eq.s32.totalorder %s26, 1
      %p238 = por %p236, %p237
      %p239 = scmp.ne.s32.totalorder %s228, %s229
      %p240 = scmp.eq.s32.totalorder %s26, 0
      %p241 = por %p239, %p240
      %p242 = scmp.ne.s32.totalorder %s228, %s229
      %p243 = scmp.eq.s32.totalorder %s27, 1
      %p244 = por %p242, %p243
      %p246 = scmp.ne.s32.totalorder %s229, %s245
      %p247 = scmp.eq.s32.totalorder %s27, 0
      %p248 = por %p246, %p247
      %p249 = scmp.le.s32.totalorder 1, %s21
      %p250 = scmp.lt.s32.totalorder %s21, 3
      %p251 = pnand %p249, %p250
      %p252 = pneg %p251
      // Predicated region
      $region9: #{net_forward.1} parent=5 // pred_check
        _
      $region10: #{net_forward.1} parent=5 // pred_check_branch
        %254 = sbr.rel (%p251) target = $region12
      $region11: #{net_forward.1} parent=5 // pred_region
        %s255 = ssub.s32 %s21, 1
        // Predicated region
        $region13: #{net_forward.1} parent=11 // pred_check
          %p256 = pneg %p68
        $region14: #{net_forward.1} parent=11 // pred_check_branch
          %258 = sbr.rel (%p256) target = $region16
        $region15: #{net_forward.1} parent=11 // pred_region
          _
        $region16: #{net_forward.1} parent=11 // pred_fallthru
          _
        // Predicated region
        $region17: #{net_forward.1} parent=11 // pred_check
          %p259 = pneg %p89
        $region18: #{net_forward.1} parent=11 // pred_check_branch
          %261 = sbr.rel (%p259) target = $region20
        $region19: #{net_forward.1} parent=11 // pred_region
          _
        $region20: #{net_forward.1} parent=11 // pred_fallthru
          _
        // Predicated region
        $region21: #{net_forward.1} parent=11 // pred_check
          %p262 = pneg %p110
        $region22: #{net_forward.1} parent=11 // pred_check_branch
          %264 = sbr.rel (%p262) target = $region24
        $region23: #{net_forward.1} parent=11 // pred_region
          _
        $region24: #{net_forward.1} parent=11 // pred_fallthru
          _
        // Predicated region
        $region25: #{net_forward.1} parent=11 // pred_check
          %p265 = pneg %p131
        $region26: #{net_forward.1} parent=11 // pred_check_branch
          %267 = sbr.rel (%p265) target = $region28
        $region27: #{net_forward.1} parent=11 // pred_region
          _
        $region28: #{net_forward.1} parent=11 // pred_fallthru
          _
        // Predicated region
        $region29: #{net_forward.1} parent=11 // pred_check
          %p268 = pneg %p152
        $region30: #{net_forward.1} parent=11 // pred_check_branch
          %270 = sbr.rel (%p268) target = $region32
        $region31: #{net_forward.1} parent=11 // pred_region
          _
        $region32: #{net_forward.1} parent=11 // pred_fallthru
          _
        // Predicated region
        $region33: #{net_forward.1} parent=11 // pred_check
          %p271 = pneg %p173
        $region34: #{net_forward.1} parent=11 // pred_check_branch
          %273 = sbr.rel (%p271) target = $region36
        $region35: #{net_forward.1} parent=11 // pred_region
          _
        $region36: #{net_forward.1} parent=11 // pred_fallthru
          _
        // Predicated region
        $region37: #{net_forward.1} parent=11 // pred_check
          %p274 = pneg %p194
        $region38: #{net_forward.1} parent=11 // pred_check_branch
          %276 = sbr.rel (%p274) target = $region40
        $region39: #{net_forward.1} parent=11 // pred_region
          _
        $region40: #{net_forward.1} parent=11 // pred_fallthru
          _
        // Predicated region
        $region41: #{net_forward.1} parent=11 // pred_check
          %p277 = pneg %p215
        $region42: #{net_forward.1} parent=11 // pred_check_branch
          %279 = sbr.rel (%p277) target = $region44
        $region43: #{net_forward.1} parent=11 // pred_region
          _
        $region44: #{net_forward.1} parent=11 // pred_fallthru
          _
      $region12: #{net_forward.1} parent=5 // pred_fallthru
        _
      %p280 = scmp.lt.s32.totalorder %s21, 2
      // Predicated region
      $region45: #{net_forward.1} parent=5 // pred_check
        %p281 = pneg %p280
      $region46: #{net_forward.1} parent=5 // pred_check_branch
        %283 = sbr.rel (%p281) target = $region48
      $region47: #{net_forward.1} parent=5 // pred_region
        // Predicated region
        $region49: #{net_forward.1} parent=47 // pred_check
          %p284 = pneg %p41
        $region50: #{net_forward.1} parent=47 // pred_check_branch
          %286 = sbr.rel (%p284) target = $region52
        $region51: #{net_forward.1} parent=47 // pred_region
          %s287 = sand.u32 %s31, 1
          %s288 = scalar_lea.sflag [#allocation3], %s287
          %s289 = sand.u32 %s31, 1
          %s290 = smul.addr %s289, 192
          %s291 = scalar_lea.vmem [#allocation2], %s290
          %s293 = ssub.s32 3072, 3072
          %294 = vsyncadd %s288, %s293
          %s295 = smul.addr %s21, 24
          %s296 = smul.addr %s295, 128
          %s297 = scalar_lea.hbm %s0, %s296
          %s298 = sshll.u32 %s291, 4
          %s299 = int_to_ptr.vmem [resolvable:$true] %s298
          %304 = dma.hbm_to_vmem [thread:$0]  %s297, 3072, %s299, %s288, 128, 128, 8
        $region52: #{net_forward.1} parent=47 // pred_fallthru
          _
      $region48: #{net_forward.1} parent=5 // pred_fallthru
        _
      %p305 = scmp.le.s32.totalorder 1, %s21
      %p306 = scmp.lt.s32.totalorder %s21, 3
      %p307 = pnand %p305, %p306
      %p308 = pneg %p307
      // Predicated region
      $region53: #{net_forward.1} parent=5 // pred_check
        _
      $region54: #{net_forward.1} parent=5 // pred_check_branch
        %310 = sbr.rel (%p307) target = $region56
      $region55: #{net_forward.1} parent=5 // pred_region
        %s311 = ssub.s32 %s21, 1
        %s312 = sand.u32 %s34, 1
        %s313 = scalar_lea.sflag [#allocation3], %s312
        %s314 = sand.u32 %s34, 1
        %s315 = smul.addr %s314, 192
        %s316 = scalar_lea.vmem [#allocation2], %s315
        // Predicated region
        $region57: #{net_forward.1} parent=55 // pred_check
          %p317 = pneg %p47
        $region58: #{net_forward.1} parent=55 // pred_check_branch
          %319 = sbr.rel (%p317) target = $region60
        $region59: #{net_forward.1} parent=55 // pred_region
          %320 = dma.done %s313, 3072
        $region60: #{net_forward.1} parent=55 // pred_fallthru
          _
        %s321 = sand.u32 %s34, 1
        %s322 = scalar_lea.sflag [#allocation3], %s321
        %s323 = sand.u32 %s34, 1
        %s324 = smul.addr %s323, 192
        %s325 = scalar_lea.vmem [#allocation2], %s324
        %p326 = pneg %p47
        %p327 = pneg %p44
        %p328 = pneg %p68
        %p329 = pneg %p65
        %p330 = pneg %p89
        %p331 = pneg %p86
        %p332 = pneg %p110
        %p333 = pneg %p107
        %p334 = pneg %p131
        %p335 = pneg %p128
        %p336 = pneg %p152
        %p337 = pneg %p149
        %p338 = pneg %p173
        %p339 = pneg %p170
        %p340 = pneg %p194
        %p341 = pneg %p191
        %p342 = pneg %p215
        %p343 = pneg %p212
        %p344 = pneg %p241
        %p345 = pneg %p238
        %s346 = sand.u32 %s228, 1
        %s347 = scalar_lea.sflag [#allocation4], %s346
        %s348 = sand.u32 %s228, 1
        %s349 = scalar_lea.vmem [#allocation5], %s348
        %v351 = vld [vmem:[%s316] sm:$0xff]
        %v352 = vld [vmem:[%s316 + $0x8] sm:$0xff]
        %v353 = vld [vmem:[%s316 + $0x10] sm:$0xff]
        %v354 = vld [vmem:[%s316 + $0x18] sm:$0xff]
        %v355 = vld [vmem:[%s316 + $0x20] sm:$0xff]
        %v356 = vld [vmem:[%s316 + $0x28] sm:$0xff]
        %v357 = vld [vmem:[%s316 + $0x30] sm:$0xff]
        %v358 = vld [vmem:[%s316 + $0x38] sm:$0xf]
        %v359 = vpack.c.bf16 %v352, %v351
        %v360 = vpack.c.bf16 %v354, %v353
        %v361 = vpack.c.bf16 %v356, %v355
        %v362 = vpack.c.bf16 %v358, %v357
        %v363 = vld [vmem:[%s1] sm:$0xff]
        %v364 = vld [vmem:[%s1 + $0x8] sm:$0xf]
        %v365 = vld [vmem:[%s1 + $0xc] sm:$0xff]
        %v366 = vld [vmem:[%s1 + $0x14] sm:$0xf]
        %v367 = vld [vmem:[%s1 + $0x18] sm:$0xff]
        %v368 = vld [vmem:[%s1 + $0x20] sm:$0xf]
        %v369 = vld [vmem:[%s1 + $0x24] sm:$0xff]
        %v370 = vld [vmem:[%s1 + $0x2c] sm:$0xf]
        %v371 = vld [vmem:[%s1 + $0x30] sm:$0xff]
        %v372 = vld [vmem:[%s1 + $0x38] sm:$0xf]
        %v373 = vld [vmem:[%s1 + $0x3c] sm:$0xff]
        %v374 = vld [vmem:[%s1 + $0x44] sm:$0xf]
        %v375 = vld [vmem:[%s1 + $0x48] sm:$0xff]
        %v376 = vld [vmem:[%s1 + $0x50] sm:$0xf]
        %v377 = vld [vmem:[%s1 + $0x54] sm:$0xff]
        %v378 = vld [vmem:[%s1 + $0x5c] sm:$0xf]
        %v379 = vld [vmem:[%s316 + $0x40] sm:$0xff]
        %v380 = vld [vmem:[%s316 + $0x48] sm:$0xff]
        %v381 = vld [vmem:[%s316 + $0x50] sm:$0xff]
        %v382 = vld [vmem:[%s316 + $0x58] sm:$0xff]
        %v383 = vld [vmem:[%s316 + $0x60] sm:$0xff]
        %v384 = vld [vmem:[%s316 + $0x68] sm:$0xff]
        %v385 = vld [vmem:[%s316 + $0x70] sm:$0xff]
        %v386 = vld [vmem:[%s316 + $0x78] sm:$0xf]
        %v387 = vpack.c.bf16 %v380, %v379
        %v388 = vpack.c.bf16 %v382, %v381
        %v389 = vpack.c.bf16 %v384, %v383
        %v390 = vpack.c.bf16 %v386, %v385
        %s391 = scalar_lea.vmem %s1, 96
        %v392 = vld [vmem:[%s391] sm:$0xff]
        %v393 = vld [vmem:[%s391 + $0x8] sm:$0xf]
        %v394 = vld [vmem:[%s391 + $0xc] sm:$0xff]
        %v395 = vld [vmem:[%s391 + $0x14] sm:$0xf]
        %v396 = vld [vmem:[%s391 + $0x18] sm:$0xff]
        %v397 = vld [vmem:[%s391 + $0x20] sm:$0xf]
        %v398 = vld [vmem:[%s391 + $0x24] sm:$0xff]
        %v399 = vld [vmem:[%s391 + $0x2c] sm:$0xf]
        %v400 = vld [vmem:[%s391 + $0x30] sm:$0xff]
        %v401 = vld [vmem:[%s391 + $0x38] sm:$0xf]
        %v402 = vld [vmem:[%s391 + $0x3c] sm:$0xff]
        %v403 = vld [vmem:[%s391 + $0x44] sm:$0xf]
        %v404 = vld [vmem:[%s391 + $0x48] sm:$0xff]
        %v405 = vld [vmem:[%s391 + $0x50] sm:$0xf]
        %v406 = vld [vmem:[%s391 + $0x54] sm:$0xff]
        %v407 = vld [vmem:[%s391 + $0x5c] sm:$0xf]
        %v424 = vunpack.c.l.b16 %v392
        %v425 = vunpack.c.h.b16 %v392
        %v426 = vunpack.c.l.b16 %v393
        %v427 = vunpack.c.l.b16 %v394
        %v428 = vunpack.c.h.b16 %v394
        %v429 = vunpack.c.l.b16 %v395
        %v430 = vunpack.c.l.b16 %v396
        %v431 = vunpack.c.h.b16 %v396
        %v432 = vunpack.c.l.b16 %v397
        %v433 = vunpack.c.l.b16 %v398
        %v434 = vunpack.c.h.b16 %v398
        %v435 = vunpack.c.l.b16 %v399
        %v436 = vunpack.c.l.b16 %v400
        %v437 = vunpack.c.h.b16 %v400
        %v438 = vunpack.c.l.b16 %v401
        %v439 = vunpack.c.l.b16 %v402
        %v440 = vunpack.c.h.b16 %v402
        %v441 = vunpack.c.l.b16 %v403
        %v442 = vunpack.c.l.b16 %v404
        %v443 = vunpack.c.h.b16 %v404
        %v444 = vunpack.c.l.b16 %v405
        %v445 = vunpack.c.l.b16 %v406
        %v446 = vunpack.c.h.b16 %v406
        %v447 = vunpack.c.l.b16 %v407
        %v448 = vpack.c.b16 %v427, %v424
        %v449 = vpack.c.b16 %v428, %v425
        %v450 = vpack.c.b16 %v429, %v426
        %v451 = vpack.c.b16 %v433, %v430
        %v452 = vpack.c.b16 %v434, %v431
        %v453 = vpack.c.b16 %v435, %v432
        %v454 = vpack.c.b16 %v439, %v436
        %v455 = vpack.c.b16 %v440, %v437
        %v456 = vpack.c.b16 %v441, %v438
        %v457 = vpack.c.b16 %v445, %v442
        %v458 = vpack.c.b16 %v446, %v443
        %v459 = vpack.c.b16 %v447, %v444
        %vm472 = vcmask 523264
        %v474 = vsel %vm472, %v387, 0
        %v477 = vsel %vm472, %v388, 0
        %v480 = vsel %vm472, %v389, 0
        %v483 = vsel %vm472, %v390, 0
        %485 = vmatprep.subr.bf16.mxu0 %v449
        %486 = vmatpush1.bf16.msra.mxu0 %v448
        %487 = vmatprep.subr.bf16.mxu0 %v452
        %488 = vmatpush1.bf16.msra.mxu0 %v451
        %489 = vmatprep.subr.bf16.mxu0 %v455
        %490 = vmatpush1.bf16.msra.mxu0 %v454
        %491 = vmatprep.subr.bf16.mxu0 %v458
        %492 = vmatpush1.bf16.msra.mxu0 %v457
        %493 = vmatprep.subr.bf16.mxu0 0
        %494 = vmatpush1.bf16.msra.mxu0 0
        %495 = vmatprep.subr.bf16.mxu0 0
        %496 = vmatpush1.bf16.msra.mxu0 0
        %497 = vmatprep.subr.bf16.mxu0 0
        %498 = vmatpush1.bf16.msra.mxu0 0
        %499 = vmatprep.subr.bf16.mxu0 0
        %500 = vmatpush1.bf16.msra.mxu0 0
        %501 = vmatprep.subr.bf16.mxu0 0
        %502 = vmatpush1.bf16.msra.mxu0 0
        %503 = vmatprep.subr.bf16.mxu0 0
        %504 = vmatpush1.bf16.msra.mxu0 0
        %505 = vmatprep.subr.bf16.mxu0 0
        %506 = vmatpush1.bf16.msra.mxu0 0
        %507 = vmatprep.subr.bf16.mxu0 0
        %508 = vmatpush1.bf16.msra.mxu0 0
        %509 = vmatprep.subr.bf16.mxu0 0
        %510 = vmatpush1.bf16.msra.mxu0 0
        %511 = vmatprep.subr.bf16.mxu0 0
        %512 = vmatpush1.bf16.msra.mxu0 0
        %513 = vmatprep.subr.bf16.mxu0 0
        %514 = vmatpush1.bf16.msra.mxu0 0
        %515 = vmatprep.subr.bf16.mxu0 0
        %516 = vmatpush1.bf16.msra.mxu0 0
        %517 = vmatprep.mubr.bf16.mxu0 0
        %518 = vmatmul.mubr.bf16.gmra.mrb[0].mxu0 %v474
        %v519 = vpop.f32.mrb[0].mxu0
        %v520 = vadd.f32 0.0, %v519
        %v521 = vpop.f32.mrb[0].mxu0
        %v522 = vadd.f32 0.0, %v521
        %v523 = vpop.f32.mrb[0].mxu0
        %v524 = vadd.f32 0.0, %v523
        %v525 = vpop.f32.mrb[0].mxu0
        %v526 = vadd.f32 0.0, %v525
        %527 = vmatprep.mubr.bf16.mxu0 0
        %528 = vmatmul.mubr.bf16.gmra.mrb[0].mxu0 %v477
        %v529 = vpop.f32.mrb[0].mxu0
        %v530 = vadd.f32 0.0, %v529
        %v531 = vpop.f32.mrb[0].mxu0
        %v532 = vadd.f32 0.0, %v531
        %v533 = vpop.f32.mrb[0].mxu0
        %v534 = vadd.f32 0.0, %v533
        %v535 = vpop.f32.mrb[0].mxu0
        %v536 = vadd.f32 0.0, %v535
        %537 = vmatprep.mubr.bf16.mxu0 0
        %538 = vmatmul.mubr.bf16.gmra.mrb[0].mxu0 %v480
        %v539 = vpop.f32.mrb[0].mxu0
        %v540 = vadd.f32 0.0, %v539
        %v541 = vpop.f32.mrb[0].mxu0
        %v542 = vadd.f32 0.0, %v541
        %v543 = vpop.f32.mrb[0].mxu0
        %v544 = vadd.f32 0.0, %v543
        %v545 = vpop.f32.mrb[0].mxu0
        %v546 = vadd.f32 0.0, %v545
        %547 = vmatprep.mubr.bf16.mxu0 0
        %548 = vmatmul.mubr.bf16.gmra.mrb[0].mxu0 %v483
        %v549 = vpop.f32.mrb[0].mxu0
        %v550 = vadd.f32 0.0, %v549
        %v551 = vpop.f32.mrb[0].mxu0
        %v552 = vadd.f32 0.0, %v551
        %v553 = vpop.f32.mrb[0].mxu0
        %v554 = vadd.f32 0.0, %v553
        %v555 = vpop.f32.mrb[0].mxu0
        %v556 = vadd.f32 0.0, %v555
        %557 = vdwg.mxu0
        %558 = vmatprep.subr.bf16.mxu0 0
        %559 = vmatpush1.bf16.msra.mxu0 %v450
        %560 = vmatprep.subr.bf16.mxu0 0
        %561 = vmatpush1.bf16.msra.mxu0 %v453
        %562 = vmatprep.subr.bf16.mxu0 0
        %563 = vmatpush1.bf16.msra.mxu0 %v456
        %564 = vmatprep.subr.bf16.mxu0 0
        %565 = vmatpush1.bf16.msra.mxu0 %v459
        %566 = vmatprep.subr.bf16.mxu0 0
        %567 = vmatpush1.bf16.msra.mxu0 0
        %568 = vmatprep.subr.bf16.mxu0 0
        %569 = vmatpush1.bf16.msra.mxu0 0
        %570 = vmatprep.subr.bf16.mxu0 0
        %571 = vmatpush1.bf16.msra.mxu0 0
        %572 = vmatprep.subr.bf16.mxu0 0
        %573 = vmatpush1.bf16.msra.mxu0 0
        %574 = vmatprep.subr.bf16.mxu0 0
        %575 = vmatpush1.bf16.msra.mxu0 0
        %576 = vmatprep.subr.bf16.mxu0 0
        %577 = vmatpush1.bf16.msra.mxu0 0
        %578 = vmatprep.subr.bf16.mxu0 0
        %579 = vmatpush1.bf16.msra.mxu0 0
        %580 = vmatprep.subr.bf16.mxu0 0
        %581 = vmatpush1.bf16.msra.mxu0 0
        %582 = vmatprep.subr.bf16.mxu0 0
        %583 = vmatpush1.bf16.msra.mxu0 0
        %584 = vmatprep.subr.bf16.mxu0 0
        %585 = vmatpush1.bf16.msra.mxu0 0
        %586 = vmatprep.subr.bf16.mxu0 0
        %587 = vmatpush1.bf16.msra.mxu0 0
        %588 = vmatprep.subr.bf16.mxu0 0
        %589 = vmatpush1.bf16.msra.mxu0 0
        %590 = vmatprep.mubr.bf16.mxu0 0
        %591 = vmatmul.mubr.bf16.gmra.mrb[0].mxu0 %v474
        %v592 = vpop.f32.mrb[0].mxu0
        %v593 = vadd.f32 0.0, %v592
        %v594 = vpop.f32.mrb[0].mxu0
        %v595 = vpop.f32.mrb[0].mxu0
        %v596 = vadd.f32 0.0, %v595
        %v597 = vpop.f32.mrb[0].mxu0
        %598 = vmatprep.mubr.bf16.mxu0 0
        %599 = vmatmul.mubr.bf16.gmra.mrb[0].mxu0 %v477
        %v600 = vpop.f32.mrb[0].mxu0
        %v601 = vadd.f32 0.0, %v600
        %v602 = vpop.f32.mrb[0].mxu0
        %v603 = vpop.f32.mrb[0].mxu0
        %v604 = vadd.f32 0.0, %v603
        %v605 = vpop.f32.mrb[0].mxu0
        %606 = vmatprep.mubr.bf16.mxu0 0
        %607 = vmatmul.mubr.bf16.gmra.mrb[0].mxu0 %v480
        %v608 = vpop.f32.mrb[0].mxu0
        %v609 = vadd.f32 0.0, %v608
        %v610 = vpop.f32.mrb[0].mxu0
        %v611 = vpop.f32.mrb[0].mxu0
        %v612 = vadd.f32 0.0, %v611
        %v613 = vpop.f32.mrb[0].mxu0
        %614 = vmatprep.mubr.bf16.mxu0 0
        %615 = vmatmul.mubr.bf16.gmra.mrb[0].mxu0 %v483
        %v616 = vpop.f32.mrb[0].mxu0
        %v617 = vadd.f32 0.0, %v616
        %v618 = vpop.f32.mrb[0].mxu0
        %v619 = vpop.f32.mrb[0].mxu0
        %v620 = vadd.f32 0.0, %v619
        %v621 = vpop.f32.mrb[0].mxu0
        %622 = vdwg.mxu0
        %v639 = vunpack.c.l.b16 %v363
        %v640 = vunpack.c.h.b16 %v363
        %v641 = vunpack.c.l.b16 %v364
        %v642 = vunpack.c.l.b16 %v365
        %v643 = vunpack.c.h.b16 %v365
        %v644 = vunpack.c.l.b16 %v366
        %v645 = vunpack.c.l.b16 %v367
        %v646 = vunpack.c.h.b16 %v367
        %v647 = vunpack.c.l.b16 %v368
        %v648 = vunpack.c.l.b16 %v369
        %v649 = vunpack.c.h.b16 %v369
        %v650 = vunpack.c.l.b16 %v370
        %v651 = vunpack.c.l.b16 %v371
        %v652 = vunpack.c.h.b16 %v371
        %v653 = vunpack.c.l.b16 %v372
        %v654 = vunpack.c.l.b16 %v373
        %v655 = vunpack.c.h.b16 %v373
        %v656 = vunpack.c.l.b16 %v374
        %v657 = vunpack.c.l.b16 %v375
        %v658 = vunpack.c.h.b16 %v375
        %v659 = vunpack.c.l.b16 %v376
        %v660 = vunpack.c.l.b16 %v377
        %v661 = vunpack.c.h.b16 %v377
        %v662 = vunpack.c.l.b16 %v378
        %v663 = vpack.c.b16 %v642, %v639
        %v664 = vpack.c.b16 %v643, %v640
        %v665 = vpack.c.b16 %v644, %v641
        %v666 = vpack.c.b16 %v648, %v645
        %v667 = vpack.c.b16 %v649, %v646
        %v668 = vpack.c.b16 %v650, %v647
        %v669 = vpack.c.b16 %v654, %v651
        %v670 = vpack.c.b16 %v655, %v652
        %v671 = vpack.c.b16 %v656, %v653
        %v672 = vpack.c.b16 %v660, %v657
        %v673 = vpack.c.b16 %v661, %v658
        %v674 = vpack.c.b16 %v662, %v659
        %v688 = vsel %vm472, %v359, 0
        %v691 = vsel %vm472, %v360, 0
        %v694 = vsel %vm472, %v361, 0
        %v697 = vsel %vm472, %v362, 0
        %699 = vmatprep.subr.bf16.mxu0 %v664
        %700 = vmatpush1.bf16.msra.mxu0 %v663
        %701 = vmatprep.subr.bf16.mxu0 %v667
        %702 = vmatpush1.bf16.msra.mxu0 %v666
        %703 = vmatprep.subr.bf16.mxu0 %v670
        %704 = vmatpush1.bf16.msra.mxu0 %v669
        %705 = vmatprep.subr.bf16.mxu0 %v673
        %706 = vmatpush1.bf16.msra.mxu0 %v672
        %707 = vmatprep.subr.bf16.mxu0 0
        %708 = vmatpush1.bf16.msra.mxu0 0
        %709 = vmatprep.subr.bf16.mxu0 0
        %710 = vmatpush1.bf16.msra.mxu0 0
        %711 = vmatprep.subr.bf16.mxu0 0
        %712 = vmatpush1.bf16.msra.mxu0 0
        %713 = vmatprep.subr.bf16.mxu0 0
        %714 = vmatpush1.bf16.msra.mxu0 0
        %715 = vmatprep.subr.bf16.mxu0 0
        %716 = vmatpush1.bf16.msra.mxu0 0
        %717 = vmatprep.subr.bf16.mxu0 0
        %718 = vmatpush1.bf16.msra.mxu0 0
        %719 = vmatprep.subr.bf16.mxu0 0
        %720 = vmatpush1.bf16.msra.mxu0 0
        %721 = vmatprep.subr.bf16.mxu0 0
        %722 = vmatpush1.bf16.msra.mxu0 0
        %723 = vmatprep.subr.bf16.mxu0 0
        %724 = vmatpush1.bf16.msra.mxu0 0
        %725 = vmatprep.subr.bf16.mxu0 0
        %726 = vmatpush1.bf16.msra.mxu0 0
        %727 = vmatprep.subr.bf16.mxu0 0
        %728 = vmatpush1.bf16.msra.mxu0 0
        %729 = vmatprep.subr.bf16.mxu0 0
        %730 = vmatpush1.bf16.msra.mxu0 0
        %731 = vmatprep.mubr.bf16.mxu0 0
        %732 = vmatmul.mubr.bf16.gmra.mrb[0].mxu0 %v688
        %v733 = vpop.f32.mrb[0].mxu0
        %v734 = vadd.f32 %v520, %v733
        %v735 = vpop.f32.mrb[0].mxu0
        %v736 = vadd.f32 %v522, %v735
        %v737 = vpop.f32.mrb[0].mxu0
        %v738 = vadd.f32 %v524, %v737
        %v739 = vpop.f32.mrb[0].mxu0
        %v740 = vadd.f32 %v526, %v739
        %741 = vmatprep.mubr.bf16.mxu0 0
        %742 = vmatmul.mubr.bf16.gmra.mrb[0].mxu0 %v691
        %v743 = vpop.f32.mrb[0].mxu0
        %v744 = vadd.f32 %v530, %v743
        %v745 = vpop.f32.mrb[0].mxu0
        %v746 = vadd.f32 %v532, %v745
        %v747 = vpop.f32.mrb[0].mxu0
        %v748 = vadd.f32 %v534, %v747
        %v749 = vpop.f32.mrb[0].mxu0
        %v750 = vadd.f32 %v536, %v749
        %751 = vmatprep.mubr.bf16.mxu0 0
        %752 = vmatmul.mubr.bf16.gmra.mrb[0].mxu0 %v694
        %v753 = vpop.f32.mrb[0].mxu0
        %v754 = vadd.f32 %v540, %v753
        %v755 = vpop.f32.mrb[0].mxu0
        %v756 = vadd.f32 %v542, %v755
        %v757 = vpop.f32.mrb[0].mxu0
        %v758 = vadd.f32 %v544, %v757
        %v759 = vpop.f32.mrb[0].mxu0
        %v760 = vadd.f32 %v546, %v759
        %761 = vmatprep.mubr.bf16.mxu0 0
        %762 = vmatmul.mubr.bf16.gmra.mrb[0].mxu0 %v697
        %v763 = vpop.f32.mrb[0].mxu0
        %v764 = vadd.f32 %v550, %v763
        %v765 = vpop.f32.mrb[0].mxu0
        %v766 = vadd.f32 %v552, %v765
        %v767 = vpop.f32.mrb[0].mxu0
        %v768 = vadd.f32 %v554, %v767
        %v769 = vpop.f32.mrb[0].mxu0
        %v770 = vadd.f32 %v556, %v769
        %771 = vdwg.mxu0
        %772 = vmatprep.subr.bf16.mxu0 0
        %773 = vmatpush1.bf16.msra.mxu0 %v665
        %774 = vmatprep.subr.bf16.mxu0 0
        %775 = vmatpush1.bf16.msra.mxu0 %v668
        %776 = vmatprep.subr.bf16.mxu0 0
        %777 = vmatpush1.bf16.msra.mxu0 %v671
        %778 = vmatprep.subr.bf16.mxu0 0
        %779 = vmatpush1.bf16.msra.mxu0 %v674
        %780 = vmatprep.subr.bf16.mxu0 0
        %781 = vmatpush1.bf16.msra.mxu0 0
        %782 = vmatprep.subr.bf16.mxu0 0
        %783 = vmatpush1.bf16.msra.mxu0 0
        %784 = vmatprep.subr.bf16.mxu0 0
        %785 = vmatpush1.bf16.msra.mxu0 0
        %786 = vmatprep.subr.bf16.mxu0 0
        %787 = vmatpush1.bf16.msra.mxu0 0
        %788 = vmatprep.subr.bf16.mxu0 0
        %789 = vmatpush1.bf16.msra.mxu0 0
        %790 = vmatprep.subr.bf16.mxu0 0
        %791 = vmatpush1.bf16.msra.mxu0 0
        %792 = vmatprep.subr.bf16.mxu0 0
        %793 = vmatpush1.bf16.msra.mxu0 0
        %794 = vmatprep.subr.bf16.mxu0 0
        %795 = vmatpush1.bf16.msra.mxu0 0
        %796 = vmatprep.subr.bf16.mxu0 0
        %797 = vmatpush1.bf16.msra.mxu0 0
        %798 = vmatprep.subr.bf16.mxu0 0
        %799 = vmatpush1.bf16.msra.mxu0 0
        %800 = vmatprep.subr.bf16.mxu0 0
        %801 = vmatpush1.bf16.msra.mxu0 0
        %802 = vmatprep.subr.bf16.mxu0 0
        %803 = vmatpush1.bf16.msra.mxu0 0
        %804 = vmatprep.mubr.bf16.mxu0 0
        %805 = vmatmul.mubr.bf16.gmra.mrb[0].mxu0 %v688
        %v806 = vpop.f32.mrb[0].mxu0
        %v807 = vadd.f32 %v593, %v806
        %v808 = vpop.f32.mrb[0].mxu0
        %v809 = vpop.f32.mrb[0].mxu0
        %v810 = vadd.f32 %v596, %v809
        %v811 = vpop.f32.mrb[0].mxu0
        %812 = vmatprep.mubr.bf16.mxu0 0
        %813 = vmatmul.mubr.bf16.gmra.mrb[0].mxu0 %v691
        %v814 = vpop.f32.mrb[0].mxu0
        %v815 = vadd.f32 %v601, %v814
        %v816 = vpop.f32.mrb[0].mxu0
        %v817 = vpop.f32.mrb[0].mxu0
        %v818 = vadd.f32 %v604, %v817
        %v819 = vpop.f32.mrb[0].mxu0
        %820 = vmatprep.mubr.bf16.mxu0 0
        %821 = vmatmul.mubr.bf16.gmra.mrb[0].mxu0 %v694
        %v822 = vpop.f32.mrb[0].mxu0
        %v823 = vadd.f32 %v609, %v822
        %v824 = vpop.f32.mrb[0].mxu0
        %v825 = vpop.f32.mrb[0].mxu0
        %v826 = vadd.f32 %v612, %v825
        %v827 = vpop.f32.mrb[0].mxu0
        %828 = vmatprep.mubr.bf16.mxu0 0
        %829 = vmatmul.mubr.bf16.gmra.mrb[0].mxu0 %v697
        %v830 = vpop.f32.mrb[0].mxu0
        %v831 = vadd.f32 %v617, %v830
        %v832 = vpop.f32.mrb[0].mxu0
        %v833 = vpop.f32.mrb[0].mxu0
        %v834 = vadd.f32 %v620, %v833
        %v835 = vpop.f32.mrb[0].mxu0
        %836 = vdwg.mxu0
        %v837 = vld [vmem:[%s316 + $0x80] sm:$0xff]
        %v838 = vld [vmem:[%s316 + $0x88] sm:$0xff]
        %v839 = vld [vmem:[%s316 + $0x90] sm:$0xff]
        %v840 = vld [vmem:[%s316 + $0x98] sm:$0xff]
        %v841 = vld [vmem:[%s316 + $0xa0] sm:$0xff]
        %v842 = vld [vmem:[%s316 + $0xa8] sm:$0xff]
        %v843 = vld [vmem:[%s316 + $0xb0] sm:$0xff]
        %v844 = vld [vmem:[%s316 + $0xb8] sm:$0xf]
        %v845 = vpack.c.bf16 %v838, %v837
        %v846 = vpack.c.bf16 %v840, %v839
        %v847 = vpack.c.bf16 %v842, %v841
        %v848 = vpack.c.bf16 %v844, %v843
        %s849 = scalar_lea.vmem %s1, 192
        %v850 = vld [vmem:[%s849] sm:$0xff]
        %v851 = vld [vmem:[%s849 + $0x8] sm:$0xf]
        %v852 = vld [vmem:[%s849 + $0xc] sm:$0xff]
        %v853 = vld [vmem:[%s849 + $0x14] sm:$0xf]
        %v854 = vld [vmem:[%s849 + $0x18] sm:$0xff]
        %v855 = vld [vmem:[%s849 + $0x20] sm:$0xf]
        %v856 = vld [vmem:[%s849 + $0x24] sm:$0xff]
        %v857 = vld [vmem:[%s849 + $0x2c] sm:$0xf]
        %v858 = vld [vmem:[%s849 + $0x30] sm:$0xff]
        %v859 = vld [vmem:[%s849 + $0x38] sm:$0xf]
        %v860 = vld [vmem:[%s849 + $0x3c] sm:$0xff]
        %v861 = vld [vmem:[%s849 + $0x44] sm:$0xf]
        %v862 = vld [vmem:[%s849 + $0x48] sm:$0xff]
        %v863 = vld [vmem:[%s849 + $0x50] sm:$0xf]
        %v864 = vld [vmem:[%s849 + $0x54] sm:$0xff]
        %v865 = vld [vmem:[%s849 + $0x5c] sm:$0xf]
        %v882 = vunpack.c.l.b16 %v850
        %v883 = vunpack.c.h.b16 %v850
        %v884 = vunpack.c.l.b16 %v851
        %v885 = vunpack.c.l.b16 %v852
        %v886 = vunpack.c.h.b16 %v852
        %v887 = vunpack.c.l.b16 %v853
        %v888 = vunpack.c.l.b16 %v854
        %v889 = vunpack.c.h.b16 %v854
        %v890 = vunpack.c.l.b16 %v855
        %v891 = vunpack.c.l.b16 %v856
        %v892 = vunpack.c.h.b16 %v856
        %v893 = vunpack.c.l.b16 %v857
        %v894 = vunpack.c.l.b16 %v858
        %v895 = vunpack.c.h.b16 %v858
        %v896 = vunpack.c.l.b16 %v859
        %v897 = vunpack.c.l.b16 %v860
        %v898 = vunpack.c.h.b16 %v860
        %v899 = vunpack.c.l.b16 %v861
        %v900 = vunpack.c.l.b16 %v862
        %v901 = vunpack.c.h.b16 %v862
        %v902 = vunpack.c.l.b16 %v863
        %v903 = vunpack.c.l.b16 %v864
        %v904 = vunpack.c.h.b16 %v864
        %v905 = vunpack.c.l.b16 %v865
        %v906 = vpack.c.b16 %v885, %v882
        %v907 = vpack.c.b16 %v886, %v883
        %v908 = vpack.c.b16 %v887, %v884
        %v909 = vpack.c.b16 %v891, %v888
        %v910 = vpack.c.b16 %v892, %v889
        %v911 = vpack.c.b16 %v893, %v890
        %v912 = vpack.c.b16 %v897, %v894
        %v913 = vpack.c.b16 %v898, %v895
        %v914 = vpack.c.b16 %v899, %v896
        %v915 = vpack.c.b16 %v903, %v900
        %v916 = vpack.c.b16 %v904, %v901
        %v917 = vpack.c.b16 %v905, %v902
        %v931 = vsel %vm472, %v845, 0
        %v934 = vsel %vm472, %v846, 0
        %v937 = vsel %vm472, %v847, 0
        %v940 = vsel %vm472, %v848, 0
        %942 = vmatprep.subr.bf16.mxu0 %v907
        %943 = vmatpush1.bf16.msra.mxu0 %v906
        %944 = vmatprep.subr.bf16.mxu0 %v910
        %945 = vmatpush1.bf16.msra.mxu0 %v909
        %946 = vmatprep.subr.bf16.mxu0 %v913
        %947 = vmatpush1.bf16.msra.mxu0 %v912
        %948 = vmatprep.subr.bf16.mxu0 %v916
        %949 = vmatpush1.bf16.msra.mxu0 %v915
        %950 = vmatprep.subr.bf16.mxu0 0
        %951 = vmatpush1.bf16.msra.mxu0 0
        %952 = vmatprep.subr.bf16.mxu0 0
        %953 = vmatpush1.bf16.msra.mxu0 0
        %954 = vmatprep.subr.bf16.mxu0 0
        %955 = vmatpush1.bf16.msra.mxu0 0
        %956 = vmatprep.subr.bf16.mxu0 0
        %957 = vmatpush1.bf16.msra.mxu0 0
        %958 = vmatprep.subr.bf16.mxu0 0
        %959 = vmatpush1.bf16.msra.mxu0 0
        %960 = vmatprep.subr.bf16.mxu0 0
        %961 = vmatpush1.bf16.msra.mxu0 0
        %962 = vmatprep.subr.bf16.mxu0 0
        %963 = vmatpush1.bf16.msra.mxu0 0
        %964 = vmatprep.subr.bf16.mxu0 0
        %965 = vmatpush1.bf16.msra.mxu0 0
        %966 = vmatprep.subr.bf16.mxu0 0
        %967 = vmatpush1.bf16.msra.mxu0 0
        %968 = vmatprep.subr.bf16.mxu0 0
        %969 = vmatpush1.bf16.msra.mxu0 0
        %970 = vmatprep.subr.bf16.mxu0 0
        %971 = vmatpush1.bf16.msra.mxu0 0
        %972 = vmatprep.subr.bf16.mxu0 0
        %973 = vmatpush1.bf16.msra.mxu0 0
        %974 = vmatprep.mubr.bf16.mxu0 0
        %975 = vmatmul.mubr.bf16.gmra.mrb[0].mxu0 %v931
        %v976 = vpop.f32.mrb[0].mxu0
        %v977 = vadd.f32 0.0, %v976
        %v978 = vpop.f32.mrb[0].mxu0
        %v979 = vadd.f32 0.0, %v978
        %v980 = vpop.f32.mrb[0].mxu0
        %v981 = vadd.f32 0.0, %v980
        %v982 = vpop.f32.mrb[0].mxu0
        %v983 = vadd.f32 0.0, %v982
        %984 = vmatprep.mubr.bf16.mxu0 0
        %985 = vmatmul.mubr.bf16.gmra.mrb[0].mxu0 %v934
        %v986 = vpop.f32.mrb[0].mxu0
        %v987 = vadd.f32 0.0, %v986
        %v988 = vpop.f32.mrb[0].mxu0
        %v989 = vadd.f32 0.0, %v988
        %v990 = vpop.f32.mrb[0].mxu0
        %v991 = vadd.f32 0.0, %v990
        %v992 = vpop.f32.mrb[0].mxu0
        %v993 = vadd.f32 0.0, %v992
        %994 = vmatprep.mubr.bf16.mxu0 0
        %995 = vmatmul.mubr.bf16.gmra.mrb[0].mxu0 %v937
        %v996 = vpop.f32.mrb[0].mxu0
        %v997 = vadd.f32 0.0, %v996
        %v998 = vpop.f32.mrb[0].mxu0
        %v999 = vadd.f32 0.0, %v998
        %v1000 = vpop.f32.mrb[0].mxu0
        %v1001 = vadd.f32 0.0, %v1000
        %v1002 = vpop.f32.mrb[0].mxu0
        %v1003 = vadd.f32 0.0, %v1002
        %1004 = vmatprep.mubr.bf16.mxu0 0
        %1005 = vmatmul.mubr.bf16.gmra.mrb[0].mxu0 %v940
        %v1006 = vpop.f32.mrb[0].mxu0
        %v1007 = vadd.f32 0.0, %v1006
        %v1008 = vpop.f32.mrb[0].mxu0
        %v1009 = vadd.f32 0.0, %v1008
        %v1010 = vpop.f32.mrb[0].mxu0
        %v1011 = vadd.f32 0.0, %v1010
        %v1012 = vpop.f32.mrb[0].mxu0
        %v1013 = vadd.f32 0.0, %v1012
        %1014 = vdwg.mxu0
        %1015 = vmatprep.subr.bf16.mxu0 0
        %1016 = vmatpush1.bf16.msra.mxu0 %v908
        %1017 = vmatprep.subr.bf16.mxu0 0
        %1018 = vmatpush1.bf16.msra.mxu0 %v911
        %1019 = vmatprep.subr.bf16.mxu0 0
        %1020 = vmatpush1.bf16.msra.mxu0 %v914
        %1021 = vmatprep.subr.bf16.mxu0 0
        %1022 = vmatpush1.bf16.msra.mxu0 %v917
        %1023 = vmatprep.subr.bf16.mxu0 0
        %1024 = vmatpush1.bf16.msra.mxu0 0
        %1025 = vmatprep.subr.bf16.mxu0 0
        %1026 = vmatpush1.bf16.msra.mxu0 0
        %1027 = vmatprep.subr.bf16.mxu0 0
        %1028 = vmatpush1.bf16.msra.mxu0 0
        %1029 = vmatprep.subr.bf16.mxu0 0
        %1030 = vmatpush1.bf16.msra.mxu0 0
        %1031 = vmatprep.subr.bf16.mxu0 0
        %1032 = vmatpush1.bf16.msra.mxu0 0
        %1033 = vmatprep.subr.bf16.mxu0 0
        %1034 = vmatpush1.bf16.msra.mxu0 0
        %1035 = vmatprep.subr.bf16.mxu0 0
        %1036 = vmatpush1.bf16.msra.mxu0 0
        %1037 = vmatprep.subr.bf16.mxu0 0
        %1038 = vmatpush1.bf16.msra.mxu0 0
        %1039 = vmatprep.subr.bf16.mxu0 0
        %1040 = vmatpush1.bf16.msra.mxu0 0
        %1041 = vmatprep.subr.bf16.mxu0 0
        %1042 = vmatpush1.bf16.msra.mxu0 0
        %1043 = vmatprep.subr.bf16.mxu0 0
        %1044 = vmatpush1.bf16.msra.mxu0 0
        %1045 = vmatprep.subr.bf16.mxu0 0
        %1046 = vmatpush1.bf16.msra.mxu0 0
        %1047 = vmatprep.mubr.bf16.mxu0 0
        %1048 = vmatmul.mubr.bf16.gmra.mrb[0].mxu0 %v931
        %v1049 = vpop.f32.mrb[0].mxu0
        %v1050 = vadd.f32 0.0, %v1049
        %v1051 = vpop.f32.mrb[0].mxu0
        %v1052 = vpop.f32.mrb[0].mxu0
        %v1053 = vadd.f32 0.0, %v1052
        %v1054 = vpop.f32.mrb[0].mxu0
        %1055 = vmatprep.mubr.bf16.mxu0 0
        %1056 = vmatmul.mubr.bf16.gmra.mrb[0].mxu0 %v934
        %v1057 = vpop.f32.mrb[0].mxu0
        %v1058 = vadd.f32 0.0, %v1057
        %v1059 = vpop.f32.mrb[0].mxu0
        %v1060 = vpop.f32.mrb[0].mxu0
        %v1061 = vadd.f32 0.0, %v1060
        %v1062 = vpop.f32.mrb[0].mxu0
        %1063 = vmatprep.mubr.bf16.mxu0 0
        %1064 = vmatmul.mubr.bf16.gmra.mrb[0].mxu0 %v937
        %v1065 = vpop.f32.mrb[0].mxu0
        %v1066 = vadd.f32 0.0, %v1065
        %v1067 = vpop.f32.mrb[0].mxu0
        %v1068 = vpop.f32.mrb[0].mxu0
        %v1069 = vadd.f32 0.0, %v1068
        %v1070 = vpop.f32.mrb[0].mxu0
        %1071 = vmatprep.mubr.bf16.mxu0 0
        %1072 = vmatmul.mubr.bf16.gmra.mrb[0].mxu0 %v940
        %v1073 = vpop.f32.mrb[0].mxu0
        %v1074 = vadd.f32 0.0, %v1073
        %v1075 = vpop.f32.mrb[0].mxu0
        %v1076 = vpop.f32.mrb[0].mxu0
        %v1077 = vadd.f32 0.0, %v1076
        %v1078 = vpop.f32.mrb[0].mxu0
        %1079 = vdwg.mxu0
        %v1080 = vadd.f32 %v734, %v977
        %v1081 = vadd.f32 %v736, %v979
        %v1082 = vadd.f32 %v807, %v1050
        %v1083 = vadd.f32 %v738, %v981
        %v1084 = vadd.f32 %v740, %v983
        %v1085 = vadd.f32 %v810, %v1053
        %v1086 = vadd.f32 %v744, %v987
        %v1087 = vadd.f32 %v746, %v989
        %v1088 = vadd.f32 %v815, %v1058
        %v1089 = vadd.f32 %v748, %v991
        %v1090 = vadd.f32 %v750, %v993
        %v1091 = vadd.f32 %v818, %v1061
        %v1092 = vadd.f32 %v754, %v997
        %v1093 = vadd.f32 %v756, %v999
        %v1094 = vadd.f32 %v823, %v1066
        %v1095 = vadd.f32 %v758, %v1001
        %v1096 = vadd.f32 %v760, %v1003
        %v1097 = vadd.f32 %v826, %v1069
        %v1098 = vadd.f32 %v764, %v1007
        %v1099 = vadd.f32 %v766, %v1009
        %v1100 = vadd.f32 %v831, %v1074
        %v1101 = vadd.f32 %v768, %v1011
        %v1102 = vadd.f32 %v770, %v1013
        %v1103 = vadd.f32 %v834, %v1077
        %v1104 = vld [vmem:[%s316 + $0x1] sm:$0xff]
        %v1105 = vld [vmem:[%s316 + $0x9] sm:$0xff]
        %v1106 = vld [vmem:[%s316 + $0x11] sm:$0xff]
        %v1107 = vld [vmem:[%s316 + $0x19] sm:$0xff]
        %v1108 = vld [vmem:[%s316 + $0x21] sm:$0xff]
        %v1109 = vld [vmem:[%s316 + $0x29] sm:$0xff]
        %v1110 = vld [vmem:[%s316 + $0x31] sm:$0xff]
        %v1111 = vld [vmem:[%s316 + $0x39] sm:$0xf]
        %v1112 = vpack.c.bf16 %v1105, %v1104
        %v1113 = vpack.c.bf16 %v1107, %v1106
        %v1114 = vpack.c.bf16 %v1109, %v1108
        %v1115 = vpack.c.bf16 %v1111, %v1110
        %s1116 = scalar_lea.vmem %s1, 288
        %v1117 = vld [vmem:[%s1116] sm:$0xff]
        %v1118 = vld [vmem:[%s1116 + $0x8] sm:$0xf]
        %v1119 = vld [vmem:[%s1116 + $0xc] sm:$0xff]
        %v1120 = vld [vmem:[%s1116 + $0x14] sm:$0xf]
        %v1121 = vld [vmem:[%s1116 + $0x18] sm:$0xff]
        %v1122 = vld [vmem:[%s1116 + $0x20] sm:$0xf]
        %v1123 = vld [vmem:[%s1116 + $0x24] sm:$0xff]
        %v1124 = vld [vmem:[%s1116 + $0x2c] sm:$0xf]
        %v1125 = vld [vmem:[%s1116 + $0x30] sm:$0xff]
        %v1126 = vld [vmem:[%s1116 + $0x38] sm:$0xf]
        %v1127 = vld [vmem:[%s1116 + $0x3c] sm:$0xff]
        %v1128 = vld [vmem:[%s1116 + $0x44] sm:$0xf]
        %v1129 = vld [vmem:[%s1116 + $0x48] sm:$0xff]
        %v1130 = vld [vmem:[%s1116 + $0x50] sm:$0xf]
        %v1131 = vld [vmem:[%s1116 + $0x54] sm:$0xff]
        %v1132 = vld [vmem:[%s1116 + $0x5c] sm:$0xf]
        %v1149 = vunpack.c.l.b16 %v1117
        %v1150 = vunpack.c.h.b16 %v1117
        %v1151 = vunpack.c.l.b16 %v1118
        %v1152 = vunpack.c.l.b16 %v1119
        %v1153 = vunpack.c.h.b16 %v1119
        %v1154 = vunpack.c.l.b16 %v1120
        %v1155 = vunpack.c.l.b16 %v1121
        %v1156 = vunpack.c.h.b16 %v1121
        %v1157 = vunpack.c.l.b16 %v1122
        %v1158 = vunpack.c.l.b16 %v1123
        %v1159 = vunpack.c.h.b16 %v1123
        %v1160 = vunpack.c.l.b16 %v1124
        %v1161 = vunpack.c.l.b16 %v1125
        %v1162 = vunpack.c.h.b16 %v1125
        %v1163 = vunpack.c.l.b16 %v1126
        %v1164 = vunpack.c.l.b16 %v1127
        %v1165 = vunpack.c.h.b16 %v1127
        %v1166 = vunpack.c.l.b16 %v1128
        %v1167 = vunpack.c.l.b16 %v1129
        %v1168 = vunpack.c.h.b16 %v1129
        %v1169 = vunpack.c.l.b16 %v1130
        %v1170 = vunpack.c.l.b16 %v1131
        %v1171 = vunpack.c.h.b16 %v1131
        %v1172 = vunpack.c.l.b16 %v1132
        %v1173 = vpack.c.b16 %v1152, %v1149
        %v1174 = vpack.c.b16 %v1153, %v1150
        %v1175 = vpack.c.b16 %v1154, %v1151
        %v1176 = vpack.c.b16 %v1158, %v1155
        %v1177 = vpack.c.b16 %v1159, %v1156
        %v1178 = vpack.c.b16 %v1160, %v1157
        %v1179 = vpack.c.b16 %v1164, %v1161
        %v1180 = vpack.c.b16 %v1165, %v1162
        %v1181 = vpack.c.b16 %v1166, %v1163
        %v1182 = vpack.c.b16 %v1170, %v1167
        %v1183 = vpack.c.b16 %v1171, %v1168
        %v1184 = vpack.c.b16 %v1172, %v1169
        %v1198 = vsel %vm472, %v1112, 0
        %v1201 = vsel %vm472, %v1113, 0
        %v1204 = vsel %vm472, %v1114, 0
        %v1207 = vsel %vm472, %v1115, 0
        %1209 = vmatprep.subr.bf16.mxu0 %v1174
        %1210 = vmatpush1.bf16.msra.mxu0 %v1173
        %1211 = vmatprep.subr.bf16.mxu0 %v1177
        %1212 = vmatpush1.bf16.msra.mxu0 %v1176
        %1213 = vmatprep.subr.bf16.mxu0 %v1180
        %1214 = vmatpush1.bf16.msra.mxu0 %v1179
        %1215 = vmatprep.subr.bf16.mxu0 %v1183
        %1216 = vmatpush1.bf16.msra.mxu0 %v1182
        %1217 = vmatprep.subr.bf16.mxu0 0
        %1218 = vmatpush1.bf16.msra.mxu0 0
        %1219 = vmatprep.subr.bf16.mxu0 0
        %1220 = vmatpush1.bf16.msra.mxu0 0
        %1221 = vmatprep.subr.bf16.mxu0 0
        %1222 = vmatpush1.bf16.msra.mxu0 0
        %1223 = vmatprep.subr.bf16.mxu0 0
        %1224 = vmatpush1.bf16.msra.mxu0 0
        %1225 = vmatprep.subr.bf16.mxu0 0
        %1226 = vmatpush1.bf16.msra.mxu0 0
        %1227 = vmatprep.subr.bf16.mxu0 0
        %1228 = vmatpush1.bf16.msra.mxu0 0
        %1229 = vmatprep.subr.bf16.mxu0 0
        %1230 = vmatpush1.bf16.msra.mxu0 0
        %1231 = vmatprep.subr.bf16.mxu0 0
        %1232 = vmatpush1.bf16.msra.mxu0 0
        %1233 = vmatprep.subr.bf16.mxu0 0
        %1234 = vmatpush1.bf16.msra.mxu0 0
        %1235 = vmatprep.subr.bf16.mxu0 0
        %1236 = vmatpush1.bf16.msra.mxu0 0
        %1237 = vmatprep.subr.bf16.mxu0 0
        %1238 = vmatpush1.bf16.msra.mxu0 0
        %1239 = vmatprep.subr.bf16.mxu0 0
        %1240 = vmatpush1.bf16.msra.mxu0 0
        %1241 = vmatprep.mubr.bf16.mxu0 0
        %1242 = vmatmul.mubr.bf16.gmra.mrb[0].mxu0 %v1198
        %v1243 = vpop.f32.mrb[0].mxu0
        %v1244 = vadd.f32 0.0, %v1243
        %v1245 = vpop.f32.mrb[0].mxu0
        %v1246 = vadd.f32 0.0, %v1245
        %v1247 = vpop.f32.mrb[0].mxu0
        %v1248 = vadd.f32 0.0, %v1247
        %v1249 = vpop.f32.mrb[0].mxu0
        %v1250 = vadd.f32 0.0, %v1249
        %1251 = vmatprep.mubr.bf16.mxu0 0
        %1252 = vmatmul.mubr.bf16.gmra.mrb[0].mxu0 %v1201
        %v1253 = vpop.f32.mrb[0].mxu0
        %v1254 = vadd.f32 0.0, %v1253
        %v1255 = vpop.f32.mrb[0].mxu0
        %v1256 = vadd.f32 0.0, %v1255
        %v1257 = vpop.f32.mrb[0].mxu0
        %v1258 = vadd.f32 0.0, %v1257
        %v1259 = vpop.f32.mrb[0].mxu0
        %v1260 = vadd.f32 0.0, %v1259
        %1261 = vmatprep.mubr.bf16.mxu0 0
        %1262 = vmatmul.mubr.bf16.gmra.mrb[0].mxu0 %v1204
        %v1263 = vpop.f32.mrb[0].mxu0
        %v1264 = vadd.f32 0.0, %v1263
        %v1265 = vpop.f32.mrb[0].mxu0
        %v1266 = vadd.f32 0.0, %v1265
        %v1267 = vpop.f32.mrb[0].mxu0
        %v1268 = vadd.f32 0.0, %v1267
        %v1269 = vpop.f32.mrb[0].mxu0
        %v1270 = vadd.f32 0.0, %v1269
        %1271 = vmatprep.mubr.bf16.mxu0 0
        %1272 = vmatmul.mubr.bf16.gmra.mrb[0].mxu0 %v1207
        %v1273 = vpop.f32.mrb[0].mxu0
        %v1274 = vadd.f32 0.0, %v1273
        %v1275 = vpop.f32.mrb[0].mxu0
        %v1276 = vadd.f32 0.0, %v1275
        %v1277 = vpop.f32.mrb[0].mxu0
        %v1278 = vadd.f32 0.0, %v1277
        %v1279 = vpop.f32.mrb[0].mxu0
        %v1280 = vadd.f32 0.0, %v1279
        %1281 = vdwg.mxu0
        %1282 = vmatprep.subr.bf16.mxu0 0
        %1283 = vmatpush1.bf16.msra.mxu0 %v1175
        %1284 = vmatprep.subr.bf16.mxu0 0
        %1285 = vmatpush1.bf16.msra.mxu0 %v1178
        %1286 = vmatprep.subr.bf16.mxu0 0
        %1287 = vmatpush1.bf16.msra.mxu0 %v1181
        %1288 = vmatprep.subr.bf16.mxu0 0
        %1289 = vmatpush1.bf16.msra.mxu0 %v1184
        %1290 = vmatprep.subr.bf16.mxu0 0
        %1291 = vmatpush1.bf16.msra.mxu0 0
        %1292 = vmatprep.subr.bf16.mxu0 0
        %1293 = vmatpush1.bf16.msra.mxu0 0
        %1294 = vmatprep.subr.bf16.mxu0 0
        %1295 = vmatpush1.bf16.msra.mxu0 0
        %1296 = vmatprep.subr.bf16.mxu0 0
        %1297 = vmatpush1.bf16.msra.mxu0 0
        %1298 = vmatprep.subr.bf16.mxu0 0
        %1299 = vmatpush1.bf16.msra.mxu0 0
        %1300 = vmatprep.subr.bf16.mxu0 0
        %1301 = vmatpush1.bf16.msra.mxu0 0
        %1302 = vmatprep.subr.bf16.mxu0 0
        %1303 = vmatpush1.bf16.msra.mxu0 0
        %1304 = vmatprep.subr.bf16.mxu0 0
        %1305 = vmatpush1.bf16.msra.mxu0 0
        %1306 = vmatprep.subr.bf16.mxu0 0
        %1307 = vmatpush1.bf16.msra.mxu0 0
        %1308 = vmatprep.subr.bf16.mxu0 0
        %1309 = vmatpush1.bf16.msra.mxu0 0
        %1310 = vmatprep.subr.bf16.mxu0 0
        %1311 = vmatpush1.bf16.msra.mxu0 0
        %1312 = vmatprep.subr.bf16.mxu0 0
        %1313 = vmatpush1.bf16.msra.mxu0 0
        %1314 = vmatprep.mubr.bf16.mxu0 0
        %1315 = vmatmul.mubr.bf16.gmra.mrb[0].mxu0 %v1198
        %v1316 = vpop.f32.mrb[0].mxu0
        %v1317 = vadd.f32 0.0, %v1316
        %v1318 = vpop.f32.mrb[0].mxu0
        %v1319 = vpop.f32.mrb[0].mxu0
        %v1320 = vadd.f32 0.0, %v1319
        %v1321 = vpop.f32.mrb[0].mxu0
        %1322 = vmatprep.mubr.bf16.mxu0 0
        %1323 = vmatmul.mubr.bf16.gmra.mrb[0].mxu0 %v1201
        %v1324 = vpop.f32.mrb[0].mxu0
        %v1325 = vadd.f32 0.0, %v1324
        %v1326 = vpop.f32.mrb[0].mxu0
        %v1327 = vpop.f32.mrb[0].mxu0
        %v1328 = vadd.f32 0.0, %v1327
        %v1329 = vpop.f32.mrb[0].mxu0
        %1330 = vmatprep.mubr.bf16.mxu0 0
        %1331 = vmatmul.mubr.bf16.gmra.mrb[0].mxu0 %v1204
        %v1332 = vpop.f32.mrb[0].mxu0
        %v1333 = vadd.f32 0.0, %v1332
        %v1334 = vpop.f32.mrb[0].mxu0
        %v1335 = vpop.f32.mrb[0].mxu0
        %v1336 = vadd.f32 0.0, %v1335
        %v1337 = vpop.f32.mrb[0].mxu0
        %1338 = vmatprep.mubr.bf16.mxu0 0
        %1339 = vmatmul.mubr.bf16.gmra.mrb[0].mxu0 %v1207
        %v1340 = vpop.f32.mrb[0].mxu0
        %v1341 = vadd.f32 0.0, %v1340
        %v1342 = vpop.f32.mrb[0].mxu0
        %v1343 = vpop.f32.mrb[0].mxu0
        %v1344 = vadd.f32 0.0, %v1343
        %v1345 = vpop.f32.mrb[0].mxu0
        %1346 = vdwg.mxu0
        %v1347 = vadd.f32 %v1080, %v1244
        %v1348 = vadd.f32 %v1081, %v1246
        %v1349 = vadd.f32 %v1082, %v1317
        %v1350 = vadd.f32 %v1083, %v1248
        %v1351 = vadd.f32 %v1084, %v1250
        %v1352 = vadd.f32 %v1085, %v1320
        %v1353 = vadd.f32 %v1086, %v1254
        %v1354 = vadd.f32 %v1087, %v1256
        %v1355 = vadd.f32 %v1088, %v1325
        %v1356 = vadd.f32 %v1089, %v1258
        %v1357 = vadd.f32 %v1090, %v1260
        %v1358 = vadd.f32 %v1091, %v1328
        %v1359 = vadd.f32 %v1092, %v1264
        %v1360 = vadd.f32 %v1093, %v1266
        %v1361 = vadd.f32 %v1094, %v1333
        %v1362 = vadd.f32 %v1095, %v1268
        %v1363 = vadd.f32 %v1096, %v1270
        %v1364 = vadd.f32 %v1097, %v1336
        %v1365 = vadd.f32 %v1098, %v1274
        %v1366 = vadd.f32 %v1099, %v1276
        %v1367 = vadd.f32 %v1100, %v1341
        %v1368 = vadd.f32 %v1101, %v1278
        %v1369 = vadd.f32 %v1102, %v1280
        %v1370 = vadd.f32 %v1103, %v1344
        %v1371 = vld [vmem:[%s316 + $0x41] sm:$0xff]
        %v1372 = vld [vmem:[%s316 + $0x49] sm:$0xff]
        %v1373 = vld [vmem:[%s316 + $0x51] sm:$0xff]
        %v1374 = vld [vmem:[%s316 + $0x59] sm:$0xff]
        %v1375 = vld [vmem:[%s316 + $0x61] sm:$0xff]
        %v1376 = vld [vmem:[%s316 + $0x69] sm:$0xff]
        %v1377 = vld [vmem:[%s316 + $0x71] sm:$0xff]
        %v1378 = vld [vmem:[%s316 + $0x79] sm:$0xf]
        %v1379 = vpack.c.bf16 %v1372, %v1371
        %v1380 = vpack.c.bf16 %v1374, %v1373
        %v1381 = vpack.c.bf16 %v1376, %v1375
        %v1382 = vpack.c.bf16 %v1378, %v1377
        %s1383 = scalar_lea.vmem %s1, 384
        %v1384 = vld [vmem:[%s1383] sm:$0xff]
        %v1385 = vld [vmem:[%s1383 + $0x8] sm:$0xf]
        %v1386 = vld [vmem:[%s1383 + $0xc] sm:$0xff]
        %v1387 = vld [vmem:[%s1383 + $0x14] sm:$0xf]
        %v1388 = vld [vmem:[%s1383 + $0x18] sm:$0xff]
        %v1389 = vld [vmem:[%s1383 + $0x20] sm:$0xf]
        %v1390 = vld [vmem:[%s1383 + $0x24] sm:$0xff]
        %v1391 = vld [vmem:[%s1383 + $0x2c] sm:$0xf]
        %v1392 = vld [vmem:[%s1383 + $0x30] sm:$0xff]
        %v1393 = vld [vmem:[%s1383 + $0x38] sm:$0xf]
        %v1394 = vld [vmem:[%s1383 + $0x3c] sm:$0xff]
        %v1395 = vld [vmem:[%s1383 + $0x44] sm:$0xf]
        %v1396 = vld [vmem:[%s1383 + $0x48] sm:$0xff]
        %v1397 = vld [vmem:[%s1383 + $0x50] sm:$0xf]
        %v1398 = vld [vmem:[%s1383 + $0x54] sm:$0xff]
        %v1399 = vld [vmem:[%s1383 + $0x5c] sm:$0xf]
        %v1416 = vunpack.c.l.b16 %v1384
        %v1417 = vunpack.c.h.b16 %v1384
        %v1418 = vunpack.c.l.b16 %v1385
        %v1419 = vunpack.c.l.b16 %v1386
        %v1420 = vunpack.c.h.b16 %v1386
        %v1421 = vunpack.c.l.b16 %v1387
        %v1422 = vunpack.c.l.b16 %v1388
        %v1423 = vunpack.c.h.b16 %v1388
        %v1424 = vunpack.c.l.b16 %v1389
        %v1425 = vunpack.c.l.b16 %v1390
        %v1426 = vunpack.c.h.b16 %v1390
        %v1427 = vunpack.c.l.b16 %v1391
        %v1428 = vunpack.c.l.b16 %v1392
        %v1429 = vunpack.c.h.b16 %v1392
        %v1430 = vunpack.c.l.b16 %v1393
        %v1431 = vunpack.c.l.b16 %v1394
        %v1432 = vunpack.c.h.b16 %v1394
        %v1433 = vunpack.c.l.b16 %v1395
        %v1434 = vunpack.c.l.b16 %v1396
        %v1435 = vunpack.c.h.b16 %v1396
        %v1436 = vunpack.c.l.b16 %v1397
        %v1437 = vunpack.c.l.b16 %v1398
        %v1438 = vunpack.c.h.b16 %v1398
        %v1439 = vunpack.c.l.b16 %v1399
        %v1440 = vpack.c.b16 %v1419, %v1416
        %v1441 = vpack.c.b16 %v1420, %v1417
        %v1442 = vpack.c.b16 %v1421, %v1418
        %v1443 = vpack.c.b16 %v1425, %v1422
        %v1444 = vpack.c.b16 %v1426, %v1423
        %v1445 = vpack.c.b16 %v1427, %v1424
        %v1446 = vpack.c.b16 %v1431, %v1428
        %v1447 = vpack.c.b16 %v1432, %v1429
        %v1448 = vpack.c.b16 %v1433, %v1430
        %v1449 = vpack.c.b16 %v1437, %v1434
        %v1450 = vpack.c.b16 %v1438, %v1435
        %v1451 = vpack.c.b16 %v1439, %v1436
        %v1465 = vsel %vm472, %v1379, 0
        %v1468 = vsel %vm472, %v1380, 0
        %v1471 = vsel %vm472, %v1381, 0
        %v1474 = vsel %vm472, %v1382, 0
        %1476 = vmatprep.subr.bf16.mxu0 %v1441
        %1477 = vmatpush1.bf16.msra.mxu0 %v1440
        %1478 = vmatprep.subr.bf16.mxu0 %v1444
        %1479 = vmatpush1.bf16.msra.mxu0 %v1443
        %1480 = vmatprep.subr.bf16.mxu0 %v1447
        %1481 = vmatpush1.bf16.msra.mxu0 %v1446
        %1482 = vmatprep.subr.bf16.mxu0 %v1450
        %1483 = vmatpush1.bf16.msra.mxu0 %v1449
        %1484 = vmatprep.subr.bf16.mxu0 0
        %1485 = vmatpush1.bf16.msra.mxu0 0
        %1486 = vmatprep.subr.bf16.mxu0 0
        %1487 = vmatpush1.bf16.msra.mxu0 0
        %1488 = vmatprep.subr.bf16.mxu0 0
        %1489 = vmatpush1.bf16.msra.mxu0 0
        %1490 = vmatprep.subr.bf16.mxu0 0
        %1491 = vmatpush1.bf16.msra.mxu0 0
        %1492 = vmatprep.subr.bf16.mxu0 0
        %1493 = vmatpush1.bf16.msra.mxu0 0
        %1494 = vmatprep.subr.bf16.mxu0 0
        %1495 = vmatpush1.bf16.msra.mxu0 0
        %1496 = vmatprep.subr.bf16.mxu0 0
        %1497 = vmatpush1.bf16.msra.mxu0 0
        %1498 = vmatprep.subr.bf16.mxu0 0
        %1499 = vmatpush1.bf16.msra.mxu0 0
        %1500 = vmatprep.subr.bf16.mxu0 0
        %1501 = vmatpush1.bf16.msra.mxu0 0
        %1502 = vmatprep.subr.bf16.mxu0 0
        %1503 = vmatpush1.bf16.msra.mxu0 0
        %1504 = vmatprep.subr.bf16.mxu0 0
        %1505 = vmatpush1.bf16.msra.mxu0 0
        %1506 = vmatprep.subr.bf16.mxu0 0
        %1507 = vmatpush1.bf16.msra.mxu0 0
        %1508 = vmatprep.mubr.bf16.mxu0 0
        %1509 = vmatmul.mubr.bf16.gmra.mrb[0].mxu0 %v1465
        %v1510 = vpop.f32.mrb[0].mxu0
        %v1511 = vadd.f32 0.0, %v1510
        %v1512 = vpop.f32.mrb[0].mxu0
        %v1513 = vadd.f32 0.0, %v1512
        %v1514 = vpop.f32.mrb[0].mxu0
        %v1515 = vadd.f32 0.0, %v1514
        %v1516 = vpop.f32.mrb[0].mxu0
        %v1517 = vadd.f32 0.0, %v1516
        %1518 = vmatprep.mubr.bf16.mxu0 0
        %1519 = vmatmul.mubr.bf16.gmra.mrb[0].mxu0 %v1468
        %v1520 = vpop.f32.mrb[0].mxu0
        %v1521 = vadd.f32 0.0, %v1520
        %v1522 = vpop.f32.mrb[0].mxu0
        %v1523 = vadd.f32 0.0, %v1522
        %v1524 = vpop.f32.mrb[0].mxu0
        %v1525 = vadd.f32 0.0, %v1524
        %v1526 = vpop.f32.mrb[0].mxu0
        %v1527 = vadd.f32 0.0, %v1526
        %1528 = vmatprep.mubr.bf16.mxu0 0
        %1529 = vmatmul.mubr.bf16.gmra.mrb[0].mxu0 %v1471
        %v1530 = vpop.f32.mrb[0].mxu0
        %v1531 = vadd.f32 0.0, %v1530
        %v1532 = vpop.f32.mrb[0].mxu0
        %v1533 = vadd.f32 0.0, %v1532
        %v1534 = vpop.f32.mrb[0].mxu0
        %v1535 = vadd.f32 0.0, %v1534
        %v1536 = vpop.f32.mrb[0].mxu0
        %v1537 = vadd.f32 0.0, %v1536
        %1538 = vmatprep.mubr.bf16.mxu0 0
        %1539 = vmatmul.mubr.bf16.gmra.mrb[0].mxu0 %v1474
        %v1540 = vpop.f32.mrb[0].mxu0
        %v1541 = vadd.f32 0.0, %v1540
        %v1542 = vpop.f32.mrb[0].mxu0
        %v1543 = vadd.f32 0.0, %v1542
        %v1544 = vpop.f32.mrb[0].mxu0
        %v1545 = vadd.f32 0.0, %v1544
        %v1546 = vpop.f32.mrb[0].mxu0
        %v1547 = vadd.f32 0.0, %v1546
        %1548 = vdwg.mxu0
        %1549 = vmatprep.subr.bf16.mxu0 0
        %1550 = vmatpush1.bf16.msra.mxu0 %v1442
        %1551 = vmatprep.subr.bf16.mxu0 0
        %1552 = vmatpush1.bf16.msra.mxu0 %v1445
        %1553 = vmatprep.subr.bf16.mxu0 0
        %1554 = vmatpush1.bf16.msra.mxu0 %v1448
        %1555 = vmatprep.subr.bf16.mxu0 0
        %1556 = vmatpush1.bf16.msra.mxu0 %v1451
        %1557 = vmatprep.subr.bf16.mxu0 0
        %1558 = vmatpush1.bf16.msra.mxu0 0
        %1559 = vmatprep.subr.bf16.mxu0 0
        %1560 = vmatpush1.bf16.msra.mxu0 0
        %1561 = vmatprep.subr.bf16.mxu0 0
        %1562 = vmatpush1.bf16.msra.mxu0 0
        %1563 = vmatprep.subr.bf16.mxu0 0
        %1564 = vmatpush1.bf16.msra.mxu0 0
        %1565 = vmatprep.subr.bf16.mxu0 0
        %1566 = vmatpush1.bf16.msra.mxu0 0
        %1567 = vmatprep.subr.bf16.mxu0 0
        %1568 = vmatpush1.bf16.msra.mxu0 0
        %1569 = vmatprep.subr.bf16.mxu0 0
        %1570 = vmatpush1.bf16.msra.mxu0 0
        %1571 = vmatprep.subr.bf16.mxu0 0
        %1572 = vmatpush1.bf16.msra.mxu0 0
        %1573 = vmatprep.subr.bf16.mxu0 0
        %1574 = vmatpush1.bf16.msra.mxu0 0
        %1575 = vmatprep.subr.bf16.mxu0 0
        %1576 = vmatpush1.bf16.msra.mxu0 0
        %1577 = vmatprep.subr.bf16.mxu0 0
        %1578 = vmatpush1.bf16.msra.mxu0 0
        %1579 = vmatprep.subr.bf16.mxu0 0
        %1580 = vmatpush1.bf16.msra.mxu0 0
        %1581 = vmatprep.mubr.bf16.mxu0 0
        %1582 = vmatmul.mubr.bf16.gmra.mrb[0].mxu0 %v1465
        %v1583 = vpop.f32.mrb[0].mxu0
        %v1584 = vadd.f32 0.0, %v1583
        %v1585 = vpop.f32.mrb[0].mxu0
        %v1586 = vpop.f32.mrb[0].mxu0
        %v1587 = vadd.f32 0.0, %v1586
        %v1588 = vpop.f32.mrb[0].mxu0
        %1589 = vmatprep.mubr.bf16.mxu0 0
        %1590 = vmatmul.mubr.bf16.gmra.mrb[0].mxu0 %v1468
        %v1591 = vpop.f32.mrb[0].mxu0
        %v1592 = vadd.f32 0.0, %v1591
        %v1593 = vpop.f32.mrb[0].mxu0
        %v1594 = vpop.f32.mrb[0].mxu0
        %v1595 = vadd.f32 0.0, %v1594
        %v1596 = vpop.f32.mrb[0].mxu0
        %1597 = vmatprep.mubr.bf16.mxu0 0
        %1598 = vmatmul.mubr.bf16.gmra.mrb[0].mxu0 %v1471
        %v1599 = vpop.f32.mrb[0].mxu0
        %v1600 = vadd.f32 0.0, %v1599
        %v1601 = vpop.f32.mrb[0].mxu0
        %v1602 = vpop.f32.mrb[0].mxu0
        %v1603 = vadd.f32 0.0, %v1602
        %v1604 = vpop.f32.mrb[0].mxu0
        %1605 = vmatprep.mubr.bf16.mxu0 0
        %1606 = vmatmul.mubr.bf16.gmra.mrb[0].mxu0 %v1474
        %v1607 = vpop.f32.mrb[0].mxu0
        %v1608 = vadd.f32 0.0, %v1607
        %v1609 = vpop.f32.mrb[0].mxu0
        %v1610 = vpop.f32.mrb[0].mxu0
        %v1611 = vadd.f32 0.0, %v1610
        %v1612 = vpop.f32.mrb[0].mxu0
        %1613 = vdwg.mxu0
        %v1614 = vadd.f32 %v1347, %v1511
        %v1615 = vadd.f32 %v1348, %v1513
        %v1616 = vadd.f32 %v1349, %v1584
        %v1617 = vadd.f32 %v1350, %v1515
        %v1618 = vadd.f32 %v1351, %v1517
        %v1619 = vadd.f32 %v1352, %v1587
        %v1620 = vadd.f32 %v1353, %v1521
        %v1621 = vadd.f32 %v1354, %v1523
        %v1622 = vadd.f32 %v1355, %v1592
        %v1623 = vadd.f32 %v1356, %v1525
        %v1624 = vadd.f32 %v1357, %v1527
        %v1625 = vadd.f32 %v1358, %v1595
        %v1626 = vadd.f32 %v1359, %v1531
        %v1627 = vadd.f32 %v1360, %v1533
        %v1628 = vadd.f32 %v1361, %v1600
        %v1629 = vadd.f32 %v1362, %v1535
        %v1630 = vadd.f32 %v1363, %v1537
        %v1631 = vadd.f32 %v1364, %v1603
        %v1632 = vadd.f32 %v1365, %v1541
        %v1633 = vadd.f32 %v1366, %v1543
        %v1634 = vadd.f32 %v1367, %v1608
        %v1635 = vadd.f32 %v1368, %v1545
        %v1636 = vadd.f32 %v1369, %v1547
        %v1637 = vadd.f32 %v1370, %v1611
        %v1638 = vld [vmem:[%s316 + $0x81] sm:$0xff]
        %v1639 = vld [vmem:[%s316 + $0x89] sm:$0xff]
        %v1640 = vld [vmem:[%s316 + $0x91] sm:$0xff]
        %v1641 = vld [vmem:[%s316 + $0x99] sm:$0xff]
        %v1642 = vld [vmem:[%s316 + $0xa1] sm:$0xff]
        %v1643 = vld [vmem:[%s316 + $0xa9] sm:$0xff]
        %v1644 = vld [vmem:[%s316 + $0xb1] sm:$0xff]
        %v1645 = vld [vmem:[%s316 + $0xb9] sm:$0xf]
        %v1646 = vpack.c.bf16 %v1639, %v1638
        %v1647 = vpack.c.bf16 %v1641, %v1640
        %v1648 = vpack.c.bf16 %v1643, %v1642
        %v1649 = vpack.c.bf16 %v1645, %v1644
        %s1650 = scalar_lea.vmem %s1, 480
        %v1651 = vld [vmem:[%s1650] sm:$0xff]
        %v1652 = vld [vmem:[%s1650 + $0x8] sm:$0xf]
        %v1653 = vld [vmem:[%s1650 + $0xc] sm:$0xff]
        %v1654 = vld [vmem:[%s1650 + $0x14] sm:$0xf]
        %v1655 = vld [vmem:[%s1650 + $0x18] sm:$0xff]
        %v1656 = vld [vmem:[%s1650 + $0x20] sm:$0xf]
        %v1657 = vld [vmem:[%s1650 + $0x24] sm:$0xff]
        %v1658 = vld [vmem:[%s1650 + $0x2c] sm:$0xf]
        %v1659 = vld [vmem:[%s1650 + $0x30] sm:$0xff]
        %v1660 = vld [vmem:[%s1650 + $0x38] sm:$0xf]
        %v1661 = vld [vmem:[%s1650 + $0x3c] sm:$0xff]
        %v1662 = vld [vmem:[%s1650 + $0x44] sm:$0xf]
        %v1663 = vld [vmem:[%s1650 + $0x48] sm:$0xff]
        %v1664 = vld [vmem:[%s1650 + $0x50] sm:$0xf]
        %v1665 = vld [vmem:[%s1650 + $0x54] sm:$0xff]
        %v1666 = vld [vmem:[%s1650 + $0x5c] sm:$0xf]
        %v1683 = vunpack.c.l.b16 %v1651
        %v1684 = vunpack.c.h.b16 %v1651
        %v1685 = vunpack.c.l.b16 %v1652
        %v1686 = vunpack.c.l.b16 %v1653
        %v1687 = vunpack.c.h.b16 %v1653
        %v1688 = vunpack.c.l.b16 %v1654
        %v1689 = vunpack.c.l.b16 %v1655
        %v1690 = vunpack.c.h.b16 %v1655
        %v1691 = vunpack.c.l.b16 %v1656
        %v1692 = vunpack.c.l.b16 %v1657
        %v1693 = vunpack.c.h.b16 %v1657
        %v1694 = vunpack.c.l.b16 %v1658
        %v1695 = vunpack.c.l.b16 %v1659
        %v1696 = vunpack.c.h.b16 %v1659
        %v1697 = vunpack.c.l.b16 %v1660
        %v1698 = vunpack.c.l.b16 %v1661
        %v1699 = vunpack.c.h.b16 %v1661
        %v1700 = vunpack.c.l.b16 %v1662
        %v1701 = vunpack.c.l.b16 %v1663
        %v1702 = vunpack.c.h.b16 %v1663
        %v1703 = vunpack.c.l.b16 %v1664
        %v1704 = vunpack.c.l.b16 %v1665
        %v1705 = vunpack.c.h.b16 %v1665
        %v1706 = vunpack.c.l.b16 %v1666
        %v1707 = vpack.c.b16 %v1686, %v1683
        %v1708 = vpack.c.b16 %v1687, %v1684
        %v1709 = vpack.c.b16 %v1688, %v1685
        %v1710 = vpack.c.b16 %v1692, %v1689
        %v1711 = vpack.c.b16 %v1693, %v1690
        %v1712 = vpack.c.b16 %v1694, %v1691
        %v1713 = vpack.c.b16 %v1698, %v1695
        %v1714 = vpack.c.b16 %v1699, %v1696
        %v1715 = vpack.c.b16 %v1700, %v1697
        %v1716 = vpack.c.b16 %v1704, %v1701
        %v1717 = vpack.c.b16 %v1705, %v1702
        %v1718 = vpack.c.b16 %v1706, %v1703
        %v1732 = vsel %vm472, %v1646, 0
        %v1735 = vsel %vm472, %v1647, 0
        %v1738 = vsel %vm472, %v1648, 0
        %v1741 = vsel %vm472, %v1649, 0
        %1743 = vmatprep.subr.bf16.mxu0 %v1708
        %1744 = vmatpush1.bf16.msra.mxu0 %v1707
        %1745 = vmatprep.subr.bf16.mxu0 %v1711
        %1746 = vmatpush1.bf16.msra.mxu0 %v1710
        %1747 = vmatprep.subr.bf16.mxu0 %v1714
        %1748 = vmatpush1.bf16.msra.mxu0 %v1713
        %1749 = vmatprep.subr.bf16.mxu0 %v1717
        %1750 = vmatpush1.bf16.msra.mxu0 %v1716
        %1751 = vmatprep.subr.bf16.mxu0 0
        %1752 = vmatpush1.bf16.msra.mxu0 0
        %1753 = vmatprep.subr.bf16.mxu0 0
        %1754 = vmatpush1.bf16.msra.mxu0 0
        %1755 = vmatprep.subr.bf16.mxu0 0
        %1756 = vmatpush1.bf16.msra.mxu0 0
        %1757 = vmatprep.subr.bf16.mxu0 0
        %1758 = vmatpush1.bf16.msra.mxu0 0
        %1759 = vmatprep.subr.bf16.mxu0 0
        %1760 = vmatpush1.bf16.msra.mxu0 0
        %1761 = vmatprep.subr.bf16.mxu0 0
        %1762 = vmatpush1.bf16.msra.mxu0 0
        %1763 = vmatprep.subr.bf16.mxu0 0
        %1764 = vmatpush1.bf16.msra.mxu0 0
        %1765 = vmatprep.subr.bf16.mxu0 0
        %1766 = vmatpush1.bf16.msra.mxu0 0
        %1767 = vmatprep.subr.bf16.mxu0 0
        %1768 = vmatpush1.bf16.msra.mxu0 0
        %1769 = vmatprep.subr.bf16.mxu0 0
        %1770 = vmatpush1.bf16.msra.mxu0 0
        %1771 = vmatprep.subr.bf16.mxu0 0
        %1772 = vmatpush1.bf16.msra.mxu0 0
        %1773 = vmatprep.subr.bf16.mxu0 0
        %1774 = vmatpush1.bf16.msra.mxu0 0
        %1775 = vmatprep.mubr.bf16.mxu0 0
        %1776 = vmatmul.mubr.bf16.gmra.mrb[0].mxu0 %v1732
        %v1777 = vpop.f32.mrb[0].mxu0
        %v1778 = vadd.f32 0.0, %v1777
        %v1779 = vpop.f32.mrb[0].mxu0
        %v1780 = vadd.f32 0.0, %v1779
        %v1781 = vpop.f32.mrb[0].mxu0
        %v1782 = vadd.f32 0.0, %v1781
        %v1783 = vpop.f32.mrb[0].mxu0
        %v1784 = vadd.f32 0.0, %v1783
        %1785 = vmatprep.mubr.bf16.mxu0 0
        %1786 = vmatmul.mubr.bf16.gmra.mrb[0].mxu0 %v1735
        %v1787 = vpop.f32.mrb[0].mxu0
        %v1788 = vadd.f32 0.0, %v1787
        %v1789 = vpop.f32.mrb[0].mxu0
        %v1790 = vadd.f32 0.0, %v1789
        %v1791 = vpop.f32.mrb[0].mxu0
        %v1792 = vadd.f32 0.0, %v1791
        %v1793 = vpop.f32.mrb[0].mxu0
        %v1794 = vadd.f32 0.0, %v1793
        %1795 = vmatprep.mubr.bf16.mxu0 0
        %1796 = vmatmul.mubr.bf16.gmra.mrb[0].mxu0 %v1738
        %v1797 = vpop.f32.mrb[0].mxu0
        %v1798 = vadd.f32 0.0, %v1797
        %v1799 = vpop.f32.mrb[0].mxu0
        %v1800 = vadd.f32 0.0, %v1799
        %v1801 = vpop.f32.mrb[0].mxu0
        %v1802 = vadd.f32 0.0, %v1801
        %v1803 = vpop.f32.mrb[0].mxu0
        %v1804 = vadd.f32 0.0, %v1803
        %1805 = vmatprep.mubr.bf16.mxu0 0
        %1806 = vmatmul.mubr.bf16.gmra.mrb[0].mxu0 %v1741
        %v1807 = vpop.f32.mrb[0].mxu0
        %v1808 = vadd.f32 0.0, %v1807
        %v1809 = vpop.f32.mrb[0].mxu0
        %v1810 = vadd.f32 0.0, %v1809
        %v1811 = vpop.f32.mrb[0].mxu0
        %v1812 = vadd.f32 0.0, %v1811
        %v1813 = vpop.f32.mrb[0].mxu0
        %v1814 = vadd.f32 0.0, %v1813
        %1815 = vdwg.mxu0
        %1816 = vmatprep.subr.bf16.mxu0 0
        %1817 = vmatpush1.bf16.msra.mxu0 %v1709
        %1818 = vmatprep.subr.bf16.mxu0 0
        %1819 = vmatpush1.bf16.msra.mxu0 %v1712
        %1820 = vmatprep.subr.bf16.mxu0 0
        %1821 = vmatpush1.bf16.msra.mxu0 %v1715
        %1822 = vmatprep.subr.bf16.mxu0 0
        %1823 = vmatpush1.bf16.msra.mxu0 %v1718
        %1824 = vmatprep.subr.bf16.mxu0 0
        %1825 = vmatpush1.bf16.msra.mxu0 0
        %1826 = vmatprep.subr.bf16.mxu0 0
        %1827 = vmatpush1.bf16.msra.mxu0 0
        %1828 = vmatprep.subr.bf16.mxu0 0
        %1829 = vmatpush1.bf16.msra.mxu0 0
        %1830 = vmatprep.subr.bf16.mxu0 0
        %1831 = vmatpush1.bf16.msra.mxu0 0
        %1832 = vmatprep.subr.bf16.mxu0 0
        %1833 = vmatpush1.bf16.msra.mxu0 0
        %1834 = vmatprep.subr.bf16.mxu0 0
        %1835 = vmatpush1.bf16.msra.mxu0 0
        %1836 = vmatprep.subr.bf16.mxu0 0
        %1837 = vmatpush1.bf16.msra.mxu0 0
        %1838 = vmatprep.subr.bf16.mxu0 0
        %1839 = vmatpush1.bf16.msra.mxu0 0
        %1840 = vmatprep.subr.bf16.mxu0 0
        %1841 = vmatpush1.bf16.msra.mxu0 0
        %1842 = vmatprep.subr.bf16.mxu0 0
        %1843 = vmatpush1.bf16.msra.mxu0 0
        %1844 = vmatprep.subr.bf16.mxu0 0
        %1845 = vmatpush1.bf16.msra.mxu0 0
        %1846 = vmatprep.subr.bf16.mxu0 0
        %1847 = vmatpush1.bf16.msra.mxu0 0
        %1848 = vmatprep.mubr.bf16.mxu0 0
        %1849 = vmatmul.mubr.bf16.gmra.mrb[0].mxu0 %v1732
        %v1850 = vpop.f32.mrb[0].mxu0
        %v1851 = vadd.f32 0.0, %v1850
        %v1852 = vpop.f32.mrb[0].mxu0
        %v1853 = vpop.f32.mrb[0].mxu0
        %v1854 = vadd.f32 0.0, %v1853
        %v1855 = vpop.f32.mrb[0].mxu0
        %1856 = vmatprep.mubr.bf16.mxu0 0
        %1857 = vmatmul.mubr.bf16.gmra.mrb[0].mxu0 %v1735
        %v1858 = vpop.f32.mrb[0].mxu0
        %v1859 = vadd.f32 0.0, %v1858
        %v1860 = vpop.f32.mrb[0].mxu0
        %v1861 = vpop.f32.mrb[0].mxu0
        %v1862 = vadd.f32 0.0, %v1861
        %v1863 = vpop.f32.mrb[0].mxu0
        %1864 = vmatprep.mubr.bf16.mxu0 0
        %1865 = vmatmul.mubr.bf16.gmra.mrb[0].mxu0 %v1738
        %v1866 = vpop.f32.mrb[0].mxu0
        %v1867 = vadd.f32 0.0, %v1866
        %v1868 = vpop.f32.mrb[0].mxu0
        %v1869 = vpop.f32.mrb[0].mxu0
        %v1870 = vadd.f32 0.0, %v1869
        %v1871 = vpop.f32.mrb[0].mxu0
        %1872 = vmatprep.mubr.bf16.mxu0 0
        %1873 = vmatmul.mubr.bf16.gmra.mrb[0].mxu0 %v1741
        %v1874 = vpop.f32.mrb[0].mxu0
        %v1875 = vadd.f32 0.0, %v1874
        %v1876 = vpop.f32.mrb[0].mxu0
        %v1877 = vpop.f32.mrb[0].mxu0
        %v1878 = vadd.f32 0.0, %v1877
        %v1879 = vpop.f32.mrb[0].mxu0
        %1880 = vdwg.mxu0
        %v1881 = vadd.f32 %v1614, %v1778
        %v1882 = vadd.f32 %v1615, %v1780
        %v1883 = vadd.f32 %v1616, %v1851
        %v1884 = vadd.f32 %v1617, %v1782
        %v1885 = vadd.f32 %v1618, %v1784
        %v1886 = vadd.f32 %v1619, %v1854
        %v1887 = vadd.f32 %v1620, %v1788
        %v1888 = vadd.f32 %v1621, %v1790
        %v1889 = vadd.f32 %v1622, %v1859
        %v1890 = vadd.f32 %v1623, %v1792
        %v1891 = vadd.f32 %v1624, %v1794
        %v1892 = vadd.f32 %v1625, %v1862
        %v1893 = vadd.f32 %v1626, %v1798
        %v1894 = vadd.f32 %v1627, %v1800
        %v1895 = vadd.f32 %v1628, %v1867
        %v1896 = vadd.f32 %v1629, %v1802
        %v1897 = vadd.f32 %v1630, %v1804
        %v1898 = vadd.f32 %v1631, %v1870
        %v1899 = vadd.f32 %v1632, %v1808
        %v1900 = vadd.f32 %v1633, %v1810
        %v1901 = vadd.f32 %v1634, %v1875
        %v1902 = vadd.f32 %v1635, %v1812
        %v1903 = vadd.f32 %v1636, %v1814
        %v1904 = vadd.f32 %v1637, %v1878
        %v1905 = vld [vmem:[%s316 + $0x2] sm:$0xff]
        %v1906 = vld [vmem:[%s316 + $0xa] sm:$0xff]
        %v1907 = vld [vmem:[%s316 + $0x12] sm:$0xff]
        %v1908 = vld [vmem:[%s316 + $0x1a] sm:$0xff]
        %v1909 = vld [vmem:[%s316 + $0x22] sm:$0xff]
        %v1910 = vld [vmem:[%s316 + $0x2a] sm:$0xff]
        %v1911 = vld [vmem:[%s316 + $0x32] sm:$0xff]
        %v1912 = vld [vmem:[%s316 + $0x3a] sm:$0xf]
        %v1913 = vpack.c.bf16 %v1906, %v1905
        %v1914 = vpack.c.bf16 %v1908, %v1907
        %v1915 = vpack.c.bf16 %v1910, %v1909
        %v1916 = vpack.c.bf16 %v1912, %v1911
        %s1917 = scalar_lea.vmem %s1, 576
        %v1918 = vld [vmem:[%s1917] sm:$0xff]
        %v1919 = vld [vmem:[%s1917 + $0x8] sm:$0xf]
        %v1920 = vld [vmem:[%s1917 + $0xc] sm:$0xff]
        %v1921 = vld [vmem:[%s1917 + $0x14] sm:$0xf]
        %v1922 = vld [vmem:[%s1917 + $0x18] sm:$0xff]
        %v1923 = vld [vmem:[%s1917 + $0x20] sm:$0xf]
        %v1924 = vld [vmem:[%s1917 + $0x24] sm:$0xff]
        %v1925 = vld [vmem:[%s1917 + $0x2c] sm:$0xf]
        %v1926 = vld [vmem:[%s1917 + $0x30] sm:$0xff]
        %v1927 = vld [vmem:[%s1917 + $0x38] sm:$0xf]
        %v1928 = vld [vmem:[%s1917 + $0x3c] sm:$0xff]
        %v1929 = vld [vmem:[%s1917 + $0x44] sm:$0xf]
        %v1930 = vld [vmem:[%s1917 + $0x48] sm:$0xff]
        %v1931 = vld [vmem:[%s1917 + $0x50] sm:$0xf]
        %v1932 = vld [vmem:[%s1917 + $0x54] sm:$0xff]
        %v1933 = vld [vmem:[%s1917 + $0x5c] sm:$0xf]
        %v1950 = vunpack.c.l.b16 %v1918
        %v1951 = vunpack.c.h.b16 %v1918
        %v1952 = vunpack.c.l.b16 %v1919
        %v1953 = vunpack.c.l.b16 %v1920
        %v1954 = vunpack.c.h.b16 %v1920
        %v1955 = vunpack.c.l.b16 %v1921
        %v1956 = vunpack.c.l.b16 %v1922
        %v1957 = vunpack.c.h.b16 %v1922
        %v1958 = vunpack.c.l.b16 %v1923
        %v1959 = vunpack.c.l.b16 %v1924
        %v1960 = vunpack.c.h.b16 %v1924
        %v1961 = vunpack.c.l.b16 %v1925
        %v1962 = vunpack.c.l.b16 %v1926
        %v1963 = vunpack.c.h.b16 %v1926
        %v1964 = vunpack.c.l.b16 %v1927
        %v1965 = vunpack.c.l.b16 %v1928
        %v1966 = vunpack.c.h.b16 %v1928
        %v1967 = vunpack.c.l.b16 %v1929
        %v1968 = vunpack.c.l.b16 %v1930
        %v1969 = vunpack.c.h.b16 %v1930
        %v1970 = vunpack.c.l.b16 %v1931
        %v1971 = vunpack.c.l.b16 %v1932
        %v1972 = vunpack.c.h.b16 %v1932
        %v1973 = vunpack.c.l.b16 %v1933
        %v1974 = vpack.c.b16 %v1953, %v1950
        %v1975 = vpack.c.b16 %v1954, %v1951
        %v1976 = vpack.c.b16 %v1955, %v1952
        %v1977 = vpack.c.b16 %v1959, %v1956
        %v1978 = vpack.c.b16 %v1960, %v1957
        %v1979 = vpack.c.b16 %v1961, %v1958
        %v1980 = vpack.c.b16 %v1965, %v1962
        %v1981 = vpack.c.b16 %v1966, %v1963
        %v1982 = vpack.c.b16 %v1967, %v1964
        %v1983 = vpack.c.b16 %v1971, %v1968
        %v1984 = vpack.c.b16 %v1972, %v1969
        %v1985 = vpack.c.b16 %v1973, %v1970
        %v1999 = vsel %vm472, %v1913, 0
        %v2002 = vsel %vm472, %v1914, 0
        %v2005 = vsel %vm472, %v1915, 0
        %v2008 = vsel %vm472, %v1916, 0
        %2010 = vmatprep.subr.bf16.mxu0 %v1975
        %2011 = vmatpush1.bf16.msra.mxu0 %v1974
        %2012 = vmatprep.subr.bf16.mxu0 %v1978
        %2013 = vmatpush1.bf16.msra.mxu0 %v1977
        %2014 = vmatprep.subr.bf16.mxu0 %v1981
        %2015 = vmatpush1.bf16.msra.mxu0 %v1980
        %2016 = vmatprep.subr.bf16.mxu0 %v1984
        %2017 = vmatpush1.bf16.msra.mxu0 %v1983
        %2018 = vmatprep.subr.bf16.mxu0 0
        %2019 = vmatpush1.bf16.msra.mxu0 0
        %2020 = vmatprep.subr.bf16.mxu0 0
        %2021 = vmatpush1.bf16.msra.mxu0 0
        %2022 = vmatprep.subr.bf16.mxu0 0
        %2023 = vmatpush1.bf16.msra.mxu0 0
        %2024 = vmatprep.subr.bf16.mxu0 0
        %2025 = vmatpush1.bf16.msra.mxu0 0
        %2026 = vmatprep.subr.bf16.mxu0 0
        %2027 = vmatpush1.bf16.msra.mxu0 0
        %2028 = vmatprep.subr.bf16.mxu0 0
        %2029 = vmatpush1.bf16.msra.mxu0 0
        %2030 = vmatprep.subr.bf16.mxu0 0
        %2031 = vmatpush1.bf16.msra.mxu0 0
        %2032 = vmatprep.subr.bf16.mxu0 0
        %2033 = vmatpush1.bf16.msra.mxu0 0
        %2034 = vmatprep.subr.bf16.mxu0 0
        %2035 = vmatpush1.bf16.msra.mxu0 0
        %2036 = vmatprep.subr.bf16.mxu0 0
        %2037 = vmatpush1.bf16.msra.mxu0 0
        %2038 = vmatprep.subr.bf16.mxu0 0
        %2039 = vmatpush1.bf16.msra.mxu0 0
        %2040 = vmatprep.subr.bf16.mxu0 0
        %2041 = vmatpush1.bf16.msra.mxu0 0
        %2042 = vmatprep.mubr.bf16.mxu0 0
        %2043 = vmatmul.mubr.bf16.gmra.mrb[0].mxu0 %v1999
        %v2044 = vpop.f32.mrb[0].mxu0
        %v2045 = vadd.f32 0.0, %v2044
        %v2046 = vpop.f32.mrb[0].mxu0
        %v2047 = vadd.f32 0.0, %v2046
        %v2048 = vpop.f32.mrb[0].mxu0
        %v2049 = vadd.f32 0.0, %v2048
        %v2050 = vpop.f32.mrb[0].mxu0
        %v2051 = vadd.f32 0.0, %v2050
        %2052 = vmatprep.mubr.bf16.mxu0 0
        %2053 = vmatmul.mubr.bf16.gmra.mrb[0].mxu0 %v2002
        %v2054 = vpop.f32.mrb[0].mxu0
        %v2055 = vadd.f32 0.0, %v2054
        %v2056 = vpop.f32.mrb[0].mxu0
        %v2057 = vadd.f32 0.0, %v2056
        %v2058 = vpop.f32.mrb[0].mxu0
        %v2059 = vadd.f32 0.0, %v2058
        %v2060 = vpop.f32.mrb[0].mxu0
        %v2061 = vadd.f32 0.0, %v2060
        %2062 = vmatprep.mubr.bf16.mxu0 0
        %2063 = vmatmul.mubr.bf16.gmra.mrb[0].mxu0 %v2005
        %v2064 = vpop.f32.mrb[0].mxu0
        %v2065 = vadd.f32 0.0, %v2064
        %v2066 = vpop.f32.mrb[0].mxu0
        %v2067 = vadd.f32 0.0, %v2066
        %v2068 = vpop.f32.mrb[0].mxu0
        %v2069 = vadd.f32 0.0, %v2068
        %v2070 = vpop.f32.mrb[0].mxu0
        %v2071 = vadd.f32 0.0, %v2070
        %2072 = vmatprep.mubr.bf16.mxu0 0
        %2073 = vmatmul.mubr.bf16.gmra.mrb[0].mxu0 %v2008
        %v2074 = vpop.f32.mrb[0].mxu0
        %v2075 = vadd.f32 0.0, %v2074
        %v2076 = vpop.f32.mrb[0].mxu0
        %v2077 = vadd.f32 0.0, %v2076
        %v2078 = vpop.f32.mrb[0].mxu0
        %v2079 = vadd.f32 0.0, %v2078
        %v2080 = vpop.f32.mrb[0].mxu0
        %v2081 = vadd.f32 0.0, %v2080
        %2082 = vdwg.mxu0
        %2083 = vmatprep.subr.bf16.mxu0 0
        %2084 = vmatpush1.bf16.msra.mxu0 %v1976
        %2085 = vmatprep.subr.bf16.mxu0 0
        %2086 = vmatpush1.bf16.msra.mxu0 %v1979
        %2087 = vmatprep.subr.bf16.mxu0 0
        %2088 = vmatpush1.bf16.msra.mxu0 %v1982
        %2089 = vmatprep.subr.bf16.mxu0 0
        %2090 = vmatpush1.bf16.msra.mxu0 %v1985
        %2091 = vmatprep.subr.bf16.mxu0 0
        %2092 = vmatpush1.bf16.msra.mxu0 0
        %2093 = vmatprep.subr.bf16.mxu0 0
        %2094 = vmatpush1.bf16.msra.mxu0 0
        %2095 = vmatprep.subr.bf16.mxu0 0
        %2096 = vmatpush1.bf16.msra.mxu0 0
        %2097 = vmatprep.subr.bf16.mxu0 0
        %2098 = vmatpush1.bf16.msra.mxu0 0
        %2099 = vmatprep.subr.bf16.mxu0 0
        %2100 = vmatpush1.bf16.msra.mxu0 0
        %2101 = vmatprep.subr.bf16.mxu0 0
        %2102 = vmatpush1.bf16.msra.mxu0 0
        %2103 = vmatprep.subr.bf16.mxu0 0
        %2104 = vmatpush1.bf16.msra.mxu0 0
        %2105 = vmatprep.subr.bf16.mxu0 0
        %2106 = vmatpush1.bf16.msra.mxu0 0
        %2107 = vmatprep.subr.bf16.mxu0 0
        %2108 = vmatpush1.bf16.msra.mxu0 0
        %2109 = vmatprep.subr.bf16.mxu0 0
        %2110 = vmatpush1.bf16.msra.mxu0 0
        %2111 = vmatprep.subr.bf16.mxu0 0
        %2112 = vmatpush1.bf16.msra.mxu0 0
        %2113 = vmatprep.subr.bf16.mxu0 0
        %2114 = vmatpush1.bf16.msra.mxu0 0
        %2115 = vmatprep.mubr.bf16.mxu0 0
        %2116 = vmatmul.mubr.bf16.gmra.mrb[0].mxu0 %v1999
        %v2117 = vpop.f32.mrb[0].mxu0
        %v2118 = vadd.f32 0.0, %v2117
        %v2119 = vpop.f32.mrb[0].mxu0
        %v2120 = vpop.f32.mrb[0].mxu0
        %v2121 = vadd.f32 0.0, %v2120
        %v2122 = vpop.f32.mrb[0].mxu0
        %2123 = vmatprep.mubr.bf16.mxu0 0
        %2124 = vmatmul.mubr.bf16.gmra.mrb[0].mxu0 %v2002
        %v2125 = vpop.f32.mrb[0].mxu0
        %v2126 = vadd.f32 0.0, %v2125
        %v2127 = vpop.f32.mrb[0].mxu0
        %v2128 = vpop.f32.mrb[0].mxu0
        %v2129 = vadd.f32 0.0, %v2128
        %v2130 = vpop.f32.mrb[0].mxu0
        %2131 = vmatprep.mubr.bf16.mxu0 0
        %2132 = vmatmul.mubr.bf16.gmra.mrb[0].mxu0 %v2005
        %v2133 = vpop.f32.mrb[0].mxu0
        %v2134 = vadd.f32 0.0, %v2133
        %v2135 = vpop.f32.mrb[0].mxu0
        %v2136 = vpop.f32.mrb[0].mxu0
        %v2137 = vadd.f32 0.0, %v2136
        %v2138 = vpop.f32.mrb[0].mxu0
        %2139 = vmatprep.mubr.bf16.mxu0 0
        %2140 = vmatmul.mubr.bf16.gmra.mrb[0].mxu0 %v2008
        %v2141 = vpop.f32.mrb[0].mxu0
        %v2142 = vadd.f32 0.0, %v2141
        %v2143 = vpop.f32.mrb[0].mxu0
        %v2144 = vpop.f32.mrb[0].mxu0
        %v2145 = vadd.f32 0.0, %v2144
        %v2146 = vpop.f32.mrb[0].mxu0
        %2147 = vdwg.mxu0
        %v2148 = vadd.f32 %v1881, %v2045
        %v2149 = vadd.f32 %v1882, %v2047
        %v2150 = vadd.f32 %v1883, %v2118
        %v2151 = vadd.f32 %v1884, %v2049
        %v2152 = vadd.f32 %v1885, %v2051
        %v2153 = vadd.f32 %v1886, %v2121
        %v2154 = vadd.f32 %v1887, %v2055
        %v2155 = vadd.f32 %v1888, %v2057
        %v2156 = vadd.f32 %v1889, %v2126
        %v2157 = vadd.f32 %v1890, %v2059
        %v2158 = vadd.f32 %v1891, %v2061
        %v2159 = vadd.f32 %v1892, %v2129
        %v2160 = vadd.f32 %v1893, %v2065
        %v2161 = vadd.f32 %v1894, %v2067
        %v2162 = vadd.f32 %v1895, %v2134
        %v2163 = vadd.f32 %v1896, %v2069
        %v2164 = vadd.f32 %v1897, %v2071
        %v2165 = vadd.f32 %v1898, %v2137
        %v2166 = vadd.f32 %v1899, %v2075
        %v2167 = vadd.f32 %v1900, %v2077
        %v2168 = vadd.f32 %v1901, %v2142
        %v2169 = vadd.f32 %v1902, %v2079
        %v2170 = vadd.f32 %v1903, %v2081
        %v2171 = vadd.f32 %v1904, %v2145
        %v2172 = vld [vmem:[%s316 + $0x42] sm:$0xff]
        %v2173 = vld [vmem:[%s316 + $0x4a] sm:$0xff]
        %v2174 = vld [vmem:[%s316 + $0x52] sm:$0xff]
        %v2175 = vld [vmem:[%s316 + $0x5a] sm:$0xff]
        %v2176 = vld [vmem:[%s316 + $0x62] sm:$0xff]
        %v2177 = vld [vmem:[%s316 + $0x6a] sm:$0xff]
        %v2178 = vld [vmem:[%s316 + $0x72] sm:$0xff]
        %v2179 = vld [vmem:[%s316 + $0x7a] sm:$0xf]
        %v2180 = vpack.c.bf16 %v2173, %v2172
        %v2181 = vpack.c.bf16 %v2175, %v2174
        %v2182 = vpack.c.bf16 %v2177, %v2176
        %v2183 = vpack.c.bf16 %v2179, %v2178
        %s2184 = scalar_lea.vmem %s1, 672
        %v2185 = vld [vmem:[%s2184] sm:$0xff]
        %v2186 = vld [vmem:[%s2184 + $0x8] sm:$0xf]
        %v2187 = vld [vmem:[%s2184 + $0xc] sm:$0xff]
        %v2188 = vld [vmem:[%s2184 + $0x14] sm:$0xf]
        %v2189 = vld [vmem:[%s2184 + $0x18] sm:$0xff]
        %v2190 = vld [vmem:[%s2184 + $0x20] sm:$0xf]
        %v2191 = vld [vmem:[%s2184 + $0x24] sm:$0xff]
        %v2192 = vld [vmem:[%s2184 + $0x2c] sm:$0xf]
        %v2193 = vld [vmem:[%s2184 + $0x30] sm:$0xff]
        %v2194 = vld [vmem:[%s2184 + $0x38] sm:$0xf]
        %v2195 = vld [vmem:[%s2184 + $0x3c] sm:$0xff]
        %v2196 = vld [vmem:[%s2184 + $0x44] sm:$0xf]
        %v2197 = vld [vmem:[%s2184 + $0x48] sm:$0xff]
        %v2198 = vld [vmem:[%s2184 + $0x50] sm:$0xf]
        %v2199 = vld [vmem:[%s2184 + $0x54] sm:$0xff]
        %v2200 = vld [vmem:[%s2184 + $0x5c] sm:$0xf]
        %v2217 = vunpack.c.l.b16 %v2185
        %v2218 = vunpack.c.h.b16 %v2185
        %v2219 = vunpack.c.l.b16 %v2186
        %v2220 = vunpack.c.l.b16 %v2187
        %v2221 = vunpack.c.h.b16 %v2187
        %v2222 = vunpack.c.l.b16 %v2188
        %v2223 = vunpack.c.l.b16 %v2189
        %v2224 = vunpack.c.h.b16 %v2189
        %v2225 = vunpack.c.l.b16 %v2190
        %v2226 = vunpack.c.l.b16 %v2191
        %v2227 = vunpack.c.h.b16 %v2191
        %v2228 = vunpack.c.l.b16 %v2192
        %v2229 = vunpack.c.l.b16 %v2193
        %v2230 = vunpack.c.h.b16 %v2193
        %v2231 = vunpack.c.l.b16 %v2194
        %v2232 = vunpack.c.l.b16 %v2195
        %v2233 = vunpack.c.h.b16 %v2195
        %v2234 = vunpack.c.l.b16 %v2196
        %v2235 = vunpack.c.l.b16 %v2197
        %v2236 = vunpack.c.h.b16 %v2197
        %v2237 = vunpack.c.l.b16 %v2198
        %v2238 = vunpack.c.l.b16 %v2199
        %v2239 = vunpack.c.h.b16 %v2199
        %v2240 = vunpack.c.l.b16 %v2200
        %v2241 = vpack.c.b16 %v2220, %v2217
        %v2242 = vpack.c.b16 %v2221, %v2218
        %v2243 = vpack.c.b16 %v2222, %v2219
        %v2244 = vpack.c.b16 %v2226, %v2223
        %v2245 = vpack.c.b16 %v2227, %v2224
        %v2246 = vpack.c.b16 %v2228, %v2225
        %v2247 = vpack.c.b16 %v2232, %v2229
        %v2248 = vpack.c.b16 %v2233, %v2230
        %v2249 = vpack.c.b16 %v2234, %v2231
        %v2250 = vpack.c.b16 %v2238, %v2235
        %v2251 = vpack.c.b16 %v2239, %v2236
        %v2252 = vpack.c.b16 %v2240, %v2237
        %v2266 = vsel %vm472, %v2180, 0
        %v2269 = vsel %vm472, %v2181, 0
        %v2272 = vsel %vm472, %v2182, 0
        %v2275 = vsel %vm472, %v2183, 0
        %2277 = vmatprep.subr.bf16.mxu0 %v2242
        %2278 = vmatpush1.bf16.msra.mxu0 %v2241
        %2279 = vmatprep.subr.bf16.mxu0 %v2245
        %2280 = vmatpush1.bf16.msra.mxu0 %v2244
        %2281 = vmatprep.subr.bf16.mxu0 %v2248
        %2282 = vmatpush1.bf16.msra.mxu0 %v2247
        %2283 = vmatprep.subr.bf16.mxu0 %v2251
        %2284 = vmatpush1.bf16.msra.mxu0 %v2250
        %2285 = vmatprep.subr.bf16.mxu0 0
        %2286 = vmatpush1.bf16.msra.mxu0 0
        %2287 = vmatprep.subr.bf16.mxu0 0
        %2288 = vmatpush1.bf16.msra.mxu0 0
        %2289 = vmatprep.subr.bf16.mxu0 0
        %2290 = vmatpush1.bf16.msra.mxu0 0
        %2291 = vmatprep.subr.bf16.mxu0 0
        %2292 = vmatpush1.bf16.msra.mxu0 0
        %2293 = vmatprep.subr.bf16.mxu0 0
        %2294 = vmatpush1.bf16.msra.mxu0 0
        %2295 = vmatprep.subr.bf16.mxu0 0
        %2296 = vmatpush1.bf16.msra.mxu0 0
        %2297 = vmatprep.subr.bf16.mxu0 0
        %2298 = vmatpush1.bf16.msra.mxu0 0
        %2299 = vmatprep.subr.bf16.mxu0 0
        %2300 = vmatpush1.bf16.msra.mxu0 0
        %2301 = vmatprep.subr.bf16.mxu0 0
        %2302 = vmatpush1.bf16.msra.mxu0 0
        %2303 = vmatprep.subr.bf16.mxu0 0
        %2304 = vmatpush1.bf16.msra.mxu0 0
        %2305 = vmatprep.subr.bf16.mxu0 0
        %2306 = vmatpush1.bf16.msra.mxu0 0
        %2307 = vmatprep.subr.bf16.mxu0 0
        %2308 = vmatpush1.bf16.msra.mxu0 0
        %2309 = vmatprep.mubr.bf16.mxu0 0
        %2310 = vmatmul.mubr.bf16.gmra.mrb[0].mxu0 %v2266
        %v2311 = vpop.f32.mrb[0].mxu0
        %v2312 = vadd.f32 0.0, %v2311
        %v2313 = vpop.f32.mrb[0].mxu0
        %v2314 = vadd.f32 0.0, %v2313
        %v2315 = vpop.f32.mrb[0].mxu0
        %v2316 = vadd.f32 0.0, %v2315
        %v2317 = vpop.f32.mrb[0].mxu0
        %v2318 = vadd.f32 0.0, %v2317
        %2319 = vmatprep.mubr.bf16.mxu0 0
        %2320 = vmatmul.mubr.bf16.gmra.mrb[0].mxu0 %v2269
        %v2321 = vpop.f32.mrb[0].mxu0
        %v2322 = vadd.f32 0.0, %v2321
        %v2323 = vpop.f32.mrb[0].mxu0
        %v2324 = vadd.f32 0.0, %v2323
        %v2325 = vpop.f32.mrb[0].mxu0
        %v2326 = vadd.f32 0.0, %v2325
        %v2327 = vpop.f32.mrb[0].mxu0
        %v2328 = vadd.f32 0.0, %v2327
        %2329 = vmatprep.mubr.bf16.mxu0 0
        %2330 = vmatmul.mubr.bf16.gmra.mrb[0].mxu0 %v2272
        %v2331 = vpop.f32.mrb[0].mxu0
        %v2332 = vadd.f32 0.0, %v2331
        %v2333 = vpop.f32.mrb[0].mxu0
        %v2334 = vadd.f32 0.0, %v2333
        %v2335 = vpop.f32.mrb[0].mxu0
        %v2336 = vadd.f32 0.0, %v2335
        %v2337 = vpop.f32.mrb[0].mxu0
        %v2338 = vadd.f32 0.0, %v2337
        %2339 = vmatprep.mubr.bf16.mxu0 0
        %2340 = vmatmul.mubr.bf16.gmra.mrb[0].mxu0 %v2275
        %v2341 = vpop.f32.mrb[0].mxu0
        %v2342 = vadd.f32 0.0, %v2341
        %v2343 = vpop.f32.mrb[0].mxu0
        %v2344 = vadd.f32 0.0, %v2343
        %v2345 = vpop.f32.mrb[0].mxu0
        %v2346 = vadd.f32 0.0, %v2345
        %v2347 = vpop.f32.mrb[0].mxu0
        %v2348 = vadd.f32 0.0, %v2347
        %2349 = vdwg.mxu0
        %2350 = vmatprep.subr.bf16.mxu0 0
        %2351 = vmatpush1.bf16.msra.mxu0 %v2243
        %2352 = vmatprep.subr.bf16.mxu0 0
        %2353 = vmatpush1.bf16.msra.mxu0 %v2246
        %2354 = vmatprep.subr.bf16.mxu0 0
        %2355 = vmatpush1.bf16.msra.mxu0 %v2249
        %2356 = vmatprep.subr.bf16.mxu0 0
        %2357 = vmatpush1.bf16.msra.mxu0 %v2252
        %2358 = vmatprep.subr.bf16.mxu0 0
        %2359 = vmatpush1.bf16.msra.mxu0 0
        %2360 = vmatprep.subr.bf16.mxu0 0
        %2361 = vmatpush1.bf16.msra.mxu0 0
        %2362 = vmatprep.subr.bf16.mxu0 0
        %2363 = vmatpush1.bf16.msra.mxu0 0
        %2364 = vmatprep.subr.bf16.mxu0 0
        %2365 = vmatpush1.bf16.msra.mxu0 0
        %2366 = vmatprep.subr.bf16.mxu0 0
        %2367 = vmatpush1.bf16.msra.mxu0 0
        %2368 = vmatprep.subr.bf16.mxu0 0
        %2369 = vmatpush1.bf16.msra.mxu0 0
        %2370 = vmatprep.subr.bf16.mxu0 0
        %2371 = vmatpush1.bf16.msra.mxu0 0
        %2372 = vmatprep.subr.bf16.mxu0 0
        %2373 = vmatpush1.bf16.msra.mxu0 0
        %2374 = vmatprep.subr.bf16.mxu0 0
        %2375 = vmatpush1.bf16.msra.mxu0 0
        %2376 = vmatprep.subr.bf16.mxu0 0
        %2377 = vmatpush1.bf16.msra.mxu0 0
        %2378 = vmatprep.subr.bf16.mxu0 0
        %2379 = vmatpush1.bf16.msra.mxu0 0
        %2380 = vmatprep.subr.bf16.mxu0 0
        %2381 = vmatpush1.bf16.msra.mxu0 0
        %2382 = vmatprep.mubr.bf16.mxu0 0
        %2383 = vmatmul.mubr.bf16.gmra.mrb[0].mxu0 %v2266
        %v2384 = vpop.f32.mrb[0].mxu0
        %v2385 = vadd.f32 0.0, %v2384
        %v2386 = vpop.f32.mrb[0].mxu0
        %v2387 = vpop.f32.mrb[0].mxu0
        %v2388 = vadd.f32 0.0, %v2387
        %v2389 = vpop.f32.mrb[0].mxu0
        %2390 = vmatprep.mubr.bf16.mxu0 0
        %2391 = vmatmul.mubr.bf16.gmra.mrb[0].mxu0 %v2269
        %v2392 = vpop.f32.mrb[0].mxu0
        %v2393 = vadd.f32 0.0, %v2392
        %v2394 = vpop.f32.mrb[0].mxu0
        %v2395 = vpop.f32.mrb[0].mxu0
        %v2396 = vadd.f32 0.0, %v2395
        %v2397 = vpop.f32.mrb[0].mxu0
        %2398 = vmatprep.mubr.bf16.mxu0 0
        %2399 = vmatmul.mubr.bf16.gmra.mrb[0].mxu0 %v2272
        %v2400 = vpop.f32.mrb[0].mxu0
        %v2401 = vadd.f32 0.0, %v2400
        %v2402 = vpop.f32.mrb[0].mxu0
        %v2403 = vpop.f32.mrb[0].mxu0
        %v2404 = vadd.f32 0.0, %v2403
        %v2405 = vpop.f32.mrb[0].mxu0
        %2406 = vmatprep.mubr.bf16.mxu0 0
        %2407 = vmatmul.mubr.bf16.gmra.mrb[0].mxu0 %v2275
        %v2408 = vpop.f32.mrb[0].mxu0
        %v2409 = vadd.f32 0.0, %v2408
        %v2410 = vpop.f32.mrb[0].mxu0
        %v2411 = vpop.f32.mrb[0].mxu0
        %v2412 = vadd.f32 0.0, %v2411
        %v2413 = vpop.f32.mrb[0].mxu0
        %2414 = vdwg.mxu0
        %v2415 = vadd.f32 %v2148, %v2312
        %v2416 = vadd.f32 %v2149, %v2314
        %v2417 = vadd.f32 %v2150, %v2385
        %v2418 = vadd.f32 %v2151, %v2316
        %v2419 = vadd.f32 %v2152, %v2318
        %v2420 = vadd.f32 %v2153, %v2388
        %v2421 = vadd.f32 %v2154, %v2322
        %v2422 = vadd.f32 %v2155, %v2324
        %v2423 = vadd.f32 %v2156, %v2393
        %v2424 = vadd.f32 %v2157, %v2326
        %v2425 = vadd.f32 %v2158, %v2328
        %v2426 = vadd.f32 %v2159, %v2396
        %v2427 = vadd.f32 %v2160, %v2332
        %v2428 = vadd.f32 %v2161, %v2334
        %v2429 = vadd.f32 %v2162, %v2401
        %v2430 = vadd.f32 %v2163, %v2336
        %v2431 = vadd.f32 %v2164, %v2338
        %v2432 = vadd.f32 %v2165, %v2404
        %v2433 = vadd.f32 %v2166, %v2342
        %v2434 = vadd.f32 %v2167, %v2344
        %v2435 = vadd.f32 %v2168, %v2409
        %v2436 = vadd.f32 %v2169, %v2346
        %v2437 = vadd.f32 %v2170, %v2348
        %v2438 = vadd.f32 %v2171, %v2412
        %v2439 = vld [vmem:[%s316 + $0x82] sm:$0xff]
        %v2440 = vld [vmem:[%s316 + $0x8a] sm:$0xff]
        %v2441 = vld [vmem:[%s316 + $0x92] sm:$0xff]
        %v2442 = vld [vmem:[%s316 + $0x9a] sm:$0xff]
        %v2443 = vld [vmem:[%s316 + $0xa2] sm:$0xff]
        %v2444 = vld [vmem:[%s316 + $0xaa] sm:$0xff]
        %v2445 = vld [vmem:[%s316 + $0xb2] sm:$0xff]
        %v2446 = vld [vmem:[%s316 + $0xba] sm:$0xf]
        %v2447 = vpack.c.bf16 %v2440, %v2439
        %v2448 = vpack.c.bf16 %v2442, %v2441
        %v2449 = vpack.c.bf16 %v2444, %v2443
        %v2450 = vpack.c.bf16 %v2446, %v2445
        %s2451 = scalar_lea.vmem %s1, 768
        %v2452 = vld [vmem:[%s2451] sm:$0xff]
        %v2453 = vld [vmem:[%s2451 + $0x8] sm:$0xf]
        %v2454 = vld [vmem:[%s2451 + $0xc] sm:$0xff]
        %v2455 = vld [vmem:[%s2451 + $0x14] sm:$0xf]
        %v2456 = vld [vmem:[%s2451 + $0x18] sm:$0xff]
        %v2457 = vld [vmem:[%s2451 + $0x20] sm:$0xf]
        %v2458 = vld [vmem:[%s2451 + $0x24] sm:$0xff]
        %v2459 = vld [vmem:[%s2451 + $0x2c] sm:$0xf]
        %v2460 = vld [vmem:[%s2451 + $0x30] sm:$0xff]
        %v2461 = vld [vmem:[%s2451 + $0x38] sm:$0xf]
        %v2462 = vld [vmem:[%s2451 + $0x3c] sm:$0xff]
        %v2463 = vld [vmem:[%s2451 + $0x44] sm:$0xf]
        %v2464 = vld [vmem:[%s2451 + $0x48] sm:$0xff]
        %v2465 = vld [vmem:[%s2451 + $0x50] sm:$0xf]
        %v2466 = vld [vmem:[%s2451 + $0x54] sm:$0xff]
        %v2467 = vld [vmem:[%s2451 + $0x5c] sm:$0xf]
        %v2484 = vunpack.c.l.b16 %v2452
        %v2485 = vunpack.c.h.b16 %v2452
        %v2486 = vunpack.c.l.b16 %v2453
        %v2487 = vunpack.c.l.b16 %v2454
        %v2488 = vunpack.c.h.b16 %v2454
        %v2489 = vunpack.c.l.b16 %v2455
        %v2490 = vunpack.c.l.b16 %v2456
        %v2491 = vunpack.c.h.b16 %v2456
        %v2492 = vunpack.c.l.b16 %v2457
        %v2493 = vunpack.c.l.b16 %v2458
        %v2494 = vunpack.c.h.b16 %v2458
        %v2495 = vunpack.c.l.b16 %v2459
        %v2496 = vunpack.c.l.b16 %v2460
        %v2497 = vunpack.c.h.b16 %v2460
        %v2498 = vunpack.c.l.b16 %v2461
        %v2499 = vunpack.c.l.b16 %v2462
        %v2500 = vunpack.c.h.b16 %v2462
        %v2501 = vunpack.c.l.b16 %v2463
        %v2502 = vunpack.c.l.b16 %v2464
        %v2503 = vunpack.c.h.b16 %v2464
        %v2504 = vunpack.c.l.b16 %v2465
        %v2505 = vunpack.c.l.b16 %v2466
        %v2506 = vunpack.c.h.b16 %v2466
        %v2507 = vunpack.c.l.b16 %v2467
        %v2508 = vpack.c.b16 %v2487, %v2484
        %v2509 = vpack.c.b16 %v2488, %v2485
        %v2510 = vpack.c.b16 %v2489, %v2486
        %v2511 = vpack.c.b16 %v2493, %v2490
        %v2512 = vpack.c.b16 %v2494, %v2491
        %v2513 = vpack.c.b16 %v2495, %v2492
        %v2514 = vpack.c.b16 %v2499, %v2496
        %v2515 = vpack.c.b16 %v2500, %v2497
        %v2516 = vpack.c.b16 %v2501, %v2498
        %v2517 = vpack.c.b16 %v2505, %v2502
        %v2518 = vpack.c.b16 %v2506, %v2503
        %v2519 = vpack.c.b16 %v2507, %v2504
        %v2533 = vsel %vm472, %v2447, 0
        %v2536 = vsel %vm472, %v2448, 0
        %v2539 = vsel %vm472, %v2449, 0
        %v2542 = vsel %vm472, %v2450, 0
        %2544 = vmatprep.subr.bf16.mxu0 %v2509
        %2545 = vmatpush1.bf16.msra.mxu0 %v2508
        %2546 = vmatprep.subr.bf16.mxu0 %v2512
        %2547 = vmatpush1.bf16.msra.mxu0 %v2511
        %2548 = vmatprep.subr.bf16.mxu0 %v2515
        %2549 = vmatpush1.bf16.msra.mxu0 %v2514
        %2550 = vmatprep.subr.bf16.mxu0 %v2518
        %2551 = vmatpush1.bf16.msra.mxu0 %v2517
        %2552 = vmatprep.subr.bf16.mxu0 0
        %2553 = vmatpush1.bf16.msra.mxu0 0
        %2554 = vmatprep.subr.bf16.mxu0 0
        %2555 = vmatpush1.bf16.msra.mxu0 0
        %2556 = vmatprep.subr.bf16.mxu0 0
        %2557 = vmatpush1.bf16.msra.mxu0 0
        %2558 = vmatprep.subr.bf16.mxu0 0
        %2559 = vmatpush1.bf16.msra.mxu0 0
        %2560 = vmatprep.subr.bf16.mxu0 0
        %2561 = vmatpush1.bf16.msra.mxu0 0
        %2562 = vmatprep.subr.bf16.mxu0 0
        %2563 = vmatpush1.bf16.msra.mxu0 0
        %2564 = vmatprep.subr.bf16.mxu0 0
        %2565 = vmatpush1.bf16.msra.mxu0 0
        %2566 = vmatprep.subr.bf16.mxu0 0
        %2567 = vmatpush1.bf16.msra.mxu0 0
        %2568 = vmatprep.subr.bf16.mxu0 0
        %2569 = vmatpush1.bf16.msra.mxu0 0
        %2570 = vmatprep.subr.bf16.mxu0 0
        %2571 = vmatpush1.bf16.msra.mxu0 0
        %2572 = vmatprep.subr.bf16.mxu0 0
        %2573 = vmatpush1.bf16.msra.mxu0 0
        %2574 = vmatprep.subr.bf16.mxu0 0
        %2575 = vmatpush1.bf16.msra.mxu0 0
        %2576 = vmatprep.mubr.bf16.mxu0 0
        %2577 = vmatmul.mubr.bf16.gmra.mrb[0].mxu0 %v2533
        %v2578 = vpop.f32.mrb[0].mxu0
        %v2579 = vadd.f32 0.0, %v2578
        %v2580 = vpop.f32.mrb[0].mxu0
        %v2581 = vadd.f32 0.0, %v2580
        %v2582 = vpop.f32.mrb[0].mxu0
        %v2583 = vadd.f32 0.0, %v2582
        %v2584 = vpop.f32.mrb[0].mxu0
        %v2585 = vadd.f32 0.0, %v2584
        %2586 = vmatprep.mubr.bf16.mxu0 0
        %2587 = vmatmul.mubr.bf16.gmra.mrb[0].mxu0 %v2536
        %v2588 = vpop.f32.mrb[0].mxu0
        %v2589 = vadd.f32 0.0, %v2588
        %v2590 = vpop.f32.mrb[0].mxu0
        %v2591 = vadd.f32 0.0, %v2590
        %v2592 = vpop.f32.mrb[0].mxu0
        %v2593 = vadd.f32 0.0, %v2592
        %v2594 = vpop.f32.mrb[0].mxu0
        %v2595 = vadd.f32 0.0, %v2594
        %2596 = vmatprep.mubr.bf16.mxu0 0
        %2597 = vmatmul.mubr.bf16.gmra.mrb[0].mxu0 %v2539
        %v2598 = vpop.f32.mrb[0].mxu0
        %v2599 = vadd.f32 0.0, %v2598
        %v2600 = vpop.f32.mrb[0].mxu0
        %v2601 = vadd.f32 0.0, %v2600
        %v2602 = vpop.f32.mrb[0].mxu0
        %v2603 = vadd.f32 0.0, %v2602
        %v2604 = vpop.f32.mrb[0].mxu0
        %v2605 = vadd.f32 0.0, %v2604
        %2606 = vmatprep.mubr.bf16.mxu0 0
        %2607 = vmatmul.mubr.bf16.gmra.mrb[0].mxu0 %v2542
        %v2608 = vpop.f32.mrb[0].mxu0
        %v2609 = vadd.f32 0.0, %v2608
        %v2610 = vpop.f32.mrb[0].mxu0
        %v2611 = vadd.f32 0.0, %v2610
        %v2612 = vpop.f32.mrb[0].mxu0
        %v2613 = vadd.f32 0.0, %v2612
        %v2614 = vpop.f32.mrb[0].mxu0
        %v2615 = vadd.f32 0.0, %v2614
        %2616 = vdwg.mxu0
        %2617 = vmatprep.subr.bf16.mxu0 0
        %2618 = vmatpush1.bf16.msra.mxu0 %v2510
        %2619 = vmatprep.subr.bf16.mxu0 0
        %2620 = vmatpush1.bf16.msra.mxu0 %v2513
        %2621 = vmatprep.subr.bf16.mxu0 0
        %2622 = vmatpush1.bf16.msra.mxu0 %v2516
        %2623 = vmatprep.subr.bf16.mxu0 0
        %2624 = vmatpush1.bf16.msra.mxu0 %v2519
        %2625 = vmatprep.subr.bf16.mxu0 0
        %2626 = vmatpush1.bf16.msra.mxu0 0
        %2627 = vmatprep.subr.bf16.mxu0 0
        %2628 = vmatpush1.bf16.msra.mxu0 0
        %2629 = vmatprep.subr.bf16.mxu0 0
        %2630 = vmatpush1.bf16.msra.mxu0 0
        %2631 = vmatprep.subr.bf16.mxu0 0
        %2632 = vmatpush1.bf16.msra.mxu0 0
        %2633 = vmatprep.subr.bf16.mxu0 0
        %2634 = vmatpush1.bf16.msra.mxu0 0
        %2635 = vmatprep.subr.bf16.mxu0 0
        %2636 = vmatpush1.bf16.msra.mxu0 0
        %2637 = vmatprep.subr.bf16.mxu0 0
        %2638 = vmatpush1.bf16.msra.mxu0 0
        %2639 = vmatprep.subr.bf16.mxu0 0
        %2640 = vmatpush1.bf16.msra.mxu0 0
        %2641 = vmatprep.subr.bf16.mxu0 0
        %2642 = vmatpush1.bf16.msra.mxu0 0
        %2643 = vmatprep.subr.bf16.mxu0 0
        %2644 = vmatpush1.bf16.msra.mxu0 0
        %2645 = vmatprep.subr.bf16.mxu0 0
        %2646 = vmatpush1.bf16.msra.mxu0 0
        %2647 = vmatprep.subr.bf16.mxu0 0
        %2648 = vmatpush1.bf16.msra.mxu0 0
        %2649 = vmatprep.mubr.bf16.mxu0 0
        %2650 = vmatmul.mubr.bf16.gmra.mrb[0].mxu0 %v2533
        %v2651 = vpop.f32.mrb[0].mxu0
        %v2652 = vadd.f32 0.0, %v2651
        %v2653 = vpop.f32.mrb[0].mxu0
        %v2654 = vpop.f32.mrb[0].mxu0
        %v2655 = vadd.f32 0.0, %v2654
        %v2656 = vpop.f32.mrb[0].mxu0
        %2657 = vmatprep.mubr.bf16.mxu0 0
        %2658 = vmatmul.mubr.bf16.gmra.mrb[0].mxu0 %v2536
        %v2659 = vpop.f32.mrb[0].mxu0
        %v2660 = vadd.f32 0.0, %v2659
        %v2661 = vpop.f32.mrb[0].mxu0
        %v2662 = vpop.f32.mrb[0].mxu0
        %v2663 = vadd.f32 0.0, %v2662
        %v2664 = vpop.f32.mrb[0].mxu0
        %2665 = vmatprep.mubr.bf16.mxu0 0
        %2666 = vmatmul.mubr.bf16.gmra.mrb[0].mxu0 %v2539
        %v2667 = vpop.f32.mrb[0].mxu0
        %v2668 = vadd.f32 0.0, %v2667
        %v2669 = vpop.f32.mrb[0].mxu0
        %v2670 = vpop.f32.mrb[0].mxu0
        %v2671 = vadd.f32 0.0, %v2670
        %v2672 = vpop.f32.mrb[0].mxu0
        %2673 = vmatprep.mubr.bf16.mxu0 0
        %2674 = vmatmul.mubr.bf16.gmra.mrb[0].mxu0 %v2542
        %v2675 = vpop.f32.mrb[0].mxu0
        %v2676 = vadd.f32 0.0, %v2675
        %v2677 = vpop.f32.mrb[0].mxu0
        %v2678 = vpop.f32.mrb[0].mxu0
        %v2679 = vadd.f32 0.0, %v2678
        %v2680 = vpop.f32.mrb[0].mxu0
        %2681 = vdwg.mxu0
        %v2682 = vadd.f32 %v2415, %v2579
        %v2683 = vadd.f32 %v2416, %v2581
        %v2684 = vadd.f32 %v2417, %v2652
        %v2685 = vadd.f32 %v2418, %v2583
        %v2686 = vadd.f32 %v2419, %v2585
        %v2687 = vadd.f32 %v2420, %v2655
        %v2688 = vadd.f32 %v2421, %v2589
        %v2689 = vadd.f32 %v2422, %v2591
        %v2690 = vadd.f32 %v2423, %v2660
        %v2691 = vadd.f32 %v2424, %v2593
        %v2692 = vadd.f32 %v2425, %v2595
        %v2693 = vadd.f32 %v2426, %v2663
        %v2694 = vadd.f32 %v2427, %v2599
        %v2695 = vadd.f32 %v2428, %v2601
        %v2696 = vadd.f32 %v2429, %v2668
        %v2697 = vadd.f32 %v2430, %v2603
        %v2698 = vadd.f32 %v2431, %v2605
        %v2699 = vadd.f32 %v2432, %v2671
        %v2700 = vadd.f32 %v2433, %v2609
        %v2701 = vadd.f32 %v2434, %v2611
        %v2702 = vadd.f32 %v2435, %v2676
        %v2703 = vadd.f32 %v2436, %v2613
        %v2704 = vadd.f32 %v2437, %v2615
        %v2705 = vadd.f32 %v2438, %v2679
        %v2706 = vld [vmem:[%s316 + $0x3] sm:$0xff]
        %v2707 = vld [vmem:[%s316 + $0xb] sm:$0xff]
        %v2708 = vld [vmem:[%s316 + $0x13] sm:$0xff]
        %v2709 = vld [vmem:[%s316 + $0x1b] sm:$0xff]
        %v2710 = vld [vmem:[%s316 + $0x23] sm:$0xff]
        %v2711 = vld [vmem:[%s316 + $0x2b] sm:$0xff]
        %v2712 = vld [vmem:[%s316 + $0x33] sm:$0xff]
        %v2713 = vld [vmem:[%s316 + $0x3b] sm:$0xf]
        %v2714 = vpack.c.bf16 %v2707, %v2706
        %v2715 = vpack.c.bf16 %v2709, %v2708
        %v2716 = vpack.c.bf16 %v2711, %v2710
        %v2717 = vpack.c.bf16 %v2713, %v2712
        %s2718 = scalar_lea.vmem %s1, 864
        %v2719 = vld [vmem:[%s2718] sm:$0xff]
        %v2720 = vld [vmem:[%s2718 + $0x8] sm:$0xf]
        %v2721 = vld [vmem:[%s2718 + $0xc] sm:$0xff]
        %v2722 = vld [vmem:[%s2718 + $0x14] sm:$0xf]
        %v2723 = vld [vmem:[%s2718 + $0x18] sm:$0xff]
        %v2724 = vld [vmem:[%s2718 + $0x20] sm:$0xf]
        %v2725 = vld [vmem:[%s2718 + $0x24] sm:$0xff]
        %v2726 = vld [vmem:[%s2718 + $0x2c] sm:$0xf]
        %v2727 = vld [vmem:[%s2718 + $0x30] sm:$0xff]
        %v2728 = vld [vmem:[%s2718 + $0x38] sm:$0xf]
        %v2729 = vld [vmem:[%s2718 + $0x3c] sm:$0xff]
        %v2730 = vld [vmem:[%s2718 + $0x44] sm:$0xf]
        %v2731 = vld [vmem:[%s2718 + $0x48] sm:$0xff]
        %v2732 = vld [vmem:[%s2718 + $0x50] sm:$0xf]
        %v2733 = vld [vmem:[%s2718 + $0x54] sm:$0xff]
        %v2734 = vld [vmem:[%s2718 + $0x5c] sm:$0xf]
        %v2751 = vunpack.c.l.b16 %v2719
        %v2752 = vunpack.c.h.b16 %v2719
        %v2753 = vunpack.c.l.b16 %v2720
        %v2754 = vunpack.c.l.b16 %v2721
        %v2755 = vunpack.c.h.b16 %v2721
        %v2756 = vunpack.c.l.b16 %v2722
        %v2757 = vunpack.c.l.b16 %v2723
        %v2758 = vunpack.c.h.b16 %v2723
        %v2759 = vunpack.c.l.b16 %v2724
        %v2760 = vunpack.c.l.b16 %v2725
        %v2761 = vunpack.c.h.b16 %v2725
        %v2762 = vunpack.c.l.b16 %v2726
        %v2763 = vunpack.c.l.b16 %v2727
        %v2764 = vunpack.c.h.b16 %v2727
        %v2765 = vunpack.c.l.b16 %v2728
        %v2766 = vunpack.c.l.b16 %v2729
        %v2767 = vunpack.c.h.b16 %v2729
        %v2768 = vunpack.c.l.b16 %v2730
        %v2769 = vunpack.c.l.b16 %v2731
        %v2770 = vunpack.c.h.b16 %v2731
        %v2771 = vunpack.c.l.b16 %v2732
        %v2772 = vunpack.c.l.b16 %v2733
        %v2773 = vunpack.c.h.b16 %v2733
        %v2774 = vunpack.c.l.b16 %v2734
        %v2775 = vpack.c.b16 %v2754, %v2751
        %v2776 = vpack.c.b16 %v2755, %v2752
        %v2777 = vpack.c.b16 %v2756, %v2753
        %v2778 = vpack.c.b16 %v2760, %v2757
        %v2779 = vpack.c.b16 %v2761, %v2758
        %v2780 = vpack.c.b16 %v2762, %v2759
        %v2781 = vpack.c.b16 %v2766, %v2763
        %v2782 = vpack.c.b16 %v2767, %v2764
        %v2783 = vpack.c.b16 %v2768, %v2765
        %v2784 = vpack.c.b16 %v2772, %v2769
        %v2785 = vpack.c.b16 %v2773, %v2770
        %v2786 = vpack.c.b16 %v2774, %v2771
        %v2800 = vsel %vm472, %v2714, 0
        %v2803 = vsel %vm472, %v2715, 0
        %v2806 = vsel %vm472, %v2716, 0
        %v2809 = vsel %vm472, %v2717, 0
        %2811 = vmatprep.subr.bf16.mxu0 %v2776
        %2812 = vmatpush1.bf16.msra.mxu0 %v2775
        %2813 = vmatprep.subr.bf16.mxu0 %v2779
        %2814 = vmatpush1.bf16.msra.mxu0 %v2778
        %2815 = vmatprep.subr.bf16.mxu0 %v2782
        %2816 = vmatpush1.bf16.msra.mxu0 %v2781
        %2817 = vmatprep.subr.bf16.mxu0 %v2785
        %2818 = vmatpush1.bf16.msra.mxu0 %v2784
        %2819 = vmatprep.subr.bf16.mxu0 0
        %2820 = vmatpush1.bf16.msra.mxu0 0
        %2821 = vmatprep.subr.bf16.mxu0 0
        %2822 = vmatpush1.bf16.msra.mxu0 0
        %2823 = vmatprep.subr.bf16.mxu0 0
        %2824 = vmatpush1.bf16.msra.mxu0 0
        %2825 = vmatprep.subr.bf16.mxu0 0
        %2826 = vmatpush1.bf16.msra.mxu0 0
        %2827 = vmatprep.subr.bf16.mxu0 0
        %2828 = vmatpush1.bf16.msra.mxu0 0
        %2829 = vmatprep.subr.bf16.mxu0 0
        %2830 = vmatpush1.bf16.msra.mxu0 0
        %2831 = vmatprep.subr.bf16.mxu0 0
        %2832 = vmatpush1.bf16.msra.mxu0 0
        %2833 = vmatprep.subr.bf16.mxu0 0
        %2834 = vmatpush1.bf16.msra.mxu0 0
        %2835 = vmatprep.subr.bf16.mxu0 0
        %2836 = vmatpush1.bf16.msra.mxu0 0
        %2837 = vmatprep.subr.bf16.mxu0 0
        %2838 = vmatpush1.bf16.msra.mxu0 0
        %2839 = vmatprep.subr.bf16.mxu0 0
        %2840 = vmatpush1.bf16.msra.mxu0 0
        %2841 = vmatprep.subr.bf16.mxu0 0
        %2842 = vmatpush1.bf16.msra.mxu0 0
        %2843 = vmatprep.mubr.bf16.mxu0 0
        %2844 = vmatmul.mubr.bf16.gmra.mrb[0].mxu0 %v2800
        %v2845 = vpop.f32.mrb[0].mxu0
        %v2846 = vadd.f32 0.0, %v2845
        %v2847 = vpop.f32.mrb[0].mxu0
        %v2848 = vadd.f32 0.0, %v2847
        %v2849 = vpop.f32.mrb[0].mxu0
        %v2850 = vadd.f32 0.0, %v2849
        %v2851 = vpop.f32.mrb[0].mxu0
        %v2852 = vadd.f32 0.0, %v2851
        %2853 = vmatprep.mubr.bf16.mxu0 0
        %2854 = vmatmul.mubr.bf16.gmra.mrb[0].mxu0 %v2803
        %v2855 = vpop.f32.mrb[0].mxu0
        %v2856 = vadd.f32 0.0, %v2855
        %v2857 = vpop.f32.mrb[0].mxu0
        %v2858 = vadd.f32 0.0, %v2857
        %v2859 = vpop.f32.mrb[0].mxu0
        %v2860 = vadd.f32 0.0, %v2859
        %v2861 = vpop.f32.mrb[0].mxu0
        %v2862 = vadd.f32 0.0, %v2861
        %2863 = vmatprep.mubr.bf16.mxu0 0
        %2864 = vmatmul.mubr.bf16.gmra.mrb[0].mxu0 %v2806
        %v2865 = vpop.f32.mrb[0].mxu0
        %v2866 = vadd.f32 0.0, %v2865
        %v2867 = vpop.f32.mrb[0].mxu0
        %v2868 = vadd.f32 0.0, %v2867
        %v2869 = vpop.f32.mrb[0].mxu0
        %v2870 = vadd.f32 0.0, %v2869
        %v2871 = vpop.f32.mrb[0].mxu0
        %v2872 = vadd.f32 0.0, %v2871
        %2873 = vmatprep.mubr.bf16.mxu0 0
        %2874 = vmatmul.mubr.bf16.gmra.mrb[0].mxu0 %v2809
        %v2875 = vpop.f32.mrb[0].mxu0
        %v2876 = vadd.f32 0.0, %v2875
        %v2877 = vpop.f32.mrb[0].mxu0
        %v2878 = vadd.f32 0.0, %v2877
        %v2879 = vpop.f32.mrb[0].mxu0
        %v2880 = vadd.f32 0.0, %v2879
        %v2881 = vpop.f32.mrb[0].mxu0
        %v2882 = vadd.f32 0.0, %v2881
        %2883 = vdwg.mxu0
        %2884 = vmatprep.subr.bf16.mxu0 0
        %2885 = vmatpush1.bf16.msra.mxu0 %v2777
        %2886 = vmatprep.subr.bf16.mxu0 0
        %2887 = vmatpush1.bf16.msra.mxu0 %v2780
        %2888 = vmatprep.subr.bf16.mxu0 0
        %2889 = vmatpush1.bf16.msra.mxu0 %v2783
        %2890 = vmatprep.subr.bf16.mxu0 0
        %2891 = vmatpush1.bf16.msra.mxu0 %v2786
        %2892 = vmatprep.subr.bf16.mxu0 0
        %2893 = vmatpush1.bf16.msra.mxu0 0
        %2894 = vmatprep.subr.bf16.mxu0 0
        %2895 = vmatpush1.bf16.msra.mxu0 0
        %2896 = vmatprep.subr.bf16.mxu0 0
        %2897 = vmatpush1.bf16.msra.mxu0 0
        %2898 = vmatprep.subr.bf16.mxu0 0
        %2899 = vmatpush1.bf16.msra.mxu0 0
        %2900 = vmatprep.subr.bf16.mxu0 0
        %2901 = vmatpush1.bf16.msra.mxu0 0
        %2902 = vmatprep.subr.bf16.mxu0 0
        %2903 = vmatpush1.bf16.msra.mxu0 0
        %2904 = vmatprep.subr.bf16.mxu0 0
        %2905 = vmatpush1.bf16.msra.mxu0 0
        %2906 = vmatprep.subr.bf16.mxu0 0
        %2907 = vmatpush1.bf16.msra.mxu0 0
        %2908 = vmatprep.subr.bf16.mxu0 0
        %2909 = vmatpush1.bf16.msra.mxu0 0
        %2910 = vmatprep.subr.bf16.mxu0 0
        %2911 = vmatpush1.bf16.msra.mxu0 0
        %2912 = vmatprep.subr.bf16.mxu0 0
        %2913 = vmatpush1.bf16.msra.mxu0 0
        %2914 = vmatprep.subr.bf16.mxu0 0
        %2915 = vmatpush1.bf16.msra.mxu0 0
        %2916 = vmatprep.mubr.bf16.mxu0 0
        %2917 = vmatmul.mubr.bf16.gmra.mrb[0].mxu0 %v2800
        %v2918 = vpop.f32.mrb[0].mxu0
        %v2919 = vadd.f32 0.0, %v2918
        %v2920 = vpop.f32.mrb[0].mxu0
        %v2921 = vpop.f32.mrb[0].mxu0
        %v2922 = vadd.f32 0.0, %v2921
        %v2923 = vpop.f32.mrb[0].mxu0
        %2924 = vmatprep.mubr.bf16.mxu0 0
        %2925 = vmatmul.mubr.bf16.gmra.mrb[0].mxu0 %v2803
        %v2926 = vpop.f32.mrb[0].mxu0
        %v2927 = vadd.f32 0.0, %v2926
        %v2928 = vpop.f32.mrb[0].mxu0
        %v2929 = vpop.f32.mrb[0].mxu0
        %v2930 = vadd.f32 0.0, %v2929
        %v2931 = vpop.f32.mrb[0].mxu0
        %2932 = vmatprep.mubr.bf16.mxu0 0
        %2933 = vmatmul.mubr.bf16.gmra.mrb[0].mxu0 %v2806
        %v2934 = vpop.f32.mrb[0].mxu0
        %v2935 = vadd.f32 0.0, %v2934
        %v2936 = vpop.f32.mrb[0].mxu0
        %v2937 = vpop.f32.mrb[0].mxu0
        %v2938 = vadd.f32 0.0, %v2937
        %v2939 = vpop.f32.mrb[0].mxu0
        %2940 = vmatprep.mubr.bf16.mxu0 0
        %2941 = vmatmul.mubr.bf16.gmra.mrb[0].mxu0 %v2809
        %v2942 = vpop.f32.mrb[0].mxu0
        %v2943 = vadd.f32 0.0, %v2942
        %v2944 = vpop.f32.mrb[0].mxu0
        %v2945 = vpop.f32.mrb[0].mxu0
        %v2946 = vadd.f32 0.0, %v2945
        %v2947 = vpop.f32.mrb[0].mxu0
        %2948 = vdwg.mxu0
        %v2949 = vadd.f32 %v2682, %v2846
        %v2950 = vadd.f32 %v2683, %v2848
        %v2951 = vadd.f32 %v2684, %v2919
        %v2952 = vadd.f32 %v2685, %v2850
        %v2953 = vadd.f32 %v2686, %v2852
        %v2954 = vadd.f32 %v2687, %v2922
        %v2955 = vadd.f32 %v2688, %v2856
        %v2956 = vadd.f32 %v2689, %v2858
        %v2957 = vadd.f32 %v2690, %v2927
        %v2958 = vadd.f32 %v2691, %v2860
        %v2959 = vadd.f32 %v2692, %v2862
        %v2960 = vadd.f32 %v2693, %v2930
        %v2961 = vadd.f32 %v2694, %v2866
        %v2962 = vadd.f32 %v2695, %v2868
        %v2963 = vadd.f32 %v2696, %v2935
        %v2964 = vadd.f32 %v2697, %v2870
        %v2965 = vadd.f32 %v2698, %v2872
        %v2966 = vadd.f32 %v2699, %v2938
        %v2967 = vadd.f32 %v2700, %v2876
        %v2968 = vadd.f32 %v2701, %v2878
        %v2969 = vadd.f32 %v2702, %v2943
        %v2970 = vadd.f32 %v2703, %v2880
        %v2971 = vadd.f32 %v2704, %v2882
        %v2972 = vadd.f32 %v2705, %v2946
        %v2973 = vld [vmem:[%s316 + $0x43] sm:$0xff]
        %v2974 = vld [vmem:[%s316 + $0x4b] sm:$0xff]
        %v2975 = vld [vmem:[%s316 + $0x53] sm:$0xff]
        %v2976 = vld [vmem:[%s316 + $0x5b] sm:$0xff]
        %v2977 = vld [vmem:[%s316 + $0x63] sm:$0xff]
        %v2978 = vld [vmem:[%s316 + $0x6b] sm:$0xff]
        %v2979 = vld [vmem:[%s316 + $0x73] sm:$0xff]
        %v2980 = vld [vmem:[%s316 + $0x7b] sm:$0xf]
        %v2981 = vpack.c.bf16 %v2974, %v2973
        %v2982 = vpack.c.bf16 %v2976, %v2975
        %v2983 = vpack.c.bf16 %v2978, %v2977
        %v2984 = vpack.c.bf16 %v2980, %v2979
        %s2985 = scalar_lea.vmem %s1, 960
        %v2986 = vld [vmem:[%s2985] sm:$0xff]
        %v2987 = vld [vmem:[%s2985 + $0x8] sm:$0xf]
        %v2988 = vld [vmem:[%s2985 + $0xc] sm:$0xff]
        %v2989 = vld [vmem:[%s2985 + $0x14] sm:$0xf]
        %v2990 = vld [vmem:[%s2985 + $0x18] sm:$0xff]
        %v2991 = vld [vmem:[%s2985 + $0x20] sm:$0xf]
        %v2992 = vld [vmem:[%s2985 + $0x24] sm:$0xff]
        %v2993 = vld [vmem:[%s2985 + $0x2c] sm:$0xf]
        %v2994 = vld [vmem:[%s2985 + $0x30] sm:$0xff]
        %v2995 = vld [vmem:[%s2985 + $0x38] sm:$0xf]
        %v2996 = vld [vmem:[%s2985 + $0x3c] sm:$0xff]
        %v2997 = vld [vmem:[%s2985 + $0x44] sm:$0xf]
        %v2998 = vld [vmem:[%s2985 + $0x48] sm:$0xff]
        %v2999 = vld [vmem:[%s2985 + $0x50] sm:$0xf]
        %v3000 = vld [vmem:[%s2985 + $0x54] sm:$0xff]
        %v3001 = vld [vmem:[%s2985 + $0x5c] sm:$0xf]
        %v3018 = vunpack.c.l.b16 %v2986
        %v3019 = vunpack.c.h.b16 %v2986
        %v3020 = vunpack.c.l.b16 %v2987
        %v3021 = vunpack.c.l.b16 %v2988
        %v3022 = vunpack.c.h.b16 %v2988
        %v3023 = vunpack.c.l.b16 %v2989
        %v3024 = vunpack.c.l.b16 %v2990
        %v3025 = vunpack.c.h.b16 %v2990
        %v3026 = vunpack.c.l.b16 %v2991
        %v3027 = vunpack.c.l.b16 %v2992
        %v3028 = vunpack.c.h.b16 %v2992
        %v3029 = vunpack.c.l.b16 %v2993
        %v3030 = vunpack.c.l.b16 %v2994
        %v3031 = vunpack.c.h.b16 %v2994
        %v3032 = vunpack.c.l.b16 %v2995
        %v3033 = vunpack.c.l.b16 %v2996
        %v3034 = vunpack.c.h.b16 %v2996
        %v3035 = vunpack.c.l.b16 %v2997
        %v3036 = vunpack.c.l.b16 %v2998
        %v3037 = vunpack.c.h.b16 %v2998
        %v3038 = vunpack.c.l.b16 %v2999
        %v3039 = vunpack.c.l.b16 %v3000
        %v3040 = vunpack.c.h.b16 %v3000
        %v3041 = vunpack.c.l.b16 %v3001
        %v3042 = vpack.c.b16 %v3021, %v3018
        %v3043 = vpack.c.b16 %v3022, %v3019
        %v3044 = vpack.c.b16 %v3023, %v3020
        %v3045 = vpack.c.b16 %v3027, %v3024
        %v3046 = vpack.c.b16 %v3028, %v3025
        %v3047 = vpack.c.b16 %v3029, %v3026
        %v3048 = vpack.c.b16 %v3033, %v3030
        %v3049 = vpack.c.b16 %v3034, %v3031
        %v3050 = vpack.c.b16 %v3035, %v3032
        %v3051 = vpack.c.b16 %v3039, %v3036
        %v3052 = vpack.c.b16 %v3040, %v3037
        %v3053 = vpack.c.b16 %v3041, %v3038
        %v3067 = vsel %vm472, %v2981, 0
        %v3070 = vsel %vm472, %v2982, 0
        %v3073 = vsel %vm472, %v2983, 0
        %v3076 = vsel %vm472, %v2984, 0
        %3078 = vmatprep.subr.bf16.mxu0 %v3043
        %3079 = vmatpush1.bf16.msra.mxu0 %v3042
        %3080 = vmatprep.subr.bf16.mxu0 %v3046
        %3081 = vmatpush1.bf16.msra.mxu0 %v3045
        %3082 = vmatprep.subr.bf16.mxu0 %v3049
        %3083 = vmatpush1.bf16.msra.mxu0 %v3048
        %3084 = vmatprep.subr.bf16.mxu0 %v3052
        %3085 = vmatpush1.bf16.msra.mxu0 %v3051
        %3086 = vmatprep.subr.bf16.mxu0 0
        %3087 = vmatpush1.bf16.msra.mxu0 0
        %3088 = vmatprep.subr.bf16.mxu0 0
        %3089 = vmatpush1.bf16.msra.mxu0 0
        %3090 = vmatprep.subr.bf16.mxu0 0
        %3091 = vmatpush1.bf16.msra.mxu0 0
        %3092 = vmatprep.subr.bf16.mxu0 0
        %3093 = vmatpush1.bf16.msra.mxu0 0
        %3094 = vmatprep.subr.bf16.mxu0 0
        %3095 = vmatpush1.bf16.msra.mxu0 0
        %3096 = vmatprep.subr.bf16.mxu0 0
        %3097 = vmatpush1.bf16.msra.mxu0 0
        %3098 = vmatprep.subr.bf16.mxu0 0
        %3099 = vmatpush1.bf16.msra.mxu0 0
        %3100 = vmatprep.subr.bf16.mxu0 0
        %3101 = vmatpush1.bf16.msra.mxu0 0
        %3102 = vmatprep.subr.bf16.mxu0 0
        %3103 = vmatpush1.bf16.msra.mxu0 0
        %3104 = vmatprep.subr.bf16.mxu0 0
        %3105 = vmatpush1.bf16.msra.mxu0 0
        %3106 = vmatprep.subr.bf16.mxu0 0
        %3107 = vmatpush1.bf16.msra.mxu0 0
        %3108 = vmatprep.subr.bf16.mxu0 0
        %3109 = vmatpush1.bf16.msra.mxu0 0
        %3110 = vmatprep.mubr.bf16.mxu0 0
        %3111 = vmatmul.mubr.bf16.gmra.mrb[0].mxu0 %v3067
        %v3112 = vpop.f32.mrb[0].mxu0
        %v3113 = vadd.f32 0.0, %v3112
        %v3114 = vpop.f32.mrb[0].mxu0
        %v3115 = vadd.f32 0.0, %v3114
        %v3116 = vpop.f32.mrb[0].mxu0
        %v3117 = vadd.f32 0.0, %v3116
        %v3118 = vpop.f32.mrb[0].mxu0
        %v3119 = vadd.f32 0.0, %v3118
        %3120 = vmatprep.mubr.bf16.mxu0 0
        %3121 = vmatmul.mubr.bf16.gmra.mrb[0].mxu0 %v3070
        %v3122 = vpop.f32.mrb[0].mxu0
        %v3123 = vadd.f32 0.0, %v3122
        %v3124 = vpop.f32.mrb[0].mxu0
        %v3125 = vadd.f32 0.0, %v3124
        %v3126 = vpop.f32.mrb[0].mxu0
        %v3127 = vadd.f32 0.0, %v3126
        %v3128 = vpop.f32.mrb[0].mxu0
        %v3129 = vadd.f32 0.0, %v3128
        %3130 = vmatprep.mubr.bf16.mxu0 0
        %3131 = vmatmul.mubr.bf16.gmra.mrb[0].mxu0 %v3073
        %v3132 = vpop.f32.mrb[0].mxu0
        %v3133 = vadd.f32 0.0, %v3132
        %v3134 = vpop.f32.mrb[0].mxu0
        %v3135 = vadd.f32 0.0, %v3134
        %v3136 = vpop.f32.mrb[0].mxu0
        %v3137 = vadd.f32 0.0, %v3136
        %v3138 = vpop.f32.mrb[0].mxu0
        %v3139 = vadd.f32 0.0, %v3138
        %3140 = vmatprep.mubr.bf16.mxu0 0
        %3141 = vmatmul.mubr.bf16.gmra.mrb[0].mxu0 %v3076
        %v3142 = vpop.f32.mrb[0].mxu0
        %v3143 = vadd.f32 0.0, %v3142
        %v3144 = vpop.f32.mrb[0].mxu0
        %v3145 = vadd.f32 0.0, %v3144
        %v3146 = vpop.f32.mrb[0].mxu0
        %v3147 = vadd.f32 0.0, %v3146
        %v3148 = vpop.f32.mrb[0].mxu0
        %v3149 = vadd.f32 0.0, %v3148
        %3150 = vdwg.mxu0
        %3151 = vmatprep.subr.bf16.mxu0 0
        %3152 = vmatpush1.bf16.msra.mxu0 %v3044
        %3153 = vmatprep.subr.bf16.mxu0 0
        %3154 = vmatpush1.bf16.msra.mxu0 %v3047
        %3155 = vmatprep.subr.bf16.mxu0 0
        %3156 = vmatpush1.bf16.msra.mxu0 %v3050
        %3157 = vmatprep.subr.bf16.mxu0 0
        %3158 = vmatpush1.bf16.msra.mxu0 %v3053
        %3159 = vmatprep.subr.bf16.mxu0 0
        %3160 = vmatpush1.bf16.msra.mxu0 0
        %3161 = vmatprep.subr.bf16.mxu0 0
        %3162 = vmatpush1.bf16.msra.mxu0 0
        %3163 = vmatprep.subr.bf16.mxu0 0
        %3164 = vmatpush1.bf16.msra.mxu0 0
        %3165 = vmatprep.subr.bf16.mxu0 0
        %3166 = vmatpush1.bf16.msra.mxu0 0
        %3167 = vmatprep.subr.bf16.mxu0 0
        %3168 = vmatpush1.bf16.msra.mxu0 0
        %3169 = vmatprep.subr.bf16.mxu0 0
        %3170 = vmatpush1.bf16.msra.mxu0 0
        %3171 = vmatprep.subr.bf16.mxu0 0
        %3172 = vmatpush1.bf16.msra.mxu0 0
        %3173 = vmatprep.subr.bf16.mxu0 0
        %3174 = vmatpush1.bf16.msra.mxu0 0
        %3175 = vmatprep.subr.bf16.mxu0 0
        %3176 = vmatpush1.bf16.msra.mxu0 0
        %3177 = vmatprep.subr.bf16.mxu0 0
        %3178 = vmatpush1.bf16.msra.mxu0 0
        %3179 = vmatprep.subr.bf16.mxu0 0
        %3180 = vmatpush1.bf16.msra.mxu0 0
        %3181 = vmatprep.subr.bf16.mxu0 0
        %3182 = vmatpush1.bf16.msra.mxu0 0
        %3183 = vmatprep.mubr.bf16.mxu0 0
        %3184 = vmatmul.mubr.bf16.gmra.mrb[0].mxu0 %v3067
        %v3185 = vpop.f32.mrb[0].mxu0
        %v3186 = vadd.f32 0.0, %v3185
        %v3187 = vpop.f32.mrb[0].mxu0
        %v3188 = vpop.f32.mrb[0].mxu0
        %v3189 = vadd.f32 0.0, %v3188
        %v3190 = vpop.f32.mrb[0].mxu0
        %3191 = vmatprep.mubr.bf16.mxu0 0
        %3192 = vmatmul.mubr.bf16.gmra.mrb[0].mxu0 %v3070
        %v3193 = vpop.f32.mrb[0].mxu0
        %v3194 = vadd.f32 0.0, %v3193
        %v3195 = vpop.f32.mrb[0].mxu0
        %v3196 = vpop.f32.mrb[0].mxu0
        %v3197 = vadd.f32 0.0, %v3196
        %v3198 = vpop.f32.mrb[0].mxu0
        %3199 = vmatprep.mubr.bf16.mxu0 0
        %3200 = vmatmul.mubr.bf16.gmra.mrb[0].mxu0 %v3073
        %v3201 = vpop.f32.mrb[0].mxu0
        %v3202 = vadd.f32 0.0, %v3201
        %v3203 = vpop.f32.mrb[0].mxu0
        %v3204 = vpop.f32.mrb[0].mxu0
        %v3205 = vadd.f32 0.0, %v3204
        %v3206 = vpop.f32.mrb[0].mxu0
        %3207 = vmatprep.mubr.bf16.mxu0 0
        %3208 = vmatmul.mubr.bf16.gmra.mrb[0].mxu0 %v3076
        %v3209 = vpop.f32.mrb[0].mxu0
        %v3210 = vadd.f32 0.0, %v3209
        %v3211 = vpop.f32.mrb[0].mxu0
        %v3212 = vpop.f32.mrb[0].mxu0
        %v3213 = vadd.f32 0.0, %v3212
        %v3214 = vpop.f32.mrb[0].mxu0
        %3215 = vdwg.mxu0
        %v3216 = vadd.f32 %v2949, %v3113
        %v3217 = vadd.f32 %v2950, %v3115
        %v3218 = vadd.f32 %v2951, %v3186
        %v3219 = vadd.f32 %v2952, %v3117
        %v3220 = vadd.f32 %v2953, %v3119
        %v3221 = vadd.f32 %v2954, %v3189
        %v3222 = vadd.f32 %v2955, %v3123
        %v3223 = vadd.f32 %v2956, %v3125
        %v3224 = vadd.f32 %v2957, %v3194
        %v3225 = vadd.f32 %v2958, %v3127
        %v3226 = vadd.f32 %v2959, %v3129
        %v3227 = vadd.f32 %v2960, %v3197
        %v3228 = vadd.f32 %v2961, %v3133
        %v3229 = vadd.f32 %v2962, %v3135
        %v3230 = vadd.f32 %v2963, %v3202
        %v3231 = vadd.f32 %v2964, %v3137
        %v3232 = vadd.f32 %v2965, %v3139
        %v3233 = vadd.f32 %v2966, %v3205
        %v3234 = vadd.f32 %v2967, %v3143
        %v3235 = vadd.f32 %v2968, %v3145
        %v3236 = vadd.f32 %v2969, %v3210
        %v3237 = vadd.f32 %v2970, %v3147
        %v3238 = vadd.f32 %v2971, %v3149
        %v3239 = vadd.f32 %v2972, %v3213
        %v3240 = vld [vmem:[%s316 + $0x83] sm:$0xff]
        %v3241 = vld [vmem:[%s316 + $0x8b] sm:$0xff]
        %v3242 = vld [vmem:[%s316 + $0x93] sm:$0xff]
        %v3243 = vld [vmem:[%s316 + $0x9b] sm:$0xff]
        %v3244 = vld [vmem:[%s316 + $0xa3] sm:$0xff]
        %v3245 = vld [vmem:[%s316 + $0xab] sm:$0xff]
        %v3246 = vld [vmem:[%s316 + $0xb3] sm:$0xff]
        %v3247 = vld [vmem:[%s316 + $0xbb] sm:$0xf]
        %v3248 = vpack.c.bf16 %v3241, %v3240
        %v3249 = vpack.c.bf16 %v3243, %v3242
        %v3250 = vpack.c.bf16 %v3245, %v3244
        %v3251 = vpack.c.bf16 %v3247, %v3246
        %s3252 = scalar_lea.vmem %s1, 1056
        %v3253 = vld [vmem:[%s3252] sm:$0xff]
        %v3254 = vld [vmem:[%s3252 + $0x8] sm:$0xf]
        %v3255 = vld [vmem:[%s3252 + $0xc] sm:$0xff]
        %v3256 = vld [vmem:[%s3252 + $0x14] sm:$0xf]
        %v3257 = vld [vmem:[%s3252 + $0x18] sm:$0xff]
        %v3258 = vld [vmem:[%s3252 + $0x20] sm:$0xf]
        %v3259 = vld [vmem:[%s3252 + $0x24] sm:$0xff]
        %v3260 = vld [vmem:[%s3252 + $0x2c] sm:$0xf]
        %v3261 = vld [vmem:[%s3252 + $0x30] sm:$0xff]
        %v3262 = vld [vmem:[%s3252 + $0x38] sm:$0xf]
        %v3263 = vld [vmem:[%s3252 + $0x3c] sm:$0xff]
        %v3264 = vld [vmem:[%s3252 + $0x44] sm:$0xf]
        %v3265 = vld [vmem:[%s3252 + $0x48] sm:$0xff]
        %v3266 = vld [vmem:[%s3252 + $0x50] sm:$0xf]
        %v3267 = vld [vmem:[%s3252 + $0x54] sm:$0xff]
        %v3268 = vld [vmem:[%s3252 + $0x5c] sm:$0xf]
        %v3285 = vunpack.c.l.b16 %v3253
        %v3286 = vunpack.c.h.b16 %v3253
        %v3287 = vunpack.c.l.b16 %v3254
        %v3288 = vunpack.c.l.b16 %v3255
        %v3289 = vunpack.c.h.b16 %v3255
        %v3290 = vunpack.c.l.b16 %v3256
        %v3291 = vunpack.c.l.b16 %v3257
        %v3292 = vunpack.c.h.b16 %v3257
        %v3293 = vunpack.c.l.b16 %v3258
        %v3294 = vunpack.c.l.b16 %v3259
        %v3295 = vunpack.c.h.b16 %v3259
        %v3296 = vunpack.c.l.b16 %v3260
        %v3297 = vunpack.c.l.b16 %v3261
        %v3298 = vunpack.c.h.b16 %v3261
        %v3299 = vunpack.c.l.b16 %v3262
        %v3300 = vunpack.c.l.b16 %v3263
        %v3301 = vunpack.c.h.b16 %v3263
        %v3302 = vunpack.c.l.b16 %v3264
        %v3303 = vunpack.c.l.b16 %v3265
        %v3304 = vunpack.c.h.b16 %v3265
        %v3305 = vunpack.c.l.b16 %v3266
        %v3306 = vunpack.c.l.b16 %v3267
        %v3307 = vunpack.c.h.b16 %v3267
        %v3308 = vunpack.c.l.b16 %v3268
        %v3309 = vpack.c.b16 %v3288, %v3285
        %v3310 = vpack.c.b16 %v3289, %v3286
        %v3311 = vpack.c.b16 %v3290, %v3287
        %v3312 = vpack.c.b16 %v3294, %v3291
        %v3313 = vpack.c.b16 %v3295, %v3292
        %v3314 = vpack.c.b16 %v3296, %v3293
        %v3315 = vpack.c.b16 %v3300, %v3297
        %v3316 = vpack.c.b16 %v3301, %v3298
        %v3317 = vpack.c.b16 %v3302, %v3299
        %v3318 = vpack.c.b16 %v3306, %v3303
        %v3319 = vpack.c.b16 %v3307, %v3304
        %v3320 = vpack.c.b16 %v3308, %v3305
        %v3334 = vsel %vm472, %v3248, 0
        %v3337 = vsel %vm472, %v3249, 0
        %v3340 = vsel %vm472, %v3250, 0
        %v3343 = vsel %vm472, %v3251, 0
        %3345 = vmatprep.subr.bf16.mxu0 %v3310
        %3346 = vmatpush1.bf16.msra.mxu0 %v3309
        %3347 = vmatprep.subr.bf16.mxu0 %v3313
        %3348 = vmatpush1.bf16.msra.mxu0 %v3312
        %3349 = vmatprep.subr.bf16.mxu0 %v3316
        %3350 = vmatpush1.bf16.msra.mxu0 %v3315
        %3351 = vmatprep.subr.bf16.mxu0 %v3319
        %3352 = vmatpush1.bf16.msra.mxu0 %v3318
        %3353 = vmatprep.subr.bf16.mxu0 0
        %3354 = vmatpush1.bf16.msra.mxu0 0
        %3355 = vmatprep.subr.bf16.mxu0 0
        %3356 = vmatpush1.bf16.msra.mxu0 0
        %3357 = vmatprep.subr.bf16.mxu0 0
        %3358 = vmatpush1.bf16.msra.mxu0 0
        %3359 = vmatprep.subr.bf16.mxu0 0
        %3360 = vmatpush1.bf16.msra.mxu0 0
        %3361 = vmatprep.subr.bf16.mxu0 0
        %3362 = vmatpush1.bf16.msra.mxu0 0
        %3363 = vmatprep.subr.bf16.mxu0 0
        %3364 = vmatpush1.bf16.msra.mxu0 0
        %3365 = vmatprep.subr.bf16.mxu0 0
        %3366 = vmatpush1.bf16.msra.mxu0 0
        %3367 = vmatprep.subr.bf16.mxu0 0
        %3368 = vmatpush1.bf16.msra.mxu0 0
        %3369 = vmatprep.subr.bf16.mxu0 0
        %3370 = vmatpush1.bf16.msra.mxu0 0
        %3371 = vmatprep.subr.bf16.mxu0 0
        %3372 = vmatpush1.bf16.msra.mxu0 0
        %3373 = vmatprep.subr.bf16.mxu0 0
        %3374 = vmatpush1.bf16.msra.mxu0 0
        %3375 = vmatprep.subr.bf16.mxu0 0
        %3376 = vmatpush1.bf16.msra.mxu0 0
        %3377 = vmatprep.mubr.bf16.mxu0 0
        %3378 = vmatmul.mubr.bf16.gmra.mrb[0].mxu0 %v3334
        %v3379 = vpop.f32.mrb[0].mxu0
        %v3380 = vadd.f32 0.0, %v3379
        %v3381 = vpop.f32.mrb[0].mxu0
        %v3382 = vadd.f32 0.0, %v3381
        %v3383 = vpop.f32.mrb[0].mxu0
        %v3384 = vadd.f32 0.0, %v3383
        %v3385 = vpop.f32.mrb[0].mxu0
        %v3386 = vadd.f32 0.0, %v3385
        %3387 = vmatprep.mubr.bf16.mxu0 0
        %3388 = vmatmul.mubr.bf16.gmra.mrb[0].mxu0 %v3337
        %v3389 = vpop.f32.mrb[0].mxu0
        %v3390 = vadd.f32 0.0, %v3389
        %v3391 = vpop.f32.mrb[0].mxu0
        %v3392 = vadd.f32 0.0, %v3391
        %v3393 = vpop.f32.mrb[0].mxu0
        %v3394 = vadd.f32 0.0, %v3393
        %v3395 = vpop.f32.mrb[0].mxu0
        %v3396 = vadd.f32 0.0, %v3395
        %3397 = vmatprep.mubr.bf16.mxu0 0
        %3398 = vmatmul.mubr.bf16.gmra.mrb[0].mxu0 %v3340
        %v3399 = vpop.f32.mrb[0].mxu0
        %v3400 = vadd.f32 0.0, %v3399
        %v3401 = vpop.f32.mrb[0].mxu0
        %v3402 = vadd.f32 0.0, %v3401
        %v3403 = vpop.f32.mrb[0].mxu0
        %v3404 = vadd.f32 0.0, %v3403
        %v3405 = vpop.f32.mrb[0].mxu0
        %v3406 = vadd.f32 0.0, %v3405
        %3407 = vmatprep.mubr.bf16.mxu0 0
        %3408 = vmatmul.mubr.bf16.gmra.mrb[0].mxu0 %v3343
        %v3409 = vpop.f32.mrb[0].mxu0
        %v3410 = vadd.f32 0.0, %v3409
        %v3411 = vpop.f32.mrb[0].mxu0
        %v3412 = vadd.f32 0.0, %v3411
        %v3413 = vpop.f32.mrb[0].mxu0
        %v3414 = vadd.f32 0.0, %v3413
        %v3415 = vpop.f32.mrb[0].mxu0
        %v3416 = vadd.f32 0.0, %v3415
        %3417 = vdwg.mxu0
        %3418 = vmatprep.subr.bf16.mxu0 0
        %3419 = vmatpush1.bf16.msra.mxu0 %v3311
        %3420 = vmatprep.subr.bf16.mxu0 0
        %3421 = vmatpush1.bf16.msra.mxu0 %v3314
        %3422 = vmatprep.subr.bf16.mxu0 0
        %3423 = vmatpush1.bf16.msra.mxu0 %v3317
        %3424 = vmatprep.subr.bf16.mxu0 0
        %3425 = vmatpush1.bf16.msra.mxu0 %v3320
        %3426 = vmatprep.subr.bf16.mxu0 0
        %3427 = vmatpush1.bf16.msra.mxu0 0
        %3428 = vmatprep.subr.bf16.mxu0 0
        %3429 = vmatpush1.bf16.msra.mxu0 0
        %3430 = vmatprep.subr.bf16.mxu0 0
        %3431 = vmatpush1.bf16.msra.mxu0 0
        %3432 = vmatprep.subr.bf16.mxu0 0
        %3433 = vmatpush1.bf16.msra.mxu0 0
        %3434 = vmatprep.subr.bf16.mxu0 0
        %3435 = vmatpush1.bf16.msra.mxu0 0
        %3436 = vmatprep.subr.bf16.mxu0 0
        %3437 = vmatpush1.bf16.msra.mxu0 0
        %3438 = vmatprep.subr.bf16.mxu0 0
        %3439 = vmatpush1.bf16.msra.mxu0 0
        %3440 = vmatprep.subr.bf16.mxu0 0
        %3441 = vmatpush1.bf16.msra.mxu0 0
        %3442 = vmatprep.subr.bf16.mxu0 0
        %3443 = vmatpush1.bf16.msra.mxu0 0
        %3444 = vmatprep.subr.bf16.mxu0 0
        %3445 = vmatpush1.bf16.msra.mxu0 0
        %3446 = vmatprep.subr.bf16.mxu0 0
        %3447 = vmatpush1.bf16.msra.mxu0 0
        %3448 = vmatprep.subr.bf16.mxu0 0
        %3449 = vmatpush1.bf16.msra.mxu0 0
        %3450 = vmatprep.mubr.bf16.mxu0 0
        %3451 = vmatmul.mubr.bf16.gmra.mrb[0].mxu0 %v3334
        %v3452 = vpop.f32.mrb[0].mxu0
        %v3453 = vadd.f32 0.0, %v3452
        %v3454 = vpop.f32.mrb[0].mxu0
        %v3455 = vpop.f32.mrb[0].mxu0
        %v3456 = vadd.f32 0.0, %v3455
        %v3457 = vpop.f32.mrb[0].mxu0
        %3458 = vmatprep.mubr.bf16.mxu0 0
        %3459 = vmatmul.mubr.bf16.gmra.mrb[0].mxu0 %v3337
        %v3460 = vpop.f32.mrb[0].mxu0
        %v3461 = vadd.f32 0.0, %v3460
        %v3462 = vpop.f32.mrb[0].mxu0
        %v3463 = vpop.f32.mrb[0].mxu0
        %v3464 = vadd.f32 0.0, %v3463
        %v3465 = vpop.f32.mrb[0].mxu0
        %3466 = vmatprep.mubr.bf16.mxu0 0
        %3467 = vmatmul.mubr.bf16.gmra.mrb[0].mxu0 %v3340
        %v3468 = vpop.f32.mrb[0].mxu0
        %v3469 = vadd.f32 0.0, %v3468
        %v3470 = vpop.f32.mrb[0].mxu0
        %v3471 = vpop.f32.mrb[0].mxu0
        %v3472 = vadd.f32 0.0, %v3471
        %v3473 = vpop.f32.mrb[0].mxu0
        %3474 = vmatprep.mubr.bf16.mxu0 0
        %3475 = vmatmul.mubr.bf16.gmra.mrb[0].mxu0 %v3343
        %v3476 = vpop.f32.mrb[0].mxu0
        %v3477 = vadd.f32 0.0, %v3476
        %v3478 = vpop.f32.mrb[0].mxu0
        %v3479 = vpop.f32.mrb[0].mxu0
        %v3480 = vadd.f32 0.0, %v3479
        %v3481 = vpop.f32.mrb[0].mxu0
        %3482 = vdwg.mxu0
        %v3483 = vadd.f32 %v3216, %v3380
        %v3484 = vadd.f32 %v3217, %v3382
        %v3485 = vadd.f32 %v3218, %v3453
        %v3486 = vadd.f32 %v3219, %v3384
        %v3487 = vadd.f32 %v3220, %v3386
        %v3488 = vadd.f32 %v3221, %v3456
        %v3489 = vadd.f32 %v3222, %v3390
        %v3490 = vadd.f32 %v3223, %v3392
        %v3491 = vadd.f32 %v3224, %v3461
        %v3492 = vadd.f32 %v3225, %v3394
        %v3493 = vadd.f32 %v3226, %v3396
        %v3494 = vadd.f32 %v3227, %v3464
        %v3495 = vadd.f32 %v3228, %v3400
        %v3496 = vadd.f32 %v3229, %v3402
        %v3497 = vadd.f32 %v3230, %v3469
        %v3498 = vadd.f32 %v3231, %v3404
        %v3499 = vadd.f32 %v3232, %v3406
        %v3500 = vadd.f32 %v3233, %v3472
        %v3501 = vadd.f32 %v3234, %v3410
        %v3502 = vadd.f32 %v3235, %v3412
        %v3503 = vadd.f32 %v3236, %v3477
        %v3504 = vadd.f32 %v3237, %v3414
        %v3505 = vadd.f32 %v3238, %v3416
        %v3506 = vadd.f32 %v3239, %v3480
        %v3507 = vld [vmem:[%s316 + $0x4] sm:$0xff]
        %v3508 = vld [vmem:[%s316 + $0xc] sm:$0xff]
        %v3509 = vld [vmem:[%s316 + $0x14] sm:$0xff]
        %v3510 = vld [vmem:[%s316 + $0x1c] sm:$0xff]
        %v3511 = vld [vmem:[%s316 + $0x24] sm:$0xff]
        %v3512 = vld [vmem:[%s316 + $0x2c] sm:$0xff]
        %v3513 = vld [vmem:[%s316 + $0x34] sm:$0xff]
        %v3514 = vld [vmem:[%s316 + $0x3c] sm:$0xf]
        %v3515 = vpack.c.bf16 %v3508, %v3507
        %v3516 = vpack.c.bf16 %v3510, %v3509
        %v3517 = vpack.c.bf16 %v3512, %v3511
        %v3518 = vpack.c.bf16 %v3514, %v3513
        %s3519 = scalar_lea.vmem %s1, 1152
        %v3520 = vld [vmem:[%s3519] sm:$0xff]
        %v3521 = vld [vmem:[%s3519 + $0x8] sm:$0xf]
        %v3522 = vld [vmem:[%s3519 + $0xc] sm:$0xff]
        %v3523 = vld [vmem:[%s3519 + $0x14] sm:$0xf]
        %v3524 = vld [vmem:[%s3519 + $0x18] sm:$0xff]
        %v3525 = vld [vmem:[%s3519 + $0x20] sm:$0xf]
        %v3526 = vld [vmem:[%s3519 + $0x24] sm:$0xff]
        %v3527 = vld [vmem:[%s3519 + $0x2c] sm:$0xf]
        %v3528 = vld [vmem:[%s3519 + $0x30] sm:$0xff]
        %v3529 = vld [vmem:[%s3519 + $0x38] sm:$0xf]
        %v3530 = vld [vmem:[%s3519 + $0x3c] sm:$0xff]
        %v3531 = vld [vmem:[%s3519 + $0x44] sm:$0xf]
        %v3532 = vld [vmem:[%s3519 + $0x48] sm:$0xff]
        %v3533 = vld [vmem:[%s3519 + $0x50] sm:$0xf]
        %v3534 = vld [vmem:[%s3519 + $0x54] sm:$0xff]
        %v3535 = vld [vmem:[%s3519 + $0x5c] sm:$0xf]
        %v3552 = vunpack.c.l.b16 %v3520
        %v3553 = vunpack.c.h.b16 %v3520
        %v3554 = vunpack.c.l.b16 %v3521
        %v3555 = vunpack.c.l.b16 %v3522
        %v3556 = vunpack.c.h.b16 %v3522
        %v3557 = vunpack.c.l.b16 %v3523
        %v3558 = vunpack.c.l.b16 %v3524
        %v3559 = vunpack.c.h.b16 %v3524
        %v3560 = vunpack.c.l.b16 %v3525
        %v3561 = vunpack.c.l.b16 %v3526
        %v3562 = vunpack.c.h.b16 %v3526
        %v3563 = vunpack.c.l.b16 %v3527
        %v3564 = vunpack.c.l.b16 %v3528
        %v3565 = vunpack.c.h.b16 %v3528
        %v3566 = vunpack.c.l.b16 %v3529
        %v3567 = vunpack.c.l.b16 %v3530
        %v3568 = vunpack.c.h.b16 %v3530
        %v3569 = vunpack.c.l.b16 %v3531
        %v3570 = vunpack.c.l.b16 %v3532
        %v3571 = vunpack.c.h.b16 %v3532
        %v3572 = vunpack.c.l.b16 %v3533
        %v3573 = vunpack.c.l.b16 %v3534
        %v3574 = vunpack.c.h.b16 %v3534
        %v3575 = vunpack.c.l.b16 %v3535
        %v3576 = vpack.c.b16 %v3555, %v3552
        %v3577 = vpack.c.b16 %v3556, %v3553
        %v3578 = vpack.c.b16 %v3557, %v3554
        %v3579 = vpack.c.b16 %v3561, %v3558
        %v3580 = vpack.c.b16 %v3562, %v3559
        %v3581 = vpack.c.b16 %v3563, %v3560
        %v3582 = vpack.c.b16 %v3567, %v3564
        %v3583 = vpack.c.b16 %v3568, %v3565
        %v3584 = vpack.c.b16 %v3569, %v3566
        %v3585 = vpack.c.b16 %v3573, %v3570
        %v3586 = vpack.c.b16 %v3574, %v3571
        %v3587 = vpack.c.b16 %v3575, %v3572
        %v3601 = vsel %vm472, %v3515, 0
        %v3604 = vsel %vm472, %v3516, 0
        %v3607 = vsel %vm472, %v3517, 0
        %v3610 = vsel %vm472, %v3518, 0
        %3612 = vmatprep.subr.bf16.mxu0 %v3577
        %3613 = vmatpush1.bf16.msra.mxu0 %v3576
        %3614 = vmatprep.subr.bf16.mxu0 %v3580
        %3615 = vmatpush1.bf16.msra.mxu0 %v3579
        %3616 = vmatprep.subr.bf16.mxu0 %v3583
        %3617 = vmatpush1.bf16.msra.mxu0 %v3582
        %3618 = vmatprep.subr.bf16.mxu0 %v3586
        %3619 = vmatpush1.bf16.msra.mxu0 %v3585
        %3620 = vmatprep.subr.bf16.mxu0 0
        %3621 = vmatpush1.bf16.msra.mxu0 0
        %3622 = vmatprep.subr.bf16.mxu0 0
        %3623 = vmatpush1.bf16.msra.mxu0 0
        %3624 = vmatprep.subr.bf16.mxu0 0
        %3625 = vmatpush1.bf16.msra.mxu0 0
        %3626 = vmatprep.subr.bf16.mxu0 0
        %3627 = vmatpush1.bf16.msra.mxu0 0
        %3628 = vmatprep.subr.bf16.mxu0 0
        %3629 = vmatpush1.bf16.msra.mxu0 0
        %3630 = vmatprep.subr.bf16.mxu0 0
        %3631 = vmatpush1.bf16.msra.mxu0 0
        %3632 = vmatprep.subr.bf16.mxu0 0
        %3633 = vmatpush1.bf16.msra.mxu0 0
        %3634 = vmatprep.subr.bf16.mxu0 0
        %3635 = vmatpush1.bf16.msra.mxu0 0
        %3636 = vmatprep.subr.bf16.mxu0 0
        %3637 = vmatpush1.bf16.msra.mxu0 0
        %3638 = vmatprep.subr.bf16.mxu0 0
        %3639 = vmatpush1.bf16.msra.mxu0 0
        %3640 = vmatprep.subr.bf16.mxu0 0
        %3641 = vmatpush1.bf16.msra.mxu0 0
        %3642 = vmatprep.subr.bf16.mxu0 0
        %3643 = vmatpush1.bf16.msra.mxu0 0
        %3644 = vmatprep.mubr.bf16.mxu0 0
        %3645 = vmatmul.mubr.bf16.gmra.mrb[0].mxu0 %v3601
        %v3646 = vpop.f32.mrb[0].mxu0
        %v3647 = vadd.f32 0.0, %v3646
        %v3648 = vpop.f32.mrb[0].mxu0
        %v3649 = vadd.f32 0.0, %v3648
        %v3650 = vpop.f32.mrb[0].mxu0
        %v3651 = vadd.f32 0.0, %v3650
        %v3652 = vpop.f32.mrb[0].mxu0
        %v3653 = vadd.f32 0.0, %v3652
        %3654 = vmatprep.mubr.bf16.mxu0 0
        %3655 = vmatmul.mubr.bf16.gmra.mrb[0].mxu0 %v3604
        %v3656 = vpop.f32.mrb[0].mxu0
        %v3657 = vadd.f32 0.0, %v3656
        %v3658 = vpop.f32.mrb[0].mxu0
        %v3659 = vadd.f32 0.0, %v3658
        %v3660 = vpop.f32.mrb[0].mxu0
        %v3661 = vadd.f32 0.0, %v3660
        %v3662 = vpop.f32.mrb[0].mxu0
        %v3663 = vadd.f32 0.0, %v3662
        %3664 = vmatprep.mubr.bf16.mxu0 0
        %3665 = vmatmul.mubr.bf16.gmra.mrb[0].mxu0 %v3607
        %v3666 = vpop.f32.mrb[0].mxu0
        %v3667 = vadd.f32 0.0, %v3666
        %v3668 = vpop.f32.mrb[0].mxu0
        %v3669 = vadd.f32 0.0, %v3668
        %v3670 = vpop.f32.mrb[0].mxu0
        %v3671 = vadd.f32 0.0, %v3670
        %v3672 = vpop.f32.mrb[0].mxu0
        %v3673 = vadd.f32 0.0, %v3672
        %3674 = vmatprep.mubr.bf16.mxu0 0
        %3675 = vmatmul.mubr.bf16.gmra.mrb[0].mxu0 %v3610
        %v3676 = vpop.f32.mrb[0].mxu0
        %v3677 = vadd.f32 0.0, %v3676
        %v3678 = vpop.f32.mrb[0].mxu0
        %v3679 = vadd.f32 0.0, %v3678
        %v3680 = vpop.f32.mrb[0].mxu0
        %v3681 = vadd.f32 0.0, %v3680
        %v3682 = vpop.f32.mrb[0].mxu0
        %v3683 = vadd.f32 0.0, %v3682
        %3684 = vdwg.mxu0
        %3685 = vmatprep.subr.bf16.mxu0 0
        %3686 = vmatpush1.bf16.msra.mxu0 %v3578
        %3687 = vmatprep.subr.bf16.mxu0 0
        %3688 = vmatpush1.bf16.msra.mxu0 %v3581
        %3689 = vmatprep.subr.bf16.mxu0 0
        %3690 = vmatpush1.bf16.msra.mxu0 %v3584
        %3691 = vmatprep.subr.bf16.mxu0 0
        %3692 = vmatpush1.bf16.msra.mxu0 %v3587
        %3693 = vmatprep.subr.bf16.mxu0 0
        %3694 = vmatpush1.bf16.msra.mxu0 0
        %3695 = vmatprep.subr.bf16.mxu0 0
        %3696 = vmatpush1.bf16.msra.mxu0 0
        %3697 = vmatprep.subr.bf16.mxu0 0
        %3698 = vmatpush1.bf16.msra.mxu0 0
        %3699 = vmatprep.subr.bf16.mxu0 0
        %3700 = vmatpush1.bf16.msra.mxu0 0
        %3701 = vmatprep.subr.bf16.mxu0 0
        %3702 = vmatpush1.bf16.msra.mxu0 0
        %3703 = vmatprep.subr.bf16.mxu0 0
        %3704 = vmatpush1.bf16.msra.mxu0 0
        %3705 = vmatprep.subr.bf16.mxu0 0
        %3706 = vmatpush1.bf16.msra.mxu0 0
        %3707 = vmatprep.subr.bf16.mxu0 0
        %3708 = vmatpush1.bf16.msra.mxu0 0
        %3709 = vmatprep.subr.bf16.mxu0 0
        %3710 = vmatpush1.bf16.msra.mxu0 0
        %3711 = vmatprep.subr.bf16.mxu0 0
        %3712 = vmatpush1.bf16.msra.mxu0 0
        %3713 = vmatprep.subr.bf16.mxu0 0
        %3714 = vmatpush1.bf16.msra.mxu0 0
        %3715 = vmatprep.subr.bf16.mxu0 0
        %3716 = vmatpush1.bf16.msra.mxu0 0
        %3717 = vmatprep.mubr.bf16.mxu0 0
        %3718 = vmatmul.mubr.bf16.gmra.mrb[0].mxu0 %v3601
        %v3719 = vpop.f32.mrb[0].mxu0
        %v3720 = vadd.f32 0.0, %v3719
        %v3721 = vpop.f32.mrb[0].mxu0
        %v3722 = vpop.f32.mrb[0].mxu0
        %v3723 = vadd.f32 0.0, %v3722
        %v3724 = vpop.f32.mrb[0].mxu0
        %3725 = vmatprep.mubr.bf16.mxu0 0
        %3726 = vmatmul.mubr.bf16.gmra.mrb[0].mxu0 %v3604
        %v3727 = vpop.f32.mrb[0].mxu0
        %v3728 = vadd.f32 0.0, %v3727
        %v3729 = vpop.f32.mrb[0].mxu0
        %v3730 = vpop.f32.mrb[0].mxu0
        %v3731 = vadd.f32 0.0, %v3730
        %v3732 = vpop.f32.mrb[0].mxu0
        %3733 = vmatprep.mubr.bf16.mxu0 0
        %3734 = vmatmul.mubr.bf16.gmra.mrb[0].mxu0 %v3607
        %v3735 = vpop.f32.mrb[0].mxu0
        %v3736 = vadd.f32 0.0, %v3735
        %v3737 = vpop.f32.mrb[0].mxu0
        %v3738 = vpop.f32.mrb[0].mxu0
        %v3739 = vadd.f32 0.0, %v3738
        %v3740 = vpop.f32.mrb[0].mxu0
        %3741 = vmatprep.mubr.bf16.mxu0 0
        %3742 = vmatmul.mubr.bf16.gmra.mrb[0].mxu0 %v3610
        %v3743 = vpop.f32.mrb[0].mxu0
        %v3744 = vadd.f32 0.0, %v3743
        %v3745 = vpop.f32.mrb[0].mxu0
        %v3746 = vpop.f32.mrb[0].mxu0
        %v3747 = vadd.f32 0.0, %v3746
        %v3748 = vpop.f32.mrb[0].mxu0
        %3749 = vdwg.mxu0
        %v3750 = vadd.f32 %v3483, %v3647
        %v3751 = vadd.f32 %v3484, %v3649
        %v3752 = vadd.f32 %v3485, %v3720
        %v3753 = vadd.f32 %v3486, %v3651
        %v3754 = vadd.f32 %v3487, %v3653
        %v3755 = vadd.f32 %v3488, %v3723
        %v3756 = vadd.f32 %v3489, %v3657
        %v3757 = vadd.f32 %v3490, %v3659
        %v3758 = vadd.f32 %v3491, %v3728
        %v3759 = vadd.f32 %v3492, %v3661
        %v3760 = vadd.f32 %v3493, %v3663
        %v3761 = vadd.f32 %v3494, %v3731
        %v3762 = vadd.f32 %v3495, %v3667
        %v3763 = vadd.f32 %v3496, %v3669
        %v3764 = vadd.f32 %v3497, %v3736
        %v3765 = vadd.f32 %v3498, %v3671
        %v3766 = vadd.f32 %v3499, %v3673
        %v3767 = vadd.f32 %v3500, %v3739
        %v3768 = vadd.f32 %v3501, %v3677
        %v3769 = vadd.f32 %v3502, %v3679
        %v3770 = vadd.f32 %v3503, %v3744
        %v3771 = vadd.f32 %v3504, %v3681
        %v3772 = vadd.f32 %v3505, %v3683
        %v3773 = vadd.f32 %v3506, %v3747
        %v3774 = vld [vmem:[%s316 + $0x44] sm:$0xff]
        %v3775 = vld [vmem:[%s316 + $0x4c] sm:$0xff]
        %v3776 = vld [vmem:[%s316 + $0x54] sm:$0xff]
        %v3777 = vld [vmem:[%s316 + $0x5c] sm:$0xff]
        %v3778 = vld [vmem:[%s316 + $0x64] sm:$0xff]
        %v3779 = vld [vmem:[%s316 + $0x6c] sm:$0xff]
        %v3780 = vld [vmem:[%s316 + $0x74] sm:$0xff]
        %v3781 = vld [vmem:[%s316 + $0x7c] sm:$0xf]
        %v3782 = vpack.c.bf16 %v3775, %v3774
        %v3783 = vpack.c.bf16 %v3777, %v3776
        %v3784 = vpack.c.bf16 %v3779, %v3778
        %v3785 = vpack.c.bf16 %v3781, %v3780
        %s3786 = scalar_lea.vmem %s1, 1248
        %v3787 = vld [vmem:[%s3786] sm:$0xff]
        %v3788 = vld [vmem:[%s3786 + $0x8] sm:$0xf]
        %v3789 = vld [vmem:[%s3786 + $0xc] sm:$0xff]
        %v3790 = vld [vmem:[%s3786 + $0x14] sm:$0xf]
        %v3791 = vld [vmem:[%s3786 + $0x18] sm:$0xff]
        %v3792 = vld [vmem:[%s3786 + $0x20] sm:$0xf]
        %v3793 = vld [vmem:[%s3786 + $0x24] sm:$0xff]
        %v3794 = vld [vmem:[%s3786 + $0x2c] sm:$0xf]
        %v3795 = vld [vmem:[%s3786 + $0x30] sm:$0xff]
        %v3796 = vld [vmem:[%s3786 + $0x38] sm:$0xf]
        %v3797 = vld [vmem:[%s3786 + $0x3c] sm:$0xff]
        %v3798 = vld [vmem:[%s3786 + $0x44] sm:$0xf]
        %v3799 = vld [vmem:[%s3786 + $0x48] sm:$0xff]
        %v3800 = vld [vmem:[%s3786 + $0x50] sm:$0xf]
        %v3801 = vld [vmem:[%s3786 + $0x54] sm:$0xff]
        %v3802 = vld [vmem:[%s3786 + $0x5c] sm:$0xf]
        %v3819 = vunpack.c.l.b16 %v3787
        %v3820 = vunpack.c.h.b16 %v3787
        %v3821 = vunpack.c.l.b16 %v3788
        %v3822 = vunpack.c.l.b16 %v3789
        %v3823 = vunpack.c.h.b16 %v3789
        %v3824 = vunpack.c.l.b16 %v3790
        %v3825 = vunpack.c.l.b16 %v3791
        %v3826 = vunpack.c.h.b16 %v3791
        %v3827 = vunpack.c.l.b16 %v3792
        %v3828 = vunpack.c.l.b16 %v3793
        %v3829 = vunpack.c.h.b16 %v3793
        %v3830 = vunpack.c.l.b16 %v3794
        %v3831 = vunpack.c.l.b16 %v3795
        %v3832 = vunpack.c.h.b16 %v3795
        %v3833 = vunpack.c.l.b16 %v3796
        %v3834 = vunpack.c.l.b16 %v3797
        %v3835 = vunpack.c.h.b16 %v3797
        %v3836 = vunpack.c.l.b16 %v3798
        %v3837 = vunpack.c.l.b16 %v3799
        %v3838 = vunpack.c.h.b16 %v3799
        %v3839 = vunpack.c.l.b16 %v3800
        %v3840 = vunpack.c.l.b16 %v3801
        %v3841 = vunpack.c.h.b16 %v3801
        %v3842 = vunpack.c.l.b16 %v3802
        %v3843 = vpack.c.b16 %v3822, %v3819
        %v3844 = vpack.c.b16 %v3823, %v3820
        %v3845 = vpack.c.b16 %v3824, %v3821
        %v3846 = vpack.c.b16 %v3828, %v3825
        %v3847 = vpack.c.b16 %v3829, %v3826
        %v3848 = vpack.c.b16 %v3830, %v3827
        %v3849 = vpack.c.b16 %v3834, %v3831
        %v3850 = vpack.c.b16 %v3835, %v3832
        %v3851 = vpack.c.b16 %v3836, %v3833
        %v3852 = vpack.c.b16 %v3840, %v3837
        %v3853 = vpack.c.b16 %v3841, %v3838
        %v3854 = vpack.c.b16 %v3842, %v3839
        %v3868 = vsel %vm472, %v3782, 0
        %v3871 = vsel %vm472, %v3783, 0
        %v3874 = vsel %vm472, %v3784, 0
        %v3877 = vsel %vm472, %v3785, 0
        %3879 = vmatprep.subr.bf16.mxu0 %v3844
        %3880 = vmatpush1.bf16.msra.mxu0 %v3843
        %3881 = vmatprep.subr.bf16.mxu0 %v3847
        %3882 = vmatpush1.bf16.msra.mxu0 %v3846
        %3883 = vmatprep.subr.bf16.mxu0 %v3850
        %3884 = vmatpush1.bf16.msra.mxu0 %v3849
        %3885 = vmatprep.subr.bf16.mxu0 %v3853
        %3886 = vmatpush1.bf16.msra.mxu0 %v3852
        %3887 = vmatprep.subr.bf16.mxu0 0
        %3888 = vmatpush1.bf16.msra.mxu0 0
        %3889 = vmatprep.subr.bf16.mxu0 0
        %3890 = vmatpush1.bf16.msra.mxu0 0
        %3891 = vmatprep.subr.bf16.mxu0 0
        %3892 = vmatpush1.bf16.msra.mxu0 0
        %3893 = vmatprep.subr.bf16.mxu0 0
        %3894 = vmatpush1.bf16.msra.mxu0 0
        %3895 = vmatprep.subr.bf16.mxu0 0
        %3896 = vmatpush1.bf16.msra.mxu0 0
        %3897 = vmatprep.subr.bf16.mxu0 0
        %3898 = vmatpush1.bf16.msra.mxu0 0
        %3899 = vmatprep.subr.bf16.mxu0 0
        %3900 = vmatpush1.bf16.msra.mxu0 0
        %3901 = vmatprep.subr.bf16.mxu0 0
        %3902 = vmatpush1.bf16.msra.mxu0 0
        %3903 = vmatprep.subr.bf16.mxu0 0
        %3904 = vmatpush1.bf16.msra.mxu0 0
        %3905 = vmatprep.subr.bf16.mxu0 0
        %3906 = vmatpush1.bf16.msra.mxu0 0
        %3907 = vmatprep.subr.bf16.mxu0 0
        %3908 = vmatpush1.bf16.msra.mxu0 0
        %3909 = vmatprep.subr.bf16.mxu0 0
        %3910 = vmatpush1.bf16.msra.mxu0 0
        %3911 = vmatprep.mubr.bf16.mxu0 0
        %3912 = vmatmul.mubr.bf16.gmra.mrb[0].mxu0 %v3868
        %v3913 = vpop.f32.mrb[0].mxu0
        %v3914 = vadd.f32 0.0, %v3913
        %v3915 = vpop.f32.mrb[0].mxu0
        %v3916 = vadd.f32 0.0, %v3915
        %v3917 = vpop.f32.mrb[0].mxu0
        %v3918 = vadd.f32 0.0, %v3917
        %v3919 = vpop.f32.mrb[0].mxu0
        %v3920 = vadd.f32 0.0, %v3919
        %3921 = vmatprep.mubr.bf16.mxu0 0
        %3922 = vmatmul.mubr.bf16.gmra.mrb[0].mxu0 %v3871
        %v3923 = vpop.f32.mrb[0].mxu0
        %v3924 = vadd.f32 0.0, %v3923
        %v3925 = vpop.f32.mrb[0].mxu0
        %v3926 = vadd.f32 0.0, %v3925
        %v3927 = vpop.f32.mrb[0].mxu0
        %v3928 = vadd.f32 0.0, %v3927
        %v3929 = vpop.f32.mrb[0].mxu0
        %v3930 = vadd.f32 0.0, %v3929
        %3931 = vmatprep.mubr.bf16.mxu0 0
        %3932 = vmatmul.mubr.bf16.gmra.mrb[0].mxu0 %v3874
        %v3933 = vpop.f32.mrb[0].mxu0
        %v3934 = vadd.f32 0.0, %v3933
        %v3935 = vpop.f32.mrb[0].mxu0
        %v3936 = vadd.f32 0.0, %v3935
        %v3937 = vpop.f32.mrb[0].mxu0
        %v3938 = vadd.f32 0.0, %v3937
        %v3939 = vpop.f32.mrb[0].mxu0
        %v3940 = vadd.f32 0.0, %v3939
        %3941 = vmatprep.mubr.bf16.mxu0 0
        %3942 = vmatmul.mubr.bf16.gmra.mrb[0].mxu0 %v3877
        %v3943 = vpop.f32.mrb[0].mxu0
        %v3944 = vadd.f32 0.0, %v3943
        %v3945 = vpop.f32.mrb[0].mxu0
        %v3946 = vadd.f32 0.0, %v3945
        %v3947 = vpop.f32.mrb[0].mxu0
        %v3948 = vadd.f32 0.0, %v3947
        %v3949 = vpop.f32.mrb[0].mxu0
        %v3950 = vadd.f32 0.0, %v3949
        %3951 = vdwg.mxu0
        %3952 = vmatprep.subr.bf16.mxu0 0
        %3953 = vmatpush1.bf16.msra.mxu0 %v3845
        %3954 = vmatprep.subr.bf16.mxu0 0
        %3955 = vmatpush1.bf16.msra.mxu0 %v3848
        %3956 = vmatprep.subr.bf16.mxu0 0
        %3957 = vmatpush1.bf16.msra.mxu0 %v3851
        %3958 = vmatprep.subr.bf16.mxu0 0
        %3959 = vmatpush1.bf16.msra.mxu0 %v3854
        %3960 = vmatprep.subr.bf16.mxu0 0
        %3961 = vmatpush1.bf16.msra.mxu0 0
        %3962 = vmatprep.subr.bf16.mxu0 0
        %3963 = vmatpush1.bf16.msra.mxu0 0
        %3964 = vmatprep.subr.bf16.mxu0 0
        %3965 = vmatpush1.bf16.msra.mxu0 0
        %3966 = vmatprep.subr.bf16.mxu0 0
        %3967 = vmatpush1.bf16.msra.mxu0 0
        %3968 = vmatprep.subr.bf16.mxu0 0
        %3969 = vmatpush1.bf16.msra.mxu0 0
        %3970 = vmatprep.subr.bf16.mxu0 0
        %3971 = vmatpush1.bf16.msra.mxu0 0
        %3972 = vmatprep.subr.bf16.mxu0 0
        %3973 = vmatpush1.bf16.msra.mxu0 0
        %3974 = vmatprep.subr.bf16.mxu0 0
        %3975 = vmatpush1.bf16.msra.mxu0 0
        %3976 = vmatprep.subr.bf16.mxu0 0
        %3977 = vmatpush1.bf16.msra.mxu0 0
        %3978 = vmatprep.subr.bf16.mxu0 0
        %3979 = vmatpush1.bf16.msra.mxu0 0
        %3980 = vmatprep.subr.bf16.mxu0 0
        %3981 = vmatpush1.bf16.msra.mxu0 0
        %3982 = vmatprep.subr.bf16.mxu0 0
        %3983 = vmatpush1.bf16.msra.mxu0 0
        %3984 = vmatprep.mubr.bf16.mxu0 0
        %3985 = vmatmul.mubr.bf16.gmra.mrb[0].mxu0 %v3868
        %v3986 = vpop.f32.mrb[0].mxu0
        %v3987 = vadd.f32 0.0, %v3986
        %v3988 = vpop.f32.mrb[0].mxu0
        %v3989 = vpop.f32.mrb[0].mxu0
        %v3990 = vadd.f32 0.0, %v3989
        %v3991 = vpop.f32.mrb[0].mxu0
        %3992 = vmatprep.mubr.bf16.mxu0 0
        %3993 = vmatmul.mubr.bf16.gmra.mrb[0].mxu0 %v3871
        %v3994 = vpop.f32.mrb[0].mxu0
        %v3995 = vadd.f32 0.0, %v3994
        %v3996 = vpop.f32.mrb[0].mxu0
        %v3997 = vpop.f32.mrb[0].mxu0
        %v3998 = vadd.f32 0.0, %v3997
        %v3999 = vpop.f32.mrb[0].mxu0
        %4000 = vmatprep.mubr.bf16.mxu0 0
        %4001 = vmatmul.mubr.bf16.gmra.mrb[0].mxu0 %v3874
        %v4002 = vpop.f32.mrb[0].mxu0
        %v4003 = vadd.f32 0.0, %v4002
        %v4004 = vpop.f32.mrb[0].mxu0
        %v4005 = vpop.f32.mrb[0].mxu0
        %v4006 = vadd.f32 0.0, %v4005
        %v4007 = vpop.f32.mrb[0].mxu0
        %4008 = vmatprep.mubr.bf16.mxu0 0
        %4009 = vmatmul.mubr.bf16.gmra.mrb[0].mxu0 %v3877
        %v4010 = vpop.f32.mrb[0].mxu0
        %v4011 = vadd.f32 0.0, %v4010
        %v4012 = vpop.f32.mrb[0].mxu0
        %v4013 = vpop.f32.mrb[0].mxu0
        %v4014 = vadd.f32 0.0, %v4013
        %v4015 = vpop.f32.mrb[0].mxu0
        %4016 = vdwg.mxu0
        %v4017 = vadd.f32 %v3750, %v3914
        %v4018 = vadd.f32 %v3751, %v3916
        %v4019 = vadd.f32 %v3752, %v3987
        %v4020 = vadd.f32 %v3753, %v3918
        %v4021 = vadd.f32 %v3754, %v3920
        %v4022 = vadd.f32 %v3755, %v3990
        %v4023 = vadd.f32 %v3756, %v3924
        %v4024 = vadd.f32 %v3757, %v3926
        %v4025 = vadd.f32 %v3758, %v3995
        %v4026 = vadd.f32 %v3759, %v3928
        %v4027 = vadd.f32 %v3760, %v3930
        %v4028 = vadd.f32 %v3761, %v3998
        %v4029 = vadd.f32 %v3762, %v3934
        %v4030 = vadd.f32 %v3763, %v3936
        %v4031 = vadd.f32 %v3764, %v4003
        %v4032 = vadd.f32 %v3765, %v3938
        %v4033 = vadd.f32 %v3766, %v3940
        %v4034 = vadd.f32 %v3767, %v4006
        %v4035 = vadd.f32 %v3768, %v3944
        %v4036 = vadd.f32 %v3769, %v3946
        %v4037 = vadd.f32 %v3770, %v4011
        %v4038 = vadd.f32 %v3771, %v3948
        %v4039 = vadd.f32 %v3772, %v3950
        %v4040 = vadd.f32 %v3773, %v4014
        %v4041 = vld [vmem:[%s316 + $0x84] sm:$0xff]
        %v4042 = vld [vmem:[%s316 + $0x8c] sm:$0xff]
        %v4043 = vld [vmem:[%s316 + $0x94] sm:$0xff]
        %v4044 = vld [vmem:[%s316 + $0x9c] sm:$0xff]
        %v4045 = vld [vmem:[%s316 + $0xa4] sm:$0xff]
        %v4046 = vld [vmem:[%s316 + $0xac] sm:$0xff]
        %v4047 = vld [vmem:[%s316 + $0xb4] sm:$0xff]
        %v4048 = vld [vmem:[%s316 + $0xbc] sm:$0xf]
        %v4049 = vpack.c.bf16 %v4042, %v4041
        %v4050 = vpack.c.bf16 %v4044, %v4043
        %v4051 = vpack.c.bf16 %v4046, %v4045
        %v4052 = vpack.c.bf16 %v4048, %v4047
        %s4053 = scalar_lea.vmem %s1, 1344
        %v4054 = vld [vmem:[%s4053] sm:$0xff]
        %v4055 = vld [vmem:[%s4053 + $0x8] sm:$0xf]
        %v4056 = vld [vmem:[%s4053 + $0xc] sm:$0xff]
        %v4057 = vld [vmem:[%s4053 + $0x14] sm:$0xf]
        %v4058 = vld [vmem:[%s4053 + $0x18] sm:$0xff]
        %v4059 = vld [vmem:[%s4053 + $0x20] sm:$0xf]
        %v4060 = vld [vmem:[%s4053 + $0x24] sm:$0xff]
        %v4061 = vld [vmem:[%s4053 + $0x2c] sm:$0xf]
        %v4062 = vld [vmem:[%s4053 + $0x30] sm:$0xff]
        %v4063 = vld [vmem:[%s4053 + $0x38] sm:$0xf]
        %v4064 = vld [vmem:[%s4053 + $0x3c] sm:$0xff]
        %v4065 = vld [vmem:[%s4053 + $0x44] sm:$0xf]
        %v4066 = vld [vmem:[%s4053 + $0x48] sm:$0xff]
        %v4067 = vld [vmem:[%s4053 + $0x50] sm:$0xf]
        %v4068 = vld [vmem:[%s4053 + $0x54] sm:$0xff]
        %v4069 = vld [vmem:[%s4053 + $0x5c] sm:$0xf]
        %v4086 = vunpack.c.l.b16 %v4054
        %v4087 = vunpack.c.h.b16 %v4054
        %v4088 = vunpack.c.l.b16 %v4055
        %v4089 = vunpack.c.l.b16 %v4056
        %v4090 = vunpack.c.h.b16 %v4056
        %v4091 = vunpack.c.l.b16 %v4057
        %v4092 = vunpack.c.l.b16 %v4058
        %v4093 = vunpack.c.h.b16 %v4058
        %v4094 = vunpack.c.l.b16 %v4059
        %v4095 = vunpack.c.l.b16 %v4060
        %v4096 = vunpack.c.h.b16 %v4060
        %v4097 = vunpack.c.l.b16 %v4061
        %v4098 = vunpack.c.l.b16 %v4062
        %v4099 = vunpack.c.h.b16 %v4062
        %v4100 = vunpack.c.l.b16 %v4063
        %v4101 = vunpack.c.l.b16 %v4064
        %v4102 = vunpack.c.h.b16 %v4064
        %v4103 = vunpack.c.l.b16 %v4065
        %v4104 = vunpack.c.l.b16 %v4066
        %v4105 = vunpack.c.h.b16 %v4066
        %v4106 = vunpack.c.l.b16 %v4067
        %v4107 = vunpack.c.l.b16 %v4068
        %v4108 = vunpack.c.h.b16 %v4068
        %v4109 = vunpack.c.l.b16 %v4069
        %v4110 = vpack.c.b16 %v4089, %v4086
        %v4111 = vpack.c.b16 %v4090, %v4087
        %v4112 = vpack.c.b16 %v4091, %v4088
        %v4113 = vpack.c.b16 %v4095, %v4092
        %v4114 = vpack.c.b16 %v4096, %v4093
        %v4115 = vpack.c.b16 %v4097, %v4094
        %v4116 = vpack.c.b16 %v4101, %v4098
        %v4117 = vpack.c.b16 %v4102, %v4099
        %v4118 = vpack.c.b16 %v4103, %v4100
        %v4119 = vpack.c.b16 %v4107, %v4104
        %v4120 = vpack.c.b16 %v4108, %v4105
        %v4121 = vpack.c.b16 %v4109, %v4106
        %v4135 = vsel %vm472, %v4049, 0
        %v4138 = vsel %vm472, %v4050, 0
        %v4141 = vsel %vm472, %v4051, 0
        %v4144 = vsel %vm472, %v4052, 0
        %4146 = vmatprep.subr.bf16.mxu0 %v4111
        %4147 = vmatpush1.bf16.msra.mxu0 %v4110
        %4148 = vmatprep.subr.bf16.mxu0 %v4114
        %4149 = vmatpush1.bf16.msra.mxu0 %v4113
        %4150 = vmatprep.subr.bf16.mxu0 %v4117
        %4151 = vmatpush1.bf16.msra.mxu0 %v4116
        %4152 = vmatprep.subr.bf16.mxu0 %v4120
        %4153 = vmatpush1.bf16.msra.mxu0 %v4119
        %4154 = vmatprep.subr.bf16.mxu0 0
        %4155 = vmatpush1.bf16.msra.mxu0 0
        %4156 = vmatprep.subr.bf16.mxu0 0
        %4157 = vmatpush1.bf16.msra.mxu0 0
        %4158 = vmatprep.subr.bf16.mxu0 0
        %4159 = vmatpush1.bf16.msra.mxu0 0
        %4160 = vmatprep.subr.bf16.mxu0 0
        %4161 = vmatpush1.bf16.msra.mxu0 0
        %4162 = vmatprep.subr.bf16.mxu0 0
        %4163 = vmatpush1.bf16.msra.mxu0 0
        %4164 = vmatprep.subr.bf16.mxu0 0
        %4165 = vmatpush1.bf16.msra.mxu0 0
        %4166 = vmatprep.subr.bf16.mxu0 0
        %4167 = vmatpush1.bf16.msra.mxu0 0
        %4168 = vmatprep.subr.bf16.mxu0 0
        %4169 = vmatpush1.bf16.msra.mxu0 0
        %4170 = vmatprep.subr.bf16.mxu0 0
        %4171 = vmatpush1.bf16.msra.mxu0 0
        %4172 = vmatprep.subr.bf16.mxu0 0
        %4173 = vmatpush1.bf16.msra.mxu0 0
        %4174 = vmatprep.subr.bf16.mxu0 0
        %4175 = vmatpush1.bf16.msra.mxu0 0
        %4176 = vmatprep.subr.bf16.mxu0 0
        %4177 = vmatpush1.bf16.msra.mxu0 0
        %4178 = vmatprep.mubr.bf16.mxu0 0
        %4179 = vmatmul.mubr.bf16.gmra.mrb[0].mxu0 %v4135
        %v4180 = vpop.f32.mrb[0].mxu0
        %v4181 = vadd.f32 0.0, %v4180
        %v4182 = vpop.f32.mrb[0].mxu0
        %v4183 = vadd.f32 0.0, %v4182
        %v4184 = vpop.f32.mrb[0].mxu0
        %v4185 = vadd.f32 0.0, %v4184
        %v4186 = vpop.f32.mrb[0].mxu0
        %v4187 = vadd.f32 0.0, %v4186
        %4188 = vmatprep.mubr.bf16.mxu0 0
        %4189 = vmatmul.mubr.bf16.gmra.mrb[0].mxu0 %v4138
        %v4190 = vpop.f32.mrb[0].mxu0
        %v4191 = vadd.f32 0.0, %v4190
        %v4192 = vpop.f32.mrb[0].mxu0
        %v4193 = vadd.f32 0.0, %v4192
        %v4194 = vpop.f32.mrb[0].mxu0
        %v4195 = vadd.f32 0.0, %v4194
        %v4196 = vpop.f32.mrb[0].mxu0
        %v4197 = vadd.f32 0.0, %v4196
        %4198 = vmatprep.mubr.bf16.mxu0 0
        %4199 = vmatmul.mubr.bf16.gmra.mrb[0].mxu0 %v4141
        %v4200 = vpop.f32.mrb[0].mxu0
        %v4201 = vadd.f32 0.0, %v4200
        %v4202 = vpop.f32.mrb[0].mxu0
        %v4203 = vadd.f32 0.0, %v4202
        %v4204 = vpop.f32.mrb[0].mxu0
        %v4205 = vadd.f32 0.0, %v4204
        %v4206 = vpop.f32.mrb[0].mxu0
        %v4207 = vadd.f32 0.0, %v4206
        %4208 = vmatprep.mubr.bf16.mxu0 0
        %4209 = vmatmul.mubr.bf16.gmra.mrb[0].mxu0 %v4144
        %v4210 = vpop.f32.mrb[0].mxu0
        %v4211 = vadd.f32 0.0, %v4210
        %v4212 = vpop.f32.mrb[0].mxu0
        %v4213 = vadd.f32 0.0, %v4212
        %v4214 = vpop.f32.mrb[0].mxu0
        %v4215 = vadd.f32 0.0, %v4214
        %v4216 = vpop.f32.mrb[0].mxu0
        %v4217 = vadd.f32 0.0, %v4216
        %4218 = vdwg.mxu0
        %4219 = vmatprep.subr.bf16.mxu0 0
        %4220 = vmatpush1.bf16.msra.mxu0 %v4112
        %4221 = vmatprep.subr.bf16.mxu0 0
        %4222 = vmatpush1.bf16.msra.mxu0 %v4115
        %4223 = vmatprep.subr.bf16.mxu0 0
        %4224 = vmatpush1.bf16.msra.mxu0 %v4118
        %4225 = vmatprep.subr.bf16.mxu0 0
        %4226 = vmatpush1.bf16.msra.mxu0 %v4121
        %4227 = vmatprep.subr.bf16.mxu0 0
        %4228 = vmatpush1.bf16.msra.mxu0 0
        %4229 = vmatprep.subr.bf16.mxu0 0
        %4230 = vmatpush1.bf16.msra.mxu0 0
        %4231 = vmatprep.subr.bf16.mxu0 0
        %4232 = vmatpush1.bf16.msra.mxu0 0
        %4233 = vmatprep.subr.bf16.mxu0 0
        %4234 = vmatpush1.bf16.msra.mxu0 0
        %4235 = vmatprep.subr.bf16.mxu0 0
        %4236 = vmatpush1.bf16.msra.mxu0 0
        %4237 = vmatprep.subr.bf16.mxu0 0
        %4238 = vmatpush1.bf16.msra.mxu0 0
        %4239 = vmatprep.subr.bf16.mxu0 0
        %4240 = vmatpush1.bf16.msra.mxu0 0
        %4241 = vmatprep.subr.bf16.mxu0 0
        %4242 = vmatpush1.bf16.msra.mxu0 0
        %4243 = vmatprep.subr.bf16.mxu0 0
        %4244 = vmatpush1.bf16.msra.mxu0 0
        %4245 = vmatprep.subr.bf16.mxu0 0
        %4246 = vmatpush1.bf16.msra.mxu0 0
        %4247 = vmatprep.subr.bf16.mxu0 0
        %4248 = vmatpush1.bf16.msra.mxu0 0
        %4249 = vmatprep.subr.bf16.mxu0 0
        %4250 = vmatpush1.bf16.msra.mxu0 0
        %4251 = vmatprep.mubr.bf16.mxu0 0
        %4252 = vmatmul.mubr.bf16.gmra.mrb[0].mxu0 %v4135
        %v4253 = vpop.f32.mrb[0].mxu0
        %v4254 = vadd.f32 0.0, %v4253
        %v4255 = vpop.f32.mrb[0].mxu0
        %v4256 = vpop.f32.mrb[0].mxu0
        %v4257 = vadd.f32 0.0, %v4256
        %v4258 = vpop.f32.mrb[0].mxu0
        %4259 = vmatprep.mubr.bf16.mxu0 0
        %4260 = vmatmul.mubr.bf16.gmra.mrb[0].mxu0 %v4138
        %v4261 = vpop.f32.mrb[0].mxu0
        %v4262 = vadd.f32 0.0, %v4261
        %v4263 = vpop.f32.mrb[0].mxu0
        %v4264 = vpop.f32.mrb[0].mxu0
        %v4265 = vadd.f32 0.0, %v4264
        %v4266 = vpop.f32.mrb[0].mxu0
        %4267 = vmatprep.mubr.bf16.mxu0 0
        %4268 = vmatmul.mubr.bf16.gmra.mrb[0].mxu0 %v4141
        %v4269 = vpop.f32.mrb[0].mxu0
        %v4270 = vadd.f32 0.0, %v4269
        %v4271 = vpop.f32.mrb[0].mxu0
        %v4272 = vpop.f32.mrb[0].mxu0
        %v4273 = vadd.f32 0.0, %v4272
        %v4274 = vpop.f32.mrb[0].mxu0
        %4275 = vmatprep.mubr.bf16.mxu0 0
        %4276 = vmatmul.mubr.bf16.gmra.mrb[0].mxu0 %v4144
        %v4277 = vpop.f32.mrb[0].mxu0
        %v4278 = vadd.f32 0.0, %v4277
        %v4279 = vpop.f32.mrb[0].mxu0
        %v4280 = vpop.f32.mrb[0].mxu0
        %v4281 = vadd.f32 0.0, %v4280
        %v4282 = vpop.f32.mrb[0].mxu0
        %4283 = vdwg.mxu0
        %v4284 = vadd.f32 %v4017, %v4181
        %v4285 = vadd.f32 %v4018, %v4183
        %v4286 = vadd.f32 %v4019, %v4254
        %v4287 = vadd.f32 %v4020, %v4185
        %v4288 = vadd.f32 %v4021, %v4187
        %v4289 = vadd.f32 %v4022, %v4257
        %v4290 = vadd.f32 %v4023, %v4191
        %v4291 = vadd.f32 %v4024, %v4193
        %v4292 = vadd.f32 %v4025, %v4262
        %v4293 = vadd.f32 %v4026, %v4195
        %v4294 = vadd.f32 %v4027, %v4197
        %v4295 = vadd.f32 %v4028, %v4265
        %v4296 = vadd.f32 %v4029, %v4201
        %v4297 = vadd.f32 %v4030, %v4203
        %v4298 = vadd.f32 %v4031, %v4270
        %v4299 = vadd.f32 %v4032, %v4205
        %v4300 = vadd.f32 %v4033, %v4207
        %v4301 = vadd.f32 %v4034, %v4273
        %v4302 = vadd.f32 %v4035, %v4211
        %v4303 = vadd.f32 %v4036, %v4213
        %v4304 = vadd.f32 %v4037, %v4278
        %v4305 = vadd.f32 %v4038, %v4215
        %v4306 = vadd.f32 %v4039, %v4217
        %v4307 = vadd.f32 %v4040, %v4281
        %v4308 = vld [vmem:[%s2] sm:$0x7]
        %v4310 = vlaneseq
        %v4311 = vshrl.u32 %v4310, 7
        %v4312 = vsub.s32 0, %v4311
        %v4313 = vrot.slane %v4308, %v4312
        %v4314 = vlaneseq
        %v4315 = vshrl.u32 %v4314, 7
        %v4316 = vsub.s32 1, %v4315
        %v4317 = vrot.slane %v4308, %v4316
        %v4318 = vlaneseq
        %v4319 = vshrl.u32 %v4318, 7
        %v4320 = vsub.s32 2, %v4319
        %v4321 = vrot.slane %v4308, %v4320
        %v4325 = vadd.f32 %v4284, %v4313
        %v4326 = vadd.f32 %v4285, %v4317
        %v4327 = vadd.f32 %v4286, %v4321
        %v4328 = vadd.f32 %v4287, %v4313
        %v4329 = vadd.f32 %v4288, %v4317
        %v4330 = vadd.f32 %v4289, %v4321
        %v4331 = vadd.f32 %v4290, %v4313
        %v4332 = vadd.f32 %v4291, %v4317
        %v4333 = vadd.f32 %v4292, %v4321
        %v4334 = vadd.f32 %v4293, %v4313
        %v4335 = vadd.f32 %v4294, %v4317
        %v4336 = vadd.f32 %v4295, %v4321
        %v4337 = vadd.f32 %v4296, %v4313
        %v4338 = vadd.f32 %v4297, %v4317
        %v4339 = vadd.f32 %v4298, %v4321
        %v4340 = vadd.f32 %v4299, %v4313
        %v4341 = vadd.f32 %v4300, %v4317
        %v4342 = vadd.f32 %v4301, %v4321
        %v4343 = vadd.f32 %v4302, %v4313
        %v4344 = vadd.f32 %v4303, %v4317
        %v4345 = vadd.f32 %v4304, %v4321
        %v4346 = vadd.f32 %v4305, %v4313
        %v4347 = vadd.f32 %v4306, %v4317
        %v4348 = vadd.f32 %v4307, %v4321
        %vm4373 = vcmask 1046528
        %v4374 = vrot.slane %v4325, 1
        %v4375 = vrot.slane %v4328, 1
        %v4376 = vsel %vm4373, %v4374, %v4375
        %v4377 = vrot.slane %v4326, 1
        %v4378 = vrot.slane %v4329, 1
        %v4379 = vsel %vm4373, %v4377, %v4378
        %v4380 = vrot.slane %v4327, 1
        %v4381 = vrot.slane %v4330, 1
        %v4382 = vsel %vm4373, %v4380, %v4381
        %v4383 = vrot.slane %v4331, 1
        %v4384 = vsel %vm4373, %v4375, %v4383
        %v4385 = vrot.slane %v4332, 1
        %v4386 = vsel %vm4373, %v4378, %v4385
        %v4387 = vrot.slane %v4333, 1
        %v4388 = vsel %vm4373, %v4381, %v4387
        %v4389 = vrot.slane %v4334, 1
        %v4390 = vsel %vm4373, %v4383, %v4389
        %v4391 = vrot.slane %v4335, 1
        %v4392 = vsel %vm4373, %v4385, %v4391
        %v4393 = vrot.slane %v4336, 1
        %v4394 = vsel %vm4373, %v4387, %v4393
        %v4395 = vrot.slane %v4337, 1
        %v4396 = vsel %vm4373, %v4389, %v4395
        %v4397 = vrot.slane %v4338, 1
        %v4398 = vsel %vm4373, %v4391, %v4397
        %v4399 = vrot.slane %v4339, 1
        %v4400 = vsel %vm4373, %v4393, %v4399
        %v4401 = vrot.slane %v4340, 1
        %v4402 = vsel %vm4373, %v4395, %v4401
        %v4403 = vrot.slane %v4341, 1
        %v4404 = vsel %vm4373, %v4397, %v4403
        %v4405 = vrot.slane %v4342, 1
        %v4406 = vsel %vm4373, %v4399, %v4405
        %v4407 = vrot.slane %v4343, 1
        %v4408 = vsel %vm4373, %v4401, %v4407
        %v4409 = vrot.slane %v4344, 1
        %v4410 = vsel %vm4373, %v4403, %v4409
        %v4411 = vrot.slane %v4345, 1
        %v4412 = vsel %vm4373, %v4405, %v4411
        %v4413 = vrot.slane %v4346, 1
        %v4414 = vsel %vm4373, %v4407, %v4413
        %v4415 = vrot.slane %v4347, 1
        %v4416 = vsel %vm4373, %v4409, %v4415
        %v4417 = vrot.slane %v4348, 1
        %v4418 = vsel %vm4373, %v4411, %v4417
        %v4443 = vmax.f32 %v4325, %v4376
        %v4444 = vmax.f32 %v4326, %v4379
        %v4445 = vmax.f32 %v4327, %v4382
        %v4446 = vmax.f32 %v4328, %v4384
        %v4447 = vmax.f32 %v4329, %v4386
        %v4448 = vmax.f32 %v4330, %v4388
        %v4449 = vmax.f32 %v4331, %v4390
        %v4450 = vmax.f32 %v4332, %v4392
        %v4451 = vmax.f32 %v4333, %v4394
        %v4452 = vmax.f32 %v4334, %v4396
        %v4453 = vmax.f32 %v4335, %v4398
        %v4454 = vmax.f32 %v4336, %v4400
        %v4455 = vmax.f32 %v4337, %v4402
        %v4456 = vmax.f32 %v4338, %v4404
        %v4457 = vmax.f32 %v4339, %v4406
        %v4458 = vmax.f32 %v4340, %v4408
        %v4459 = vmax.f32 %v4341, %v4410
        %v4460 = vmax.f32 %v4342, %v4412
        %v4461 = vmax.f32 %v4343, %v4414
        %v4462 = vmax.f32 %v4344, %v4416
        %v4463 = vmax.f32 %v4345, %v4418
        %v4464 = vmax.f32 %v4346, %v4413
        %v4465 = vmax.f32 %v4347, %v4415
        %v4466 = vmax.f32 %v4348, %v4417
        %vm4467 = vcmask 1045504
        %v4468 = vrot.slane %v4325, 2
        %v4469 = vrot.slane %v4328, 2
        %v4470 = vsel %vm4467, %v4468, %v4469
        %v4471 = vrot.slane %v4326, 2
        %v4472 = vrot.slane %v4329, 2
        %v4473 = vsel %vm4467, %v4471, %v4472
        %v4474 = vrot.slane %v4327, 2
        %v4475 = vrot.slane %v4330, 2
        %v4476 = vsel %vm4467, %v4474, %v4475
        %v4477 = vrot.slane %v4331, 2
        %v4478 = vsel %vm4467, %v4469, %v4477
        %v4479 = vrot.slane %v4332, 2
        %v4480 = vsel %vm4467, %v4472, %v4479
        %v4481 = vrot.slane %v4333, 2
        %v4482 = vsel %vm4467, %v4475, %v4481
        %v4483 = vrot.slane %v4334, 2
        %v4484 = vsel %vm4467, %v4477, %v4483
        %v4485 = vrot.slane %v4335, 2
        %v4486 = vsel %vm4467, %v4479, %v4485
        %v4487 = vrot.slane %v4336, 2
        %v4488 = vsel %vm4467, %v4481, %v4487
        %v4489 = vrot.slane %v4337, 2
        %v4490 = vsel %vm4467, %v4483, %v4489
        %v4491 = vrot.slane %v4338, 2
        %v4492 = vsel %vm4467, %v4485, %v4491
        %v4493 = vrot.slane %v4339, 2
        %v4494 = vsel %vm4467, %v4487, %v4493
        %v4495 = vrot.slane %v4340, 2
        %v4496 = vsel %vm4467, %v4489, %v4495
        %v4497 = vrot.slane %v4341, 2
        %v4498 = vsel %vm4467, %v4491, %v4497
        %v4499 = vrot.slane %v4342, 2
        %v4500 = vsel %vm4467, %v4493, %v4499
        %v4501 = vrot.slane %v4343, 2
        %v4502 = vsel %vm4467, %v4495, %v4501
        %v4503 = vrot.slane %v4344, 2
        %v4504 = vsel %vm4467, %v4497, %v4503
        %v4505 = vrot.slane %v4345, 2
        %v4506 = vsel %vm4467, %v4499, %v4505
        %v4507 = vrot.slane %v4346, 2
        %v4508 = vsel %vm4467, %v4501, %v4507
        %v4509 = vrot.slane %v4347, 2
        %v4510 = vsel %vm4467, %v4503, %v4509
        %v4511 = vrot.slane %v4348, 2
        %v4512 = vsel %vm4467, %v4505, %v4511
        %v4537 = vmax.f32 %v4443, %v4470
        %v4538 = vmax.f32 %v4444, %v4473
        %v4539 = vmax.f32 %v4445, %v4476
        %v4540 = vmax.f32 %v4446, %v4478
        %v4541 = vmax.f32 %v4447, %v4480
        %v4542 = vmax.f32 %v4448, %v4482
        %v4543 = vmax.f32 %v4449, %v4484
        %v4544 = vmax.f32 %v4450, %v4486
        %v4545 = vmax.f32 %v4451, %v4488
        %v4546 = vmax.f32 %v4452, %v4490
        %v4547 = vmax.f32 %v4453, %v4492
        %v4548 = vmax.f32 %v4454, %v4494
        %v4549 = vmax.f32 %v4455, %v4496
        %v4550 = vmax.f32 %v4456, %v4498
        %v4551 = vmax.f32 %v4457, %v4500
        %v4552 = vmax.f32 %v4458, %v4502
        %v4553 = vmax.f32 %v4459, %v4504
        %v4554 = vmax.f32 %v4460, %v4506
        %v4555 = vmax.f32 %v4461, %v4508
        %v4556 = vmax.f32 %v4462, %v4510
        %v4557 = vmax.f32 %v4463, %v4512
        %v4558 = vmax.f32 %v4464, %v4507
        %v4559 = vmax.f32 %v4465, %v4509
        %v4560 = vmax.f32 %v4466, %v4511
        %4585 = vrot.lane.b32.xlu0 %v4537, 127
        %v4586 = vpop.permute.xlu0 %4585
        %4587 = vrot.lane.b32.xlu0 %v4538, 127
        %v4588 = vpop.permute.xlu0 %4587
        %4589 = vrot.lane.b32.xlu0 %v4539, 127
        %v4590 = vpop.permute.xlu0 %4589
        %4591 = vrot.lane.b32.xlu0 %v4540, 127
        %v4592 = vpop.permute.xlu0 %4591
        %4593 = vrot.lane.b32.xlu0 %v4541, 127
        %v4594 = vpop.permute.xlu0 %4593
        %4595 = vrot.lane.b32.xlu0 %v4542, 127
        %v4596 = vpop.permute.xlu0 %4595
        %4597 = vrot.lane.b32.xlu0 %v4543, 127
        %v4598 = vpop.permute.xlu0 %4597
        %4599 = vrot.lane.b32.xlu0 %v4544, 127
        %v4600 = vpop.permute.xlu0 %4599
        %4601 = vrot.lane.b32.xlu0 %v4545, 127
        %v4602 = vpop.permute.xlu0 %4601
        %4603 = vrot.lane.b32.xlu0 %v4546, 127
        %v4604 = vpop.permute.xlu0 %4603
        %4605 = vrot.lane.b32.xlu0 %v4547, 127
        %v4606 = vpop.permute.xlu0 %4605
        %4607 = vrot.lane.b32.xlu0 %v4548, 127
        %v4608 = vpop.permute.xlu0 %4607
        %4609 = vrot.lane.b32.xlu0 %v4549, 127
        %v4610 = vpop.permute.xlu0 %4609
        %4611 = vrot.lane.b32.xlu0 %v4550, 127
        %v4612 = vpop.permute.xlu0 %4611
        %4613 = vrot.lane.b32.xlu0 %v4551, 127
        %v4614 = vpop.permute.xlu0 %4613
        %4615 = vrot.lane.b32.xlu0 %v4552, 127
        %v4616 = vpop.permute.xlu0 %4615
        %4617 = vrot.lane.b32.xlu0 %v4553, 127
        %v4618 = vpop.permute.xlu0 %4617
        %4619 = vrot.lane.b32.xlu0 %v4554, 127
        %v4620 = vpop.permute.xlu0 %4619
        %4621 = vrot.lane.b32.xlu0 %v4555, 127
        %v4622 = vpop.permute.xlu0 %4621
        %4623 = vrot.lane.b32.xlu0 %v4556, 127
        %v4624 = vpop.permute.xlu0 %4623
        %4625 = vrot.lane.b32.xlu0 %v4557, 127
        %v4626 = vpop.permute.xlu0 %4625
        %4627 = vrot.lane.b32.xlu0 %v4558, 127
        %v4628 = vpop.permute.xlu0 %4627
        %4629 = vrot.lane.b32.xlu0 %v4559, 127
        %v4630 = vpop.permute.xlu0 %4629
        %4631 = vrot.lane.b32.xlu0 %v4560, 127
        %v4632 = vpop.permute.xlu0 %4631
        %vm4633 = vcmask 1039360
        %v4634 = vsel %vm4633, %v4586, %v4588
        %v4635 = vsel %vm4633, %v4588, %v4590
        %v4636 = vsel %vm4633, %v4592, %v4594
        %v4637 = vsel %vm4633, %v4594, %v4596
        %v4638 = vsel %vm4633, %v4598, %v4600
        %v4639 = vsel %vm4633, %v4600, %v4602
        %v4640 = vsel %vm4633, %v4604, %v4606
        %v4641 = vsel %vm4633, %v4606, %v4608
        %v4642 = vsel %vm4633, %v4610, %v4612
        %v4643 = vsel %vm4633, %v4612, %v4614
        %v4644 = vsel %vm4633, %v4616, %v4618
        %v4645 = vsel %vm4633, %v4618, %v4620
        %v4646 = vsel %vm4633, %v4622, %v4624
        %v4647 = vsel %vm4633, %v4624, %v4626
        %v4648 = vsel %vm4633, %v4628, %v4630
        %v4649 = vsel %vm4633, %v4630, %v4632
        %v4674 = vmax.f32 %v4537, %v4634
        %v4675 = vmax.f32 %v4538, %v4635
        %v4676 = vmax.f32 %v4539, %v4590
        %v4677 = vmax.f32 %v4540, %v4636
        %v4678 = vmax.f32 %v4541, %v4637
        %v4679 = vmax.f32 %v4542, %v4596
        %v4680 = vmax.f32 %v4543, %v4638
        %v4681 = vmax.f32 %v4544, %v4639
        %v4682 = vmax.f32 %v4545, %v4602
        %v4683 = vmax.f32 %v4546, %v4640
        %v4684 = vmax.f32 %v4547, %v4641
        %v4685 = vmax.f32 %v4548, %v4608
        %v4686 = vmax.f32 %v4549, %v4642
        %v4687 = vmax.f32 %v4550, %v4643
        %v4688 = vmax.f32 %v4551, %v4614
        %v4689 = vmax.f32 %v4552, %v4644
        %v4690 = vmax.f32 %v4553, %v4645
        %v4691 = vmax.f32 %v4554, %v4620
        %v4692 = vmax.f32 %v4555, %v4646
        %v4693 = vmax.f32 %v4556, %v4647
        %v4694 = vmax.f32 %v4557, %v4626
        %v4695 = vmax.f32 %v4558, %v4648
        %v4696 = vmax.f32 %v4559, %v4649
        %v4697 = vmax.f32 %v4560, %v4632
        %4698 = vrot.lane.b32.xlu0 %v4537, 126
        %v4699 = vpop.permute.xlu0 %4698
        %4700 = vrot.lane.b32.xlu0 %v4538, 126
        %v4701 = vpop.permute.xlu0 %4700
        %4702 = vrot.lane.b32.xlu0 %v4539, 126
        %v4703 = vpop.permute.xlu0 %4702
        %4704 = vrot.lane.b32.xlu0 %v4540, 126
        %v4705 = vpop.permute.xlu0 %4704
        %4706 = vrot.lane.b32.xlu0 %v4541, 126
        %v4707 = vpop.permute.xlu0 %4706
        %4708 = vrot.lane.b32.xlu0 %v4542, 126
        %v4709 = vpop.permute.xlu0 %4708
        %4710 = vrot.lane.b32.xlu0 %v4543, 126
        %v4711 = vpop.permute.xlu0 %4710
        %4712 = vrot.lane.b32.xlu0 %v4544, 126
        %v4713 = vpop.permute.xlu0 %4712
        %4714 = vrot.lane.b32.xlu0 %v4545, 126
        %v4715 = vpop.permute.xlu0 %4714
        %4716 = vrot.lane.b32.xlu0 %v4546, 126
        %v4717 = vpop.permute.xlu0 %4716
        %4718 = vrot.lane.b32.xlu0 %v4547, 126
        %v4719 = vpop.permute.xlu0 %4718
        %4720 = vrot.lane.b32.xlu0 %v4548, 126
        %v4721 = vpop.permute.xlu0 %4720
        %4722 = vrot.lane.b32.xlu0 %v4549, 126
        %v4723 = vpop.permute.xlu0 %4722
        %4724 = vrot.lane.b32.xlu0 %v4550, 126
        %v4725 = vpop.permute.xlu0 %4724
        %4726 = vrot.lane.b32.xlu0 %v4551, 126
        %v4727 = vpop.permute.xlu0 %4726
        %4728 = vrot.lane.b32.xlu0 %v4552, 126
        %v4729 = vpop.permute.xlu0 %4728
        %4730 = vrot.lane.b32.xlu0 %v4553, 126
        %v4731 = vpop.permute.xlu0 %4730
        %4732 = vrot.lane.b32.xlu0 %v4554, 126
        %v4733 = vpop.permute.xlu0 %4732
        %4734 = vrot.lane.b32.xlu0 %v4555, 126
        %v4735 = vpop.permute.xlu0 %4734
        %4736 = vrot.lane.b32.xlu0 %v4556, 126
        %v4737 = vpop.permute.xlu0 %4736
        %4738 = vrot.lane.b32.xlu0 %v4557, 126
        %v4739 = vpop.permute.xlu0 %4738
        %4740 = vrot.lane.b32.xlu0 %v4558, 126
        %v4741 = vpop.permute.xlu0 %4740
        %4742 = vrot.lane.b32.xlu0 %v4559, 126
        %v4743 = vpop.permute.xlu0 %4742
        %4744 = vrot.lane.b32.xlu0 %v4560, 126
        %v4745 = vpop.permute.xlu0 %4744
        %vm4746 = vcmask 1031168
        %v4747 = vsel %vm4746, %v4699, %v4701
        %v4748 = vsel %vm4746, %v4701, %v4703
        %v4749 = vsel %vm4746, %v4705, %v4707
        %v4750 = vsel %vm4746, %v4707, %v4709
        %v4751 = vsel %vm4746, %v4711, %v4713
        %v4752 = vsel %vm4746, %v4713, %v4715
        %v4753 = vsel %vm4746, %v4717, %v4719
        %v4754 = vsel %vm4746, %v4719, %v4721
        %v4755 = vsel %vm4746, %v4723, %v4725
        %v4756 = vsel %vm4746, %v4725, %v4727
        %v4757 = vsel %vm4746, %v4729, %v4731
        %v4758 = vsel %vm4746, %v4731, %v4733
        %v4759 = vsel %vm4746, %v4735, %v4737
        %v4760 = vsel %vm4746, %v4737, %v4739
        %v4761 = vsel %vm4746, %v4741, %v4743
        %v4762 = vsel %vm4746, %v4743, %v4745
        %v4787 = vmax.f32 %v4674, %v4747
        %v4788 = vmax.f32 %v4675, %v4748
        %v4789 = vmax.f32 %v4676, %v4703
        %v4790 = vmax.f32 %v4677, %v4749
        %v4791 = vmax.f32 %v4678, %v4750
        %v4792 = vmax.f32 %v4679, %v4709
        %v4793 = vmax.f32 %v4680, %v4751
        %v4794 = vmax.f32 %v4681, %v4752
        %v4795 = vmax.f32 %v4682, %v4715
        %v4796 = vmax.f32 %v4683, %v4753
        %v4797 = vmax.f32 %v4684, %v4754
        %v4798 = vmax.f32 %v4685, %v4721
        %v4799 = vmax.f32 %v4686, %v4755
        %v4800 = vmax.f32 %v4687, %v4756
        %v4801 = vmax.f32 %v4688, %v4727
        %v4802 = vmax.f32 %v4689, %v4757
        %v4803 = vmax.f32 %v4690, %v4758
        %v4804 = vmax.f32 %v4691, %v4733
        %v4805 = vmax.f32 %v4692, %v4759
        %v4806 = vmax.f32 %v4693, %v4760
        %v4807 = vmax.f32 %v4694, %v4739
        %v4808 = vmax.f32 %v4695, %v4761
        %v4809 = vmax.f32 %v4696, %v4762
        %v4810 = vmax.f32 %v4697, %v4745
        %v4811 = vmax.f32 %v4787, 0.0
        %v4812 = vmax.f32 %v4788, 0.0
        %v4813 = vmax.f32 %v4789, 0.0
        %v4814 = vmax.f32 %v4790, 0.0
        %v4815 = vmax.f32 %v4791, 0.0
        %v4816 = vmax.f32 %v4792, 0.0
        %v4817 = vmax.f32 %v4793, 0.0
        %v4818 = vmax.f32 %v4794, 0.0
        %v4819 = vmax.f32 %v4795, 0.0
        %v4820 = vmax.f32 %v4796, 0.0
        %v4821 = vmax.f32 %v4797, 0.0
        %v4822 = vmax.f32 %v4798, 0.0
        %v4823 = vmax.f32 %v4799, 0.0
        %v4824 = vmax.f32 %v4800, 0.0
        %v4825 = vmax.f32 %v4801, 0.0
        %v4826 = vmax.f32 %v4802, 0.0
        %v4827 = vmax.f32 %v4803, 0.0
        %v4828 = vmax.f32 %v4804, 0.0
        %v4829 = vmax.f32 %v4805, 0.0
        %v4830 = vmax.f32 %v4806, 0.0
        %v4831 = vmax.f32 %v4807, 0.0
        %v4832 = vmax.f32 %v4808, 0.0
        %v4833 = vmax.f32 %v4809, 0.0
        %v4834 = vmax.f32 %v4810, 0.0
        %v4835 = vpack.c.bf16 %v4814, %v4811
        %v4836 = vpack.c.bf16 %v4815, %v4812
        %v4837 = vpack.c.bf16 %v4816, %v4813
        %v4838 = vpack.c.bf16 %v4820, %v4817
        %v4839 = vpack.c.bf16 %v4821, %v4818
        %v4840 = vpack.c.bf16 %v4822, %v4819
        %v4841 = vpack.c.bf16 %v4826, %v4823
        %v4842 = vpack.c.bf16 %v4827, %v4824
        %v4843 = vpack.c.bf16 %v4828, %v4825
        %v4844 = vld [vmem:[%s3] sm:$0xf]
        %v4845 = vld [vmem:[%s3 + $0x4] sm:$0xf]
        %v4846 = vld [vmem:[%s3 + $0x8] sm:$0xf]
        %v4847 = vld [vmem:[%s3 + $0xc] sm:$0xf]
        %v4848 = vld [vmem:[%s3 + $0x10] sm:$0xf]
        %v4849 = vld [vmem:[%s3 + $0x14] sm:$0xf]
        %v4850 = vld [vmem:[%s3 + $0x18] sm:$0xf]
        %v4851 = vld [vmem:[%s3 + $0x1c] sm:$0xf]
        %v4852 = vld [vmem:[%s3 + $0x20] sm:$0xf]
        %v4853 = vld [vmem:[%s3 + $0x24] sm:$0xf]
        %v4854 = vld [vmem:[%s3 + $0x28] sm:$0xf]
        %v4855 = vld [vmem:[%s3 + $0x2c] sm:$0xf]
        %v4856 = vld [vmem:[%s3 + $0x30] sm:$0xf]
        %v4857 = vld [vmem:[%s3 + $0x34] sm:$0xf]
        %v4858 = vld [vmem:[%s3 + $0x38] sm:$0xf]
        %v4859 = vld [vmem:[%s3 + $0x3c] sm:$0xf]
        %v4860 = vld [vmem:[%s3 + $0x40] sm:$0xf]
        %v4861 = vld [vmem:[%s3 + $0x44] sm:$0xf]
        %v4862 = vld [vmem:[%s3 + $0x48] sm:$0xf]
        %v4863 = vld [vmem:[%s3 + $0x4c] sm:$0xf]
        %v4864 = vld [vmem:[%s3 + $0x50] sm:$0xf]
        %v4865 = vld [vmem:[%s3 + $0x54] sm:$0xf]
        %v4866 = vld [vmem:[%s3 + $0x58] sm:$0xf]
        %v4867 = vld [vmem:[%s3 + $0x5c] sm:$0xf]
        %v4868 = vld [vmem:[%s3 + $0x60] sm:$0xf]
        %v4869 = vld [vmem:[%s3 + $0x64] sm:$0xf]
        %v4870 = vld [vmem:[%s3 + $0x68] sm:$0xf]
        %v4871 = vld [vmem:[%s3 + $0x6c] sm:$0xf]
        %v4872 = vld [vmem:[%s3 + $0x70] sm:$0xf]
        %v4873 = vld [vmem:[%s3 + $0x74] sm:$0xf]
        %v4874 = vld [vmem:[%s3 + $0x78] sm:$0xf]
        %v4875 = vld [vmem:[%s3 + $0x7c] sm:$0xf]
        %v4876 = vld [vmem:[%s3 + $0x80] sm:$0xf]
        %v4877 = vld [vmem:[%s3 + $0x84] sm:$0xf]
        %v4878 = vld [vmem:[%s3 + $0x88] sm:$0xf]
        %v4879 = vld [vmem:[%s3 + $0x8c] sm:$0xf]
        %v4880 = vld [vmem:[%s3 + $0x90] sm:$0xf]
        %v4881 = vld [vmem:[%s3 + $0x94] sm:$0x1]
        %v4882 = vpack.c.bf16 %v4829, %v4829
        %v4883 = vpack.c.bf16 %v4830, %v4830
        %v4884 = vpack.c.bf16 %v4831, %v4831
        %s4885 = scalar_lea.vmem %s3, 152
        %v4886 = vld [vmem:[%s4885] sm:$0xf]
        %v4887 = vld [vmem:[%s4885 + $0x4] sm:$0xf]
        %v4888 = vld [vmem:[%s4885 + $0x8] sm:$0xf]
        %v4889 = vld [vmem:[%s4885 + $0xc] sm:$0xf]
        %v4890 = vld [vmem:[%s4885 + $0x10] sm:$0xf]
        %v4891 = vld [vmem:[%s4885 + $0x14] sm:$0xf]
        %v4892 = vld [vmem:[%s4885 + $0x18] sm:$0xf]
        %v4893 = vld [vmem:[%s4885 + $0x1c] sm:$0xf]
        %v4894 = vld [vmem:[%s4885 + $0x20] sm:$0xf]
        %v4895 = vld [vmem:[%s4885 + $0x24] sm:$0xf]
        %v4896 = vld [vmem:[%s4885 + $0x28] sm:$0xf]
        %v4897 = vld [vmem:[%s4885 + $0x2c] sm:$0xf]
        %v4898 = vld [vmem:[%s4885 + $0x30] sm:$0xf]
        %v4899 = vld [vmem:[%s4885 + $0x34] sm:$0xf]
        %v4900 = vld [vmem:[%s4885 + $0x38] sm:$0xf]
        %v4901 = vld [vmem:[%s4885 + $0x3c] sm:$0xf]
        %v4902 = vld [vmem:[%s4885 + $0x40] sm:$0xf]
        %v4903 = vld [vmem:[%s4885 + $0x44] sm:$0xf]
        %v4904 = vld [vmem:[%s4885 + $0x48] sm:$0xf]
        %v4905 = vld [vmem:[%s4885 + $0x4c] sm:$0xf]
        %v4906 = vld [vmem:[%s4885 + $0x50] sm:$0xf]
        %v4907 = vld [vmem:[%s4885 + $0x54] sm:$0xf]
        %v4908 = vld [vmem:[%s4885 + $0x58] sm:$0xf]
        %v4909 = vld [vmem:[%s4885 + $0x5c] sm:$0xf]
        %v4910 = vld [vmem:[%s4885 + $0x60] sm:$0xf]
        %v4911 = vld [vmem:[%s4885 + $0x64] sm:$0xf]
        %v4912 = vld [vmem:[%s4885 + $0x68] sm:$0xf]
        %v4913 = vld [vmem:[%s4885 + $0x6c] sm:$0xf]
        %v4914 = vld [vmem:[%s4885 + $0x70] sm:$0xf]
        %v4915 = vld [vmem:[%s4885 + $0x74] sm:$0xf]
        %v4916 = vld [vmem:[%s4885 + $0x78] sm:$0xf]
        %v4917 = vld [vmem:[%s4885 + $0x7c] sm:$0xf]
        %v4918 = vld [vmem:[%s4885 + $0x80] sm:$0xf]
        %v4919 = vld [vmem:[%s4885 + $0x84] sm:$0xf]
        %v4920 = vld [vmem:[%s4885 + $0x88] sm:$0xf]
        %v4921 = vld [vmem:[%s4885 + $0x8c] sm:$0xf]
        %v4922 = vld [vmem:[%s4885 + $0x90] sm:$0xf]
        %v4923 = vld [vmem:[%s4885 + $0x94] sm:$0x1]
        %vm4924 = vsmask.f32 6400
        %v4926 = vshrl.u32 %v4835, 16
        %v4928 = vrot.slane %v4926, 1
        %v4929 = vshll.u32 %v4835, 16
        %v4931 = vrot.slane %v4929, 2
        %v4932 = vor.u32 %v4928, %v4931
        %v4934 = vshrl.u32 %v4838, 16
        %v4936 = vrot.slane %v4934, 1
        %v4937 = vshll.u32 %v4838, 16
        %v4939 = vrot.slane %v4937, 2
        %v4940 = vor.u32 %v4936, %v4939
        %v4941 = vsel %vm4924, %v4932, %v4940
        %v4943 = vshrl.u32 %v4836, 16
        %v4945 = vrot.slane %v4943, 1
        %v4946 = vshll.u32 %v4836, 16
        %v4948 = vrot.slane %v4946, 2
        %v4949 = vor.u32 %v4945, %v4948
        %v4951 = vshrl.u32 %v4839, 16
        %v4953 = vrot.slane %v4951, 1
        %v4954 = vshll.u32 %v4839, 16
        %v4956 = vrot.slane %v4954, 2
        %v4957 = vor.u32 %v4953, %v4956
        %v4958 = vsel %vm4924, %v4949, %v4957
        %v4960 = vshrl.u32 %v4837, 16
        %v4962 = vrot.slane %v4960, 1
        %v4963 = vshll.u32 %v4837, 16
        %v4965 = vrot.slane %v4963, 2
        %v4966 = vor.u32 %v4962, %v4965
        %v4968 = vshrl.u32 %v4840, 16
        %v4970 = vrot.slane %v4968, 1
        %v4971 = vshll.u32 %v4840, 16
        %v4973 = vrot.slane %v4971, 2
        %v4974 = vor.u32 %v4970, %v4973
        %v4975 = vsel %vm4924, %v4966, %v4974
        %v4977 = vshrl.u32 %v4841, 16
        %v4979 = vrot.slane %v4977, 1
        %v4980 = vshll.u32 %v4841, 16
        %v4982 = vrot.slane %v4980, 2
        %v4983 = vor.u32 %v4979, %v4982
        %v4984 = vsel %vm4924, %v4940, %v4983
        %v4986 = vshrl.u32 %v4842, 16
        %v4988 = vrot.slane %v4986, 1
        %v4989 = vshll.u32 %v4842, 16
        %v4991 = vrot.slane %v4989, 2
        %v4992 = vor.u32 %v4988, %v4991
        %v4993 = vsel %vm4924, %v4957, %v4992
        %v4995 = vshrl.u32 %v4843, 16
        %v4997 = vrot.slane %v4995, 1
        %v4998 = vshll.u32 %v4843, 16
        %v5000 = vrot.slane %v4998, 2
        %v5001 = vor.u32 %v4997, %v5000
        %v5002 = vsel %vm4924, %v4974, %v5001
        %v5004 = vshll.u32 %v4882, 16
        %v5006 = vrot.slane %v5004, 2
        %v5007 = vsel %vm4924, %v4983, %v5006
        %v5009 = vshll.u32 %v4883, 16
        %v5011 = vrot.slane %v5009, 2
        %v5012 = vsel %vm4924, %v4992, %v5011
        %v5014 = vshll.u32 %v4884, 16
        %v5016 = vrot.slane %v5014, 2
        %v5017 = vsel %vm4924, %v5001, %v5016
        %v5062 = vunpack.c.l.b16 %v4886
        %v5063 = vunpack.c.l.b16 %v4887
        %v5064 = vunpack.c.l.b16 %v4888
        %v5065 = vunpack.c.l.b16 %v4889
        %v5066 = vunpack.c.l.b16 %v4890
        %v5067 = vunpack.c.l.b16 %v4891
        %v5068 = vunpack.c.l.b16 %v4892
        %v5069 = vunpack.c.l.b16 %v4893
        %v5070 = vunpack.c.l.b16 %v4894
        %v5071 = vunpack.c.l.b16 %v4895
        %v5072 = vunpack.c.l.b16 %v4896
        %v5073 = vunpack.c.l.b16 %v4897
        %v5074 = vunpack.c.l.b16 %v4898
        %v5075 = vunpack.c.l.b16 %v4899
        %v5076 = vunpack.c.l.b16 %v4900
        %v5077 = vunpack.c.l.b16 %v4901
        %v5078 = vunpack.c.l.b16 %v4902
        %v5079 = vunpack.c.l.b16 %v4903
        %v5080 = vunpack.c.l.b16 %v4904
        %v5081 = vunpack.c.l.b16 %v4905
        %v5082 = vunpack.c.l.b16 %v4906
        %v5083 = vunpack.c.l.b16 %v4907
        %v5084 = vunpack.c.l.b16 %v4908
        %v5085 = vunpack.c.l.b16 %v4909
        %v5086 = vunpack.c.l.b16 %v4910
        %v5087 = vunpack.c.l.b16 %v4911
        %v5088 = vunpack.c.l.b16 %v4912
        %v5089 = vunpack.c.l.b16 %v4913
        %v5090 = vunpack.c.l.b16 %v4914
        %v5091 = vunpack.c.l.b16 %v4915
        %v5092 = vunpack.c.l.b16 %v4916
        %v5093 = vunpack.c.l.b16 %v4917
        %v5094 = vunpack.c.l.b16 %v4918
        %v5095 = vunpack.c.l.b16 %v4919
        %v5096 = vunpack.c.l.b16 %v4920
        %v5097 = vunpack.c.l.b16 %v4921
        %v5098 = vunpack.c.l.b16 %v4922
        %v5099 = vunpack.c.l.b16 %v4923
        %v5100 = vpack.c.b16 %v5063, %v5062
        %v5101 = vpack.c.b16 %v5065, %v5064
        %v5102 = vpack.c.b16 %v5067, %v5066
        %v5103 = vpack.c.b16 %v5069, %v5068
        %v5104 = vpack.c.b16 %v5071, %v5070
        %v5105 = vpack.c.b16 %v5073, %v5072
        %v5106 = vpack.c.b16 %v5075, %v5074
        %v5107 = vpack.c.b16 %v5077, %v5076
        %v5108 = vpack.c.b16 %v5079, %v5078
        %v5109 = vpack.c.b16 %v5081, %v5080
        %v5110 = vpack.c.b16 %v5083, %v5082
        %v5111 = vpack.c.b16 %v5085, %v5084
        %v5112 = vpack.c.b16 %v5087, %v5086
        %v5113 = vpack.c.b16 %v5089, %v5088
        %v5114 = vpack.c.b16 %v5091, %v5090
        %v5115 = vpack.c.b16 %v5093, %v5092
        %v5116 = vpack.c.b16 %v5095, %v5094
        %v5117 = vpack.c.b16 %v5097, %v5096
        %v5118 = vpack.c.b16 %v5099, %v5098
        %vm5137 = vcmask 343040
        %v5139 = vsel %vm5137, %v4975, 0
        %v5142 = vsel %vm5137, %v5002, 0
        %v5145 = vsel %vm5137, %v5017, 0
        %vm5147 = vcmask 1044480
        %v5149 = vsel %vm5147, %v5118, 0
        %5151 = vmatprep.subr.bf16.mxu0 0
        %5152 = vmatpush1.bf16.msra.mxu0 %v5100
        %5153 = vmatprep.subr.bf16.mxu0 0
        %5154 = vmatpush1.bf16.msra.mxu0 %v5101
        %5155 = vmatprep.subr.bf16.mxu0 0
        %5156 = vmatpush1.bf16.msra.mxu0 %v5102
        %5157 = vmatprep.subr.bf16.mxu0 0
        %5158 = vmatpush1.bf16.msra.mxu0 %v5103
        %5159 = vmatprep.subr.bf16.mxu0 0
        %5160 = vmatpush1.bf16.msra.mxu0 %v5104
        %5161 = vmatprep.subr.bf16.mxu0 0
        %5162 = vmatpush1.bf16.msra.mxu0 %v5105
        %5163 = vmatprep.subr.bf16.mxu0 0
        %5164 = vmatpush1.bf16.msra.mxu0 %v5106
        %5165 = vmatprep.subr.bf16.mxu0 0
        %5166 = vmatpush1.bf16.msra.mxu0 %v5107
        %5167 = vmatprep.subr.bf16.mxu0 0
        %5168 = vmatpush1.bf16.msra.mxu0 %v5108
        %5169 = vmatprep.subr.bf16.mxu0 0
        %5170 = vmatpush1.bf16.msra.mxu0 %v5109
        %5171 = vmatprep.subr.bf16.mxu0 0
        %5172 = vmatpush1.bf16.msra.mxu0 %v5110
        %5173 = vmatprep.subr.bf16.mxu0 0
        %5174 = vmatpush1.bf16.msra.mxu0 %v5111
        %5175 = vmatprep.subr.bf16.mxu0 0
        %5176 = vmatpush1.bf16.msra.mxu0 %v5112
        %5177 = vmatprep.subr.bf16.mxu0 0
        %5178 = vmatpush1.bf16.msra.mxu0 %v5113
        %5179 = vmatprep.subr.bf16.mxu0 0
        %5180 = vmatpush1.bf16.msra.mxu0 %v5114
        %5181 = vmatprep.subr.bf16.mxu0 0
        %5182 = vmatpush1.bf16.msra.mxu0 %v5115
        %5183 = vmatprep.mubr.bf16.mxu0 %v4958
        %5184 = vmatmul.mubr.bf16.gmra.mrb[0].mxu0 %v4941
        %v5185 = vpop.f32.mrb[0].mxu0
        %v5186 = vadd.f32 0.0, %v5185
        %v5187 = vpop.f32.mrb[0].mxu0
        %v5188 = vpop.f32.mrb[0].mxu0
        %v5189 = vadd.f32 0.0, %v5188
        %v5190 = vpop.f32.mrb[0].mxu0
        %5191 = vmatprep.mubr.bf16.mxu0 %v4993
        %5192 = vmatmul.mubr.bf16.gmra.mrb[0].mxu0 %v4984
        %v5193 = vpop.f32.mrb[0].mxu0
        %v5194 = vadd.f32 0.0, %v5193
        %v5195 = vpop.f32.mrb[0].mxu0
        %v5196 = vpop.f32.mrb[0].mxu0
        %v5197 = vadd.f32 0.0, %v5196
        %v5198 = vpop.f32.mrb[0].mxu0
        %5199 = vmatprep.mubr.bf16.mxu0 %v5012
        %5200 = vmatmul.mubr.bf16.gmra.mrb[0].mxu0 %v5007
        %v5201 = vpop.f32.mrb[0].mxu0
        %v5202 = vadd.f32 0.0, %v5201
        %v5203 = vpop.f32.mrb[0].mxu0
        %v5204 = vpop.f32.mrb[0].mxu0
        %v5205 = vadd.f32 0.0, %v5204
        %v5206 = vpop.f32.mrb[0].mxu0
        %5207 = vdwg.mxu0
        %5208 = vmatprep.subr.bf16.mxu0 0
        %5209 = vmatpush1.bf16.msra.mxu0 %v5116
        %5210 = vmatprep.subr.bf16.mxu0 0
        %5211 = vmatpush1.bf16.msra.mxu0 %v5117
        %5212 = vmatprep.subr.bf16.mxu0 0
        %5213 = vmatpush1.bf16.msra.mxu0 %v5149
        %5214 = vmatprep.subr.bf16.mxu0 0
        %5215 = vmatpush1.bf16.msra.mxu0 0
        %5216 = vmatprep.subr.bf16.mxu0 0
        %5217 = vmatpush1.bf16.msra.mxu0 0
        %5218 = vmatprep.subr.bf16.mxu0 0
        %5219 = vmatpush1.bf16.msra.mxu0 0
        %5220 = vmatprep.subr.bf16.mxu0 0
        %5221 = vmatpush1.bf16.msra.mxu0 0
        %5222 = vmatprep.subr.bf16.mxu0 0
        %5223 = vmatpush1.bf16.msra.mxu0 0
        %5224 = vmatprep.subr.bf16.mxu0 0
        %5225 = vmatpush1.bf16.msra.mxu0 0
        %5226 = vmatprep.subr.bf16.mxu0 0
        %5227 = vmatpush1.bf16.msra.mxu0 0
        %5228 = vmatprep.subr.bf16.mxu0 0
        %5229 = vmatpush1.bf16.msra.mxu0 0
        %5230 = vmatprep.subr.bf16.mxu0 0
        %5231 = vmatpush1.bf16.msra.mxu0 0
        %5232 = vmatprep.subr.bf16.mxu0 0
        %5233 = vmatpush1.bf16.msra.mxu0 0
        %5234 = vmatprep.subr.bf16.mxu0 0
        %5235 = vmatpush1.bf16.msra.mxu0 0
        %5236 = vmatprep.subr.bf16.mxu0 0
        %5237 = vmatpush1.bf16.msra.mxu0 0
        %5238 = vmatprep.subr.bf16.mxu0 0
        %5239 = vmatpush1.bf16.msra.mxu0 0
        %5240 = vmatprep.mubr.bf16.mxu0 0
        %5241 = vmatmul.mubr.bf16.gmra.mrb[0].mxu0 %v5139
        %v5242 = vpop.f32.mrb[0].mxu0
        %v5243 = vadd.f32 %v5186, %v5242
        %v5244 = vpop.f32.mrb[0].mxu0
        %v5245 = vpop.f32.mrb[0].mxu0
        %v5246 = vadd.f32 %v5189, %v5245
        %v5247 = vpop.f32.mrb[0].mxu0
        %5248 = vmatprep.mubr.bf16.mxu0 0
        %5249 = vmatmul.mubr.bf16.gmra.mrb[0].mxu0 %v5142
        %v5250 = vpop.f32.mrb[0].mxu0
        %v5251 = vadd.f32 %v5194, %v5250
        %v5252 = vpop.f32.mrb[0].mxu0
        %v5253 = vpop.f32.mrb[0].mxu0
        %v5254 = vadd.f32 %v5197, %v5253
        %v5255 = vpop.f32.mrb[0].mxu0
        %5256 = vmatprep.mubr.bf16.mxu0 0
        %5257 = vmatmul.mubr.bf16.gmra.mrb[0].mxu0 %v5145
        %v5258 = vpop.f32.mrb[0].mxu0
        %v5259 = vadd.f32 %v5202, %v5258
        %v5260 = vpop.f32.mrb[0].mxu0
        %v5261 = vpop.f32.mrb[0].mxu0
        %v5262 = vadd.f32 %v5205, %v5261
        %v5263 = vpop.f32.mrb[0].mxu0
        %5264 = vdwg.mxu0
        %v5303 = vunpack.c.l.b16 %v4844
        %v5304 = vunpack.c.l.b16 %v4845
        %v5305 = vunpack.c.l.b16 %v4846
        %v5306 = vunpack.c.l.b16 %v4847
        %v5307 = vunpack.c.l.b16 %v4848
        %v5308 = vunpack.c.l.b16 %v4849
        %v5309 = vunpack.c.l.b16 %v4850
        %v5310 = vunpack.c.l.b16 %v4851
        %v5311 = vunpack.c.l.b16 %v4852
        %v5312 = vunpack.c.l.b16 %v4853
        %v5313 = vunpack.c.l.b16 %v4854
        %v5314 = vunpack.c.l.b16 %v4855
        %v5315 = vunpack.c.l.b16 %v4856
        %v5316 = vunpack.c.l.b16 %v4857
        %v5317 = vunpack.c.l.b16 %v4858
        %v5318 = vunpack.c.l.b16 %v4859
        %v5319 = vunpack.c.l.b16 %v4860
        %v5320 = vunpack.c.l.b16 %v4861
        %v5321 = vunpack.c.l.b16 %v4862
        %v5322 = vunpack.c.l.b16 %v4863
        %v5323 = vunpack.c.l.b16 %v4864
        %v5324 = vunpack.c.l.b16 %v4865
        %v5325 = vunpack.c.l.b16 %v4866
        %v5326 = vunpack.c.l.b16 %v4867
        %v5327 = vunpack.c.l.b16 %v4868
        %v5328 = vunpack.c.l.b16 %v4869
        %v5329 = vunpack.c.l.b16 %v4870
        %v5330 = vunpack.c.l.b16 %v4871
        %v5331 = vunpack.c.l.b16 %v4872
        %v5332 = vunpack.c.l.b16 %v4873
        %v5333 = vunpack.c.l.b16 %v4874
        %v5334 = vunpack.c.l.b16 %v4875
        %v5335 = vunpack.c.l.b16 %v4876
        %v5336 = vunpack.c.l.b16 %v4877
        %v5337 = vunpack.c.l.b16 %v4878
        %v5338 = vunpack.c.l.b16 %v4879
        %v5339 = vunpack.c.l.b16 %v4880
        %v5340 = vunpack.c.l.b16 %v4881
        %v5341 = vpack.c.b16 %v5304, %v5303
        %v5342 = vpack.c.b16 %v5306, %v5305
        %v5343 = vpack.c.b16 %v5308, %v5307
        %v5344 = vpack.c.b16 %v5310, %v5309
        %v5345 = vpack.c.b16 %v5312, %v5311
        %v5346 = vpack.c.b16 %v5314, %v5313
        %v5347 = vpack.c.b16 %v5316, %v5315
        %v5348 = vpack.c.b16 %v5318, %v5317
        %v5349 = vpack.c.b16 %v5320, %v5319
        %v5350 = vpack.c.b16 %v5322, %v5321
        %v5351 = vpack.c.b16 %v5324, %v5323
        %v5352 = vpack.c.b16 %v5326, %v5325
        %v5353 = vpack.c.b16 %v5328, %v5327
        %v5354 = vpack.c.b16 %v5330, %v5329
        %v5355 = vpack.c.b16 %v5332, %v5331
        %v5356 = vpack.c.b16 %v5334, %v5333
        %v5357 = vpack.c.b16 %v5336, %v5335
        %v5358 = vpack.c.b16 %v5338, %v5337
        %v5359 = vpack.c.b16 %v5340, %v5339
        %v5378 = vsel %vm5137, %v4837, 0
        %v5380 = vsel %vm5137, %v4840, 0
        %v5382 = vsel %vm5137, %v4843, 0
        %v5385 = vsel %vm5147, %v5359, 0
        %5387 = vmatprep.subr.bf16.mxu0 0
        %5388 = vmatpush1.bf16.msra.mxu0 %v5341
        %5389 = vmatprep.subr.bf16.mxu0 0
        %5390 = vmatpush1.bf16.msra.mxu0 %v5342
        %5391 = vmatprep.subr.bf16.mxu0 0
        %5392 = vmatpush1.bf16.msra.mxu0 %v5343
        %5393 = vmatprep.subr.bf16.mxu0 0
        %5394 = vmatpush1.bf16.msra.mxu0 %v5344
        %5395 = vmatprep.subr.bf16.mxu0 0
        %5396 = vmatpush1.bf16.msra.mxu0 %v5345
        %5397 = vmatprep.subr.bf16.mxu0 0
        %5398 = vmatpush1.bf16.msra.mxu0 %v5346
        %5399 = vmatprep.subr.bf16.mxu0 0
        %5400 = vmatpush1.bf16.msra.mxu0 %v5347
        %5401 = vmatprep.subr.bf16.mxu0 0
        %5402 = vmatpush1.bf16.msra.mxu0 %v5348
        %5403 = vmatprep.subr.bf16.mxu0 0
        %5404 = vmatpush1.bf16.msra.mxu0 %v5349
        %5405 = vmatprep.subr.bf16.mxu0 0
        %5406 = vmatpush1.bf16.msra.mxu0 %v5350
        %5407 = vmatprep.subr.bf16.mxu0 0
        %5408 = vmatpush1.bf16.msra.mxu0 %v5351
        %5409 = vmatprep.subr.bf16.mxu0 0
        %5410 = vmatpush1.bf16.msra.mxu0 %v5352
        %5411 = vmatprep.subr.bf16.mxu0 0
        %5412 = vmatpush1.bf16.msra.mxu0 %v5353
        %5413 = vmatprep.subr.bf16.mxu0 0
        %5414 = vmatpush1.bf16.msra.mxu0 %v5354
        %5415 = vmatprep.subr.bf16.mxu0 0
        %5416 = vmatpush1.bf16.msra.mxu0 %v5355
        %5417 = vmatprep.subr.bf16.mxu0 0
        %5418 = vmatpush1.bf16.msra.mxu0 %v5356
        %5419 = vmatprep.mubr.bf16.mxu0 %v4836
        %5420 = vmatmul.mubr.bf16.gmra.mrb[0].mxu0 %v4835
        %v5421 = vpop.f32.mrb[0].mxu0
        %v5422 = vadd.f32 %v5243, %v5421
        %v5423 = vpop.f32.mrb[0].mxu0
        %v5424 = vpop.f32.mrb[0].mxu0
        %v5425 = vadd.f32 %v5246, %v5424
        %v5426 = vpop.f32.mrb[0].mxu0
        %5427 = vmatprep.mubr.bf16.mxu0 %v4839
        %5428 = vmatmul.mubr.bf16.gmra.mrb[0].mxu0 %v4838
        %v5429 = vpop.f32.mrb[0].mxu0
        %v5430 = vadd.f32 %v5251, %v5429
        %v5431 = vpop.f32.mrb[0].mxu0
        %v5432 = vpop.f32.mrb[0].mxu0
        %v5433 = vadd.f32 %v5254, %v5432
        %v5434 = vpop.f32.mrb[0].mxu0
        %5435 = vmatprep.mubr.bf16.mxu0 %v4842
        %5436 = vmatmul.mubr.bf16.gmra.mrb[0].mxu0 %v4841
        %v5437 = vpop.f32.mrb[0].mxu0
        %v5438 = vadd.f32 %v5259, %v5437
        %v5439 = vpop.f32.mrb[0].mxu0
        %v5440 = vpop.f32.mrb[0].mxu0
        %v5441 = vadd.f32 %v5262, %v5440
        %v5442 = vpop.f32.mrb[0].mxu0
        %5443 = vdwg.mxu0
        %5444 = vmatprep.subr.bf16.mxu0 0
        %5445 = vmatpush1.bf16.msra.mxu0 %v5357
        %5446 = vmatprep.subr.bf16.mxu0 0
        %5447 = vmatpush1.bf16.msra.mxu0 %v5358
        %5448 = vmatprep.subr.bf16.mxu0 0
        %5449 = vmatpush1.bf16.msra.mxu0 %v5385
        %5450 = vmatprep.subr.bf16.mxu0 0
        %5451 = vmatpush1.bf16.msra.mxu0 0
        %5452 = vmatprep.subr.bf16.mxu0 0
        %5453 = vmatpush1.bf16.msra.mxu0 0
        %5454 = vmatprep.subr.bf16.mxu0 0
        %5455 = vmatpush1.bf16.msra.mxu0 0
        %5456 = vmatprep.subr.bf16.mxu0 0
        %5457 = vmatpush1.bf16.msra.mxu0 0
        %5458 = vmatprep.subr.bf16.mxu0 0
        %5459 = vmatpush1.bf16.msra.mxu0 0
        %5460 = vmatprep.subr.bf16.mxu0 0
        %5461 = vmatpush1.bf16.msra.mxu0 0
        %5462 = vmatprep.subr.bf16.mxu0 0
        %5463 = vmatpush1.bf16.msra.mxu0 0
        %5464 = vmatprep.subr.bf16.mxu0 0
        %5465 = vmatpush1.bf16.msra.mxu0 0
        %5466 = vmatprep.subr.bf16.mxu0 0
        %5467 = vmatpush1.bf16.msra.mxu0 0
        %5468 = vmatprep.subr.bf16.mxu0 0
        %5469 = vmatpush1.bf16.msra.mxu0 0
        %5470 = vmatprep.subr.bf16.mxu0 0
        %5471 = vmatpush1.bf16.msra.mxu0 0
        %5472 = vmatprep.subr.bf16.mxu0 0
        %5473 = vmatpush1.bf16.msra.mxu0 0
        %5474 = vmatprep.subr.bf16.mxu0 0
        %5475 = vmatpush1.bf16.msra.mxu0 0
        %5476 = vmatprep.mubr.bf16.mxu0 0
        %5477 = vmatmul.mubr.bf16.gmra.mrb[0].mxu0 %v5378
        %v5478 = vpop.f32.mrb[0].mxu0
        %v5479 = vadd.f32 %v5422, %v5478
        %v5480 = vpop.f32.mrb[0].mxu0
        %v5481 = vpop.f32.mrb[0].mxu0
        %v5482 = vadd.f32 %v5425, %v5481
        %v5483 = vpop.f32.mrb[0].mxu0
        %5484 = vmatprep.mubr.bf16.mxu0 0
        %5485 = vmatmul.mubr.bf16.gmra.mrb[0].mxu0 %v5380
        %v5486 = vpop.f32.mrb[0].mxu0
        %v5487 = vadd.f32 %v5430, %v5486
        %v5488 = vpop.f32.mrb[0].mxu0
        %v5489 = vpop.f32.mrb[0].mxu0
        %v5490 = vadd.f32 %v5433, %v5489
        %v5491 = vpop.f32.mrb[0].mxu0
        %5492 = vmatprep.mubr.bf16.mxu0 0
        %5493 = vmatmul.mubr.bf16.gmra.mrb[0].mxu0 %v5382
        %v5494 = vpop.f32.mrb[0].mxu0
        %v5495 = vadd.f32 %v5438, %v5494
        %v5496 = vpop.f32.mrb[0].mxu0
        %v5497 = vpop.f32.mrb[0].mxu0
        %v5498 = vadd.f32 %v5441, %v5497
        %v5499 = vpop.f32.mrb[0].mxu0
        %5500 = vdwg.mxu0
        %s5501 = scalar_lea.vmem %s3, 304
        %v5502 = vld [vmem:[%s5501] sm:$0xf]
        %v5503 = vld [vmem:[%s5501 + $0x4] sm:$0xf]
        %v5504 = vld [vmem:[%s5501 + $0x8] sm:$0xf]
        %v5505 = vld [vmem:[%s5501 + $0xc] sm:$0xf]
        %v5506 = vld [vmem:[%s5501 + $0x10] sm:$0xf]
        %v5507 = vld [vmem:[%s5501 + $0x14] sm:$0xf]
        %v5508 = vld [vmem:[%s5501 + $0x18] sm:$0xf]
        %v5509 = vld [vmem:[%s5501 + $0x1c] sm:$0xf]
        %v5510 = vld [vmem:[%s5501 + $0x20] sm:$0xf]
        %v5511 = vld [vmem:[%s5501 + $0x24] sm:$0xf]
        %v5512 = vld [vmem:[%s5501 + $0x28] sm:$0xf]
        %v5513 = vld [vmem:[%s5501 + $0x2c] sm:$0xf]
        %v5514 = vld [vmem:[%s5501 + $0x30] sm:$0xf]
        %v5515 = vld [vmem:[%s5501 + $0x34] sm:$0xf]
        %v5516 = vld [vmem:[%s5501 + $0x38] sm:$0xf]
        %v5517 = vld [vmem:[%s5501 + $0x3c] sm:$0xf]
        %v5518 = vld [vmem:[%s5501 + $0x40] sm:$0xf]
        %v5519 = vld [vmem:[%s5501 + $0x44] sm:$0xf]
        %v5520 = vld [vmem:[%s5501 + $0x48] sm:$0xf]
        %v5521 = vld [vmem:[%s5501 + $0x4c] sm:$0xf]
        %v5522 = vld [vmem:[%s5501 + $0x50] sm:$0xf]
        %v5523 = vld [vmem:[%s5501 + $0x54] sm:$0xf]
        %v5524 = vld [vmem:[%s5501 + $0x58] sm:$0xf]
        %v5525 = vld [vmem:[%s5501 + $0x5c] sm:$0xf]
        %v5526 = vld [vmem:[%s5501 + $0x60] sm:$0xf]
        %v5527 = vld [vmem:[%s5501 + $0x64] sm:$0xf]
        %v5528 = vld [vmem:[%s5501 + $0x68] sm:$0xf]
        %v5529 = vld [vmem:[%s5501 + $0x6c] sm:$0xf]
        %v5530 = vld [vmem:[%s5501 + $0x70] sm:$0xf]
        %v5531 = vld [vmem:[%s5501 + $0x74] sm:$0xf]
        %v5532 = vld [vmem:[%s5501 + $0x78] sm:$0xf]
        %v5533 = vld [vmem:[%s5501 + $0x7c] sm:$0xf]
        %v5534 = vld [vmem:[%s5501 + $0x80] sm:$0xf]
        %v5535 = vld [vmem:[%s5501 + $0x84] sm:$0xf]
        %v5536 = vld [vmem:[%s5501 + $0x88] sm:$0xf]
        %v5537 = vld [vmem:[%s5501 + $0x8c] sm:$0xf]
        %v5538 = vld [vmem:[%s5501 + $0x90] sm:$0xf]
        %v5539 = vld [vmem:[%s5501 + $0x94] sm:$0x1]
        %vm5552 = vcmask 1044480
        %v5553 = vrot.slane %v4835, 3
        %v5554 = vrot.slane %v4838, 3
        %v5555 = vsel %vm5552, %v5553, %v5554
        %v5556 = vrot.slane %v4836, 3
        %v5557 = vrot.slane %v4839, 3
        %v5558 = vsel %vm5552, %v5556, %v5557
        %v5559 = vrot.slane %v4837, 3
        %v5560 = vrot.slane %v4840, 3
        %v5561 = vsel %vm5552, %v5559, %v5560
        %v5562 = vrot.slane %v4841, 3
        %v5563 = vsel %vm5552, %v5554, %v5562
        %v5564 = vrot.slane %v4842, 3
        %v5565 = vsel %vm5552, %v5557, %v5564
        %v5566 = vrot.slane %v4843, 3
        %v5567 = vsel %vm5552, %v5560, %v5566
        %v5568 = vrot.slane %v4882, 3
        %v5569 = vsel %vm5552, %v5562, %v5568
        %v5570 = vrot.slane %v4883, 3
        %v5571 = vsel %vm5552, %v5564, %v5570
        %v5572 = vrot.slane %v4884, 3
        %v5573 = vsel %vm5552, %v5566, %v5572
        %v5618 = vunpack.c.l.b16 %v5502
        %v5619 = vunpack.c.l.b16 %v5503
        %v5620 = vunpack.c.l.b16 %v5504
        %v5621 = vunpack.c.l.b16 %v5505
        %v5622 = vunpack.c.l.b16 %v5506
        %v5623 = vunpack.c.l.b16 %v5507
        %v5624 = vunpack.c.l.b16 %v5508
        %v5625 = vunpack.c.l.b16 %v5509
        %v5626 = vunpack.c.l.b16 %v5510
        %v5627 = vunpack.c.l.b16 %v5511
        %v5628 = vunpack.c.l.b16 %v5512
        %v5629 = vunpack.c.l.b16 %v5513
        %v5630 = vunpack.c.l.b16 %v5514
        %v5631 = vunpack.c.l.b16 %v5515
        %v5632 = vunpack.c.l.b16 %v5516
        %v5633 = vunpack.c.l.b16 %v5517
        %v5634 = vunpack.c.l.b16 %v5518
        %v5635 = vunpack.c.l.b16 %v5519
        %v5636 = vunpack.c.l.b16 %v5520
        %v5637 = vunpack.c.l.b16 %v5521
        %v5638 = vunpack.c.l.b16 %v5522
        %v5639 = vunpack.c.l.b16 %v5523
        %v5640 = vunpack.c.l.b16 %v5524
        %v5641 = vunpack.c.l.b16 %v5525
        %v5642 = vunpack.c.l.b16 %v5526
        %v5643 = vunpack.c.l.b16 %v5527
        %v5644 = vunpack.c.l.b16 %v5528
        %v5645 = vunpack.c.l.b16 %v5529
        %v5646 = vunpack.c.l.b16 %v5530
        %v5647 = vunpack.c.l.b16 %v5531
        %v5648 = vunpack.c.l.b16 %v5532
        %v5649 = vunpack.c.l.b16 %v5533
        %v5650 = vunpack.c.l.b16 %v5534
        %v5651 = vunpack.c.l.b16 %v5535
        %v5652 = vunpack.c.l.b16 %v5536
        %v5653 = vunpack.c.l.b16 %v5537
        %v5654 = vunpack.c.l.b16 %v5538
        %v5655 = vunpack.c.l.b16 %v5539
        %v5656 = vpack.c.b16 %v5619, %v5618
        %v5657 = vpack.c.b16 %v5621, %v5620
        %v5658 = vpack.c.b16 %v5623, %v5622
        %v5659 = vpack.c.b16 %v5625, %v5624
        %v5660 = vpack.c.b16 %v5627, %v5626
        %v5661 = vpack.c.b16 %v5629, %v5628
        %v5662 = vpack.c.b16 %v5631, %v5630
        %v5663 = vpack.c.b16 %v5633, %v5632
        %v5664 = vpack.c.b16 %v5635, %v5634
        %v5665 = vpack.c.b16 %v5637, %v5636
        %v5666 = vpack.c.b16 %v5639, %v5638
        %v5667 = vpack.c.b16 %v5641, %v5640
        %v5668 = vpack.c.b16 %v5643, %v5642
        %v5669 = vpack.c.b16 %v5645, %v5644
        %v5670 = vpack.c.b16 %v5647, %v5646
        %v5671 = vpack.c.b16 %v5649, %v5648
        %v5672 = vpack.c.b16 %v5651, %v5650
        %v5673 = vpack.c.b16 %v5653, %v5652
        %v5674 = vpack.c.b16 %v5655, %v5654
        %v5694 = vsel %vm5137, %v5561, 0
        %v5697 = vsel %vm5137, %v5567, 0
        %v5700 = vsel %vm5137, %v5573, 0
        %v5703 = vsel %vm5147, %v5674, 0
        %5705 = vmatprep.subr.bf16.mxu0 0
        %5706 = vmatpush1.bf16.msra.mxu0 %v5656
        %5707 = vmatprep.subr.bf16.mxu0 0
        %5708 = vmatpush1.bf16.msra.mxu0 %v5657
        %5709 = vmatprep.subr.bf16.mxu0 0
        %5710 = vmatpush1.bf16.msra.mxu0 %v5658
        %5711 = vmatprep.subr.bf16.mxu0 0
        %5712 = vmatpush1.bf16.msra.mxu0 %v5659
        %5713 = vmatprep.subr.bf16.mxu0 0
        %5714 = vmatpush1.bf16.msra.mxu0 %v5660
        %5715 = vmatprep.subr.bf16.mxu0 0
        %5716 = vmatpush1.bf16.msra.mxu0 %v5661
        %5717 = vmatprep.subr.bf16.mxu0 0
        %5718 = vmatpush1.bf16.msra.mxu0 %v5662
        %5719 = vmatprep.subr.bf16.mxu0 0
        %5720 = vmatpush1.bf16.msra.mxu0 %v5663
        %5721 = vmatprep.subr.bf16.mxu0 0
        %5722 = vmatpush1.bf16.msra.mxu0 %v5664
        %5723 = vmatprep.subr.bf16.mxu0 0
        %5724 = vmatpush1.bf16.msra.mxu0 %v5665
        %5725 = vmatprep.subr.bf16.mxu0 0
        %5726 = vmatpush1.bf16.msra.mxu0 %v5666
        %5727 = vmatprep.subr.bf16.mxu0 0
        %5728 = vmatpush1.bf16.msra.mxu0 %v5667
        %5729 = vmatprep.subr.bf16.mxu0 0
        %5730 = vmatpush1.bf16.msra.mxu0 %v5668
        %5731 = vmatprep.subr.bf16.mxu0 0
        %5732 = vmatpush1.bf16.msra.mxu0 %v5669
        %5733 = vmatprep.subr.bf16.mxu0 0
        %5734 = vmatpush1.bf16.msra.mxu0 %v5670
        %5735 = vmatprep.subr.bf16.mxu0 0
        %5736 = vmatpush1.bf16.msra.mxu0 %v5671
        %5737 = vmatprep.mubr.bf16.mxu0 %v5558
        %5738 = vmatmul.mubr.bf16.gmra.mrb[0].mxu0 %v5555
        %v5739 = vpop.f32.mrb[0].mxu0
        %v5740 = vadd.f32 0.0, %v5739
        %v5741 = vpop.f32.mrb[0].mxu0
        %v5742 = vpop.f32.mrb[0].mxu0
        %v5743 = vadd.f32 0.0, %v5742
        %v5744 = vpop.f32.mrb[0].mxu0
        %5745 = vmatprep.mubr.bf16.mxu0 %v5565
        %5746 = vmatmul.mubr.bf16.gmra.mrb[0].mxu0 %v5563
        %v5747 = vpop.f32.mrb[0].mxu0
        %v5748 = vadd.f32 0.0, %v5747
        %v5749 = vpop.f32.mrb[0].mxu0
        %v5750 = vpop.f32.mrb[0].mxu0
        %v5751 = vadd.f32 0.0, %v5750
        %v5752 = vpop.f32.mrb[0].mxu0
        %5753 = vmatprep.mubr.bf16.mxu0 %v5571
        %5754 = vmatmul.mubr.bf16.gmra.mrb[0].mxu0 %v5569
        %v5755 = vpop.f32.mrb[0].mxu0
        %v5756 = vadd.f32 0.0, %v5755
        %v5757 = vpop.f32.mrb[0].mxu0
        %v5758 = vpop.f32.mrb[0].mxu0
        %v5759 = vadd.f32 0.0, %v5758
        %v5760 = vpop.f32.mrb[0].mxu0
        %5761 = vdwg.mxu0
        %5762 = vmatprep.subr.bf16.mxu0 0
        %5763 = vmatpush1.bf16.msra.mxu0 %v5672
        %5764 = vmatprep.subr.bf16.mxu0 0
        %5765 = vmatpush1.bf16.msra.mxu0 %v5673
        %5766 = vmatprep.subr.bf16.mxu0 0
        %5767 = vmatpush1.bf16.msra.mxu0 %v5703
        %5768 = vmatprep.subr.bf16.mxu0 0
        %5769 = vmatpush1.bf16.msra.mxu0 0
        %5770 = vmatprep.subr.bf16.mxu0 0
        %5771 = vmatpush1.bf16.msra.mxu0 0
        %5772 = vmatprep.subr.bf16.mxu0 0
        %5773 = vmatpush1.bf16.msra.mxu0 0
        %5774 = vmatprep.subr.bf16.mxu0 0
        %5775 = vmatpush1.bf16.msra.mxu0 0
        %5776 = vmatprep.subr.bf16.mxu0 0
        %5777 = vmatpush1.bf16.msra.mxu0 0
        %5778 = vmatprep.subr.bf16.mxu0 0
        %5779 = vmatpush1.bf16.msra.mxu0 0
        %5780 = vmatprep.subr.bf16.mxu0 0
        %5781 = vmatpush1.bf16.msra.mxu0 0
        %5782 = vmatprep.subr.bf16.mxu0 0
        %5783 = vmatpush1.bf16.msra.mxu0 0
        %5784 = vmatprep.subr.bf16.mxu0 0
        %5785 = vmatpush1.bf16.msra.mxu0 0
        %5786 = vmatprep.subr.bf16.mxu0 0
        %5787 = vmatpush1.bf16.msra.mxu0 0
        %5788 = vmatprep.subr.bf16.mxu0 0
        %5789 = vmatpush1.bf16.msra.mxu0 0
        %5790 = vmatprep.subr.bf16.mxu0 0
        %5791 = vmatpush1.bf16.msra.mxu0 0
        %5792 = vmatprep.subr.bf16.mxu0 0
        %5793 = vmatpush1.bf16.msra.mxu0 0
        %5794 = vmatprep.mubr.bf16.mxu0 0
        %5795 = vmatmul.mubr.bf16.gmra.mrb[0].mxu0 %v5694
        %v5796 = vpop.f32.mrb[0].mxu0
        %v5797 = vadd.f32 %v5740, %v5796
        %v5798 = vpop.f32.mrb[0].mxu0
        %v5799 = vpop.f32.mrb[0].mxu0
        %v5800 = vadd.f32 %v5743, %v5799
        %v5801 = vpop.f32.mrb[0].mxu0
        %5802 = vmatprep.mubr.bf16.mxu0 0
        %5803 = vmatmul.mubr.bf16.gmra.mrb[0].mxu0 %v5697
        %v5804 = vpop.f32.mrb[0].mxu0
        %v5805 = vadd.f32 %v5748, %v5804
        %v5806 = vpop.f32.mrb[0].mxu0
        %v5807 = vpop.f32.mrb[0].mxu0
        %v5808 = vadd.f32 %v5751, %v5807
        %v5809 = vpop.f32.mrb[0].mxu0
        %5810 = vmatprep.mubr.bf16.mxu0 0
        %5811 = vmatmul.mubr.bf16.gmra.mrb[0].mxu0 %v5700
        %v5812 = vpop.f32.mrb[0].mxu0
        %v5813 = vadd.f32 %v5756, %v5812
        %v5814 = vpop.f32.mrb[0].mxu0
        %v5815 = vpop.f32.mrb[0].mxu0
        %v5816 = vadd.f32 %v5759, %v5815
        %v5817 = vpop.f32.mrb[0].mxu0
        %5818 = vdwg.mxu0
        %v5819 = vadd.f32 %v5479, %v5797
        %v5820 = vadd.f32 %v5482, %v5800
        %v5821 = vadd.f32 %v5487, %v5805
        %v5822 = vadd.f32 %v5490, %v5808
        %v5823 = vadd.f32 %v5495, %v5813
        %v5824 = vadd.f32 %v5498, %v5816
        %v5825 = vpack.c.bf16 %v4817, %v4814
        %v5826 = vpack.c.bf16 %v4818, %v4815
        %v5827 = vpack.c.bf16 %v4819, %v4816
        %v5828 = vpack.c.bf16 %v4823, %v4820
        %v5829 = vpack.c.bf16 %v4824, %v4821
        %v5830 = vpack.c.bf16 %v4825, %v4822
        %v5831 = vpack.c.bf16 %v4829, %v4826
        %v5832 = vpack.c.bf16 %v4830, %v4827
        %v5833 = vpack.c.bf16 %v4831, %v4828
        %s5834 = scalar_lea.vmem %s3, 456
        %v5835 = vld [vmem:[%s5834] sm:$0xf]
        %v5836 = vld [vmem:[%s5834 + $0x4] sm:$0xf]
        %v5837 = vld [vmem:[%s5834 + $0x8] sm:$0xf]
        %v5838 = vld [vmem:[%s5834 + $0xc] sm:$0xf]
        %v5839 = vld [vmem:[%s5834 + $0x10] sm:$0xf]
        %v5840 = vld [vmem:[%s5834 + $0x14] sm:$0xf]
        %v5841 = vld [vmem:[%s5834 + $0x18] sm:$0xf]
        %v5842 = vld [vmem:[%s5834 + $0x1c] sm:$0xf]
        %v5843 = vld [vmem:[%s5834 + $0x20] sm:$0xf]
        %v5844 = vld [vmem:[%s5834 + $0x24] sm:$0xf]
        %v5845 = vld [vmem:[%s5834 + $0x28] sm:$0xf]
        %v5846 = vld [vmem:[%s5834 + $0x2c] sm:$0xf]
        %v5847 = vld [vmem:[%s5834 + $0x30] sm:$0xf]
        %v5848 = vld [vmem:[%s5834 + $0x34] sm:$0xf]
        %v5849 = vld [vmem:[%s5834 + $0x38] sm:$0xf]
        %v5850 = vld [vmem:[%s5834 + $0x3c] sm:$0xf]
        %v5851 = vld [vmem:[%s5834 + $0x40] sm:$0xf]
        %v5852 = vld [vmem:[%s5834 + $0x44] sm:$0xf]
        %v5853 = vld [vmem:[%s5834 + $0x48] sm:$0xf]
        %v5854 = vld [vmem:[%s5834 + $0x4c] sm:$0xf]
        %v5855 = vld [vmem:[%s5834 + $0x50] sm:$0xf]
        %v5856 = vld [vmem:[%s5834 + $0x54] sm:$0xf]
        %v5857 = vld [vmem:[%s5834 + $0x58] sm:$0xf]
        %v5858 = vld [vmem:[%s5834 + $0x5c] sm:$0xf]
        %v5859 = vld [vmem:[%s5834 + $0x60] sm:$0xf]
        %v5860 = vld [vmem:[%s5834 + $0x64] sm:$0xf]
        %v5861 = vld [vmem:[%s5834 + $0x68] sm:$0xf]
        %v5862 = vld [vmem:[%s5834 + $0x6c] sm:$0xf]
        %v5863 = vld [vmem:[%s5834 + $0x70] sm:$0xf]
        %v5864 = vld [vmem:[%s5834 + $0x74] sm:$0xf]
        %v5865 = vld [vmem:[%s5834 + $0x78] sm:$0xf]
        %v5866 = vld [vmem:[%s5834 + $0x7c] sm:$0xf]
        %v5867 = vld [vmem:[%s5834 + $0x80] sm:$0xf]
        %v5868 = vld [vmem:[%s5834 + $0x84] sm:$0xf]
        %v5869 = vld [vmem:[%s5834 + $0x88] sm:$0xf]
        %v5870 = vld [vmem:[%s5834 + $0x8c] sm:$0xf]
        %v5871 = vld [vmem:[%s5834 + $0x90] sm:$0xf]
        %v5872 = vld [vmem:[%s5834 + $0x94] sm:$0x1]
        %vm5873 = vsmask.f32 7424
        %v5875 = vshrl.u32 %v5825, 16
        %v5877 = vshll.u32 %v5825, 16
        %v5879 = vrot.slane %v5877, 1
        %v5880 = vor.u32 %v5875, %v5879
        %v5882 = vshll.u32 %v5828, 16
        %v5884 = vrot.slane %v5882, 1
        %v5885 = vsel %vm5873, %v5880, %v5884
        %v5887 = vshrl.u32 %v5826, 16
        %v5889 = vshll.u32 %v5826, 16
        %v5891 = vrot.slane %v5889, 1
        %v5892 = vor.u32 %v5887, %v5891
        %v5894 = vshll.u32 %v5829, 16
        %v5896 = vrot.slane %v5894, 1
        %v5897 = vsel %vm5873, %v5892, %v5896
        %v5899 = vshrl.u32 %v5827, 16
        %v5901 = vshll.u32 %v5827, 16
        %v5903 = vrot.slane %v5901, 1
        %v5904 = vor.u32 %v5899, %v5903
        %v5906 = vshll.u32 %v5830, 16
        %v5908 = vrot.slane %v5906, 1
        %v5909 = vsel %vm5873, %v5904, %v5908
        %v5910 = vshrl.u32 %v5828, 16
        %v5912 = vor.u32 %v5910, %v5884
        %v5914 = vshll.u32 %v5831, 16
        %v5916 = vrot.slane %v5914, 1
        %v5917 = vsel %vm5873, %v5912, %v5916
        %v5918 = vshrl.u32 %v5829, 16
        %v5920 = vor.u32 %v5918, %v5896
        %v5922 = vshll.u32 %v5832, 16
        %v5924 = vrot.slane %v5922, 1
        %v5925 = vsel %vm5873, %v5920, %v5924
        %v5926 = vshrl.u32 %v5830, 16
        %v5928 = vor.u32 %v5926, %v5908
        %v5930 = vshll.u32 %v5833, 16
        %v5932 = vrot.slane %v5930, 1
        %v5933 = vsel %vm5873, %v5928, %v5932
        %v5934 = vshrl.u32 %v5831, 16
        %v5936 = vor.u32 %v5934, %v5916
        %v5937 = vshrl.u32 %v5832, 16
        %v5939 = vor.u32 %v5937, %v5924
        %v5940 = vshrl.u32 %v5833, 16
        %v5942 = vor.u32 %v5940, %v5932
        %v5987 = vunpack.c.l.b16 %v5835
        %v5988 = vunpack.c.l.b16 %v5836
        %v5989 = vunpack.c.l.b16 %v5837
        %v5990 = vunpack.c.l.b16 %v5838
        %v5991 = vunpack.c.l.b16 %v5839
        %v5992 = vunpack.c.l.b16 %v5840
        %v5993 = vunpack.c.l.b16 %v5841
        %v5994 = vunpack.c.l.b16 %v5842
        %v5995 = vunpack.c.l.b16 %v5843
        %v5996 = vunpack.c.l.b16 %v5844
        %v5997 = vunpack.c.l.b16 %v5845
        %v5998 = vunpack.c.l.b16 %v5846
        %v5999 = vunpack.c.l.b16 %v5847
        %v6000 = vunpack.c.l.b16 %v5848
        %v6001 = vunpack.c.l.b16 %v5849
        %v6002 = vunpack.c.l.b16 %v5850
        %v6003 = vunpack.c.l.b16 %v5851
        %v6004 = vunpack.c.l.b16 %v5852
        %v6005 = vunpack.c.l.b16 %v5853
        %v6006 = vunpack.c.l.b16 %v5854
        %v6007 = vunpack.c.l.b16 %v5855
        %v6008 = vunpack.c.l.b16 %v5856
        %v6009 = vunpack.c.l.b16 %v5857
        %v6010 = vunpack.c.l.b16 %v5858
        %v6011 = vunpack.c.l.b16 %v5859
        %v6012 = vunpack.c.l.b16 %v5860
        %v6013 = vunpack.c.l.b16 %v5861
        %v6014 = vunpack.c.l.b16 %v5862
        %v6015 = vunpack.c.l.b16 %v5863
        %v6016 = vunpack.c.l.b16 %v5864
        %v6017 = vunpack.c.l.b16 %v5865
        %v6018 = vunpack.c.l.b16 %v5866
        %v6019 = vunpack.c.l.b16 %v5867
        %v6020 = vunpack.c.l.b16 %v5868
        %v6021 = vunpack.c.l.b16 %v5869
        %v6022 = vunpack.c.l.b16 %v5870
        %v6023 = vunpack.c.l.b16 %v5871
        %v6024 = vunpack.c.l.b16 %v5872
        %v6025 = vpack.c.b16 %v5988, %v5987
        %v6026 = vpack.c.b16 %v5990, %v5989
        %v6027 = vpack.c.b16 %v5992, %v5991
        %v6028 = vpack.c.b16 %v5994, %v5993
        %v6029 = vpack.c.b16 %v5996, %v5995
        %v6030 = vpack.c.b16 %v5998, %v5997
        %v6031 = vpack.c.b16 %v6000, %v5999
        %v6032 = vpack.c.b16 %v6002, %v6001
        %v6033 = vpack.c.b16 %v6004, %v6003
        %v6034 = vpack.c.b16 %v6006, %v6005
        %v6035 = vpack.c.b16 %v6008, %v6007
        %v6036 = vpack.c.b16 %v6010, %v6009
        %v6037 = vpack.c.b16 %v6012, %v6011
        %v6038 = vpack.c.b16 %v6014, %v6013
        %v6039 = vpack.c.b16 %v6016, %v6015
        %v6040 = vpack.c.b16 %v6018, %v6017
        %v6041 = vpack.c.b16 %v6020, %v6019
        %v6042 = vpack.c.b16 %v6022, %v6021
        %v6043 = vpack.c.b16 %v6024, %v6023
        %v6063 = vsel %vm5137, %v5909, 0
        %v6066 = vsel %vm5137, %v5933, 0
        %v6069 = vsel %vm5137, %v5942, 0
        %v6072 = vsel %vm5147, %v6043, 0
        %6074 = vmatprep.subr.bf16.mxu0 0
        %6075 = vmatpush1.bf16.msra.mxu0 %v6025
        %6076 = vmatprep.subr.bf16.mxu0 0
        %6077 = vmatpush1.bf16.msra.mxu0 %v6026
        %6078 = vmatprep.subr.bf16.mxu0 0
        %6079 = vmatpush1.bf16.msra.mxu0 %v6027
        %6080 = vmatprep.subr.bf16.mxu0 0
        %6081 = vmatpush1.bf16.msra.mxu0 %v6028
        %6082 = vmatprep.subr.bf16.mxu0 0
        %6083 = vmatpush1.bf16.msra.mxu0 %v6029
        %6084 = vmatprep.subr.bf16.mxu0 0
        %6085 = vmatpush1.bf16.msra.mxu0 %v6030
        %6086 = vmatprep.subr.bf16.mxu0 0
        %6087 = vmatpush1.bf16.msra.mxu0 %v6031
        %6088 = vmatprep.subr.bf16.mxu0 0
        %6089 = vmatpush1.bf16.msra.mxu0 %v6032
        %6090 = vmatprep.subr.bf16.mxu0 0
        %6091 = vmatpush1.bf16.msra.mxu0 %v6033
        %6092 = vmatprep.subr.bf16.mxu0 0
        %6093 = vmatpush1.bf16.msra.mxu0 %v6034
        %6094 = vmatprep.subr.bf16.mxu0 0
        %6095 = vmatpush1.bf16.msra.mxu0 %v6035
        %6096 = vmatprep.subr.bf16.mxu0 0
        %6097 = vmatpush1.bf16.msra.mxu0 %v6036
        %6098 = vmatprep.subr.bf16.mxu0 0
        %6099 = vmatpush1.bf16.msra.mxu0 %v6037
        %6100 = vmatprep.subr.bf16.mxu0 0
        %6101 = vmatpush1.bf16.msra.mxu0 %v6038
        %6102 = vmatprep.subr.bf16.mxu0 0
        %6103 = vmatpush1.bf16.msra.mxu0 %v6039
        %6104 = vmatprep.subr.bf16.mxu0 0
        %6105 = vmatpush1.bf16.msra.mxu0 %v6040
        %6106 = vmatprep.mubr.bf16.mxu0 %v5897
        %6107 = vmatmul.mubr.bf16.gmra.mrb[0].mxu0 %v5885
        %v6108 = vpop.f32.mrb[0].mxu0
        %v6109 = vadd.f32 0.0, %v6108
        %v6110 = vpop.f32.mrb[0].mxu0
        %v6111 = vpop.f32.mrb[0].mxu0
        %v6112 = vadd.f32 0.0, %v6111
        %v6113 = vpop.f32.mrb[0].mxu0
        %6114 = vmatprep.mubr.bf16.mxu0 %v5925
        %6115 = vmatmul.mubr.bf16.gmra.mrb[0].mxu0 %v5917
        %v6116 = vpop.f32.mrb[0].mxu0
        %v6117 = vadd.f32 0.0, %v6116
        %v6118 = vpop.f32.mrb[0].mxu0
        %v6119 = vpop.f32.mrb[0].mxu0
        %v6120 = vadd.f32 0.0, %v6119
        %v6121 = vpop.f32.mrb[0].mxu0
        %6122 = vmatprep.mubr.bf16.mxu0 %v5939
        %6123 = vmatmul.mubr.bf16.gmra.mrb[0].mxu0 %v5936
        %v6124 = vpop.f32.mrb[0].mxu0
        %v6125 = vadd.f32 0.0, %v6124
        %v6126 = vpop.f32.mrb[0].mxu0
        %v6127 = vpop.f32.mrb[0].mxu0
        %v6128 = vadd.f32 0.0, %v6127
        %v6129 = vpop.f32.mrb[0].mxu0
        %6130 = vdwg.mxu0
        %6131 = vmatprep.subr.bf16.mxu0 0
        %6132 = vmatpush1.bf16.msra.mxu0 %v6041
        %6133 = vmatprep.subr.bf16.mxu0 0
        %6134 = vmatpush1.bf16.msra.mxu0 %v6042
        %6135 = vmatprep.subr.bf16.mxu0 0
        %6136 = vmatpush1.bf16.msra.mxu0 %v6072
        %6137 = vmatprep.subr.bf16.mxu0 0
        %6138 = vmatpush1.bf16.msra.mxu0 0
        %6139 = vmatprep.subr.bf16.mxu0 0
        %6140 = vmatpush1.bf16.msra.mxu0 0
        %6141 = vmatprep.subr.bf16.mxu0 0
        %6142 = vmatpush1.bf16.msra.mxu0 0
        %6143 = vmatprep.subr.bf16.mxu0 0
        %6144 = vmatpush1.bf16.msra.mxu0 0
        %6145 = vmatprep.subr.bf16.mxu0 0
        %6146 = vmatpush1.bf16.msra.mxu0 0
        %6147 = vmatprep.subr.bf16.mxu0 0
        %6148 = vmatpush1.bf16.msra.mxu0 0
        %6149 = vmatprep.subr.bf16.mxu0 0
        %6150 = vmatpush1.bf16.msra.mxu0 0
        %6151 = vmatprep.subr.bf16.mxu0 0
        %6152 = vmatpush1.bf16.msra.mxu0 0
        %6153 = vmatprep.subr.bf16.mxu0 0
        %6154 = vmatpush1.bf16.msra.mxu0 0
        %6155 = vmatprep.subr.bf16.mxu0 0
        %6156 = vmatpush1.bf16.msra.mxu0 0
        %6157 = vmatprep.subr.bf16.mxu0 0
        %6158 = vmatpush1.bf16.msra.mxu0 0
        %6159 = vmatprep.subr.bf16.mxu0 0
        %6160 = vmatpush1.bf16.msra.mxu0 0
        %6161 = vmatprep.subr.bf16.mxu0 0
        %6162 = vmatpush1.bf16.msra.mxu0 0
        %6163 = vmatprep.mubr.bf16.mxu0 0
        %6164 = vmatmul.mubr.bf16.gmra.mrb[0].mxu0 %v6063
        %v6165 = vpop.f32.mrb[0].mxu0
        %v6166 = vadd.f32 %v6109, %v6165
        %v6167 = vpop.f32.mrb[0].mxu0
        %v6168 = vpop.f32.mrb[0].mxu0
        %v6169 = vadd.f32 %v6112, %v6168
        %v6170 = vpop.f32.mrb[0].mxu0
        %6171 = vmatprep.mubr.bf16.mxu0 0
        %6172 = vmatmul.mubr.bf16.gmra.mrb[0].mxu0 %v6066
        %v6173 = vpop.f32.mrb[0].mxu0
        %v6174 = vadd.f32 %v6117, %v6173
        %v6175 = vpop.f32.mrb[0].mxu0
        %v6176 = vpop.f32.mrb[0].mxu0
        %v6177 = vadd.f32 %v6120, %v6176
        %v6178 = vpop.f32.mrb[0].mxu0
        %6179 = vmatprep.mubr.bf16.mxu0 0
        %6180 = vmatmul.mubr.bf16.gmra.mrb[0].mxu0 %v6069
        %v6181 = vpop.f32.mrb[0].mxu0
        %v6182 = vadd.f32 %v6125, %v6181
        %v6183 = vpop.f32.mrb[0].mxu0
        %v6184 = vpop.f32.mrb[0].mxu0
        %v6185 = vadd.f32 %v6128, %v6184
        %v6186 = vpop.f32.mrb[0].mxu0
        %6187 = vdwg.mxu0
        %v6188 = vadd.f32 %v5819, %v6166
        %v6189 = vadd.f32 %v5820, %v6169
        %v6190 = vadd.f32 %v5821, %v6174
        %v6191 = vadd.f32 %v5822, %v6177
        %v6192 = vadd.f32 %v5823, %v6182
        %v6193 = vadd.f32 %v5824, %v6185
        %v6194 = vpack.c.bf16 %v4832, %v4832
        %v6195 = vpack.c.bf16 %v4833, %v4833
        %v6196 = vpack.c.bf16 %v4834, %v4834
        %s6197 = scalar_lea.vmem %s3, 608
        %v6198 = vld [vmem:[%s6197] sm:$0xf]
        %v6199 = vld [vmem:[%s6197 + $0x4] sm:$0xf]
        %v6200 = vld [vmem:[%s6197 + $0x8] sm:$0xf]
        %v6201 = vld [vmem:[%s6197 + $0xc] sm:$0xf]
        %v6202 = vld [vmem:[%s6197 + $0x10] sm:$0xf]
        %v6203 = vld [vmem:[%s6197 + $0x14] sm:$0xf]
        %v6204 = vld [vmem:[%s6197 + $0x18] sm:$0xf]
        %v6205 = vld [vmem:[%s6197 + $0x1c] sm:$0xf]
        %v6206 = vld [vmem:[%s6197 + $0x20] sm:$0xf]
        %v6207 = vld [vmem:[%s6197 + $0x24] sm:$0xf]
        %v6208 = vld [vmem:[%s6197 + $0x28] sm:$0xf]
        %v6209 = vld [vmem:[%s6197 + $0x2c] sm:$0xf]
        %v6210 = vld [vmem:[%s6197 + $0x30] sm:$0xf]
        %v6211 = vld [vmem:[%s6197 + $0x34] sm:$0xf]
        %v6212 = vld [vmem:[%s6197 + $0x38] sm:$0xf]
        %v6213 = vld [vmem:[%s6197 + $0x3c] sm:$0xf]
        %v6214 = vld [vmem:[%s6197 + $0x40] sm:$0xf]
        %v6215 = vld [vmem:[%s6197 + $0x44] sm:$0xf]
        %v6216 = vld [vmem:[%s6197 + $0x48] sm:$0xf]
        %v6217 = vld [vmem:[%s6197 + $0x4c] sm:$0xf]
        %v6218 = vld [vmem:[%s6197 + $0x50] sm:$0xf]
        %v6219 = vld [vmem:[%s6197 + $0x54] sm:$0xf]
        %v6220 = vld [vmem:[%s6197 + $0x58] sm:$0xf]
        %v6221 = vld [vmem:[%s6197 + $0x5c] sm:$0xf]
        %v6222 = vld [vmem:[%s6197 + $0x60] sm:$0xf]
        %v6223 = vld [vmem:[%s6197 + $0x64] sm:$0xf]
        %v6224 = vld [vmem:[%s6197 + $0x68] sm:$0xf]
        %v6225 = vld [vmem:[%s6197 + $0x6c] sm:$0xf]
        %v6226 = vld [vmem:[%s6197 + $0x70] sm:$0xf]
        %v6227 = vld [vmem:[%s6197 + $0x74] sm:$0xf]
        %v6228 = vld [vmem:[%s6197 + $0x78] sm:$0xf]
        %v6229 = vld [vmem:[%s6197 + $0x7c] sm:$0xf]
        %v6230 = vld [vmem:[%s6197 + $0x80] sm:$0xf]
        %v6231 = vld [vmem:[%s6197 + $0x84] sm:$0xf]
        %v6232 = vld [vmem:[%s6197 + $0x88] sm:$0xf]
        %v6233 = vld [vmem:[%s6197 + $0x8c] sm:$0xf]
        %v6234 = vld [vmem:[%s6197 + $0x90] sm:$0xf]
        %v6235 = vld [vmem:[%s6197 + $0x94] sm:$0x1]
        %vm6248 = vcmask 1045504
        %v6249 = vrot.slane %v5825, 2
        %v6250 = vrot.slane %v5828, 2
        %v6251 = vsel %vm6248, %v6249, %v6250
        %v6252 = vrot.slane %v5826, 2
        %v6253 = vrot.slane %v5829, 2
        %v6254 = vsel %vm6248, %v6252, %v6253
        %v6255 = vrot.slane %v5827, 2
        %v6256 = vrot.slane %v5830, 2
        %v6257 = vsel %vm6248, %v6255, %v6256
        %v6258 = vrot.slane %v5831, 2
        %v6259 = vsel %vm6248, %v6250, %v6258
        %v6260 = vrot.slane %v5832, 2
        %v6261 = vsel %vm6248, %v6253, %v6260
        %v6262 = vrot.slane %v5833, 2
        %v6263 = vsel %vm6248, %v6256, %v6262
        %v6264 = vrot.slane %v6194, 2
        %v6265 = vsel %vm6248, %v6258, %v6264
        %v6266 = vrot.slane %v6195, 2
        %v6267 = vsel %vm6248, %v6260, %v6266
        %v6268 = vrot.slane %v6196, 2
        %v6269 = vsel %vm6248, %v6262, %v6268
        %v6314 = vunpack.c.l.b16 %v6198
        %v6315 = vunpack.c.l.b16 %v6199
        %v6316 = vunpack.c.l.b16 %v6200
        %v6317 = vunpack.c.l.b16 %v6201
        %v6318 = vunpack.c.l.b16 %v6202
        %v6319 = vunpack.c.l.b16 %v6203
        %v6320 = vunpack.c.l.b16 %v6204
        %v6321 = vunpack.c.l.b16 %v6205
        %v6322 = vunpack.c.l.b16 %v6206
        %v6323 = vunpack.c.l.b16 %v6207
        %v6324 = vunpack.c.l.b16 %v6208
        %v6325 = vunpack.c.l.b16 %v6209
        %v6326 = vunpack.c.l.b16 %v6210
        %v6327 = vunpack.c.l.b16 %v6211
        %v6328 = vunpack.c.l.b16 %v6212
        %v6329 = vunpack.c.l.b16 %v6213
        %v6330 = vunpack.c.l.b16 %v6214
        %v6331 = vunpack.c.l.b16 %v6215
        %v6332 = vunpack.c.l.b16 %v6216
        %v6333 = vunpack.c.l.b16 %v6217
        %v6334 = vunpack.c.l.b16 %v6218
        %v6335 = vunpack.c.l.b16 %v6219
        %v6336 = vunpack.c.l.b16 %v6220
        %v6337 = vunpack.c.l.b16 %v6221
        %v6338 = vunpack.c.l.b16 %v6222
        %v6339 = vunpack.c.l.b16 %v6223
        %v6340 = vunpack.c.l.b16 %v6224
        %v6341 = vunpack.c.l.b16 %v6225
        %v6342 = vunpack.c.l.b16 %v6226
        %v6343 = vunpack.c.l.b16 %v6227
        %v6344 = vunpack.c.l.b16 %v6228
        %v6345 = vunpack.c.l.b16 %v6229
        %v6346 = vunpack.c.l.b16 %v6230
        %v6347 = vunpack.c.l.b16 %v6231
        %v6348 = vunpack.c.l.b16 %v6232
        %v6349 = vunpack.c.l.b16 %v6233
        %v6350 = vunpack.c.l.b16 %v6234
        %v6351 = vunpack.c.l.b16 %v6235
        %v6352 = vpack.c.b16 %v6315, %v6314
        %v6353 = vpack.c.b16 %v6317, %v6316
        %v6354 = vpack.c.b16 %v6319, %v6318
        %v6355 = vpack.c.b16 %v6321, %v6320
        %v6356 = vpack.c.b16 %v6323, %v6322
        %v6357 = vpack.c.b16 %v6325, %v6324
        %v6358 = vpack.c.b16 %v6327, %v6326
        %v6359 = vpack.c.b16 %v6329, %v6328
        %v6360 = vpack.c.b16 %v6331, %v6330
        %v6361 = vpack.c.b16 %v6333, %v6332
        %v6362 = vpack.c.b16 %v6335, %v6334
        %v6363 = vpack.c.b16 %v6337, %v6336
        %v6364 = vpack.c.b16 %v6339, %v6338
        %v6365 = vpack.c.b16 %v6341, %v6340
        %v6366 = vpack.c.b16 %v6343, %v6342
        %v6367 = vpack.c.b16 %v6345, %v6344
        %v6368 = vpack.c.b16 %v6347, %v6346
        %v6369 = vpack.c.b16 %v6349, %v6348
        %v6370 = vpack.c.b16 %v6351, %v6350
        %v6390 = vsel %vm5137, %v6257, 0
        %v6393 = vsel %vm5137, %v6263, 0
        %v6396 = vsel %vm5137, %v6269, 0
        %v6399 = vsel %vm5147, %v6370, 0
        %6401 = vmatprep.subr.bf16.mxu0 0
        %6402 = vmatpush1.bf16.msra.mxu0 %v6352
        %6403 = vmatprep.subr.bf16.mxu0 0
        %6404 = vmatpush1.bf16.msra.mxu0 %v6353
        %6405 = vmatprep.subr.bf16.mxu0 0
        %6406 = vmatpush1.bf16.msra.mxu0 %v6354
        %6407 = vmatprep.subr.bf16.mxu0 0
        %6408 = vmatpush1.bf16.msra.mxu0 %v6355
        %6409 = vmatprep.subr.bf16.mxu0 0
        %6410 = vmatpush1.bf16.msra.mxu0 %v6356
        %6411 = vmatprep.subr.bf16.mxu0 0
        %6412 = vmatpush1.bf16.msra.mxu0 %v6357
        %6413 = vmatprep.subr.bf16.mxu0 0
        %6414 = vmatpush1.bf16.msra.mxu0 %v6358
        %6415 = vmatprep.subr.bf16.mxu0 0
        %6416 = vmatpush1.bf16.msra.mxu0 %v6359
        %6417 = vmatprep.subr.bf16.mxu0 0
        %6418 = vmatpush1.bf16.msra.mxu0 %v6360
        %6419 = vmatprep.subr.bf16.mxu0 0
        %6420 = vmatpush1.bf16.msra.mxu0 %v6361
        %6421 = vmatprep.subr.bf16.mxu0 0
        %6422 = vmatpush1.bf16.msra.mxu0 %v6362
        %6423 = vmatprep.subr.bf16.mxu0 0
        %6424 = vmatpush1.bf16.msra.mxu0 %v6363
        %6425 = vmatprep.subr.bf16.mxu0 0
        %6426 = vmatpush1.bf16.msra.mxu0 %v6364
        %6427 = vmatprep.subr.bf16.mxu0 0
        %6428 = vmatpush1.bf16.msra.mxu0 %v6365
        %6429 = vmatprep.subr.bf16.mxu0 0
        %6430 = vmatpush1.bf16.msra.mxu0 %v6366
        %6431 = vmatprep.subr.bf16.mxu0 0
        %6432 = vmatpush1.bf16.msra.mxu0 %v6367
        %6433 = vmatprep.mubr.bf16.mxu0 %v6254
        %6434 = vmatmul.mubr.bf16.gmra.mrb[0].mxu0 %v6251
        %v6435 = vpop.f32.mrb[0].mxu0
        %v6436 = vadd.f32 0.0, %v6435
        %v6437 = vpop.f32.mrb[0].mxu0
        %v6438 = vpop.f32.mrb[0].mxu0
        %v6439 = vadd.f32 0.0, %v6438
        %v6440 = vpop.f32.mrb[0].mxu0
        %6441 = vmatprep.mubr.bf16.mxu0 %v6261
        %6442 = vmatmul.mubr.bf16.gmra.mrb[0].mxu0 %v6259
        %v6443 = vpop.f32.mrb[0].mxu0
        %v6444 = vadd.f32 0.0, %v6443
        %v6445 = vpop.f32.mrb[0].mxu0
        %v6446 = vpop.f32.mrb[0].mxu0
        %v6447 = vadd.f32 0.0, %v6446
        %v6448 = vpop.f32.mrb[0].mxu0
        %6449 = vmatprep.mubr.bf16.mxu0 %v6267
        %6450 = vmatmul.mubr.bf16.gmra.mrb[0].mxu0 %v6265
        %v6451 = vpop.f32.mrb[0].mxu0
        %v6452 = vadd.f32 0.0, %v6451
        %v6453 = vpop.f32.mrb[0].mxu0
        %v6454 = vpop.f32.mrb[0].mxu0
        %v6455 = vadd.f32 0.0, %v6454
        %v6456 = vpop.f32.mrb[0].mxu0
        %6457 = vdwg.mxu0
        %6458 = vmatprep.subr.bf16.mxu0 0
        %6459 = vmatpush1.bf16.msra.mxu0 %v6368
        %6460 = vmatprep.subr.bf16.mxu0 0
        %6461 = vmatpush1.bf16.msra.mxu0 %v6369
        %6462 = vmatprep.subr.bf16.mxu0 0
        %6463 = vmatpush1.bf16.msra.mxu0 %v6399
        %6464 = vmatprep.subr.bf16.mxu0 0
        %6465 = vmatpush1.bf16.msra.mxu0 0
        %6466 = vmatprep.subr.bf16.mxu0 0
        %6467 = vmatpush1.bf16.msra.mxu0 0
        %6468 = vmatprep.subr.bf16.mxu0 0
        %6469 = vmatpush1.bf16.msra.mxu0 0
        %6470 = vmatprep.subr.bf16.mxu0 0
        %6471 = vmatpush1.bf16.msra.mxu0 0
        %6472 = vmatprep.subr.bf16.mxu0 0
        %6473 = vmatpush1.bf16.msra.mxu0 0
        %6474 = vmatprep.subr.bf16.mxu0 0
        %6475 = vmatpush1.bf16.msra.mxu0 0
        %6476 = vmatprep.subr.bf16.mxu0 0
        %6477 = vmatpush1.bf16.msra.mxu0 0
        %6478 = vmatprep.subr.bf16.mxu0 0
        %6479 = vmatpush1.bf16.msra.mxu0 0
        %6480 = vmatprep.subr.bf16.mxu0 0
        %6481 = vmatpush1.bf16.msra.mxu0 0
        %6482 = vmatprep.subr.bf16.mxu0 0
        %6483 = vmatpush1.bf16.msra.mxu0 0
        %6484 = vmatprep.subr.bf16.mxu0 0
        %6485 = vmatpush1.bf16.msra.mxu0 0
        %6486 = vmatprep.subr.bf16.mxu0 0
        %6487 = vmatpush1.bf16.msra.mxu0 0
        %6488 = vmatprep.subr.bf16.mxu0 0
        %6489 = vmatpush1.bf16.msra.mxu0 0
        %6490 = vmatprep.mubr.bf16.mxu0 0
        %6491 = vmatmul.mubr.bf16.gmra.mrb[0].mxu0 %v6390
        %v6492 = vpop.f32.mrb[0].mxu0
        %v6493 = vadd.f32 %v6436, %v6492
        %v6494 = vpop.f32.mrb[0].mxu0
        %v6495 = vpop.f32.mrb[0].mxu0
        %v6496 = vadd.f32 %v6439, %v6495
        %v6497 = vpop.f32.mrb[0].mxu0
        %6498 = vmatprep.mubr.bf16.mxu0 0
        %6499 = vmatmul.mubr.bf16.gmra.mrb[0].mxu0 %v6393
        %v6500 = vpop.f32.mrb[0].mxu0
        %v6501 = vadd.f32 %v6444, %v6500
        %v6502 = vpop.f32.mrb[0].mxu0
        %v6503 = vpop.f32.mrb[0].mxu0
        %v6504 = vadd.f32 %v6447, %v6503
        %v6505 = vpop.f32.mrb[0].mxu0
        %6506 = vmatprep.mubr.bf16.mxu0 0
        %6507 = vmatmul.mubr.bf16.gmra.mrb[0].mxu0 %v6396
        %v6508 = vpop.f32.mrb[0].mxu0
        %v6509 = vadd.f32 %v6452, %v6508
        %v6510 = vpop.f32.mrb[0].mxu0
        %v6511 = vpop.f32.mrb[0].mxu0
        %v6512 = vadd.f32 %v6455, %v6511
        %v6513 = vpop.f32.mrb[0].mxu0
        %6514 = vdwg.mxu0
        %v6515 = vadd.f32 %v6188, %v6493
        %v6516 = vadd.f32 %v6189, %v6496
        %v6517 = vadd.f32 %v6190, %v6501
        %v6518 = vadd.f32 %v6191, %v6504
        %v6519 = vadd.f32 %v6192, %v6509
        %v6520 = vadd.f32 %v6193, %v6512
        %v6521 = vld [vmem:[%s4] sm:$0x1]
        %v6523 = vlaneseq
        %v6524 = vshrl.u32 %v6523, 7
        %v6525 = vsub.s32 0, %v6524
        %v6526 = vrot.slane %v6521, %v6525
        %v6528 = vadd.f32 %v6515, %v6526
        %v6529 = vadd.f32 %v6516, %v6526
        %v6530 = vadd.f32 %v6517, %v6526
        %v6531 = vadd.f32 %v6518, %v6526
        %v6532 = vadd.f32 %v6519, %v6526
        %v6533 = vadd.f32 %v6520, %v6526
        %v6540 = vrot.slane %v6528, 3
        %v6541 = vrot.slane %v6529, 3
        %v6542 = vsel %vm5147, %v6540, %v6541
        %v6543 = vrot.slane %v6530, 3
        %v6544 = vsel %vm5147, %v6541, %v6543
        %v6545 = vrot.slane %v6531, 3
        %v6546 = vsel %vm5147, %v6543, %v6545
        %v6547 = vrot.slane %v6532, 3
        %v6548 = vsel %vm5147, %v6545, %v6547
        %v6549 = vrot.slane %v6533, 3
        %v6550 = vsel %vm5147, %v6547, %v6549
        %v6556 = vmax.f32 %v6528, %v6542
        %v6557 = vmax.f32 %v6529, %v6544
        %v6558 = vmax.f32 %v6530, %v6546
        %v6559 = vmax.f32 %v6531, %v6548
        %v6560 = vmax.f32 %v6532, %v6550
        %vm6561 = vcmask 1041408
        %v6562 = vrot.slane %v6528, 6
        %v6563 = vrot.slane %v6529, 6
        %v6564 = vsel %vm6561, %v6562, %v6563
        %v6565 = vrot.slane %v6530, 6
        %v6566 = vsel %vm6561, %v6563, %v6565
        %v6567 = vrot.slane %v6531, 6
        %v6568 = vsel %vm6561, %v6565, %v6567
        %v6569 = vrot.slane %v6532, 6
        %v6570 = vsel %vm6561, %v6567, %v6569
        %v6571 = vrot.slane %v6533, 6
        %v6572 = vsel %vm6561, %v6569, %v6571
        %v6578 = vmax.f32 %v6556, %v6564
        %v6579 = vmax.f32 %v6557, %v6566
        %v6580 = vmax.f32 %v6558, %v6568
        %v6581 = vmax.f32 %v6559, %v6570
        %v6582 = vmax.f32 %v6560, %v6572
        %6588 = vrot.lane.b32.xlu0 %v6578, 127
        %v6589 = vpop.permute.xlu0 %6588
        %6590 = vrot.lane.b32.xlu0 %v6579, 127
        %v6591 = vpop.permute.xlu0 %6590
        %6592 = vrot.lane.b32.xlu0 %v6580, 127
        %v6593 = vpop.permute.xlu0 %6592
        %6594 = vrot.lane.b32.xlu0 %v6581, 127
        %v6595 = vpop.permute.xlu0 %6594
        %6596 = vrot.lane.b32.xlu0 %v6582, 127
        %v6597 = vpop.permute.xlu0 %6596
        %v6603 = vmax.f32 %v6578, %v6589
        %v6604 = vmax.f32 %v6579, %v6591
        %v6605 = vmax.f32 %v6580, %v6593
        %v6606 = vmax.f32 %v6581, %v6595
        %v6607 = vmax.f32 %v6582, %v6597
        %6608 = vrot.lane.b32.xlu0 %v6578, 126
        %v6609 = vpop.permute.xlu0 %6608
        %6610 = vrot.lane.b32.xlu0 %v6579, 126
        %v6611 = vpop.permute.xlu0 %6610
        %6612 = vrot.lane.b32.xlu0 %v6580, 126
        %v6613 = vpop.permute.xlu0 %6612
        %6614 = vrot.lane.b32.xlu0 %v6581, 126
        %v6615 = vpop.permute.xlu0 %6614
        %6616 = vrot.lane.b32.xlu0 %v6582, 126
        %v6617 = vpop.permute.xlu0 %6616
        %v6623 = vmax.f32 %v6603, %v6609
        %v6624 = vmax.f32 %v6604, %v6611
        %v6625 = vmax.f32 %v6605, %v6613
        %v6626 = vmax.f32 %v6606, %v6615
        %v6627 = vmax.f32 %v6607, %v6617
        %v6628 = vmax.f32 %v6623, 0.0
        %v6629 = vmax.f32 %v6624, 0.0
        %v6630 = vmax.f32 %v6625, 0.0
        %v6631 = vmax.f32 %v6626, 0.0
        %v6632 = vmax.f32 %v6627, 0.0
        %v6633 = vld [vmem:[%s5] sm:$0xff]
        %v6634 = vld [vmem:[%s5 + $0x8] sm:$0xff]
        %v6635 = vld [vmem:[%s5 + $0x10] sm:$0xff]
        %v6636 = vld [vmem:[%s5 + $0x18] sm:$0xff]
        %v6637 = vld [vmem:[%s5 + $0x20] sm:$0xff]
        %v6638 = vld [vmem:[%s5 + $0x28] sm:$0xff]
        %v6639 = vld [vmem:[%s5 + $0x30] sm:$0xff]
        %v6640 = vld [vmem:[%s5 + $0x38] sm:$0xff]
        %v6641 = vld [vmem:[%s5 + $0x40] sm:$0xff]
        %v6642 = vld [vmem:[%s5 + $0x48] sm:$0x3f]
        %s6643 = scalar_lea.vmem %s5, 80
        %v6644 = vld [vmem:[%s6643] sm:$0xff]
        %v6645 = vld [vmem:[%s6643 + $0x8] sm:$0xff]
        %v6646 = vld [vmem:[%s6643 + $0x10] sm:$0xff]
        %v6647 = vld [vmem:[%s6643 + $0x18] sm:$0xff]
        %v6648 = vld [vmem:[%s6643 + $0x20] sm:$0xff]
        %v6649 = vld [vmem:[%s6643 + $0x28] sm:$0xff]
        %v6650 = vld [vmem:[%s6643 + $0x30] sm:$0xff]
        %v6651 = vld [vmem:[%s6643 + $0x38] sm:$0xff]
        %v6652 = vld [vmem:[%s6643 + $0x40] sm:$0xff]
        %v6653 = vld [vmem:[%s6643 + $0x48] sm:$0x3f]
        %v6655 = vrot.slane %v6629, 1
        %vm6656 = vcmask 637952
        %v6657 = vsel %vm6656, %v6655, 0
        %v6660 = vsel %vm4467, %v6653, 0
        %6662 = vmatprep.subr.mxu0 0.0
        %6663 = vmatpush1.msra.mxu0 %v6644
        %6664 = vmatprep.subr.mxu0 0.0
        %6665 = vmatpush1.msra.mxu0 %v6645
        %6666 = vmatprep.subr.mxu0 0.0
        %6667 = vmatpush1.msra.mxu0 %v6646
        %6668 = vmatprep.subr.mxu0 0.0
        %6669 = vmatpush1.msra.mxu0 %v6647
        %6670 = vmatprep.subr.mxu0 0.0
        %6671 = vmatpush1.msra.mxu0 %v6648
        %6672 = vmatprep.subr.mxu0 0.0
        %6673 = vmatpush1.msra.mxu0 %v6649
        %6674 = vmatprep.subr.mxu0 0.0
        %6675 = vmatpush1.msra.mxu0 %v6650
        %6676 = vmatprep.subr.mxu0 0.0
        %6677 = vmatpush1.msra.mxu0 %v6651
        %6678 = vmatprep.subr.mxu0 0.0
        %6679 = vmatpush1.msra.mxu0 %v6652
        %6680 = vmatprep.subr.mxu0 0.0
        %6681 = vmatpush1.msra.mxu0 %v6660
        %6682 = vmatprep.subr.mxu0 0.0
        %6683 = vmatpush1.msra.mxu0 0.0
        %6684 = vmatprep.subr.mxu0 0.0
        %6685 = vmatpush1.msra.mxu0 0.0
        %6686 = vmatprep.subr.mxu0 0.0
        %6687 = vmatpush1.msra.mxu0 0.0
        %6688 = vmatprep.subr.mxu0 0.0
        %6689 = vmatpush1.msra.mxu0 0.0
        %6690 = vmatprep.subr.mxu0 0.0
        %6691 = vmatpush1.msra.mxu0 0.0
        %6692 = vmatprep.subr.mxu0 0.0
        %6693 = vmatpush1.msra.mxu0 0.0
        %6694 = vmatprep.subr.mxu0 0.0
        %6695 = vmatpush1.msra.mxu0 0.0
        %6696 = vmatprep.subr.mxu0 0.0
        %6697 = vmatpush1.msra.mxu0 0.0
        %6698 = vmatprep.subr.mxu0 0.0
        %6699 = vmatpush1.msra.mxu0 0.0
        %6700 = vmatprep.subr.mxu0 0.0
        %6701 = vmatpush1.msra.mxu0 0.0
        %6702 = vmatprep.subr.mxu0 0.0
        %6703 = vmatpush1.msra.mxu0 0.0
        %6704 = vmatprep.subr.mxu0 0.0
        %6705 = vmatpush1.msra.mxu0 0.0
        %6706 = vmatprep.subr.mxu0 0.0
        %6707 = vmatpush1.msra.mxu0 0.0
        %6708 = vmatprep.subr.mxu0 0.0
        %6709 = vmatpush1.msra.mxu0 0.0
        %6710 = vmatprep.subr.mxu0 0.0
        %6711 = vmatpush1.msra.mxu0 0.0
        %6712 = vmatprep.subr.mxu0 0.0
        %6713 = vmatpush1.msra.mxu0 0.0
        %6714 = vmatprep.subr.mxu0 0.0
        %6715 = vmatpush1.msra.mxu0 0.0
        %6716 = vmatprep.subr.mxu0 0.0
        %6717 = vmatpush1.msra.mxu0 0.0
        %6718 = vmatprep.subr.mxu0 0.0
        %6719 = vmatpush1.msra.mxu0 0.0
        %6720 = vmatprep.subr.mxu0 0.0
        %6721 = vmatpush1.msra.mxu0 0.0
        %6722 = vmatprep.subr.mxu0 0.0
        %6723 = vmatpush1.msra.mxu0 0.0
        %6724 = vmatprep.subr.mxu0 0.0
        %6725 = vmatpush1.msra.mxu0 0.0
        %6726 = vmatprep.mubr.f32.mxu0 0.0
        %6727 = vmatmul.mubr.f32.gmra.mrb[0].mxu0 %v6657
        %v6728 = vpop.f32.mrb[0].mxu0
        %v6729 = vadd.f32 0.0, %v6728
        %v6730 = vpop.f32.mrb[0].mxu0
        %6731 = vdwg.mxu0
        %v6733 = vsel %vm6656, %v6628, 0
        %v6736 = vsel %vm4467, %v6642, 0
        %6738 = vmatprep.subr.mxu0 0.0
        %6739 = vmatpush1.msra.mxu0 %v6633
        %6740 = vmatprep.subr.mxu0 0.0
        %6741 = vmatpush1.msra.mxu0 %v6634
        %6742 = vmatprep.subr.mxu0 0.0
        %6743 = vmatpush1.msra.mxu0 %v6635
        %6744 = vmatprep.subr.mxu0 0.0
        %6745 = vmatpush1.msra.mxu0 %v6636
        %6746 = vmatprep.subr.mxu0 0.0
        %6747 = vmatpush1.msra.mxu0 %v6637
        %6748 = vmatprep.subr.mxu0 0.0
        %6749 = vmatpush1.msra.mxu0 %v6638
        %6750 = vmatprep.subr.mxu0 0.0
        %6751 = vmatpush1.msra.mxu0 %v6639
        %6752 = vmatprep.subr.mxu0 0.0
        %6753 = vmatpush1.msra.mxu0 %v6640
        %6754 = vmatprep.subr.mxu0 0.0
        %6755 = vmatpush1.msra.mxu0 %v6641
        %6756 = vmatprep.subr.mxu0 0.0
        %6757 = vmatpush1.msra.mxu0 %v6736
        %6758 = vmatprep.subr.mxu0 0.0
        %6759 = vmatpush1.msra.mxu0 0.0
        %6760 = vmatprep.subr.mxu0 0.0
        %6761 = vmatpush1.msra.mxu0 0.0
        %6762 = vmatprep.subr.mxu0 0.0
        %6763 = vmatpush1.msra.mxu0 0.0
        %6764 = vmatprep.subr.mxu0 0.0
        %6765 = vmatpush1.msra.mxu0 0.0
        %6766 = vmatprep.subr.mxu0 0.0
        %6767 = vmatpush1.msra.mxu0 0.0
        %6768 = vmatprep.subr.mxu0 0.0
        %6769 = vmatpush1.msra.mxu0 0.0
        %6770 = vmatprep.subr.mxu0 0.0
        %6771 = vmatpush1.msra.mxu0 0.0
        %6772 = vmatprep.subr.mxu0 0.0
        %6773 = vmatpush1.msra.mxu0 0.0
        %6774 = vmatprep.subr.mxu0 0.0
        %6775 = vmatpush1.msra.mxu0 0.0
        %6776 = vmatprep.subr.mxu0 0.0
        %6777 = vmatpush1.msra.mxu0 0.0
        %6778 = vmatprep.subr.mxu0 0.0
        %6779 = vmatpush1.msra.mxu0 0.0
        %6780 = vmatprep.subr.mxu0 0.0
        %6781 = vmatpush1.msra.mxu0 0.0
        %6782 = vmatprep.subr.mxu0 0.0
        %6783 = vmatpush1.msra.mxu0 0.0
        %6784 = vmatprep.subr.mxu0 0.0
        %6785 = vmatpush1.msra.mxu0 0.0
        %6786 = vmatprep.subr.mxu0 0.0
        %6787 = vmatpush1.msra.mxu0 0.0
        %6788 = vmatprep.subr.mxu0 0.0
        %6789 = vmatpush1.msra.mxu0 0.0
        %6790 = vmatprep.subr.mxu0 0.0
        %6791 = vmatpush1.msra.mxu0 0.0
        %6792 = vmatprep.subr.mxu0 0.0
        %6793 = vmatpush1.msra.mxu0 0.0
        %6794 = vmatprep.subr.mxu0 0.0
        %6795 = vmatpush1.msra.mxu0 0.0
        %6796 = vmatprep.subr.mxu0 0.0
        %6797 = vmatpush1.msra.mxu0 0.0
        %6798 = vmatprep.subr.mxu0 0.0
        %6799 = vmatpush1.msra.mxu0 0.0
        %6800 = vmatprep.subr.mxu0 0.0
        %6801 = vmatpush1.msra.mxu0 0.0
        %6802 = vmatprep.mubr.f32.mxu0 0.0
        %6803 = vmatmul.mubr.f32.gmra.mrb[0].mxu0 %v6733
        %v6804 = vpop.f32.mrb[0].mxu0
        %v6805 = vadd.f32 %v6729, %v6804
        %v6806 = vpop.f32.mrb[0].mxu0
        %6807 = vdwg.mxu0
        %s6808 = scalar_lea.vmem %s5, 160
        %v6809 = vld [vmem:[%s6808] sm:$0xff]
        %v6810 = vld [vmem:[%s6808 + $0x8] sm:$0xff]
        %v6811 = vld [vmem:[%s6808 + $0x10] sm:$0xff]
        %v6812 = vld [vmem:[%s6808 + $0x18] sm:$0xff]
        %v6813 = vld [vmem:[%s6808 + $0x20] sm:$0xff]
        %v6814 = vld [vmem:[%s6808 + $0x28] sm:$0xff]
        %v6815 = vld [vmem:[%s6808 + $0x30] sm:$0xff]
        %v6816 = vld [vmem:[%s6808 + $0x38] sm:$0xff]
        %v6817 = vld [vmem:[%s6808 + $0x40] sm:$0xff]
        %v6818 = vld [vmem:[%s6808 + $0x48] sm:$0x3f]
        %v6820 = vrot.slane %v6630, 2
        %v6821 = vsel %vm6656, %v6820, 0
        %v6824 = vsel %vm4467, %v6818, 0
        %6826 = vmatprep.subr.mxu0 0.0
        %6827 = vmatpush1.msra.mxu0 %v6809
        %6828 = vmatprep.subr.mxu0 0.0
        %6829 = vmatpush1.msra.mxu0 %v6810
        %6830 = vmatprep.subr.mxu0 0.0
        %6831 = vmatpush1.msra.mxu0 %v6811
        %6832 = vmatprep.subr.mxu0 0.0
        %6833 = vmatpush1.msra.mxu0 %v6812
        %6834 = vmatprep.subr.mxu0 0.0
        %6835 = vmatpush1.msra.mxu0 %v6813
        %6836 = vmatprep.subr.mxu0 0.0
        %6837 = vmatpush1.msra.mxu0 %v6814
        %6838 = vmatprep.subr.mxu0 0.0
        %6839 = vmatpush1.msra.mxu0 %v6815
        %6840 = vmatprep.subr.mxu0 0.0
        %6841 = vmatpush1.msra.mxu0 %v6816
        %6842 = vmatprep.subr.mxu0 0.0
        %6843 = vmatpush1.msra.mxu0 %v6817
        %6844 = vmatprep.subr.mxu0 0.0
        %6845 = vmatpush1.msra.mxu0 %v6824
        %6846 = vmatprep.subr.mxu0 0.0
        %6847 = vmatpush1.msra.mxu0 0.0
        %6848 = vmatprep.subr.mxu0 0.0
        %6849 = vmatpush1.msra.mxu0 0.0
        %6850 = vmatprep.subr.mxu0 0.0
        %6851 = vmatpush1.msra.mxu0 0.0
        %6852 = vmatprep.subr.mxu0 0.0
        %6853 = vmatpush1.msra.mxu0 0.0
        %6854 = vmatprep.subr.mxu0 0.0
        %6855 = vmatpush1.msra.mxu0 0.0
        %6856 = vmatprep.subr.mxu0 0.0
        %6857 = vmatpush1.msra.mxu0 0.0
        %6858 = vmatprep.subr.mxu0 0.0
        %6859 = vmatpush1.msra.mxu0 0.0
        %6860 = vmatprep.subr.mxu0 0.0
        %6861 = vmatpush1.msra.mxu0 0.0
        %6862 = vmatprep.subr.mxu0 0.0
        %6863 = vmatpush1.msra.mxu0 0.0
        %6864 = vmatprep.subr.mxu0 0.0
        %6865 = vmatpush1.msra.mxu0 0.0
        %6866 = vmatprep.subr.mxu0 0.0
        %6867 = vmatpush1.msra.mxu0 0.0
        %6868 = vmatprep.subr.mxu0 0.0
        %6869 = vmatpush1.msra.mxu0 0.0
        %6870 = vmatprep.subr.mxu0 0.0
        %6871 = vmatpush1.msra.mxu0 0.0
        %6872 = vmatprep.subr.mxu0 0.0
        %6873 = vmatpush1.msra.mxu0 0.0
        %6874 = vmatprep.subr.mxu0 0.0
        %6875 = vmatpush1.msra.mxu0 0.0
        %6876 = vmatprep.subr.mxu0 0.0
        %6877 = vmatpush1.msra.mxu0 0.0
        %6878 = vmatprep.subr.mxu0 0.0
        %6879 = vmatpush1.msra.mxu0 0.0
        %6880 = vmatprep.subr.mxu0 0.0
        %6881 = vmatpush1.msra.mxu0 0.0
        %6882 = vmatprep.subr.mxu0 0.0
        %6883 = vmatpush1.msra.mxu0 0.0
        %6884 = vmatprep.subr.mxu0 0.0
        %6885 = vmatpush1.msra.mxu0 0.0
        %6886 = vmatprep.subr.mxu0 0.0
        %6887 = vmatpush1.msra.mxu0 0.0
        %6888 = vmatprep.subr.mxu0 0.0
        %6889 = vmatpush1.msra.mxu0 0.0
        %6890 = vmatprep.mubr.f32.mxu0 0.0
        %6891 = vmatmul.mubr.f32.gmra.mrb[0].mxu0 %v6821
        %v6892 = vpop.f32.mrb[0].mxu0
        %v6893 = vadd.f32 0.0, %v6892
        %v6894 = vpop.f32.mrb[0].mxu0
        %6895 = vdwg.mxu0
        %v6896 = vadd.f32 %v6805, %v6893
        %s6897 = scalar_lea.vmem %s5, 240
        %v6898 = vld [vmem:[%s6897] sm:$0xff]
        %v6899 = vld [vmem:[%s6897 + $0x8] sm:$0xff]
        %v6900 = vld [vmem:[%s6897 + $0x10] sm:$0xff]
        %v6901 = vld [vmem:[%s6897 + $0x18] sm:$0xff]
        %v6902 = vld [vmem:[%s6897 + $0x20] sm:$0xff]
        %v6903 = vld [vmem:[%s6897 + $0x28] sm:$0xff]
        %v6904 = vld [vmem:[%s6897 + $0x30] sm:$0xff]
        %v6905 = vld [vmem:[%s6897 + $0x38] sm:$0xff]
        %v6906 = vld [vmem:[%s6897 + $0x40] sm:$0xff]
        %v6907 = vld [vmem:[%s6897 + $0x48] sm:$0x3f]
        %v6909 = vrot.slane %v6631, 3
        %v6910 = vsel %vm6656, %v6909, 0
        %v6913 = vsel %vm4467, %v6907, 0
        %6915 = vmatprep.subr.mxu0 0.0
        %6916 = vmatpush1.msra.mxu0 %v6898
        %6917 = vmatprep.subr.mxu0 0.0
        %6918 = vmatpush1.msra.mxu0 %v6899
        %6919 = vmatprep.subr.mxu0 0.0
        %6920 = vmatpush1.msra.mxu0 %v6900
        %6921 = vmatprep.subr.mxu0 0.0
        %6922 = vmatpush1.msra.mxu0 %v6901
        %6923 = vmatprep.subr.mxu0 0.0
        %6924 = vmatpush1.msra.mxu0 %v6902
        %6925 = vmatprep.subr.mxu0 0.0
        %6926 = vmatpush1.msra.mxu0 %v6903
        %6927 = vmatprep.subr.mxu0 0.0
        %6928 = vmatpush1.msra.mxu0 %v6904
        %6929 = vmatprep.subr.mxu0 0.0
        %6930 = vmatpush1.msra.mxu0 %v6905
        %6931 = vmatprep.subr.mxu0 0.0
        %6932 = vmatpush1.msra.mxu0 %v6906
        %6933 = vmatprep.subr.mxu0 0.0
        %6934 = vmatpush1.msra.mxu0 %v6913
        %6935 = vmatprep.subr.mxu0 0.0
        %6936 = vmatpush1.msra.mxu0 0.0
        %6937 = vmatprep.subr.mxu0 0.0
        %6938 = vmatpush1.msra.mxu0 0.0
        %6939 = vmatprep.subr.mxu0 0.0
        %6940 = vmatpush1.msra.mxu0 0.0
        %6941 = vmatprep.subr.mxu0 0.0
        %6942 = vmatpush1.msra.mxu0 0.0
        %6943 = vmatprep.subr.mxu0 0.0
        %6944 = vmatpush1.msra.mxu0 0.0
        %6945 = vmatprep.subr.mxu0 0.0
        %6946 = vmatpush1.msra.mxu0 0.0
        %6947 = vmatprep.subr.mxu0 0.0
        %6948 = vmatpush1.msra.mxu0 0.0
        %6949 = vmatprep.subr.mxu0 0.0
        %6950 = vmatpush1.msra.mxu0 0.0
        %6951 = vmatprep.subr.mxu0 0.0
        %6952 = vmatpush1.msra.mxu0 0.0
        %6953 = vmatprep.subr.mxu0 0.0
        %6954 = vmatpush1.msra.mxu0 0.0
        %6955 = vmatprep.subr.mxu0 0.0
        %6956 = vmatpush1.msra.mxu0 0.0
        %6957 = vmatprep.subr.mxu0 0.0
        %6958 = vmatpush1.msra.mxu0 0.0
        %6959 = vmatprep.subr.mxu0 0.0
        %6960 = vmatpush1.msra.mxu0 0.0
        %6961 = vmatprep.subr.mxu0 0.0
        %6962 = vmatpush1.msra.mxu0 0.0
        %6963 = vmatprep.subr.mxu0 0.0
        %6964 = vmatpush1.msra.mxu0 0.0
        %6965 = vmatprep.subr.mxu0 0.0
        %6966 = vmatpush1.msra.mxu0 0.0
        %6967 = vmatprep.subr.mxu0 0.0
        %6968 = vmatpush1.msra.mxu0 0.0
        %6969 = vmatprep.subr.mxu0 0.0
        %6970 = vmatpush1.msra.mxu0 0.0
        %6971 = vmatprep.subr.mxu0 0.0
        %6972 = vmatpush1.msra.mxu0 0.0
        %6973 = vmatprep.subr.mxu0 0.0
        %6974 = vmatpush1.msra.mxu0 0.0
        %6975 = vmatprep.subr.mxu0 0.0
        %6976 = vmatpush1.msra.mxu0 0.0
        %6977 = vmatprep.subr.mxu0 0.0
        %6978 = vmatpush1.msra.mxu0 0.0
        %6979 = vmatprep.mubr.f32.mxu0 0.0
        %6980 = vmatmul.mubr.f32.gmra.mrb[0].mxu0 %v6910
        %v6981 = vpop.f32.mrb[0].mxu0
        %v6982 = vadd.f32 0.0, %v6981
        %v6983 = vpop.f32.mrb[0].mxu0
        %6984 = vdwg.mxu0
        %v6985 = vadd.f32 %v6896, %v6982
        %s6986 = scalar_lea.vmem %s5, 320
        %v6987 = vld [vmem:[%s6986] sm:$0xff]
        %v6988 = vld [vmem:[%s6986 + $0x8] sm:$0xff]
        %v6989 = vld [vmem:[%s6986 + $0x10] sm:$0xff]
        %v6990 = vld [vmem:[%s6986 + $0x18] sm:$0xff]
        %v6991 = vld [vmem:[%s6986 + $0x20] sm:$0xff]
        %v6992 = vld [vmem:[%s6986 + $0x28] sm:$0xff]
        %v6993 = vld [vmem:[%s6986 + $0x30] sm:$0xff]
        %v6994 = vld [vmem:[%s6986 + $0x38] sm:$0xff]
        %v6995 = vld [vmem:[%s6986 + $0x40] sm:$0xff]
        %v6996 = vld [vmem:[%s6986 + $0x48] sm:$0x3f]
        %v6998 = vrot.slane %v6632, 4
        %v6999 = vsel %vm6656, %v6998, 0
        %v7002 = vsel %vm4467, %v6996, 0
        %7004 = vmatprep.subr.mxu0 0.0
        %7005 = vmatpush1.msra.mxu0 %v6987
        %7006 = vmatprep.subr.mxu0 0.0
        %7007 = vmatpush1.msra.mxu0 %v6988
        %7008 = vmatprep.subr.mxu0 0.0
        %7009 = vmatpush1.msra.mxu0 %v6989
        %7010 = vmatprep.subr.mxu0 0.0
        %7011 = vmatpush1.msra.mxu0 %v6990
        %7012 = vmatprep.subr.mxu0 0.0
        %7013 = vmatpush1.msra.mxu0 %v6991
        %7014 = vmatprep.subr.mxu0 0.0
        %7015 = vmatpush1.msra.mxu0 %v6992
        %7016 = vmatprep.subr.mxu0 0.0
        %7017 = vmatpush1.msra.mxu0 %v6993
        %7018 = vmatprep.subr.mxu0 0.0
        %7019 = vmatpush1.msra.mxu0 %v6994
        %7020 = vmatprep.subr.mxu0 0.0
        %7021 = vmatpush1.msra.mxu0 %v6995
        %7022 = vmatprep.subr.mxu0 0.0
        %7023 = vmatpush1.msra.mxu0 %v7002
        %7024 = vmatprep.subr.mxu0 0.0
        %7025 = vmatpush1.msra.mxu0 0.0
        %7026 = vmatprep.subr.mxu0 0.0
        %7027 = vmatpush1.msra.mxu0 0.0
        %7028 = vmatprep.subr.mxu0 0.0
        %7029 = vmatpush1.msra.mxu0 0.0
        %7030 = vmatprep.subr.mxu0 0.0
        %7031 = vmatpush1.msra.mxu0 0.0
        %7032 = vmatprep.subr.mxu0 0.0
        %7033 = vmatpush1.msra.mxu0 0.0
        %7034 = vmatprep.subr.mxu0 0.0
        %7035 = vmatpush1.msra.mxu0 0.0
        %7036 = vmatprep.subr.mxu0 0.0
        %7037 = vmatpush1.msra.mxu0 0.0
        %7038 = vmatprep.subr.mxu0 0.0
        %7039 = vmatpush1.msra.mxu0 0.0
        %7040 = vmatprep.subr.mxu0 0.0
        %7041 = vmatpush1.msra.mxu0 0.0
        %7042 = vmatprep.subr.mxu0 0.0
        %7043 = vmatpush1.msra.mxu0 0.0
        %7044 = vmatprep.subr.mxu0 0.0
        %7045 = vmatpush1.msra.mxu0 0.0
        %7046 = vmatprep.subr.mxu0 0.0
        %7047 = vmatpush1.msra.mxu0 0.0
        %7048 = vmatprep.subr.mxu0 0.0
        %7049 = vmatpush1.msra.mxu0 0.0
        %7050 = vmatprep.subr.mxu0 0.0
        %7051 = vmatpush1.msra.mxu0 0.0
        %7052 = vmatprep.subr.mxu0 0.0
        %7053 = vmatpush1.msra.mxu0 0.0
        %7054 = vmatprep.subr.mxu0 0.0
        %7055 = vmatpush1.msra.mxu0 0.0
        %7056 = vmatprep.subr.mxu0 0.0
        %7057 = vmatpush1.msra.mxu0 0.0
        %7058 = vmatprep.subr.mxu0 0.0
        %7059 = vmatpush1.msra.mxu0 0.0
        %7060 = vmatprep.subr.mxu0 0.0
        %7061 = vmatpush1.msra.mxu0 0.0
        %7062 = vmatprep.subr.mxu0 0.0
        %7063 = vmatpush1.msra.mxu0 0.0
        %7064 = vmatprep.subr.mxu0 0.0
        %7065 = vmatpush1.msra.mxu0 0.0
        %7066 = vmatprep.subr.mxu0 0.0
        %7067 = vmatpush1.msra.mxu0 0.0
        %7068 = vmatprep.mubr.f32.mxu0 0.0
        %7069 = vmatmul.mubr.f32.gmra.mrb[0].mxu0 %v6999
        %v7070 = vpop.f32.mrb[0].mxu0
        %v7071 = vadd.f32 0.0, %v7070
        %v7072 = vpop.f32.mrb[0].mxu0
        %7073 = vdwg.mxu0
        %v7074 = vadd.f32 %v6985, %v7071
        %v7075 = vld [vmem:[%s6] sm:$0x1]
        %v7076 = vadd.f32 %v7074, %v7075
        %v7077 = vmax.f32 %v7076, 0.0
        %v7078 = vld [vmem:[%s7] sm:$0xff]
        %v7079 = vld [vmem:[%s7 + $0x8] sm:$0xff]
        %v7080 = vld [vmem:[%s7 + $0x10] sm:$0xff]
        %v7081 = vld [vmem:[%s7 + $0x18] sm:$0xff]
        %v7082 = vld [vmem:[%s7 + $0x20] sm:$0xff]
        %v7083 = vld [vmem:[%s7 + $0x28] sm:$0xff]
        %v7084 = vld [vmem:[%s7 + $0x30] sm:$0x3]
        %v7085 = vld [vmem:[%s8] sm:$0x1]
        %vm7086 = vcmask 408576
        %v7088 = vsel %vm7086, %v7077, 0
        %v7091 = vsel %vm6561, %v7084, 0
        %7093 = vmatprep.subr.mxu0 0.0
        %7094 = vmatpush1.msra.mxu0 %v7078
        %7095 = vmatprep.subr.mxu0 0.0
        %7096 = vmatpush1.msra.mxu0 %v7079
        %7097 = vmatprep.subr.mxu0 0.0
        %7098 = vmatpush1.msra.mxu0 %v7080
        %7099 = vmatprep.subr.mxu0 0.0
        %7100 = vmatpush1.msra.mxu0 %v7081
        %7101 = vmatprep.subr.mxu0 0.0
        %7102 = vmatpush1.msra.mxu0 %v7082
        %7103 = vmatprep.subr.mxu0 0.0
        %7104 = vmatpush1.msra.mxu0 %v7083
        %7105 = vmatprep.subr.mxu0 0.0
        %7106 = vmatpush1.msra.mxu0 %v7091
        %7107 = vmatprep.subr.mxu0 0.0
        %7108 = vmatpush1.msra.mxu0 0.0
        %7109 = vmatprep.subr.mxu0 0.0
        %7110 = vmatpush1.msra.mxu0 0.0
        %7111 = vmatprep.subr.mxu0 0.0
        %7112 = vmatpush1.msra.mxu0 0.0
        %7113 = vmatprep.subr.mxu0 0.0
        %7114 = vmatpush1.msra.mxu0 0.0
        %7115 = vmatprep.subr.mxu0 0.0
        %7116 = vmatpush1.msra.mxu0 0.0
        %7117 = vmatprep.subr.mxu0 0.0
        %7118 = vmatpush1.msra.mxu0 0.0
        %7119 = vmatprep.subr.mxu0 0.0
        %7120 = vmatpush1.msra.mxu0 0.0
        %7121 = vmatprep.subr.mxu0 0.0
        %7122 = vmatpush1.msra.mxu0 0.0
        %7123 = vmatprep.subr.mxu0 0.0
        %7124 = vmatpush1.msra.mxu0 0.0
        %7125 = vmatprep.subr.mxu0 0.0
        %7126 = vmatpush1.msra.mxu0 0.0
        %7127 = vmatprep.subr.mxu0 0.0
        %7128 = vmatpush1.msra.mxu0 0.0
        %7129 = vmatprep.subr.mxu0 0.0
        %7130 = vmatpush1.msra.mxu0 0.0
        %7131 = vmatprep.subr.mxu0 0.0
        %7132 = vmatpush1.msra.mxu0 0.0
        %7133 = vmatprep.subr.mxu0 0.0
        %7134 = vmatpush1.msra.mxu0 0.0
        %7135 = vmatprep.subr.mxu0 0.0
        %7136 = vmatpush1.msra.mxu0 0.0
        %7137 = vmatprep.subr.mxu0 0.0
        %7138 = vmatpush1.msra.mxu0 0.0
        %7139 = vmatprep.subr.mxu0 0.0
        %7140 = vmatpush1.msra.mxu0 0.0
        %7141 = vmatprep.subr.mxu0 0.0
        %7142 = vmatpush1.msra.mxu0 0.0
        %7143 = vmatprep.subr.mxu0 0.0
        %7144 = vmatpush1.msra.mxu0 0.0
        %7145 = vmatprep.subr.mxu0 0.0
        %7146 = vmatpush1.msra.mxu0 0.0
        %7147 = vmatprep.subr.mxu0 0.0
        %7148 = vmatpush1.msra.mxu0 0.0
        %7149 = vmatprep.subr.mxu0 0.0
        %7150 = vmatpush1.msra.mxu0 0.0
        %7151 = vmatprep.subr.mxu0 0.0
        %7152 = vmatpush1.msra.mxu0 0.0
        %7153 = vmatprep.subr.mxu0 0.0
        %7154 = vmatpush1.msra.mxu0 0.0
        %7155 = vmatprep.subr.mxu0 0.0
        %7156 = vmatpush1.msra.mxu0 0.0
        %7157 = vmatprep.mubr.f32.mxu0 0.0
        %7158 = vmatmul.mubr.f32.gmra.mrb[0].mxu0 %v7088
        %v7159 = vpop.f32.mrb[0].mxu0
        %v7160 = vadd.f32 %v7085, %v7159
        %v7161 = vpop.f32.mrb[0].mxu0
        %7162 = vdwg.mxu0
        %v7163 = vsub.f32 0.0, %v7160
        %v7164 = vmul.f32 %v7163, 1.442695
        %v7165 = vpow.pop %v7164
        %v7166 = vadd.f32 %v7165, 1.0
        %v7167 = vrcp.pop %v7166
        %v7168 = vmul.f32 1.0, %v7167
        %vm7169 = vcmask 122880
        %7170 = vst.msk [vmem:[%s349] sm:$0x1] %vm7169, %v7168
        %s7171 = sand.u32 %s228, 1
        %s7172 = scalar_lea.sflag [#allocation4], %s7171
        %s7173 = sand.u32 %s228, 1
        %s7174 = scalar_lea.vmem [#allocation5], %s7173
        // Predicated region
        $region61: #{net_forward.1} parent=55 // pred_check
          %p7175 = pneg %p238
        $region62: #{net_forward.1} parent=55 // pred_check_branch
          %7177 = sbr.rel (%p7175) target = $region64
        $region63: #{net_forward.1} parent=55 // pred_region
          %s7179 = ssub.s32 16, 16
          %7180 = vsyncadd %s7172, %s7179
          %s7181 = smul.addr %s26, 16
          %s7182 = scalar_lea.hbm %s9, %s7181
          %s7184 = sshll.u32 %s7174, 4
          %s7185 = int_to_ptr.vmem [resolvable:$true] %s7184
          %7187 = dma.vmem_to_hbm [thread:$0]  %s7185, 16, %s7182, %s7172
        $region64: #{net_forward.1} parent=55 // pred_fallthru
          _
      $region56: #{net_forward.1} parent=5 // pred_fallthru
        _
      %p7188 = scmp.le.s32.totalorder 2, %s21
      // Predicated region
      $region65: #{net_forward.1} parent=5 // pred_check
        %p7189 = pneg %p7188
      $region66: #{net_forward.1} parent=5 // pred_check_branch
        %7191 = sbr.rel (%p7189) target = $region68
      $region67: #{net_forward.1} parent=5 // pred_region
        %s7192 = ssub.s32 %s21, 2
        // Predicated region
        $region69: #{net_forward.1} parent=67 // pred_check
          %p7193 = pneg %p244
        $region70: #{net_forward.1} parent=67 // pred_check_branch
          %7195 = sbr.rel (%p7193) target = $region72
        $region71: #{net_forward.1} parent=67 // pred_region
          %s7196 = sand.u32 %s229, 1
          %s7197 = scalar_lea.sflag [#allocation4], %s7196
          %s7198 = sand.u32 %s229, 1
          %s7199 = scalar_lea.vmem [#allocation5], %s7198
          %7200 = dma.done %s7197, 16
        $region72: #{net_forward.1} parent=67 // pred_fallthru
          _
      $region68: #{net_forward.1} parent=5 // pred_fallthru
        _
    $region6: #{net_forward.1} parent=1 // loop_footer
      %s25 = sadd.s32 1, %s21
    $region7: #{net_forward.1} parent=1 // loop_footer_branch
      %20 = sbr.rel target = $region3
    $region8: #{net_forward.1} parent=1 // loop_exit
      _
    %7201 = vsyncpa [#allocation3], 1
    %s7202 = scalar_lea.sflag [#allocation3], 1
    %7203 = vsyncpa %s7202, 1
    %7204 = vsyncpa [#allocation4], 1
    %s7205 = scalar_lea.sflag [#allocation4], 1
    %7206 = vsyncpa %s7205, 1

</llo_original>
